<compile_context>
chip_gen: v5e
topology: v5e:2x2
jax: 0.10.0
libtpu: 0.0.40
codegen_flags: <defaults>
</compile_context>

<pallas_src>
import functools

import jax
import jax.numpy as jnp
from jax.experimental import pallas as pl
from jax.experimental.pallas import tpu as pltpu


def _round_up(x, m):
    return ((x + m - 1) // m) * m


# ----------------------------------------------------------------------------
# Pallas kernels
# ----------------------------------------------------------------------------

def pallas_matmul(a, b, bias=None, a_scale=None, a_shift=None, *,
                  collect_stats=False, tm=1024):
    """out = [relu(a*a_scale + a_shift)] @ b (+ bias);  A:(M,K), B:(K,N).

    * A stays f32 into the kernel and is cast to bf16 in-kernel (f32 MXU accumulation);
      the K-pad below fuses into the im2col producer, so no extra HBM pass over A.
    * Optional per-column (a_scale, a_shift) + ReLU fold the previous layer's
      BatchNorm+ReLU into this matmul's A path (no separate BN kernel / HBM round trip).
    * M is tiled with a large tile and the grid axis is "parallel" (>=2 tiles so v7x's
      two TensorCores split it).
    * collect_stats: per-tile (sum, sum-of-squares) over rows emitted in the epilogue
      with a single (2, N) store; padded rows are masked out of the stats.
    """
    M, K = a.shape
    K2, N = b.shape
    assert K == K2

    Kp = _round_up(K, 128)
    tm_eff = min(tm, _round_up(max(M // 2, 8), 8))
    Mp = _round_up(M, tm_eff)
    n_tiles = Mp // tm_eff
    need_row_mask = (Mp != M)          # static guard: padded rows must not pollute stats

    a_p = jnp.pad(a.astype(jnp.float32), ((0, Mp - M), (0, Kp - K)))
    b_p = jnp.pad(b.astype(jnp.float32), ((0, Kp - K), (0, 0))).astype(jnp.bfloat16)

    has_norm = a_scale is not None
    has_bias = bias is not None
    if has_norm:
        sc = jnp.pad(a_scale.reshape(1, K).astype(jnp.float32), ((0, 0), (0, Kp - K)))
        sh = jnp.pad(a_shift.reshape(1, K).astype(jnp.float32), ((0, 0), (0, Kp - K)))
    if has_bias:
        bias2 = bias.reshape(1, N).astype(jnp.float32)

    def kernel(*refs):
        idx = 0
        a_ref = refs[idx]; idx += 1
        b_ref = refs[idx]; idx += 1
        if has_norm:
            sc_ref, sh_ref = refs[idx], refs[idx + 1]; idx += 2
        if has_bias:
            bias_ref = refs[idx]; idx += 1
        o_ref = refs[idx]; idx += 1
        if collect_stats:
            s_ref = refs[idx]

        av = a_ref[...]
        if has_norm:
            # previous layer's BatchNorm + ReLU folded into the A path
            av = jnp.maximum(av * sc_ref[...] + sh_ref[...], 0.0)
        acc = jnp.dot(av.astype(jnp.bfloat16), b_ref[...],
                      preferred_element_type=jnp.float32)
        if has_bias:
            acc = acc + bias_ref[...]
        o_ref[...] = acc

        if collect_stats:
            acc_s = acc
            if need_row_mask:
                row = (jax.lax.broadcasted_iota(jnp.int32, (tm_eff, 1), 0)
                       + pl.program_id(0) * tm_eff)
                acc_s = jnp.where(row < M, acc, 0.0)
            # single store of the stacked (sum, sumsq) stats
            s_ref[0, :, :] = jnp.concatenate(
                [jnp.sum(acc_s, axis=0, keepdims=True),
                 jnp.sum(acc_s * acc_s, axis=0, keepdims=True)], axis=0)

    in_specs = [pl.BlockSpec((tm_eff, Kp), lambda i: (i, 0)),
                pl.BlockSpec((Kp, N), lambda i: (0, 0))]
    operands = [a_p, b_p]
    if has_norm:
        in_specs += [pl.BlockSpec((1, Kp), lambda i: (0, 0)),
                     pl.BlockSpec((1, Kp), lambda i: (0, 0))]
        operands += [sc, sh]
    if has_bias:
        in_specs.append(pl.BlockSpec((1, N), lambda i: (0, 0)))
        operands.append(bias2)

    out_shapes = [jax.ShapeDtypeStruct((Mp, N), jnp.float32)]
    out_specs = [pl.BlockSpec((tm_eff, N), lambda i: (i, 0))]
    if collect_stats:
        out_shapes.append(jax.ShapeDtypeStruct((n_tiles, 2, N), jnp.float32))
        out_specs.append(pl.BlockSpec((1, 2, N), lambda i: (i, 0, 0)))

    res = pl.pallas_call(
        kernel,
        grid=(n_tiles,),
        in_specs=in_specs,
        out_specs=tuple(out_specs) if collect_stats else out_specs[0],
        out_shape=tuple(out_shapes) if collect_stats else out_shapes[0],
        compiler_params=pltpu.CompilerParams(dimension_semantics=("parallel",)),
    )(*operands)

    if collect_stats:
        out, stats = res
        return out[:M], stats
    return res[:M]


def bn_scale_shift(stats, m_true, eps=1e-5):
    """Training-mode BatchNorm (gamma=1, beta=0) reduced to per-channel scale/shift.

    Tiny (2, N) reduction done in plain JAX.  Returns (scale, shift, mean) so that
    bn(x) = x*scale + shift, and bn(mean) == 0 exactly (used for mean-value padding)."""
    tot = jnp.sum(stats, axis=0)                      # (2, N)
    mean = tot[0] / float(m_true)
    # TODO(synk): E[x^2]-E[x]^2 can cancel catastrophically at production scale; use
    # a two-pass / Welford formulation there.
    var = jnp.maximum(tot[1] / float(m_true) - mean * mean, 0.0)
    scale = jax.lax.rsqrt(var + eps)
    return scale, -mean * scale, mean


def pallas_bn_relu_maxpool(y_v, scale_l, shift_l, *, Ho, Wo, C, tile_r=8):
    """Fused BatchNorm-apply + ReLU + MaxPool2d(3x3, stride 2, pad 1) over (H, W).

    y_v is the conv matmul output viewed lane-dense as (B*T, Ho, Wo*C) (Wo*C == 128
    here) so every load is a full-lane access.  The 3x3 window max uses shifted-by-one
    slices (w-shifts are +/-C lanes, h-shifts +/-1 sublane row); neighbours shifted in
    from outside are padded with 0, which is exact because values are >=0 post-ReLU and
    the window centre is always included.  The stride-2 w-downsample is an exact
    one-hot selection matmul on the MXU; the h-downsample is static row selection."""
    R_total = y_v.shape[0]
    WC = Wo * C
    assert y_v.shape == (R_total, Ho, WC)
    assert Ho % 2 == 0 and Wo % 2 == 0
    Ho_o, Wo_o = Ho // 2, Wo // 2
    WCo = Wo_o * C

    tile = min(tile_r, R_total)
    Rp = _round_up(R_total, tile)
    if Rp != R_total:
        y_v = jnp.pad(y_v, ((0, Rp - R_total), (0, 0), (0, 0)))

    ss = jnp.stack([scale_l, shift_l]).astype(jnp.float32)            # (2, WC)
    l_idx = jnp.arange(WC)[:, None]
    m_idx = jnp.arange(WCo)[None, :]
    sel_w = (((l_idx // C) == 2 * (m_idx // C)) &
             ((l_idx % C) == (m_idx % C))).astype(jnp.float32)        # (WC, WCo)

    def kernel(y_ref, ss_ref, sw_ref, o_ref):
        v = jnp.maximum(y_ref[...] * ss_ref[0] + ss_ref[1], 0.0)      # (tile, Ho, WC)
        zc = jnp.zeros((tile, Ho, C), jnp.float32)
        wl = jnp.concatenate([zc, v[:, :, :WC - C]], axis=2)          # neighbour w-1
        wr = jnp.concatenate([v[:, :, C:], zc], axis=2)               # neighbour w+1
        wmax = jnp.maximum(jnp.maximum(v, wl), wr)
        zr = jnp.zeros((tile, 1, WC), jnp.float32)
        hu = jnp.concatenate([zr, wmax[:, :Ho - 1, :]], axis=1)       # neighbour h-1
        hd = jnp.concatenate([wmax[:, 1:, :], zr], axis=1)            # neighbour h+1
        hwmax = jnp.maximum(jnp.maximum(wmax, hu), hd)                # (tile, Ho, WC)
        # stride-2 downsample along w: exact one-hot selection on the MXU
        t = jnp.dot(hwmax.reshape(tile * Ho, WC), sw_ref[...],
                    preferred_element_type=jnp.float32)
        t = t.reshape(tile, Ho, WCo)
        for p in range(Ho_o):                                         # static h selection
            o_ref[:, p:p + 1, :] = t[:, 2 * p:2 * p + 1, :]

    out = pl.pallas_call(
        kernel,
        grid=(Rp // tile,),
        in_specs=[pl.BlockSpec((tile, Ho, WC), lambda i: (i, 0, 0)),
                  pl.BlockSpec((2, WC), lambda i: (0, 0)),
                  pl.BlockSpec((WC, WCo), lambda i: (0, 0))],
        out_specs=pl.BlockSpec((tile, Ho_o, WCo), lambda i: (i, 0, 0)),
        out_shape=jax.ShapeDtypeStruct((Rp, Ho_o, WCo), jnp.float32),
        compiler_params=pltpu.CompilerParams(dimension_semantics=("parallel",)),
    )(y_v, ss, sel_w)
    return out[:R_total]


def pallas_resblock_tail_gap_fc(b_raw, z_raw, ss_main, ss_id, wcomb, bfc, *, tile_g=8):
    """Fused residual-block tail:  relu(bn2(conv2) + relu(bn1(conv1))) -> GAP -> fc.

    Both conv outputs come in as lane-dense (Nimg, S*C) views of the RAW matmul
    results (the identity's BN+ReLU is recomputed here, never materialised).  The
    global-average-pool and the resnet Linear are folded into a single (S*C, D) matmul
    whose rows tile fc_w / S, so the full-resolution activation never hits HBM."""
    G, L = b_raw.shape
    D = wcomb.shape[1]
    tile = min(tile_g, G)
    Gp = _round_up(G, tile)
    if Gp != G:
        b_raw = jnp.pad(b_raw, ((0, Gp - G), (0, 0)))
        z_raw = jnp.pad(z_raw, ((0, Gp - G), (0, 0)))

    def kernel(b_ref, z_ref, ssm_ref, ssi_ref, w_ref, bias_ref, o_ref):
        main = b_ref[...] * ssm_ref[0] + ssm_ref[1]                   # bn2(conv2)
        ident = jnp.maximum(z_ref[...] * ssi_ref[0] + ssi_ref[1], 0.0)
        v = jnp.maximum(main + ident, 0.0)                            # (tile, S*C)
        o_ref[...] = jnp.dot(v, w_ref[...],
                             preferred_element_type=jnp.float32) + bias_ref[...]

    out = pl.pallas_call(
        kernel,
        grid=(Gp // tile,),
        in_specs=[pl.BlockSpec((tile, L), lambda i: (i, 0)),
                  pl.BlockSpec((tile, L), lambda i: (i, 0)),
                  pl.BlockSpec((2, L), lambda i: (0, 0)),
                  pl.BlockSpec((2, L), lambda i: (0, 0)),
                  pl.BlockSpec((L, D), lambda i: (0, 0)),
                  pl.BlockSpec((1, D), lambda i: (0, 0))],
        out_specs=pl.BlockSpec((tile, D), lambda i: (i, 0)),
        out_shape=jax.ShapeDtypeStruct((Gp, D), jnp.float32),
        compiler_params=pltpu.CompilerParams(dimension_semantics=("parallel",)),
    )(b_raw, z_raw, ss_main.astype(jnp.float32), ss_id.astype(jnp.float32),
      wcomb.astype(jnp.float32), bfc.astype(jnp.float32))
    return out[:G]


def pallas_bilstm_fused(x_tb, w_cat, b_cat, hidden):
    """Single-kernel bidirectional LSTM with the input projection fused in.

    grid=(2,) over the two directions, marked "parallel" so v7x's two TensorCores take
    one direction each (a cheap serial loop on v5e/v6e).  Per direction the whole
    input sequence, the concatenated [W_ih; W_hh] weight and the (T, B, H) output block
    stay VMEM-resident; the time recurrence is an in-kernel fully unrolled fori_loop
    (no per-timestep grid / DMA overhead).  Each step runs ONE merged
    (B, D+H) @ (D+H, 4H) MXU matmul; sigmoid runs at full 4H lane width but tanh only
    on the g-gate slice.  Gate order matches PyTorch (i, f, g, o)."""
    T, B, D = x_tb.shape
    H = hidden
    G4 = 4 * H
    DH = w_cat.shape[1]

    def kernel(x_ref, w_ref, b_ref, o_ref, h_s, c_s):
        d = pl.program_id(0)
        h_s[...] = jnp.zeros_like(h_s)
        c_s[...] = jnp.zeros_like(c_s)
        w = w_ref[...]                                   # (D+H, 4H), VMEM resident
        bb = b_ref[...]                                  # (1, 4H)

        def step(t, carry):
            tidx = jnp.where(d == 0, t, T - 1 - t)       # fwd: t, bwd: reversed time
            xt = x_ref[tidx]                             # (B, D)
            xh = jnp.concatenate([xt, h_s[...]], axis=1)     # (B, D+H)
            gates = jnp.dot(xh, w, preferred_element_type=jnp.float32) + bb
            sg = jax.nn.sigmoid(gates)
            i_g = sg[:, 0:H]
            f_g = sg[:, H:2 * H]
            o_g = sg[:, 3 * H:4 * H]
            g_g = jnp.tanh(gates[:, 2 * H:3 * H])        # tanh only on the g slice
            c_new = f_g * c_s[...] + i_g * g_g
            h_new = o_g * jnp.tanh(c_new)
            h_s[...] = h_new
            c_s[...] = c_new
            o_ref[tidx] = h_new
            return carry

        jax.lax.fori_loop(0, T, step, 0, unroll=True)

    return pl.pallas_call(
        kernel,
        grid=(2,),
        in_specs=[pl.BlockSpec((T, B, D), lambda d: (0, 0, 0)),
                  pl.BlockSpec((None, DH, G4), lambda d: (d, 0, 0)),
                  pl.BlockSpec((None, 1, G4), lambda d: (d, 0, 0))],
        out_specs=pl.BlockSpec((None, T, B, H), lambda d: (d, 0, 0, 0)),
        out_shape=jax.ShapeDtypeStruct((2, T, B, H), jnp.float32),
        scratch_shapes=[pltpu.VMEM((B, H), jnp.float32),
                        pltpu.VMEM((B, H), jnp.float32)],
        compiler_params=pltpu.CompilerParams(dimension_semantics=("parallel",)),
    )(x_tb.astype(jnp.float32), w_cat.astype(jnp.float32), b_cat.astype(jnp.float32))


def pallas_fc_logsoftmax(h, w, b):
    """Fused final Linear + log-softmax (single tiny block)."""
    M, K = h.shape
    N = w.shape[1]

    def kernel(h_ref, w_ref, b_ref, o_ref):
        logits = jnp.dot(h_ref[...], w_ref[...],
                         preferred_element_type=jnp.float32) + b_ref[...]
        m = jnp.max(logits, axis=-1, keepdims=True)
        e = jnp.exp(logits - m)
        o_ref[...] = logits - m - jnp.log(jnp.sum(e, axis=-1, keepdims=True))

    return pl.pallas_call(
        kernel,
        out_shape=jax.ShapeDtypeStruct((M, N), jnp.float32),
    )(h.astype(jnp.float32), w.astype(jnp.float32),
      b.reshape(1, N).astype(jnp.float32))


# ----------------------------------------------------------------------------
# im2col glue (plain JAX)
# ----------------------------------------------------------------------------
# TODO(synk): im2col still materializes the expanded patch matrix in HBM; at production
# resolutions this should become in-kernel accumulation of shifted matmuls.
# TODO(synk): inter-kernel activations are kept f32; store them bf16 on v6e/v7x to
# halve HBM traffic at production scale.

def im2col_3d(x, ksize, stride, pad):
    # x: (B, T, H, W, C)
    KT, KH, KW = ksize
    st, sh, sw = stride
    pt, ph, pw = pad
    B, T, H, W, C = x.shape
    To = (T + 2 * pt - KT) // st + 1
    Ho = (H + 2 * ph - KH) // sh + 1
    Wo = (W + 2 * pw - KW) // sw + 1
    xp = jnp.pad(x, ((0, 0), (pt, pt), (ph, ph), (pw, pw), (0, 0)))
    cols = []
    for kt in range(KT):
        for kh in range(KH):
            for kw in range(KW):
                cols.append(xp[:, kt:kt + st * To:st,
                               kh:kh + sh * Ho:sh,
                               kw:kw + sw * Wo:sw, :])
    patches = jnp.stack(cols, axis=-2)               # (B,To,Ho,Wo,KT*KH*KW,C)
    return patches.reshape(B * To * Ho * Wo, KT * KH * KW * C), (B, To, Ho, Wo)


def im2col_2d(x, ksize, stride, pad, pad_value=None):
    # x: (N, H, W, C).  pad_value: optional per-channel (C,) border value; used when x
    # is a RAW pre-BN conv output so that relu(bn(border)) == 0 exactly (BN is folded
    # into the consuming matmul's A path).
    KH, KW = ksize
    sh, sw = stride
    ph, pw = pad
    N, H, W, C = x.shape
    Ho = (H + 2 * ph - KH) // sh + 1
    Wo = (W + 2 * pw - KW) // sw + 1
    if pad_value is None:
        xp = jnp.pad(x, ((0, 0), (ph, ph), (pw, pw), (0, 0)))
    else:
        xp = jnp.broadcast_to(pad_value.reshape(1, 1, 1, C),
                              (N, H + 2 * ph, W + 2 * pw, C))
        xp = xp.at[:, ph:ph + H, pw:pw + W, :].set(x)
    cols = []
    for kh in range(KH):
        for kw in range(KW):
            cols.append(xp[:, kh:kh + sh * Ho:sh, kw:kw + sw * Wo:sw, :])
    patches = jnp.stack(cols, axis=-2)               # (N,Ho,Wo,KH*KW,C)
    return patches.reshape(N * Ho * Wo, KH * KW * C), (N, Ho, Wo)


# ----------------------------------------------------------------------------
# Model: parameter init (deterministic) and forward
# ----------------------------------------------------------------------------

FRONT_CH = 8      # 3D-conv frontend channels
RES_CH = 16       # resnet trunk channels
INPUT_DIM = 32    # per-frame feature dim fed to the LSTM
HIDDEN = 32       # LSTM hidden size (bidirectional)
NCLASSES = 10


def xavier_uniform(key, shape, fan_in, fan_out):
    bound = (6.0 / (fan_in + fan_out)) ** 0.5
    return jax.random.uniform(key, shape, jnp.float32, -bound, bound)


def uniform_pm(key, shape, bound):
    return jax.random.uniform(key, shape, jnp.float32, -bound, bound)


def init_params(key):
    ks = jax.random.split(key, 16)
    p = {}
    # ConvFrontend: Conv3d(1, FRONT_CH, (5,7,7), stride=(1,2,2), pad=(2,3,3), bias=False)
    p["fe_w"] = xavier_uniform(ks[0], (5, 7, 7, 1, FRONT_CH),
                               fan_in=1 * 5 * 7 * 7,
                               fan_out=FRONT_CH * 5 * 7 * 7).reshape(-1, FRONT_CH)
    # ResNetBBC (reduced): conv1 3x3 s2 (FRONT_CH->RES_CH) + one basic residual block
    p["rn_c1_w"] = xavier_uniform(ks[1], (3, 3, FRONT_CH, RES_CH),
                                  fan_in=FRONT_CH * 9,
                                  fan_out=RES_CH * 9).reshape(-1, RES_CH)
    p["rb_w1"] = xavier_uniform(ks[2], (3, 3, RES_CH, RES_CH),
                                fan_in=RES_CH * 9, fan_out=RES_CH * 9).reshape(-1, RES_CH)
    p["rb_w2"] = xavier_uniform(ks[3], (3, 3, RES_CH, RES_CH),
                                fan_in=RES_CH * 9, fan_out=RES_CH * 9).reshape(-1, RES_CH)
    # ResNet final Linear (RES_CH -> INPUT_DIM); Linear bias set to 0 by weights_init
    p["rn_fc_w"] = uniform_pm(ks[4], (RES_CH, INPUT_DIM), 1.0 / RES_CH ** 0.5)
    p["rn_fc_b"] = jnp.zeros((INPUT_DIM,), jnp.float32)
    # LSTMBackend: bidirectional single-layer LSTM (INPUT_DIM -> HIDDEN), gates (i,f,g,o)
    lb = 1.0 / HIDDEN ** 0.5
    for d, off in (("f", 5), ("b", 8)):
        p[f"lstm_wih_{d}"] = uniform_pm(ks[off], (INPUT_DIM, 4 * HIDDEN), lb)
        p[f"lstm_whh_{d}"] = uniform_pm(ks[off + 1], (HIDDEN, 4 * HIDDEN), lb)
        # b_ih + b_hh folded into one bias
        p[f"lstm_b_{d}"] = (uniform_pm(ks[off + 2], (4 * HIDDEN,), lb)
                            + uniform_pm(jax.random.fold_in(ks[off + 2], 1),
                                         (4 * HIDDEN,), lb))
    # Final Linear(2*HIDDEN -> NCLASSES); bias set to 0 by weights_init
    p["fc_w"] = uniform_pm(ks[11], (2 * HIDDEN, NCLASSES), 1.0 / (2 * HIDDEN) ** 0.5)
    p["fc_b"] = jnp.zeros((NCLASSES,), jnp.float32)
    return p


def lipread_forward(x, params, landmark=False):
    # x: (B, 1, T, H, W)  (PyTorch NCDHW)
    x = jnp.transpose(x, (0, 2, 3, 4, 1)).astype(jnp.float32)   # (B, T, H, W, 1)

    # ---------------- ConvFrontend ----------------
    # Conv3d(1, FRONT_CH, (5,7,7), s=(1,2,2), p=(2,3,3)) + BN3d + ReLU + MaxPool3d(1,3,3)
    cols, (B, To, Ho, Wo) = im2col_3d(x, (5, 7, 7), (1, 2, 2), (2, 3, 3))
    M0 = cols.shape[0]
    y_raw, y_stats = pallas_matmul(cols, params["fe_w"], collect_stats=True)
    sc0, sh0, _ = bn_scale_shift(y_stats, M0)
    # lane-dense (B*T, Ho, Wo*C) view (Wo*C == 128): fused BN + ReLU + 3x3/s2 max-pool
    y_v = y_raw.reshape(B * To, Ho, Wo * FRONT_CH)
    pooled = pallas_bn_relu_maxpool(y_v, jnp.tile(sc0, Wo), jnp.tile(sh0, Wo),
                                    Ho=Ho, Wo=Wo, C=FRONT_CH)
    Hp, Wp = Ho // 2, Wo // 2
    y = pooled.reshape(B * To, Hp, Wp, FRONT_CH)
    attn = None  # TODO(synk): ConvFrontend landmark/attention branch source not provided; landmark=False path only.

    # ---------------- ResNetBBC (reduced) ----------------
    # TODO(synk): original ResNetBBC is a full ResNet-34; reduced to conv1 + one basic block + GAP + fc.
    # conv1 3x3 / stride 2
    cols, (Nimg, H1, W1) = im2col_2d(y, (3, 3), (2, 2), (1, 1))
    M1 = cols.shape[0]
    z_raw, z_stats = pallas_matmul(cols, params["rn_c1_w"], collect_stats=True)
    sc1, sh1, mu1 = bn_scale_shift(z_stats, M1)

    # basic block conv1: BN+ReLU of conv1 folded into this matmul's A path
    # (borders padded with the per-channel batch mean so relu(bn(pad)) == 0 exactly)
    cols, _ = im2col_2d(z_raw.reshape(Nimg, H1, W1, RES_CH), (3, 3), (1, 1), (1, 1),
                        pad_value=mu1)
    a_raw, a_stats = pallas_matmul(cols, params["rb_w1"],
                                   a_scale=jnp.tile(sc1, 9), a_shift=jnp.tile(sh1, 9),
                                   collect_stats=True)
    sc2, sh2, mu2 = bn_scale_shift(a_stats, M1)

    # basic block conv2, same folding
    cols, _ = im2col_2d(a_raw.reshape(Nimg, H1, W1, RES_CH), (3, 3), (1, 1), (1, 1),
                        pad_value=mu2)
    b_raw, b_stats = pallas_matmul(cols, params["rb_w2"],
                                   a_scale=jnp.tile(sc2, 9), a_shift=jnp.tile(sh2, 9),
                                   collect_stats=True)
    sc3, sh3, _ = bn_scale_shift(b_stats, M1)

    # tail: bn2 + residual(relu(bn1(conv1))) + relu + GAP + fc, fully fused
    S = H1 * W1
    L = S * RES_CH
    wcomb = jnp.tile(params["rn_fc_w"], (S, 1)) / float(S)       # GAP folded into fc
    seq = pallas_resblock_tail_gap_fc(
        b_raw.reshape(Nimg, L), z_raw.reshape(Nimg, L),
        jnp.stack([jnp.tile(sc3, S), jnp.tile(sh3, S)]),
        jnp.stack([jnp.tile(sc1, S), jnp.tile(sh1, S)]),
        wcomb, params["rn_fc_b"].reshape(1, -1))
    seq = seq.reshape(B, To, INPUT_DIM)

    # ---------------- LSTMBackend ----------------
    x_tb = jnp.transpose(seq, (1, 0, 2))                         # (T, B, D)
    w_cat = jnp.stack(
        [jnp.concatenate([params["lstm_wih_f"], params["lstm_whh_f"]], axis=0),
         jnp.concatenate([params["lstm_wih_b"], params["lstm_whh_b"]], axis=0)])
    b_cat = jnp.stack([params["lstm_b_f"].reshape(1, -1),
                       params["lstm_b_b"].reshape(1, -1)])
    h_all = pallas_bilstm_fused(x_tb, w_cat, b_cat, HIDDEN)      # (2, T, B, H)
    h = jnp.concatenate([h_all[0], h_all[1]], axis=-1)           # (T, B, 2H)
    h = jnp.transpose(h, (1, 0, 2)).reshape(B * To, 2 * HIDDEN)
    logp = pallas_fc_logsoftmax(h, params["fc_w"], params["fc_b"])
    return logp.reshape(B, To, NCLASSES)                         # log-probs, softmax dim=2


# ----------------------------------------------------------------------------
# main
# ----------------------------------------------------------------------------

if __name__ == "__main__":
    key = jax.random.PRNGKey(0)
    kx, kp = jax.random.split(key)

    # small shapes: B=2, 1 input channel, T=8 frames, 32x32 lip crops
    x = jax.random.normal(kx, (2, 1, 8, 32, 32), jnp.float32)
    params = init_params(kp)

    fwd = jax.jit(functools.partial(lipread_forward, landmark=False))
    out = jax.block_until_ready(fwd(x, params))

    assert out.shape == (2, 8, NCLASSES), out.shape
    assert bool(jnp.all(jnp.isfinite(out)))
    # each row of log-probs should (approximately) sum to 1 after exp
    row_sums = jnp.exp(out).sum(-1)
    assert bool(jnp.allclose(row_sums, 1.0, atol=1e-4))
    print("KERNEL_OK")
</pallas_src>

<mosaic_0001>
module attributes {stable_mosaic.version = 11 : i64} {
  func.func @kernel(%arg0: i32, %arg1: memref<1024x256xf32, #tpu.memory_space<vmem>>, %arg2: memref<256x8xbf16, #tpu.memory_space<vmem>>, %arg3: memref<1024x8xf32, #tpu.memory_space<vmem>>, %arg4: memref<1x2x8xf32, #tpu.memory_space<vmem>>) attributes {dimension_semantics = [#tpu.dimension_semantics<parallel>], iteration_bounds = array<i64: 4>, scalar_prefetch = 0 : i64, scratch_operands = 0 : i64, tpu.core_type = #tpu.core_type<tc>, window_params = [{transform_indices = @transform_0, window_bounds = array<i64: 1024, 256>}, {pipeline_mode = #tpu.pipeline_mode<synchronous>, transform_indices = @transform_1, window_bounds = array<i64: 256, 8>}, {transform_indices = @transform_2, window_bounds = array<i64: 1024, 8>}, {transform_indices = @transform_3, window_bounds = array<i64: 1, 2, 8>}]} {
    %c0 = arith.constant 0 : index
    %c0_0 = arith.constant 0 : index
    %0 = vector.load %arg1[%c0, %c0_0] : memref<1024x256xf32, #tpu.memory_space<vmem>>, vector<1024x256xf32>
    %1 = arith.truncf %0 : vector<1024x256xf32> to vector<1024x256xbf16>
    %c0_1 = arith.constant 0 : index
    %c0_2 = arith.constant 0 : index
    %2 = vector.load %arg2[%c0_1, %c0_2] : memref<256x8xbf16, #tpu.memory_space<vmem>>, vector<256x8xbf16>
    %cst = arith.constant dense<0.000000e+00> : vector<1024x8xf32>
    %3 = tpu.matmul %1, %2, %cst {dimension_numbers = #tpu.dot_dimension_numbers<[1], [0], [0], [1], [0, 0, 1, 1], [], []>} : vector<1024x256xbf16>, vector<256x8xbf16>, vector<1024x8xf32> -> vector<1024x8xf32>
    %c0_3 = arith.constant 0 : index
    %c0_4 = arith.constant 0 : index
    %4 = vector.load %arg3[%c0_3, %c0_4] : memref<1024x8xf32, #tpu.memory_space<vmem>>, vector<1024x8xf32>
    tpu.vector_store %arg3[%c0_3, %c0_4], %3 {strides = array<i32>} : memref<1024x8xf32, #tpu.memory_space<vmem>>, vector<1024x8xf32>,
    %cst_5 = arith.constant dense<0.000000e+00> : vector<8xf32>
    %5 = vector.multi_reduction <add>, %3, %cst_5 [0] : vector<1024x8xf32> to vector<8xf32>
    %6 = vector.shape_cast %5 : vector<8xf32> to vector<1x8xf32>
    %7 = arith.mulf %3, %3 : vector<1024x8xf32>
    %cst_6 = arith.constant dense<0.000000e+00> : vector<8xf32>
    %8 = vector.multi_reduction <add>, %7, %cst_6 [0] : vector<1024x8xf32> to vector<8xf32>
    %9 = vector.shape_cast %8 : vector<8xf32> to vector<1x8xf32>
    %10 = tpu.concatenate %6, %9 in 0 : vector<1x8xf32>, vector<1x8xf32> -> vector<2x8xf32>
    %c0_7 = arith.constant 0 : index
    %c0_8 = arith.constant 0 : index
    %c0_9 = arith.constant 0 : index
    %11 = vector.load %arg4[%c0_7, %c0_8, %c0_9] : memref<1x2x8xf32, #tpu.memory_space<vmem>>, vector<1x2x8xf32>
    %12 = vector.shape_cast %11 : vector<1x2x8xf32> to vector<2x8xf32>
    %13 = vector.shape_cast %10 : vector<2x8xf32> to vector<1x2x8xf32>
    tpu.vector_store %arg4[%c0_7, %c0_8, %c0_9], %13 {strides = array<i32>} : memref<1x2x8xf32, #tpu.memory_space<vmem>>, vector<1x2x8xf32>,
    return
  }
  func.func @transform_0(%arg0: i32) -> (i32, i32) {
    %c0_i32 = arith.constant 0 : i32
    %c0_i32_0 = arith.constant 0 : i32
    return %arg0, %c0_i32 : i32, i32
  }
  func.func @transform_1(%arg0: i32) -> (i32, i32) {
    %c0_i32 = arith.constant 0 : i32
    %c0_i32_0 = arith.constant 0 : i32
    %c0_i32_1 = arith.constant 0 : i32
    return %c0_i32, %c0_i32_0 : i32, i32
  }
  func.func @transform_2(%arg0: i32) -> (i32, i32) {
    %c0_i32 = arith.constant 0 : i32
    %c0_i32_0 = arith.constant 0 : i32
    return %arg0, %c0_i32 : i32, i32
  }
  func.func @transform_3(%arg0: i32) -> (i32, i32, i32) {
    %c0_i32 = arith.constant 0 : i32
    %c0_i32_0 = arith.constant 0 : i32
    %c0_i32_1 = arith.constant 0 : i32
    return %arg0, %c0_i32, %c0_i32_0 : i32, i32, i32
  }
}

module attributes {stable_mosaic.version = 11 : i64} {
  func.func @kernel(%arg0: i32, %arg1: memref<8x16x128xf32, #tpu.memory_space<vmem>>, %arg2: memref<2x128xf32, #tpu.memory_space<vmem>>, %arg3: memref<128x64xf32, #tpu.memory_space<vmem>>, %arg4: memref<8x8x64xf32, #tpu.memory_space<vmem>>) attributes {dimension_semantics = [#tpu.dimension_semantics<parallel>], iteration_bounds = array<i64: 2>, scalar_prefetch = 0 : i64, scratch_operands = 0 : i64, tpu.core_type = #tpu.core_type<tc>, window_params = [{transform_indices = @transform_0, window_bounds = array<i64: 8, 16, 128>}, {pipeline_mode = #tpu.pipeline_mode<synchronous>, transform_indices = @transform_1, window_bounds = array<i64: 2, 128>}, {pipeline_mode = #tpu.pipeline_mode<synchronous>, transform_indices = @transform_2, window_bounds = array<i64: 128, 64>}, {transform_indices = @transform_3, window_bounds = array<i64: 8, 8, 64>}]} {
    %c0 = arith.constant 0 : index
    %c0_0 = arith.constant 0 : index
    %c0_1 = arith.constant 0 : index
    %0 = vector.load %arg1[%c0, %c0_0, %c0_1] : memref<8x16x128xf32, #tpu.memory_space<vmem>>, vector<8x16x128xf32>
    %c0_2 = arith.constant 0 : index
    %c0_3 = arith.constant 0 : index
    %1 = vector.load %arg2[%c0_2, %c0_3] : memref<2x128xf32, #tpu.memory_space<vmem>>, vector<1x128xf32>
    %2 = vector.shape_cast %1 : vector<1x128xf32> to vector<128xf32>
    %3 = vector.shape_cast %2 : vector<128xf32> to vector<1x1x128xf32>
    %4 = vector.broadcast %3 : vector<1x1x128xf32> to vector<8x16x128xf32>
    %5 = arith.mulf %0, %4 : vector<8x16x128xf32>
    %c1 = arith.constant 1 : index
    %c0_4 = arith.constant 0 : index
    %6 = vector.load %arg2[%c1, %c0_4] : memref<2x128xf32, #tpu.memory_space<vmem>>, vector<1x128xf32>
    %7 = vector.shape_cast %6 : vector<1x128xf32> to vector<128xf32>
    %8 = vector.shape_cast %7 : vector<128xf32> to vector<1x1x128xf32>
    %9 = vector.broadcast %8 : vector<1x1x128xf32> to vector<8x16x128xf32>
    %10 = arith.addf %5, %9 : vector<8x16x128xf32>
    %cst = arith.constant 0.000000e+00 : f32
    %11 = vector.broadcast %cst : f32 to vector<8x16x128xf32>
    %12 = arith.maximumf %10, %11 : vector<8x16x128xf32>
    %cst_5 = arith.constant 0.000000e+00 : f32
    %13 = vector.broadcast %cst_5 : f32 to vector<8x16x8xf32>
    %14 = vector.extract_strided_slice %12 {offsets = [0, 0, 0], sizes = [8, 16, 120], strides = [1, 1, 1]} : vector<8x16x128xf32> to vector<8x16x120xf32>
    %15 = tpu.concatenate %13, %14 in 2 : vector<8x16x8xf32>, vector<8x16x120xf32> -> vector<8x16x128xf32>
    %16 = vector.extract_strided_slice %12 {offsets = [0, 0, 8], sizes = [8, 16, 120], strides = [1, 1, 1]} : vector<8x16x128xf32> to vector<8x16x120xf32>
    %17 = tpu.concatenate %16, %13 in 2 : vector<8x16x120xf32>, vector<8x16x8xf32> -> vector<8x16x128xf32>
    %18 = arith.maximumf %12, %15 : vector<8x16x128xf32>
    %19 = arith.maximumf %18, %17 : vector<8x16x128xf32>
    %cst_6 = arith.constant 0.000000e+00 : f32
    %20 = vector.broadcast %cst_6 : f32 to vector<8x1x128xf32>
    %21 = vector.extract_strided_slice %19 {offsets = [0, 0, 0], sizes = [8, 15, 128], strides = [1, 1, 1]} : vector<8x16x128xf32> to vector<8x15x128xf32>
    %22 = tpu.concatenate %20, %21 in 1 : vector<8x1x128xf32>, vector<8x15x128xf32> -> vector<8x16x128xf32>
    %23 = vector.extract_strided_slice %19 {offsets = [0, 1, 0], sizes = [8, 15, 128], strides = [1, 1, 1]} : vector<8x16x128xf32> to vector<8x15x128xf32>
    %24 = tpu.concatenate %23, %20 in 1 : vector<8x15x128xf32>, vector<8x1x128xf32> -> vector<8x16x128xf32>
    %25 = arith.maximumf %19, %22 : vector<8x16x128xf32>
    %26 = arith.maximumf %25, %24 : vector<8x16x128xf32>
    %27 = vector.shape_cast %26 : vector<8x16x128xf32> to vector<128x128xf32>
    %c0_7 = arith.constant 0 : index
    %c0_8 = arith.constant 0 : index
    %28 = vector.load %arg3[%c0_7, %c0_8] : memref<128x64xf32, #tpu.memory_space<vmem>>, vector<128x64xf32>
    %cst_9 = arith.constant dense<0.000000e+00> : vector<128x64xf32>
    %29 = tpu.matmul %27, %28, %cst_9 {dimension_numbers = #tpu.dot_dimension_numbers<[1], [0], [0], [1], [0, 0, 1, 1], [], []>} : vector<128x128xf32>, vector<128x64xf32>, vector<128x64xf32> -> vector<128x64xf32>
    %30 = vector.shape_cast %29 : vector<128x64xf32> to vector<8x16x64xf32>
    %31 = vector.extract_strided_slice %30 {offsets = [0, 0, 0], sizes = [8, 1, 64], strides = [1, 1, 1]} : vector<8x16x64xf32> to vector<8x1x64xf32>
    %c0_10 = arith.constant 0 : index
    %c0_11 = arith.constant 0 : index
    %c0_12 = arith.constant 0 : index
    %32 = vector.load %arg4[%c0_10, %c0_11, %c0_12] : memref<8x8x64xf32, #tpu.memory_space<vmem>>, vector<8x1x64xf32>
    tpu.vector_store %arg4[%c0_10, %c0_11, %c0_12], %31 {strides = array<i32>} : memref<8x8x64xf32, #tpu.memory_space<vmem>>, vector<8x1x64xf32>,
    %33 = vector.extract_strided_slice %30 {offsets = [0, 2, 0], sizes = [8, 1, 64], strides = [1, 1, 1]} : vector<8x16x64xf32> to vector<8x1x64xf32>
    %c0_13 = arith.constant 0 : index
    %c1_14 = arith.constant 1 : index
    %c0_15 = arith.constant 0 : index
    %34 = vector.load %arg4[%c0_13, %c1_14, %c0_15] : memref<8x8x64xf32, #tpu.memory_space<vmem>>, vector<8x1x64xf32>
    tpu.vector_store %arg4[%c0_13, %c1_14, %c0_15], %33 {strides = array<i32>} : memref<8x8x64xf32, #tpu.memory_space<vmem>>, vector<8x1x64xf32>,
    %35 = vector.extract_strided_slice %30 {offsets = [0, 4, 0], sizes = [8, 1, 64], strides = [1, 1, 1]} : vector<8x16x64xf32> to vector<8x1x64xf32>
    %c0_16 = arith.constant 0 : index
    %c2 = arith.constant 2 : index
    %c0_17 = arith.constant 0 : index
    %36 = vector.load %arg4[%c0_16, %c2, %c0_17] : memref<8x8x64xf32, #tpu.memory_space<vmem>>, vector<8x1x64xf32>
    tpu.vector_store %arg4[%c0_16, %c2, %c0_17], %35 {strides = array<i32>} : memref<8x8x64xf32, #tpu.memory_space<vmem>>, vector<8x1x64xf32>,
    %37 = vector.extract_strided_slice %30 {offsets = [0, 6, 0], sizes = [8, 1, 64], strides = [1, 1, 1]} : vector<8x16x64xf32> to vector<8x1x64xf32>
    %c0_18 = arith.constant 0 : index
    %c3 = arith.constant 3 : index
    %c0_19 = arith.constant 0 : index
    %38 = vector.load %arg4[%c0_18, %c3, %c0_19] : memref<8x8x64xf32, #tpu.memory_space<vmem>>, vector<8x1x64xf32>
    tpu.vector_store %arg4[%c0_18, %c3, %c0_19], %37 {strides = array<i32>} : memref<8x8x64xf32, #tpu.memory_space<vmem>>, vector<8x1x64xf32>,
    %39 = vector.extract_strided_slice %30 {offsets = [0, 8, 0], sizes = [8, 1, 64], strides = [1, 1, 1]} : vector<8x16x64xf32> to vector<8x1x64xf32>
    %c0_20 = arith.constant 0 : index
    %c4 = arith.constant 4 : index
    %c0_21 = arith.constant 0 : index
    %40 = vector.load %arg4[%c0_20, %c4, %c0_21] : memref<8x8x64xf32, #tpu.memory_space<vmem>>, vector<8x1x64xf32>
    tpu.vector_store %arg4[%c0_20, %c4, %c0_21], %39 {strides = array<i32>} : memref<8x8x64xf32, #tpu.memory_space<vmem>>, vector<8x1x64xf32>,
    %41 = vector.extract_strided_slice %30 {offsets = [0, 10, 0], sizes = [8, 1, 64], strides = [1, 1, 1]} : vector<8x16x64xf32> to vector<8x1x64xf32>
    %c0_22 = arith.constant 0 : index
    %c5 = arith.constant 5 : index
    %c0_23 = arith.constant 0 : index
    %42 = vector.load %arg4[%c0_22, %c5, %c0_23] : memref<8x8x64xf32, #tpu.memory_space<vmem>>, vector<8x1x64xf32>
    tpu.vector_store %arg4[%c0_22, %c5, %c0_23], %41 {strides = array<i32>} : memref<8x8x64xf32, #tpu.memory_space<vmem>>, vector<8x1x64xf32>,
    %43 = vector.extract_strided_slice %30 {offsets = [0, 12, 0], sizes = [8, 1, 64], strides = [1, 1, 1]} : vector<8x16x64xf32> to vector<8x1x64xf32>
    %c0_24 = arith.constant 0 : index
    %c6 = arith.constant 6 : index
    %c0_25 = arith.constant 0 : index
    %44 = vector.load %arg4[%c0_24, %c6, %c0_25] : memref<8x8x64xf32, #tpu.memory_space<vmem>>, vector<8x1x64xf32>
    tpu.vector_store %arg4[%c0_24, %c6, %c0_25], %43 {strides = array<i32>} : memref<8x8x64xf32, #tpu.memory_space<vmem>>, vector<8x1x64xf32>,
    %45 = vector.extract_strided_slice %30 {offsets = [0, 14, 0], sizes = [8, 1, 64], strides = [1, 1, 1]} : vector<8x16x64xf32> to vector<8x1x64xf32>
    %c0_26 = arith.constant 0 : index
    %c7 = arith.constant 7 : index
    %c0_27 = arith.constant 0 : index
    %46 = vector.load %arg4[%c0_26, %c7, %c0_27] : memref<8x8x64xf32, #tpu.memory_space<vmem>>, vector<8x1x64xf32>
    tpu.vector_store %arg4[%c0_26, %c7, %c0_27], %45 {strides = array<i32>} : memref<8x8x64xf32, #tpu.memory_space<vmem>>, vector<8x1x64xf32>,
    return
  }
  func.func @transform_0(%arg0: i32) -> (i32, i32, i32) {
    %c0_i32 = arith.constant 0 : i32
    %c0_i32_0 = arith.constant 0 : i32
    %c0_i32_1 = arith.constant 0 : i32
    return %arg0, %c0_i32, %c0_i32_0 : i32, i32, i32
  }
  func.func @transform_1(%arg0: i32) -> (i32, i32) {
    %c0_i32 = arith.constant 0 : i32
    %c0_i32_0 = arith.constant 0 : i32
    %c0_i32_1 = arith.constant 0 : i32
    return %c0_i32, %c0_i32_0 : i32, i32
  }
  func.func @transform_2(%arg0: i32) -> (i32, i32) {
    %c0_i32 = arith.constant 0 : i32
    %c0_i32_0 = arith.constant 0 : i32
    %c0_i32_1 = arith.constant 0 : i32
    return %c0_i32, %c0_i32_0 : i32, i32
  }
  func.func @transform_3(%arg0: i32) -> (i32, i32, i32) {
    %c0_i32 = arith.constant 0 : i32
    %c0_i32_0 = arith.constant 0 : i32
    %c0_i32_1 = arith.constant 0 : i32
    return %arg0, %c0_i32, %c0_i32_0 : i32, i32, i32
  }
}

module attributes {stable_mosaic.version = 11 : i64} {
  func.func @kernel(%arg0: i32, %arg1: memref<128x128xf32, #tpu.memory_space<vmem>>, %arg2: memref<128x16xbf16, #tpu.memory_space<vmem>>, %arg3: memref<128x16xf32, #tpu.memory_space<vmem>>, %arg4: memref<1x2x16xf32, #tpu.memory_space<vmem>>) attributes {dimension_semantics = [#tpu.dimension_semantics<parallel>], iteration_bounds = array<i64: 2>, scalar_prefetch = 0 : i64, scratch_operands = 0 : i64, tpu.core_type = #tpu.core_type<tc>, window_params = [{transform_indices = @transform_0, window_bounds = array<i64: 128, 128>}, {pipeline_mode = #tpu.pipeline_mode<synchronous>, transform_indices = @transform_1, window_bounds = array<i64: 128, 16>}, {transform_indices = @transform_2, window_bounds = array<i64: 128, 16>}, {transform_indices = @transform_3, window_bounds = array<i64: 1, 2, 16>}]} {
    %c0 = arith.constant 0 : index
    %c0_0 = arith.constant 0 : index
    %0 = vector.load %arg1[%c0, %c0_0] : memref<128x128xf32, #tpu.memory_space<vmem>>, vector<128x128xf32>
    %1 = arith.truncf %0 : vector<128x128xf32> to vector<128x128xbf16>
    %c0_1 = arith.constant 0 : index
    %c0_2 = arith.constant 0 : index
    %2 = vector.load %arg2[%c0_1, %c0_2] : memref<128x16xbf16, #tpu.memory_space<vmem>>, vector<128x16xbf16>
    %cst = arith.constant dense<0.000000e+00> : vector<128x16xf32>
    %3 = tpu.matmul %1, %2, %cst {dimension_numbers = #tpu.dot_dimension_numbers<[1], [0], [0], [1], [0, 0, 1, 1], [], []>} : vector<128x128xbf16>, vector<128x16xbf16>, vector<128x16xf32> -> vector<128x16xf32>
    %c0_3 = arith.constant 0 : index
    %c0_4 = arith.constant 0 : index
    %4 = vector.load %arg3[%c0_3, %c0_4] : memref<128x16xf32, #tpu.memory_space<vmem>>, vector<128x16xf32>
    tpu.vector_store %arg3[%c0_3, %c0_4], %3 {strides = array<i32>} : memref<128x16xf32, #tpu.memory_space<vmem>>, vector<128x16xf32>,
    %cst_5 = arith.constant dense<0.000000e+00> : vector<16xf32>
    %5 = vector.multi_reduction <add>, %3, %cst_5 [0] : vector<128x16xf32> to vector<16xf32>
    %6 = vector.shape_cast %5 : vector<16xf32> to vector<1x16xf32>
    %7 = arith.mulf %3, %3 : vector<128x16xf32>
    %cst_6 = arith.constant dense<0.000000e+00> : vector<16xf32>
    %8 = vector.multi_reduction <add>, %7, %cst_6 [0] : vector<128x16xf32> to vector<16xf32>
    %9 = vector.shape_cast %8 : vector<16xf32> to vector<1x16xf32>
    %10 = tpu.concatenate %6, %9 in 0 : vector<1x16xf32>, vector<1x16xf32> -> vector<2x16xf32>
    %c0_7 = arith.constant 0 : index
    %c0_8 = arith.constant 0 : index
    %c0_9 = arith.constant 0 : index
    %11 = vector.load %arg4[%c0_7, %c0_8, %c0_9] : memref<1x2x16xf32, #tpu.memory_space<vmem>>, vector<1x2x16xf32>
    %12 = vector.shape_cast %11 : vector<1x2x16xf32> to vector<2x16xf32>
    %13 = vector.shape_cast %10 : vector<2x16xf32> to vector<1x2x16xf32>
    tpu.vector_store %arg4[%c0_7, %c0_8, %c0_9], %13 {strides = array<i32>} : memref<1x2x16xf32, #tpu.memory_space<vmem>>, vector<1x2x16xf32>,
    return
  }
  func.func @transform_0(%arg0: i32) -> (i32, i32) {
    %c0_i32 = arith.constant 0 : i32
    %c0_i32_0 = arith.constant 0 : i32
    return %arg0, %c0_i32 : i32, i32
  }
  func.func @transform_1(%arg0: i32) -> (i32, i32) {
    %c0_i32 = arith.constant 0 : i32
    %c0_i32_0 = arith.constant 0 : i32
    %c0_i32_1 = arith.constant 0 : i32
    return %c0_i32, %c0_i32_0 : i32, i32
  }
  func.func @transform_2(%arg0: i32) -> (i32, i32) {
    %c0_i32 = arith.constant 0 : i32
    %c0_i32_0 = arith.constant 0 : i32
    return %arg0, %c0_i32 : i32, i32
  }
  func.func @transform_3(%arg0: i32) -> (i32, i32, i32) {
    %c0_i32 = arith.constant 0 : i32
    %c0_i32_0 = arith.constant 0 : i32
    %c0_i32_1 = arith.constant 0 : i32
    return %arg0, %c0_i32, %c0_i32_0 : i32, i32, i32
  }
}

module attributes {stable_mosaic.version = 11 : i64} {
  func.func @kernel(%arg0: i32, %arg1: memref<128x256xf32, #tpu.memory_space<vmem>>, %arg2: memref<256x16xbf16, #tpu.memory_space<vmem>>, %arg3: memref<1x256xf32, #tpu.memory_space<vmem>>, %arg4: memref<1x256xf32, #tpu.memory_space<vmem>>, %arg5: memref<128x16xf32, #tpu.memory_space<vmem>>, %arg6: memref<1x2x16xf32, #tpu.memory_space<vmem>>) attributes {dimension_semantics = [#tpu.dimension_semantics<parallel>], iteration_bounds = array<i64: 2>, scalar_prefetch = 0 : i64, scratch_operands = 0 : i64, tpu.core_type = #tpu.core_type<tc>, window_params = [{transform_indices = @transform_0, window_bounds = array<i64: 128, 256>}, {pipeline_mode = #tpu.pipeline_mode<synchronous>, transform_indices = @transform_1, window_bounds = array<i64: 256, 16>}, {pipeline_mode = #tpu.pipeline_mode<synchronous>, transform_indices = @transform_2, window_bounds = array<i64: 1, 256>}, {pipeline_mode = #tpu.pipeline_mode<synchronous>, transform_indices = @transform_3, window_bounds = array<i64: 1, 256>}, {transform_indices = @transform_4, window_bounds = array<i64: 128, 16>}, {transform_indices = @transform_5, window_bounds = array<i64: 1, 2, 16>}]} {
    %c0 = arith.constant 0 : index
    %c0_0 = arith.constant 0 : index
    %0 = vector.load %arg1[%c0, %c0_0] : memref<128x256xf32, #tpu.memory_space<vmem>>, vector<128x256xf32>
    %c0_1 = arith.constant 0 : index
    %c0_2 = arith.constant 0 : index
    %1 = vector.load %arg3[%c0_1, %c0_2] : memref<1x256xf32, #tpu.memory_space<vmem>>, vector<1x256xf32>
    %2 = vector.broadcast %1 : vector<1x256xf32> to vector<128x256xf32>
    %3 = arith.mulf %0, %2 : vector<128x256xf32>
    %c0_3 = arith.constant 0 : index
    %c0_4 = arith.constant 0 : index
    %4 = vector.load %arg4[%c0_3, %c0_4] : memref<1x256xf32, #tpu.memory_space<vmem>>, vector<1x256xf32>
    %5 = vector.broadcast %4 : vector<1x256xf32> to vector<128x256xf32>
    %6 = arith.addf %3, %5 : vector<128x256xf32>
    %cst = arith.constant 0.000000e+00 : f32
    %7 = vector.broadcast %cst : f32 to vector<128x256xf32>
    %8 = arith.maximumf %6, %7 : vector<128x256xf32>
    %9 = arith.truncf %8 : vector<128x256xf32> to vector<128x256xbf16>
    %c0_5 = arith.constant 0 : index
    %c0_6 = arith.constant 0 : index
    %10 = vector.load %arg2[%c0_5, %c0_6] : memref<256x16xbf16, #tpu.memory_space<vmem>>, vector<256x16xbf16>
    %cst_7 = arith.constant dense<0.000000e+00> : vector<128x16xf32>
    %11 = tpu.matmul %9, %10, %cst_7 {dimension_numbers = #tpu.dot_dimension_numbers<[1], [0], [0], [1], [0, 0, 1, 1], [], []>} : vector<128x256xbf16>, vector<256x16xbf16>, vector<128x16xf32> -> vector<128x16xf32>
    %c0_8 = arith.constant 0 : index
    %c0_9 = arith.constant 0 : index
    %12 = vector.load %arg5[%c0_8, %c0_9] : memref<128x16xf32, #tpu.memory_space<vmem>>, vector<128x16xf32>
    tpu.vector_store %arg5[%c0_8, %c0_9], %11 {strides = array<i32>} : memref<128x16xf32, #tpu.memory_space<vmem>>, vector<128x16xf32>,
    %cst_10 = arith.constant dense<0.000000e+00> : vector<16xf32>
    %13 = vector.multi_reduction <add>, %11, %cst_10 [0] : vector<128x16xf32> to vector<16xf32>
    %14 = vector.shape_cast %13 : vector<16xf32> to vector<1x16xf32>
    %15 = arith.mulf %11, %11 : vector<128x16xf32>
    %cst_11 = arith.constant dense<0.000000e+00> : vector<16xf32>
    %16 = vector.multi_reduction <add>, %15, %cst_11 [0] : vector<128x16xf32> to vector<16xf32>
    %17 = vector.shape_cast %16 : vector<16xf32> to vector<1x16xf32>
    %18 = tpu.concatenate %14, %17 in 0 : vector<1x16xf32>, vector<1x16xf32> -> vector<2x16xf32>
    %c0_12 = arith.constant 0 : index
    %c0_13 = arith.constant 0 : index
    %c0_14 = arith.constant 0 : index
    %19 = vector.load %arg6[%c0_12, %c0_13, %c0_14] : memref<1x2x16xf32, #tpu.memory_space<vmem>>, vector<1x2x16xf32>
    %20 = vector.shape_cast %19 : vector<1x2x16xf32> to vector<2x16xf32>
    %21 = vector.shape_cast %18 : vector<2x16xf32> to vector<1x2x16xf32>
    tpu.vector_store %arg6[%c0_12, %c0_13, %c0_14], %21 {strides = array<i32>} : memref<1x2x16xf32, #tpu.memory_space<vmem>>, vector<1x2x16xf32>,
    return
  }
  func.func @transform_0(%arg0: i32) -> (i32, i32) {
    %c0_i32 = arith.constant 0 : i32
    %c0_i32_0 = arith.constant 0 : i32
    return %arg0, %c0_i32 : i32, i32
  }
  func.func @transform_1(%arg0: i32) -> (i32, i32) {
    %c0_i32 = arith.constant 0 : i32
    %c0_i32_0 = arith.constant 0 : i32
    %c0_i32_1 = arith.constant 0 : i32
    return %c0_i32, %c0_i32_0 : i32, i32
  }
  func.func @transform_2(%arg0: i32) -> (i32, i32) {
    %c0_i32 = arith.constant 0 : i32
    %c0_i32_0 = arith.constant 0 : i32
    %c0_i32_1 = arith.constant 0 : i32
    return %c0_i32, %c0_i32_0 : i32, i32
  }
  func.func @transform_3(%arg0: i32) -> (i32, i32) {
    %c0_i32 = arith.constant 0 : i32
    %c0_i32_0 = arith.constant 0 : i32
    %c0_i32_1 = arith.constant 0 : i32
    return %c0_i32, %c0_i32_0 : i32, i32
  }
  func.func @transform_4(%arg0: i32) -> (i32, i32) {
    %c0_i32 = arith.constant 0 : i32
    %c0_i32_0 = arith.constant 0 : i32
    return %arg0, %c0_i32 : i32, i32
  }
  func.func @transform_5(%arg0: i32) -> (i32, i32, i32) {
    %c0_i32 = arith.constant 0 : i32
    %c0_i32_0 = arith.constant 0 : i32
    %c0_i32_1 = arith.constant 0 : i32
    return %arg0, %c0_i32, %c0_i32_0 : i32, i32, i32
  }
}

module attributes {stable_mosaic.version = 11 : i64} {
  func.func @kernel(%arg0: i32, %arg1: memref<8x256xf32, #tpu.memory_space<vmem>>, %arg2: memref<8x256xf32, #tpu.memory_space<vmem>>, %arg3: memref<2x256xf32, #tpu.memory_space<vmem>>, %arg4: memref<2x256xf32, #tpu.memory_space<vmem>>, %arg5: memref<256x32xf32, #tpu.memory_space<vmem>>, %arg6: memref<1x32xf32, #tpu.memory_space<vmem>>, %arg7: memref<8x32xf32, #tpu.memory_space<vmem>>) attributes {dimension_semantics = [#tpu.dimension_semantics<parallel>], iteration_bounds = array<i64: 2>, scalar_prefetch = 0 : i64, scratch_operands = 0 : i64, tpu.core_type = #tpu.core_type<tc>, window_params = [{transform_indices = @transform_0, window_bounds = array<i64: 8, 256>}, {transform_indices = @transform_1, window_bounds = array<i64: 8, 256>}, {pipeline_mode = #tpu.pipeline_mode<synchronous>, transform_indices = @transform_2, window_bounds = array<i64: 2, 256>}, {pipeline_mode = #tpu.pipeline_mode<synchronous>, transform_indices = @transform_3, window_bounds = array<i64: 2, 256>}, {pipeline_mode = #tpu.pipeline_mode<synchronous>, transform_indices = @transform_4, window_bounds = array<i64: 256, 32>}, {pipeline_mode = #tpu.pipeline_mode<synchronous>, transform_indices = @transform_5, window_bounds = array<i64: 1, 32>}, {transform_indices = @transform_6, window_bounds = array<i64: 8, 32>}]} {
    %c0 = arith.constant 0 : index
    %c0_0 = arith.constant 0 : index
    %0 = vector.load %arg1[%c0, %c0_0] : memref<8x256xf32, #tpu.memory_space<vmem>>, vector<8x256xf32>
    %c0_1 = arith.constant 0 : index
    %c0_2 = arith.constant 0 : index
    %1 = vector.load %arg3[%c0_1, %c0_2] : memref<2x256xf32, #tpu.memory_space<vmem>>, vector<1x256xf32>
    %2 = vector.shape_cast %1 : vector<1x256xf32> to vector<256xf32>
    %3 = vector.shape_cast %2 : vector<256xf32> to vector<1x256xf32>
    %4 = vector.broadcast %3 : vector<1x256xf32> to vector<8x256xf32>
    %5 = arith.mulf %0, %4 : vector<8x256xf32>
    %c1 = arith.constant 1 : index
    %c0_3 = arith.constant 0 : index
    %6 = vector.load %arg3[%c1, %c0_3] : memref<2x256xf32, #tpu.memory_space<vmem>>, vector<1x256xf32>
    %7 = vector.shape_cast %6 : vector<1x256xf32> to vector<256xf32>
    %8 = vector.shape_cast %7 : vector<256xf32> to vector<1x256xf32>
    %9 = vector.broadcast %8 : vector<1x256xf32> to vector<8x256xf32>
    %10 = arith.addf %5, %9 : vector<8x256xf32>
    %c0_4 = arith.constant 0 : index
    %c0_5 = arith.constant 0 : index
    %11 = vector.load %arg2[%c0_4, %c0_5] : memref<8x256xf32, #tpu.memory_space<vmem>>, vector<8x256xf32>
    %c0_6 = arith.constant 0 : index
    %c0_7 = arith.constant 0 : index
    %12 = vector.load %arg4[%c0_6, %c0_7] : memref<2x256xf32, #tpu.memory_space<vmem>>, vector<1x256xf32>
    %13 = vector.shape_cast %12 : vector<1x256xf32> to vector<256xf32>
    %14 = vector.shape_cast %13 : vector<256xf32> to vector<1x256xf32>
    %15 = vector.broadcast %14 : vector<1x256xf32> to vector<8x256xf32>
    %16 = arith.mulf %11, %15 : vector<8x256xf32>
    %c1_8 = arith.constant 1 : index
    %c0_9 = arith.constant 0 : index
    %17 = vector.load %arg4[%c1_8, %c0_9] : memref<2x256xf32, #tpu.memory_space<vmem>>, vector<1x256xf32>
    %18 = vector.shape_cast %17 : vector<1x256xf32> to vector<256xf32>
    %19 = vector.shape_cast %18 : vector<256xf32> to vector<1x256xf32>
    %20 = vector.broadcast %19 : vector<1x256xf32> to vector<8x256xf32>
    %21 = arith.addf %16, %20 : vector<8x256xf32>
    %cst = arith.constant 0.000000e+00 : f32
    %22 = vector.broadcast %cst : f32 to vector<8x256xf32>
    %23 = arith.maximumf %21, %22 : vector<8x256xf32>
    %24 = arith.addf %10, %23 : vector<8x256xf32>
    %cst_10 = arith.constant 0.000000e+00 : f32
    %25 = vector.broadcast %cst_10 : f32 to vector<8x256xf32>
    %26 = arith.maximumf %24, %25 : vector<8x256xf32>
    %c0_11 = arith.constant 0 : index
    %c0_12 = arith.constant 0 : index
    %27 = vector.load %arg5[%c0_11, %c0_12] : memref<256x32xf32, #tpu.memory_space<vmem>>, vector<256x32xf32>
    %cst_13 = arith.constant dense<0.000000e+00> : vector<8x32xf32>
    %28 = tpu.matmul %26, %27, %cst_13 {dimension_numbers = #tpu.dot_dimension_numbers<[1], [0], [0], [1], [0, 0, 1, 1], [], []>} : vector<8x256xf32>, vector<256x32xf32>, vector<8x32xf32> -> vector<8x32xf32>
    %c0_14 = arith.constant 0 : index
    %c0_15 = arith.constant 0 : index
    %29 = vector.load %arg6[%c0_14, %c0_15] : memref<1x32xf32, #tpu.memory_space<vmem>>, vector<1x32xf32>
    %30 = vector.broadcast %29 : vector<1x32xf32> to vector<8x32xf32>
    %31 = arith.addf %28, %30 : vector<8x32xf32>
    %c0_16 = arith.constant 0 : index
    %c0_17 = arith.constant 0 : index
    %32 = vector.load %arg7[%c0_16, %c0_17] : memref<8x32xf32, #tpu.memory_space<vmem>>, vector<8x32xf32>
    tpu.vector_store %arg7[%c0_16, %c0_17], %31 {strides = array<i32>} : memref<8x32xf32, #tpu.memory_space<vmem>>, vector<8x32xf32>,
    return
  }
  func.func @transform_0(%arg0: i32) -> (i32, i32) {
    %c0_i32 = arith.constant 0 : i32
    %c0_i32_0 = arith.constant 0 : i32
    return %arg0, %c0_i32 : i32, i32
  }
  func.func @transform_1(%arg0: i32) -> (i32, i32) {
    %c0_i32 = arith.constant 0 : i32
    %c0_i32_0 = arith.constant 0 : i32
    return %arg0, %c0_i32 : i32, i32
  }
  func.func @transform_2(%arg0: i32) -> (i32, i32) {
    %c0_i32 = arith.constant 0 : i32
    %c0_i32_0 = arith.constant 0 : i32
    %c0_i32_1 = arith.constant 0 : i32
    return %c0_i32, %c0_i32_0 : i32, i32
  }
  func.func @transform_3(%arg0: i32) -> (i32, i32) {
    %c0_i32 = arith.constant 0 : i32
    %c0_i32_0 = arith.constant 0 : i32
    %c0_i32_1 = arith.constant 0 : i32
    return %c0_i32, %c0_i32_0 : i32, i32
  }
  func.func @transform_4(%arg0: i32) -> (i32, i32) {
    %c0_i32 = arith.constant 0 : i32
    %c0_i32_0 = arith.constant 0 : i32
    %c0_i32_1 = arith.constant 0 : i32
    return %c0_i32, %c0_i32_0 : i32, i32
  }
  func.func @transform_5(%arg0: i32) -> (i32, i32) {
    %c0_i32 = arith.constant 0 : i32
    %c0_i32_0 = arith.constant 0 : i32
    %c0_i32_1 = arith.constant 0 : i32
    return %c0_i32, %c0_i32_0 : i32, i32
  }
  func.func @transform_6(%arg0: i32) -> (i32, i32) {
    %c0_i32 = arith.constant 0 : i32
    %c0_i32_0 = arith.constant 0 : i32
    return %arg0, %c0_i32 : i32, i32
  }
}

module attributes {stable_mosaic.version = 11 : i64} {
  func.func @kernel(%arg0: i32, %arg1: memref<8x2x32xf32, #tpu.memory_space<vmem>>, %arg2: memref<1x64x128xf32, #tpu.memory_space<vmem>>, %arg3: memref<1x1x128xf32, #tpu.memory_space<vmem>>, %arg4: memref<1x8x2x32xf32, #tpu.memory_space<vmem>>, %arg5: memref<2x32xf32, #tpu.memory_space<vmem>>, %arg6: memref<2x32xf32, #tpu.memory_space<vmem>>) attributes {dimension_semantics = [#tpu.dimension_semantics<parallel>], iteration_bounds = array<i64: 2>, scalar_prefetch = 0 : i64, scratch_operands = 2 : i64, tpu.core_type = #tpu.core_type<tc>, window_params = [{pipeline_mode = #tpu.pipeline_mode<synchronous>, transform_indices = @transform_0, window_bounds = array<i64: 8, 2, 32>}, {transform_indices = @transform_1, window_bounds = array<i64: 1, 64, 128>}, {transform_indices = @transform_2, window_bounds = array<i64: 1, 1, 128>}, {transform_indices = @transform_3, window_bounds = array<i64: 1, 8, 2, 32>}]} {
    %cst = arith.constant 0.000000e+00 : f32
    %0 = vector.broadcast %cst : f32 to vector<2x32xf32>
    %c0 = arith.constant 0 : index
    %c0_0 = arith.constant 0 : index
    %1 = vector.load %arg5[%c0, %c0_0] : memref<2x32xf32, #tpu.memory_space<vmem>>, vector<2x32xf32>
    tpu.vector_store %arg5[%c0, %c0_0], %0 {strides = array<i32>} : memref<2x32xf32, #tpu.memory_space<vmem>>, vector<2x32xf32>,
    %cst_1 = arith.constant 0.000000e+00 : f32
    %2 = vector.broadcast %cst_1 : f32 to vector<2x32xf32>
    %c0_2 = arith.constant 0 : index
    %c0_3 = arith.constant 0 : index
    %3 = vector.load %arg6[%c0_2, %c0_3] : memref<2x32xf32, #tpu.memory_space<vmem>>, vector<2x32xf32>
    tpu.vector_store %arg6[%c0_2, %c0_3], %2 {strides = array<i32>} : memref<2x32xf32, #tpu.memory_space<vmem>>, vector<2x32xf32>,
    %c0_4 = arith.constant 0 : index
    %c0_5 = arith.constant 0 : index
    %c0_6 = arith.constant 0 : index
    %4 = vector.load %arg2[%c0_4, %c0_5, %c0_6] : memref<1x64x128xf32, #tpu.memory_space<vmem>>, vector<1x64x128xf32>
    %5 = vector.shape_cast %4 : vector<1x64x128xf32> to vector<64x128xf32>
    %c0_7 = arith.constant 0 : index
    %c0_8 = arith.constant 0 : index
    %c0_9 = arith.constant 0 : index
    %6 = vector.load %arg3[%c0_7, %c0_8, %c0_9] : memref<1x1x128xf32, #tpu.memory_space<vmem>>, vector<1x1x128xf32>
    %7 = vector.shape_cast %6 : vector<1x1x128xf32> to vector<1x128xf32>
    %c0_i32 = arith.constant 0 : i32
    %c0_i32_10 = arith.constant 0 : i32
    %8 = arith.cmpi eq, %arg0, %c0_i32_10 : i32
    %c7_i32 = arith.constant 7 : i32
    %9 = arith.subi %c7_i32, %c0_i32 : i32
    %10 = arith.select %8, %c0_i32, %9 : i32
    %11 = arith.index_cast %10 : i32 to index
    %c0_11 = arith.constant 0 : index
    %c0_12 = arith.constant 0 : index
    %12 = vector.load %arg1[%11, %c0_11, %c0_12] : memref<8x2x32xf32, #tpu.memory_space<vmem>>, vector<1x2x32xf32>
    %13 = vector.shape_cast %12 : vector<1x2x32xf32> to vector<2x32xf32>
    %c0_13 = arith.constant 0 : index
    %c0_14 = arith.constant 0 : index
    %14 = vector.load %arg5[%c0_13, %c0_14] : memref<2x32xf32, #tpu.memory_space<vmem>>, vector<2x32xf32>
    %15 = tpu.concatenate %13, %14 in 1 : vector<2x32xf32>, vector<2x32xf32> -> vector<2x64xf32>
    %cst_15 = arith.constant dense<0.000000e+00> : vector<2x128xf32>
    %16 = tpu.matmul %15, %5, %cst_15 {dimension_numbers = #tpu.dot_dimension_numbers<[1], [0], [0], [1], [0, 0, 1, 1], [], []>} : vector<2x64xf32>, vector<64x128xf32>, vector<2x128xf32> -> vector<2x128xf32>
    %17 = vector.broadcast %7 : vector<1x128xf32> to vector<2x128xf32>
    %18 = arith.addf %16, %17 : vector<2x128xf32>
    %19 = arith.negf %18 : vector<2x128xf32>
    %20 = math.exp %19 : vector<2x128xf32>
    %cst_16 = arith.constant 1.000000e+00 : f32
    %21 = vector.broadcast %cst_16 : f32 to vector<2x128xf32>
    %22 = arith.addf %21, %20 : vector<2x128xf32>
    %23 = arith.divf %21, %22 : vector<2x128xf32>
    %24 = vector.extract_strided_slice %23 {offsets = [0, 0], sizes = [2, 32], strides = [1, 1]} : vector<2x128xf32> to vector<2x32xf32>
    %25 = vector.extract_strided_slice %23 {offsets = [0, 32], sizes = [2, 32], strides = [1, 1]} : vector<2x128xf32> to vector<2x32xf32>
    %26 = vector.extract_strided_slice %23 {offsets = [0, 96], sizes = [2, 32], strides = [1, 1]} : vector<2x128xf32> to vector<2x32xf32>
    %27 = vector.extract_strided_slice %18 {offsets = [0, 64], sizes = [2, 32], strides = [1, 1]} : vector<2x128xf32> to vector<2x32xf32>
    %28 = math.tanh %27 : vector<2x32xf32>
    %c0_17 = arith.constant 0 : index
    %c0_18 = arith.constant 0 : index
    %29 = vector.load %arg6[%c0_17, %c0_18] : memref<2x32xf32, #tpu.memory_space<vmem>>, vector<2x32xf32>
    %30 = arith.mulf %25, %29 : vector<2x32xf32>
    %31 = arith.mulf %24, %28 : vector<2x32xf32>
    %32 = arith.addf %30, %31 : vector<2x32xf32>
    %33 = math.tanh %32 : vector<2x32xf32>
    %34 = arith.mulf %26, %33 : vector<2x32xf32>
    %c0_19 = arith.constant 0 : index
    %c0_20 = arith.constant 0 : index
    %35 = vector.load %arg5[%c0_19, %c0_20] : memref<2x32xf32, #tpu.memory_space<vmem>>, vector<2x32xf32>
    tpu.vector_store %arg5[%c0_19, %c0_20], %34 {strides = array<i32>} : memref<2x32xf32, #tpu.memory_space<vmem>>, vector<2x32xf32>,
    %c0_21 = arith.constant 0 : index
    %c0_22 = arith.constant 0 : index
    %36 = vector.load %arg6[%c0_21, %c0_22] : memref<2x32xf32, #tpu.memory_space<vmem>>, vector<2x32xf32>
    tpu.vector_store %arg6[%c0_21, %c0_22], %32 {strides = array<i32>} : memref<2x32xf32, #tpu.memory_space<vmem>>, vector<2x32xf32>,
    %c0_23 = arith.constant 0 : index
    %37 = arith.index_cast %10 : i32 to index
    %c0_24 = arith.constant 0 : index
    %c0_25 = arith.constant 0 : index
    %38 = vector.load %arg4[%c0_23, %37, %c0_24, %c0_25] : memref<1x8x2x32xf32, #tpu.memory_space<vmem>>, vector<1x1x2x32xf32>
    %39 = vector.shape_cast %38 : vector<1x1x2x32xf32> to vector<2x32xf32>
    %40 = vector.shape_cast %34 : vector<2x32xf32> to vector<1x1x2x32xf32>
    tpu.vector_store %arg4[%c0_23, %37, %c0_24, %c0_25], %40 {strides = array<i32>} : memref<1x8x2x32xf32, #tpu.memory_space<vmem>>, vector<1x1x2x32xf32>,
    %c1_i32 = arith.constant 1 : i32
    %c0_i32_26 = arith.constant 0 : i32
    %41 = arith.cmpi eq, %arg0, %c0_i32_26 : i32
    %c7_i32_27 = arith.constant 7 : i32
    %42 = arith.subi %c7_i32_27, %c1_i32 : i32
    %43 = arith.select %41, %c1_i32, %42 : i32
    %44 = arith.index_cast %43 : i32 to index
    %c0_28 = arith.constant 0 : index
    %c0_29 = arith.constant 0 : index
    %45 = vector.load %arg1[%44, %c0_28, %c0_29] : memref<8x2x32xf32, #tpu.memory_space<vmem>>, vector<1x2x32xf32>
    %46 = vector.shape_cast %45 : vector<1x2x32xf32> to vector<2x32xf32>
    %c0_30 = arith.constant 0 : index
    %c0_31 = arith.constant 0 : index
    %47 = vector.load %arg5[%c0_30, %c0_31] : memref<2x32xf32, #tpu.memory_space<vmem>>, vector<2x32xf32>
    %48 = tpu.concatenate %46, %47 in 1 : vector<2x32xf32>, vector<2x32xf32> -> vector<2x64xf32>
    %cst_32 = arith.constant dense<0.000000e+00> : vector<2x128xf32>
    %49 = tpu.matmul %48, %5, %cst_32 {dimension_numbers = #tpu.dot_dimension_numbers<[1], [0], [0], [1], [0, 0, 1, 1], [], []>} : vector<2x64xf32>, vector<64x128xf32>, vector<2x128xf32> -> vector<2x128xf32>
    %50 = vector.broadcast %7 : vector<1x128xf32> to vector<2x128xf32>
    %51 = arith.addf %49, %50 : vector<2x128xf32>
    %52 = arith.negf %51 : vector<2x128xf32>
    %53 = math.exp %52 : vector<2x128xf32>
    %cst_33 = arith.constant 1.000000e+00 : f32
    %54 = vector.broadcast %cst_33 : f32 to vector<2x128xf32>
    %55 = arith.addf %54, %53 : vector<2x128xf32>
    %56 = arith.divf %54, %55 : vector<2x128xf32>
    %57 = vector.extract_strided_slice %56 {offsets = [0, 0], sizes = [2, 32], strides = [1, 1]} : vector<2x128xf32> to vector<2x32xf32>
    %58 = vector.extract_strided_slice %56 {offsets = [0, 32], sizes = [2, 32], strides = [1, 1]} : vector<2x128xf32> to vector<2x32xf32>
    %59 = vector.extract_strided_slice %56 {offsets = [0, 96], sizes = [2, 32], strides = [1, 1]} : vector<2x128xf32> to vector<2x32xf32>
    %60 = vector.extract_strided_slice %51 {offsets = [0, 64], sizes = [2, 32], strides = [1, 1]} : vector<2x128xf32> to vector<2x32xf32>
    %61 = math.tanh %60 : vector<2x32xf32>
    %c0_34 = arith.constant 0 : index
    %c0_35 = arith.constant 0 : index
    %62 = vector.load %arg6[%c0_34, %c0_35] : memref<2x32xf32, #tpu.memory_space<vmem>>, vector<2x32xf32>
    %63 = arith.mulf %58, %62 : vector<2x32xf32>
    %64 = arith.mulf %57, %61 : vector<2x32xf32>
    %65 = arith.addf %63, %64 : vector<2x32xf32>
    %66 = math.tanh %65 : vector<2x32xf32>
    %67 = arith.mulf %59, %66 : vector<2x32xf32>
    %c0_36 = arith.constant 0 : index
    %c0_37 = arith.constant 0 : index
    %68 = vector.load %arg5[%c0_36, %c0_37] : memref<2x32xf32, #tpu.memory_space<vmem>>, vector<2x32xf32>
    tpu.vector_store %arg5[%c0_36, %c0_37], %67 {strides = array<i32>} : memref<2x32xf32, #tpu.memory_space<vmem>>, vector<2x32xf32>,
    %c0_38 = arith.constant 0 : index
    %c0_39 = arith.constant 0 : index
    %69 = vector.load %arg6[%c0_38, %c0_39] : memref<2x32xf32, #tpu.memory_space<vmem>>, vector<2x32xf32>
    tpu.vector_store %arg6[%c0_38, %c0_39], %65 {strides = array<i32>} : memref<2x32xf32, #tpu.memory_space<vmem>>, vector<2x32xf32>,
    %c0_40 = arith.constant 0 : index
    %70 = arith.index_cast %43 : i32 to index
    %c0_41 = arith.constant 0 : index
    %c0_42 = arith.constant 0 : index
    %71 = vector.load %arg4[%c0_40, %70, %c0_41, %c0_42] : memref<1x8x2x32xf32, #tpu.memory_space<vmem>>, vector<1x1x2x32xf32>
    %72 = vector.shape_cast %71 : vector<1x1x2x32xf32> to vector<2x32xf32>
    %73 = vector.shape_cast %67 : vector<2x32xf32> to vector<1x1x2x32xf32>
    tpu.vector_store %arg4[%c0_40, %70, %c0_41, %c0_42], %73 {strides = array<i32>} : memref<1x8x2x32xf32, #tpu.memory_space<vmem>>, vector<1x1x2x32xf32>,
    %c2_i32 = arith.constant 2 : i32
    %c0_i32_43 = arith.constant 0 : i32
    %74 = arith.cmpi eq, %arg0, %c0_i32_43 : i32
    %c7_i32_44 = arith.constant 7 : i32
    %75 = arith.subi %c7_i32_44, %c2_i32 : i32
    %76 = arith.select %74, %c2_i32, %75 : i32
    %77 = arith.index_cast %76 : i32 to index
    %c0_45 = arith.constant 0 : index
    %c0_46 = arith.constant 0 : index
    %78 = vector.load %arg1[%77, %c0_45, %c0_46] : memref<8x2x32xf32, #tpu.memory_space<vmem>>, vector<1x2x32xf32>
    %79 = vector.shape_cast %78 : vector<1x2x32xf32> to vector<2x32xf32>
    %c0_47 = arith.constant 0 : index
    %c0_48 = arith.constant 0 : index
    %80 = vector.load %arg5[%c0_47, %c0_48] : memref<2x32xf32, #tpu.memory_space<vmem>>, vector<2x32xf32>
    %81 = tpu.concatenate %79, %80 in 1 : vector<2x32xf32>, vector<2x32xf32> -> vector<2x64xf32>
    %cst_49 = arith.constant dense<0.000000e+00> : vector<2x128xf32>
    %82 = tpu.matmul %81, %5, %cst_49 {dimension_numbers = #tpu.dot_dimension_numbers<[1], [0], [0], [1], [0, 0, 1, 1], [], []>} : vector<2x64xf32>, vector<64x128xf32>, vector<2x128xf32> -> vector<2x128xf32>
    %83 = vector.broadcast %7 : vector<1x128xf32> to vector<2x128xf32>
    %84 = arith.addf %82, %83 : vector<2x128xf32>
    %85 = arith.negf %84 : vector<2x128xf32>
    %86 = math.exp %85 : vector<2x128xf32>
    %cst_50 = arith.constant 1.000000e+00 : f32
    %87 = vector.broadcast %cst_50 : f32 to vector<2x128xf32>
    %88 = arith.addf %87, %86 : vector<2x128xf32>
    %89 = arith.divf %87, %88 : vector<2x128xf32>
    %90 = vector.extract_strided_slice %89 {offsets = [0, 0], sizes = [2, 32], strides = [1, 1]} : vector<2x128xf32> to vector<2x32xf32>
    %91 = vector.extract_strided_slice %89 {offsets = [0, 32], sizes = [2, 32], strides = [1, 1]} : vector<2x128xf32> to vector<2x32xf32>
    %92 = vector.extract_strided_slice %89 {offsets = [0, 96], sizes = [2, 32], strides = [1, 1]} : vector<2x128xf32> to vector<2x32xf32>
    %93 = vector.extract_strided_slice %84 {offsets = [0, 64], sizes = [2, 32], strides = [1, 1]} : vector<2x128xf32> to vector<2x32xf32>
    %94 = math.tanh %93 : vector<2x32xf32>
    %c0_51 = arith.constant 0 : index
    %c0_52 = arith.constant 0 : index
    %95 = vector.load %arg6[%c0_51, %c0_52] : memref<2x32xf32, #tpu.memory_space<vmem>>, vector<2x32xf32>
    %96 = arith.mulf %91, %95 : vector<2x32xf32>
    %97 = arith.mulf %90, %94 : vector<2x32xf32>
    %98 = arith.addf %96, %97 : vector<2x32xf32>
    %99 = math.tanh %98 : vector<2x32xf32>
    %100 = arith.mulf %92, %99 : vector<2x32xf32>
    %c0_53 = arith.constant 0 : index
    %c0_54 = arith.constant 0 : index
    %101 = vector.load %arg5[%c0_53, %c0_54] : memref<2x32xf32, #tpu.memory_space<vmem>>, vector<2x32xf32>
    tpu.vector_store %arg5[%c0_53, %c0_54], %100 {strides = array<i32>} : memref<2x32xf32, #tpu.memory_space<vmem>>, vector<2x32xf32>,
    %c0_55 = arith.constant 0 : index
    %c0_56 = arith.constant 0 : index
    %102 = vector.load %arg6[%c0_55, %c0_56] : memref<2x32xf32, #tpu.memory_space<vmem>>, vector<2x32xf32>
    tpu.vector_store %arg6[%c0_55, %c0_56], %98 {strides = array<i32>} : memref<2x32xf32, #tpu.memory_space<vmem>>, vector<2x32xf32>,
    %c0_57 = arith.constant 0 : index
    %103 = arith.index_cast %76 : i32 to index
    %c0_58 = arith.constant 0 : index
    %c0_59 = arith.constant 0 : index
    %104 = vector.load %arg4[%c0_57, %103, %c0_58, %c0_59] : memref<1x8x2x32xf32, #tpu.memory_space<vmem>>, vector<1x1x2x32xf32>
    %105 = vector.shape_cast %104 : vector<1x1x2x32xf32> to vector<2x32xf32>
    %106 = vector.shape_cast %100 : vector<2x32xf32> to vector<1x1x2x32xf32>
    tpu.vector_store %arg4[%c0_57, %103, %c0_58, %c0_59], %106 {strides = array<i32>} : memref<1x8x2x32xf32, #tpu.memory_space<vmem>>, vector<1x1x2x32xf32>,
    %c3_i32 = arith.constant 3 : i32
    %c0_i32_60 = arith.constant 0 : i32
    %107 = arith.cmpi eq, %arg0, %c0_i32_60 : i32
    %c7_i32_61 = arith.constant 7 : i32
    %108 = arith.subi %c7_i32_61, %c3_i32 : i32
    %109 = arith.select %107, %c3_i32, %108 : i32
    %110 = arith.index_cast %109 : i32 to index
    %c0_62 = arith.constant 0 : index
    %c0_63 = arith.constant 0 : index
    %111 = vector.load %arg1[%110, %c0_62, %c0_63] : memref<8x2x32xf32, #tpu.memory_space<vmem>>, vector<1x2x32xf32>
    %112 = vector.shape_cast %111 : vector<1x2x32xf32> to vector<2x32xf32>
    %c0_64 = arith.constant 0 : index
    %c0_65 = arith.constant 0 : index
    %113 = vector.load %arg5[%c0_64, %c0_65] : memref<2x32xf32, #tpu.memory_space<vmem>>, vector<2x32xf32>
    %114 = tpu.concatenate %112, %113 in 1 : vector<2x32xf32>, vector<2x32xf32> -> vector<2x64xf32>
    %cst_66 = arith.constant dense<0.000000e+00> : vector<2x128xf32>
    %115 = tpu.matmul %114, %5, %cst_66 {dimension_numbers = #tpu.dot_dimension_numbers<[1], [0], [0], [1], [0, 0, 1, 1], [], []>} : vector<2x64xf32>, vector<64x128xf32>, vector<2x128xf32> -> vector<2x128xf32>
    %116 = vector.broadcast %7 : vector<1x128xf32> to vector<2x128xf32>
    %117 = arith.addf %115, %116 : vector<2x128xf32>
    %118 = arith.negf %117 : vector<2x128xf32>
    %119 = math.exp %118 : vector<2x128xf32>
    %cst_67 = arith.constant 1.000000e+00 : f32
    %120 = vector.broadcast %cst_67 : f32 to vector<2x128xf32>
    %121 = arith.addf %120, %119 : vector<2x128xf32>
    %122 = arith.divf %120, %121 : vector<2x128xf32>
    %123 = vector.extract_strided_slice %122 {offsets = [0, 0], sizes = [2, 32], strides = [1, 1]} : vector<2x128xf32> to vector<2x32xf32>
    %124 = vector.extract_strided_slice %122 {offsets = [0, 32], sizes = [2, 32], strides = [1, 1]} : vector<2x128xf32> to vector<2x32xf32>
    %125 = vector.extract_strided_slice %122 {offsets = [0, 96], sizes = [2, 32], strides = [1, 1]} : vector<2x128xf32> to vector<2x32xf32>
    %126 = vector.extract_strided_slice %117 {offsets = [0, 64], sizes = [2, 32], strides = [1, 1]} : vector<2x128xf32> to vector<2x32xf32>
    %127 = math.tanh %126 : vector<2x32xf32>
    %c0_68 = arith.constant 0 : index
    %c0_69 = arith.constant 0 : index
    %128 = vector.load %arg6[%c0_68, %c0_69] : memref<2x32xf32, #tpu.memory_space<vmem>>, vector<2x32xf32>
    %129 = arith.mulf %124, %128 : vector<2x32xf32>
    %130 = arith.mulf %123, %127 : vector<2x32xf32>
    %131 = arith.addf %129, %130 : vector<2x32xf32>
    %132 = math.tanh %131 : vector<2x32xf32>
    %133 = arith.mulf %125, %132 : vector<2x32xf32>
    %c0_70 = arith.constant 0 : index
    %c0_71 = arith.constant 0 : index
    %134 = vector.load %arg5[%c0_70, %c0_71] : memref<2x32xf32, #tpu.memory_space<vmem>>, vector<2x32xf32>
    tpu.vector_store %arg5[%c0_70, %c0_71], %133 {strides = array<i32>} : memref<2x32xf32, #tpu.memory_space<vmem>>, vector<2x32xf32>,
    %c0_72 = arith.constant 0 : index
    %c0_73 = arith.constant 0 : index
    %135 = vector.load %arg6[%c0_72, %c0_73] : memref<2x32xf32, #tpu.memory_space<vmem>>, vector<2x32xf32>
    tpu.vector_store %arg6[%c0_72, %c0_73], %131 {strides = array<i32>} : memref<2x32xf32, #tpu.memory_space<vmem>>, vector<2x32xf32>,
    %c0_74 = arith.constant 0 : index
    %136 = arith.index_cast %109 : i32 to index
    %c0_75 = arith.constant 0 : index
    %c0_76 = arith.constant 0 : index
    %137 = vector.load %arg4[%c0_74, %136, %c0_75, %c0_76] : memref<1x8x2x32xf32, #tpu.memory_space<vmem>>, vector<1x1x2x32xf32>
    %138 = vector.shape_cast %137 : vector<1x1x2x32xf32> to vector<2x32xf32>
    %139 = vector.shape_cast %133 : vector<2x32xf32> to vector<1x1x2x32xf32>
    tpu.vector_store %arg4[%c0_74, %136, %c0_75, %c0_76], %139 {strides = array<i32>} : memref<1x8x2x32xf32, #tpu.memory_space<vmem>>, vector<1x1x2x32xf32>,
    %c4_i32 = arith.constant 4 : i32
    %c0_i32_77 = arith.constant 0 : i32
    %140 = arith.cmpi eq, %arg0, %c0_i32_77 : i32
    %c7_i32_78 = arith.constant 7 : i32
    %141 = arith.subi %c7_i32_78, %c4_i32 : i32
    %142 = arith.select %140, %c4_i32, %141 : i32
    %143 = arith.index_cast %142 : i32 to index
    %c0_79 = arith.constant 0 : index
    %c0_80 = arith.constant 0 : index
    %144 = vector.load %arg1[%143, %c0_79, %c0_80] : memref<8x2x32xf32, #tpu.memory_space<vmem>>, vector<1x2x32xf32>
    %145 = vector.shape_cast %144 : vector<1x2x32xf32> to vector<2x32xf32>
    %c0_81 = arith.constant 0 : index
    %c0_82 = arith.constant 0 : index
    %146 = vector.load %arg5[%c0_81, %c0_82] : memref<2x32xf32, #tpu.memory_space<vmem>>, vector<2x32xf32>
    %147 = tpu.concatenate %145, %146 in 1 : vector<2x32xf32>, vector<2x32xf32> -> vector<2x64xf32>
    %cst_83 = arith.constant dense<0.000000e+00> : vector<2x128xf32>
    %148 = tpu.matmul %147, %5, %cst_83 {dimension_numbers = #tpu.dot_dimension_numbers<[1], [0], [0], [1], [0, 0, 1, 1], [], []>} : vector<2x64xf32>, vector<64x128xf32>, vector<2x128xf32> -> vector<2x128xf32>
    %149 = vector.broadcast %7 : vector<1x128xf32> to vector<2x128xf32>
    %150 = arith.addf %148, %149 : vector<2x128xf32>
    %151 = arith.negf %150 : vector<2x128xf32>
    %152 = math.exp %151 : vector<2x128xf32>
    %cst_84 = arith.constant 1.000000e+00 : f32
    %153 = vector.broadcast %cst_84 : f32 to vector<2x128xf32>
    %154 = arith.addf %153, %152 : vector<2x128xf32>
    %155 = arith.divf %153, %154 : vector<2x128xf32>
    %156 = vector.extract_strided_slice %155 {offsets = [0, 0], sizes = [2, 32], strides = [1, 1]} : vector<2x128xf32> to vector<2x32xf32>
    %157 = vector.extract_strided_slice %155 {offsets = [0, 32], sizes = [2, 32], strides = [1, 1]} : vector<2x128xf32> to vector<2x32xf32>
    %158 = vector.extract_strided_slice %155 {offsets = [0, 96], sizes = [2, 32], strides = [1, 1]} : vector<2x128xf32> to vector<2x32xf32>
    %159 = vector.extract_strided_slice %150 {offsets = [0, 64], sizes = [2, 32], strides = [1, 1]} : vector<2x128xf32> to vector<2x32xf32>
    %160 = math.tanh %159 : vector<2x32xf32>
    %c0_85 = arith.constant 0 : index
    %c0_86 = arith.constant 0 : index
    %161 = vector.load %arg6[%c0_85, %c0_86] : memref<2x32xf32, #tpu.memory_space<vmem>>, vector<2x32xf32>
    %162 = arith.mulf %157, %161 : vector<2x32xf32>
    %163 = arith.mulf %156, %160 : vector<2x32xf32>
    %164 = arith.addf %162, %163 : vector<2x32xf32>
    %165 = math.tanh %164 : vector<2x32xf32>
    %166 = arith.mulf %158, %165 : vector<2x32xf32>
    %c0_87 = arith.constant 0 : index
    %c0_88 = arith.constant 0 : index
    %167 = vector.load %arg5[%c0_87, %c0_88] : memref<2x32xf32, #tpu.memory_space<vmem>>, vector<2x32xf32>
    tpu.vector_store %arg5[%c0_87, %c0_88], %166 {strides = array<i32>} : memref<2x32xf32, #tpu.memory_space<vmem>>, vector<2x32xf32>,
    %c0_89 = arith.constant 0 : index
    %c0_90 = arith.constant 0 : index
    %168 = vector.load %arg6[%c0_89, %c0_90] : memref<2x32xf32, #tpu.memory_space<vmem>>, vector<2x32xf32>
    tpu.vector_store %arg6[%c0_89, %c0_90], %164 {strides = array<i32>} : memref<2x32xf32, #tpu.memory_space<vmem>>, vector<2x32xf32>,
    %c0_91 = arith.constant 0 : index
    %169 = arith.index_cast %142 : i32 to index
    %c0_92 = arith.constant 0 : index
    %c0_93 = arith.constant 0 : index
    %170 = vector.load %arg4[%c0_91, %169, %c0_92, %c0_93] : memref<1x8x2x32xf32, #tpu.memory_space<vmem>>, vector<1x1x2x32xf32>
    %171 = vector.shape_cast %170 : vector<1x1x2x32xf32> to vector<2x32xf32>
    %172 = vector.shape_cast %166 : vector<2x32xf32> to vector<1x1x2x32xf32>
    tpu.vector_store %arg4[%c0_91, %169, %c0_92, %c0_93], %172 {strides = array<i32>} : memref<1x8x2x32xf32, #tpu.memory_space<vmem>>, vector<1x1x2x32xf32>,
    %c5_i32 = arith.constant 5 : i32
    %c0_i32_94 = arith.constant 0 : i32
    %173 = arith.cmpi eq, %arg0, %c0_i32_94 : i32
    %c7_i32_95 = arith.constant 7 : i32
    %174 = arith.subi %c7_i32_95, %c5_i32 : i32
    %175 = arith.select %173, %c5_i32, %174 : i32
    %176 = arith.index_cast %175 : i32 to index
    %c0_96 = arith.constant 0 : index
    %c0_97 = arith.constant 0 : index
    %177 = vector.load %arg1[%176, %c0_96, %c0_97] : memref<8x2x32xf32, #tpu.memory_space<vmem>>, vector<1x2x32xf32>
    %178 = vector.shape_cast %177 : vector<1x2x32xf32> to vector<2x32xf32>
    %c0_98 = arith.constant 0 : index
    %c0_99 = arith.constant 0 : index
    %179 = vector.load %arg5[%c0_98, %c0_99] : memref<2x32xf32, #tpu.memory_space<vmem>>, vector<2x32xf32>
    %180 = tpu.concatenate %178, %179 in 1 : vector<2x32xf32>, vector<2x32xf32> -> vector<2x64xf32>
    %cst_100 = arith.constant dense<0.000000e+00> : vector<2x128xf32>
    %181 = tpu.matmul %180, %5, %cst_100 {dimension_numbers = #tpu.dot_dimension_numbers<[1], [0], [0], [1], [0, 0, 1, 1], [], []>} : vector<2x64xf32>, vector<64x128xf32>, vector<2x128xf32> -> vector<2x128xf32>
    %182 = vector.broadcast %7 : vector<1x128xf32> to vector<2x128xf32>
    %183 = arith.addf %181, %182 : vector<2x128xf32>
    %184 = arith.negf %183 : vector<2x128xf32>
    %185 = math.exp %184 : vector<2x128xf32>
    %cst_101 = arith.constant 1.000000e+00 : f32
    %186 = vector.broadcast %cst_101 : f32 to vector<2x128xf32>
    %187 = arith.addf %186, %185 : vector<2x128xf32>
    %188 = arith.divf %186, %187 : vector<2x128xf32>
    %189 = vector.extract_strided_slice %188 {offsets = [0, 0], sizes = [2, 32], strides = [1, 1]} : vector<2x128xf32> to vector<2x32xf32>
    %190 = vector.extract_strided_slice %188 {offsets = [0, 32], sizes = [2, 32], strides = [1, 1]} : vector<2x128xf32> to vector<2x32xf32>
    %191 = vector.extract_strided_slice %188 {offsets = [0, 96], sizes = [2, 32], strides = [1, 1]} : vector<2x128xf32> to vector<2x32xf32>
    %192 = vector.extract_strided_slice %183 {offsets = [0, 64], sizes = [2, 32], strides = [1, 1]} : vector<2x128xf32> to vector<2x32xf32>
    %193 = math.tanh %192 : vector<2x32xf32>
    %c0_102 = arith.constant 0 : index
    %c0_103 = arith.constant 0 : index
    %194 = vector.load %arg6[%c0_102, %c0_103] : memref<2x32xf32, #tpu.memory_space<vmem>>, vector<2x32xf32>
    %195 = arith.mulf %190, %194 : vector<2x32xf32>
    %196 = arith.mulf %189, %193 : vector<2x32xf32>
    %197 = arith.addf %195, %196 : vector<2x32xf32>
    %198 = math.tanh %197 : vector<2x32xf32>
    %199 = arith.mulf %191, %198 : vector<2x32xf32>
    %c0_104 = arith.constant 0 : index
    %c0_105 = arith.constant 0 : index
    %200 = vector.load %arg5[%c0_104, %c0_105] : memref<2x32xf32, #tpu.memory_space<vmem>>, vector<2x32xf32>
    tpu.vector_store %arg5[%c0_104, %c0_105], %199 {strides = array<i32>} : memref<2x32xf32, #tpu.memory_space<vmem>>, vector<2x32xf32>,
    %c0_106 = arith.constant 0 : index
    %c0_107 = arith.constant 0 : index
    %201 = vector.load %arg6[%c0_106, %c0_107] : memref<2x32xf32, #tpu.memory_space<vmem>>, vector<2x32xf32>
    tpu.vector_store %arg6[%c0_106, %c0_107], %197 {strides = array<i32>} : memref<2x32xf32, #tpu.memory_space<vmem>>, vector<2x32xf32>,
    %c0_108 = arith.constant 0 : index
    %202 = arith.index_cast %175 : i32 to index
    %c0_109 = arith.constant 0 : index
    %c0_110 = arith.constant 0 : index
    %203 = vector.load %arg4[%c0_108, %202, %c0_109, %c0_110] : memref<1x8x2x32xf32, #tpu.memory_space<vmem>>, vector<1x1x2x32xf32>
    %204 = vector.shape_cast %203 : vector<1x1x2x32xf32> to vector<2x32xf32>
    %205 = vector.shape_cast %199 : vector<2x32xf32> to vector<1x1x2x32xf32>
    tpu.vector_store %arg4[%c0_108, %202, %c0_109, %c0_110], %205 {strides = array<i32>} : memref<1x8x2x32xf32, #tpu.memory_space<vmem>>, vector<1x1x2x32xf32>,
    %c6_i32 = arith.constant 6 : i32
    %c0_i32_111 = arith.constant 0 : i32
    %206 = arith.cmpi eq, %arg0, %c0_i32_111 : i32
    %c7_i32_112 = arith.constant 7 : i32
    %207 = arith.subi %c7_i32_112, %c6_i32 : i32
    %208 = arith.select %206, %c6_i32, %207 : i32
    %209 = arith.index_cast %208 : i32 to index
    %c0_113 = arith.constant 0 : index
    %c0_114 = arith.constant 0 : index
    %210 = vector.load %arg1[%209, %c0_113, %c0_114] : memref<8x2x32xf32, #tpu.memory_space<vmem>>, vector<1x2x32xf32>
    %211 = vector.shape_cast %210 : vector<1x2x32xf32> to vector<2x32xf32>
    %c0_115 = arith.constant 0 : index
    %c0_116 = arith.constant 0 : index
    %212 = vector.load %arg5[%c0_115, %c0_116] : memref<2x32xf32, #tpu.memory_space<vmem>>, vector<2x32xf32>
    %213 = tpu.concatenate %211, %212 in 1 : vector<2x32xf32>, vector<2x32xf32> -> vector<2x64xf32>
    %cst_117 = arith.constant dense<0.000000e+00> : vector<2x128xf32>
    %214 = tpu.matmul %213, %5, %cst_117 {dimension_numbers = #tpu.dot_dimension_numbers<[1], [0], [0], [1], [0, 0, 1, 1], [], []>} : vector<2x64xf32>, vector<64x128xf32>, vector<2x128xf32> -> vector<2x128xf32>
    %215 = vector.broadcast %7 : vector<1x128xf32> to vector<2x128xf32>
    %216 = arith.addf %214, %215 : vector<2x128xf32>
    %217 = arith.negf %216 : vector<2x128xf32>
    %218 = math.exp %217 : vector<2x128xf32>
    %cst_118 = arith.constant 1.000000e+00 : f32
    %219 = vector.broadcast %cst_118 : f32 to vector<2x128xf32>
    %220 = arith.addf %219, %218 : vector<2x128xf32>
    %221 = arith.divf %219, %220 : vector<2x128xf32>
    %222 = vector.extract_strided_slice %221 {offsets = [0, 0], sizes = [2, 32], strides = [1, 1]} : vector<2x128xf32> to vector<2x32xf32>
    %223 = vector.extract_strided_slice %221 {offsets = [0, 32], sizes = [2, 32], strides = [1, 1]} : vector<2x128xf32> to vector<2x32xf32>
    %224 = vector.extract_strided_slice %221 {offsets = [0, 96], sizes = [2, 32], strides = [1, 1]} : vector<2x128xf32> to vector<2x32xf32>
    %225 = vector.extract_strided_slice %216 {offsets = [0, 64], sizes = [2, 32], strides = [1, 1]} : vector<2x128xf32> to vector<2x32xf32>
    %226 = math.tanh %225 : vector<2x32xf32>
    %c0_119 = arith.constant 0 : index
    %c0_120 = arith.constant 0 : index
    %227 = vector.load %arg6[%c0_119, %c0_120] : memref<2x32xf32, #tpu.memory_space<vmem>>, vector<2x32xf32>
    %228 = arith.mulf %223, %227 : vector<2x32xf32>
    %229 = arith.mulf %222, %226 : vector<2x32xf32>
    %230 = arith.addf %228, %229 : vector<2x32xf32>
    %231 = math.tanh %230 : vector<2x32xf32>
    %232 = arith.mulf %224, %231 : vector<2x32xf32>
    %c0_121 = arith.constant 0 : index
    %c0_122 = arith.constant 0 : index
    %233 = vector.load %arg5[%c0_121, %c0_122] : memref<2x32xf32, #tpu.memory_space<vmem>>, vector<2x32xf32>
    tpu.vector_store %arg5[%c0_121, %c0_122], %232 {strides = array<i32>} : memref<2x32xf32, #tpu.memory_space<vmem>>, vector<2x32xf32>,
    %c0_123 = arith.constant 0 : index
    %c0_124 = arith.constant 0 : index
    %234 = vector.load %arg6[%c0_123, %c0_124] : memref<2x32xf32, #tpu.memory_space<vmem>>, vector<2x32xf32>
    tpu.vector_store %arg6[%c0_123, %c0_124], %230 {strides = array<i32>} : memref<2x32xf32, #tpu.memory_space<vmem>>, vector<2x32xf32>,
    %c0_125 = arith.constant 0 : index
    %235 = arith.index_cast %208 : i32 to index
    %c0_126 = arith.constant 0 : index
    %c0_127 = arith.constant 0 : index
    %236 = vector.load %arg4[%c0_125, %235, %c0_126, %c0_127] : memref<1x8x2x32xf32, #tpu.memory_space<vmem>>, vector<1x1x2x32xf32>
    %237 = vector.shape_cast %236 : vector<1x1x2x32xf32> to vector<2x32xf32>
    %238 = vector.shape_cast %232 : vector<2x32xf32> to vector<1x1x2x32xf32>
    tpu.vector_store %arg4[%c0_125, %235, %c0_126, %c0_127], %238 {strides = array<i32>} : memref<1x8x2x32xf32, #tpu.memory_space<vmem>>, vector<1x1x2x32xf32>,
    %c7_i32_128 = arith.constant 7 : i32
    %c0_i32_129 = arith.constant 0 : i32
    %239 = arith.cmpi eq, %arg0, %c0_i32_129 : i32
    %c7_i32_130 = arith.constant 7 : i32
    %240 = arith.subi %c7_i32_130, %c7_i32_128 : i32
    %241 = arith.select %239, %c7_i32_128, %240 : i32
    %242 = arith.index_cast %241 : i32 to index
    %c0_131 = arith.constant 0 : index
    %c0_132 = arith.constant 0 : index
    %243 = vector.load %arg1[%242, %c0_131, %c0_132] : memref<8x2x32xf32, #tpu.memory_space<vmem>>, vector<1x2x32xf32>
    %244 = vector.shape_cast %243 : vector<1x2x32xf32> to vector<2x32xf32>
    %c0_133 = arith.constant 0 : index
    %c0_134 = arith.constant 0 : index
    %245 = vector.load %arg5[%c0_133, %c0_134] : memref<2x32xf32, #tpu.memory_space<vmem>>, vector<2x32xf32>
    %246 = tpu.concatenate %244, %245 in 1 : vector<2x32xf32>, vector<2x32xf32> -> vector<2x64xf32>
    %cst_135 = arith.constant dense<0.000000e+00> : vector<2x128xf32>
    %247 = tpu.matmul %246, %5, %cst_135 {dimension_numbers = #tpu.dot_dimension_numbers<[1], [0], [0], [1], [0, 0, 1, 1], [], []>} : vector<2x64xf32>, vector<64x128xf32>, vector<2x128xf32> -> vector<2x128xf32>
    %248 = vector.broadcast %7 : vector<1x128xf32> to vector<2x128xf32>
    %249 = arith.addf %247, %248 : vector<2x128xf32>
    %250 = arith.negf %249 : vector<2x128xf32>
    %251 = math.exp %250 : vector<2x128xf32>
    %cst_136 = arith.constant 1.000000e+00 : f32
    %252 = vector.broadcast %cst_136 : f32 to vector<2x128xf32>
    %253 = arith.addf %252, %251 : vector<2x128xf32>
    %254 = arith.divf %252, %253 : vector<2x128xf32>
    %255 = vector.extract_strided_slice %254 {offsets = [0, 0], sizes = [2, 32], strides = [1, 1]} : vector<2x128xf32> to vector<2x32xf32>
    %256 = vector.extract_strided_slice %254 {offsets = [0, 32], sizes = [2, 32], strides = [1, 1]} : vector<2x128xf32> to vector<2x32xf32>
    %257 = vector.extract_strided_slice %254 {offsets = [0, 96], sizes = [2, 32], strides = [1, 1]} : vector<2x128xf32> to vector<2x32xf32>
    %258 = vector.extract_strided_slice %249 {offsets = [0, 64], sizes = [2, 32], strides = [1, 1]} : vector<2x128xf32> to vector<2x32xf32>
    %259 = math.tanh %258 : vector<2x32xf32>
    %c0_137 = arith.constant 0 : index
    %c0_138 = arith.constant 0 : index
    %260 = vector.load %arg6[%c0_137, %c0_138] : memref<2x32xf32, #tpu.memory_space<vmem>>, vector<2x32xf32>
    %261 = arith.mulf %256, %260 : vector<2x32xf32>
    %262 = arith.mulf %255, %259 : vector<2x32xf32>
    %263 = arith.addf %261, %262 : vector<2x32xf32>
    %264 = math.tanh %263 : vector<2x32xf32>
    %265 = arith.mulf %257, %264 : vector<2x32xf32>
    %c0_139 = arith.constant 0 : index
    %c0_140 = arith.constant 0 : index
    %266 = vector.load %arg5[%c0_139, %c0_140] : memref<2x32xf32, #tpu.memory_space<vmem>>, vector<2x32xf32>
    tpu.vector_store %arg5[%c0_139, %c0_140], %265 {strides = array<i32>} : memref<2x32xf32, #tpu.memory_space<vmem>>, vector<2x32xf32>,
    %c0_141 = arith.constant 0 : index
    %c0_142 = arith.constant 0 : index
    %267 = vector.load %arg6[%c0_141, %c0_142] : memref<2x32xf32, #tpu.memory_space<vmem>>, vector<2x32xf32>
    tpu.vector_store %arg6[%c0_141, %c0_142], %263 {strides = array<i32>} : memref<2x32xf32, #tpu.memory_space<vmem>>, vector<2x32xf32>,
    %c0_143 = arith.constant 0 : index
    %268 = arith.index_cast %241 : i32 to index
    %c0_144 = arith.constant 0 : index
    %c0_145 = arith.constant 0 : index
    %269 = vector.load %arg4[%c0_143, %268, %c0_144, %c0_145] : memref<1x8x2x32xf32, #tpu.memory_space<vmem>>, vector<1x1x2x32xf32>
    %270 = vector.shape_cast %269 : vector<1x1x2x32xf32> to vector<2x32xf32>
    %271 = vector.shape_cast %265 : vector<2x32xf32> to vector<1x1x2x32xf32>
    tpu.vector_store %arg4[%c0_143, %268, %c0_144, %c0_145], %271 {strides = array<i32>} : memref<1x8x2x32xf32, #tpu.memory_space<vmem>>, vector<1x1x2x32xf32>,
    %c8_i32 = arith.constant 8 : i32
    return
  }
  func.func @transform_0(%arg0: i32) -> (i32, i32, i32) {
    %c0_i32 = arith.constant 0 : i32
    %c0_i32_0 = arith.constant 0 : i32
    %c0_i32_1 = arith.constant 0 : i32
    %c0_i32_2 = arith.constant 0 : i32
    return %c0_i32, %c0_i32_0, %c0_i32_1 : i32, i32, i32
  }
  func.func @transform_1(%arg0: i32) -> (i32, i32, i32) {
    %c0_i32 = arith.constant 0 : i32
    %c0_i32_0 = arith.constant 0 : i32
    %c0_i32_1 = arith.constant 0 : i32
    return %arg0, %c0_i32, %c0_i32_0 : i32, i32, i32
  }
  func.func @transform_2(%arg0: i32) -> (i32, i32, i32) {
    %c0_i32 = arith.constant 0 : i32
    %c0_i32_0 = arith.constant 0 : i32
    %c0_i32_1 = arith.constant 0 : i32
    return %arg0, %c0_i32, %c0_i32_0 : i32, i32, i32
  }
  func.func @transform_3(%arg0: i32) -> (i32, i32, i32, i32) {
    %c0_i32 = arith.constant 0 : i32
    %c0_i32_0 = arith.constant 0 : i32
    %c0_i32_1 = arith.constant 0 : i32
    %c0_i32_2 = arith.constant 0 : i32
    return %arg0, %c0_i32, %c0_i32_0, %c0_i32_1 : i32, i32, i32, i32
  }
}

module attributes {stable_mosaic.version = 11 : i64} {
  func.func @kernel(%arg0: memref<16x64xf32, #tpu.memory_space<vmem>>, %arg1: memref<64x10xf32, #tpu.memory_space<vmem>>, %arg2: memref<1x10xf32, #tpu.memory_space<vmem>>, %arg3: memref<16x10xf32, #tpu.memory_space<vmem>>) attributes {dimension_semantics = [], scalar_prefetch = 0 : i64, scratch_operands = 0 : i64, tpu.core_type = #tpu.core_type<tc>} {
    %c0 = arith.constant 0 : index
    %c0_0 = arith.constant 0 : index
    %0 = vector.load %arg0[%c0, %c0_0] : memref<16x64xf32, #tpu.memory_space<vmem>>, vector<16x64xf32>
    %c0_1 = arith.constant 0 : index
    %c0_2 = arith.constant 0 : index
    %1 = vector.load %arg1[%c0_1, %c0_2] : memref<64x10xf32, #tpu.memory_space<vmem>>, vector<64x10xf32>
    %cst = arith.constant dense<0.000000e+00> : vector<16x10xf32>
    %2 = tpu.matmul %0, %1, %cst {dimension_numbers = #tpu.dot_dimension_numbers<[1], [0], [0], [1], [0, 0, 1, 1], [], []>} : vector<16x64xf32>, vector<64x10xf32>, vector<16x10xf32> -> vector<16x10xf32>
    %c0_3 = arith.constant 0 : index
    %c0_4 = arith.constant 0 : index
    %3 = vector.load %arg2[%c0_3, %c0_4] : memref<1x10xf32, #tpu.memory_space<vmem>>, vector<1x10xf32>
    %4 = vector.broadcast %3 : vector<1x10xf32> to vector<16x10xf32>
    %5 = arith.addf %2, %4 : vector<16x10xf32>
    %cst_5 = arith.constant dense<0xFF800000> : vector<16xf32>
    %6 = vector.multi_reduction <maximumf>, %5, %cst_5 [1] : vector<16x10xf32> to vector<16xf32>
    %7 = vector.shape_cast %6 : vector<16xf32> to vector<16x1xf32>
    %8 = vector.broadcast %7 : vector<16x1xf32> to vector<16x10xf32>
    %9 = arith.subf %5, %8 : vector<16x10xf32>
    %10 = math.exp %9 : vector<16x10xf32>
    %11 = vector.broadcast %7 : vector<16x1xf32> to vector<16x10xf32>
    %12 = arith.subf %5, %11 : vector<16x10xf32>
    %cst_6 = arith.constant dense<0.000000e+00> : vector<16xf32>
    %13 = vector.multi_reduction <add>, %10, %cst_6 [1] : vector<16x10xf32> to vector<16xf32>
    %14 = vector.shape_cast %13 : vector<16xf32> to vector<16x1xf32>
    %15 = math.log %14 : vector<16x1xf32>
    %16 = vector.broadcast %15 : vector<16x1xf32> to vector<16x10xf32>
    %17 = arith.subf %12, %16 : vector<16x10xf32>
    %c0_7 = arith.constant 0 : index
    %c0_8 = arith.constant 0 : index
    %18 = vector.load %arg3[%c0_7, %c0_8] : memref<16x10xf32, #tpu.memory_space<vmem>>, vector<16x10xf32>
    tpu.vector_store %arg3[%c0_7, %c0_8], %17 {strides = array<i32>} : memref<16x10xf32, #tpu.memory_space<vmem>>, vector<16x10xf32>,
    return
  }
}

</mosaic_0001>

<llo_original>
// kernel: tile.58
$region0: #{tile.58}
  #allocation0 [shape = 's32[1]{0}', space=sflag, size = 0x4, scoped, tag = 'scoped memory for tile.58']
  %s0 = inlined_call_operand.vmem [shape: f32[8], index: 0, kind: input, shape index: {}]
  %s1 = inlined_call_operand.vmem [shape: f32[16,8], index: 1, kind: output, shape index: {}]
  // Predicated region
  $region2: #{tile.58} parent=0 // pred_check
    _
  $region3: #{tile.58} parent=0 // pred_check_branch
    %3 = sbr.rel (0) target = $region5
  $region4: #{tile.58} parent=0 // pred_region
    _
  $region5: #{tile.58} parent=0 // pred_fallthru
    _
  %v4 = vld [vmem:[%s0] ss:$0 sm:$0xff]
  %5 = vst [vmem:[%s1] sm:$0xff] %v4
  %s6 = scalar_lea.vmem %s1, 8
  %7 = vst [vmem:[%s6] sm:$0xff] %v4

// kernel: tile.63
$region0: #{tile.63}
  %s0 = inlined_call_operand.vmem [shape: f32[16,8], index: 0, kind: input, shape index: {}]
  %s1 = inlined_call_operand.vmem [shape: f32[1,128], index: 1, kind: output, shape index: {}]
  $region1: #{tile.63} parent=0
    #allocation0 [shape = 'u8[4096]{0}', space=vmem, size = 0x1000, scoped, tag = 'scoped mem for output reshape']
    %v2 = vld [vmem:[%s0] sm:$0x1]
    %vm3 = vcmask 64512
    %4 = vst.msk [vmem:[#allocation0] sm:$0x1] %vm3, %v2
    %s5 = scalar_lea.vmem %s0, 15
    %v6 = vld [vmem:[%s5] sm:$0x1]
    %7 = vrot.lane.b32.xlu0 %v6, 120
    %v8 = vpop.permute.xlu0 %7
    %vm9 = vcmask 1048512
    %10 = vst.msk [vmem:[#allocation0] sm:$0x1] %vm9, %v8
    %s11 = scalar_lea.vmem %s0, 14
    %v12 = vld [vmem:[%s11] sm:$0x1]
    %13 = vrot.lane.b32.xlu0 %v12, 112
    %v14 = vpop.permute.xlu0 %13
    %vm15 = vcmask 982912
    %16 = vst.msk [vmem:[#allocation0] sm:$0x1] %vm15, %v14
    %s17 = scalar_lea.vmem %s0, 13
    %v18 = vld [vmem:[%s17] sm:$0x1]
    %19 = vrot.lane.b32.xlu0 %v18, 104
    %v20 = vpop.permute.xlu0 %19
    %vm21 = vcmask 917312
    %22 = vst.msk [vmem:[#allocation0] sm:$0x1] %vm21, %v20
    %s23 = scalar_lea.vmem %s0, 12
    %v24 = vld [vmem:[%s23] sm:$0x1]
    %25 = vrot.lane.b32.xlu0 %v24, 96
    %v26 = vpop.permute.xlu0 %25
    %vm27 = vcmask 851712
    %28 = vst.msk [vmem:[#allocation0] sm:$0x1] %vm27, %v26
    %s29 = scalar_lea.vmem %s0, 11
    %v30 = vld [vmem:[%s29] sm:$0x1]
    %31 = vrot.lane.b32.xlu0 %v30, 88
    %v32 = vpop.permute.xlu0 %31
    %vm33 = vcmask 786112
    %34 = vst.msk [vmem:[#allocation0] sm:$0x1] %vm33, %v32
    %s35 = scalar_lea.vmem %s0, 10
    %v36 = vld [vmem:[%s35] sm:$0x1]
    %37 = vrot.lane.b32.xlu0 %v36, 80
    %v38 = vpop.permute.xlu0 %37
    %vm39 = vcmask 720512
    %40 = vst.msk [vmem:[#allocation0] sm:$0x1] %vm39, %v38
    %s41 = scalar_lea.vmem %s0, 9
    %v42 = vld [vmem:[%s41] sm:$0x1]
    %43 = vrot.lane.b32.xlu0 %v42, 72
    %v44 = vpop.permute.xlu0 %43
    %vm45 = vcmask 654912
    %46 = vst.msk [vmem:[#allocation0] sm:$0x1] %vm45, %v44
    %s47 = scalar_lea.vmem %s0, 8
    %v48 = vld [vmem:[%s47] sm:$0x1]
    %49 = vrot.lane.b32.xlu0 %v48, 64
    %v50 = vpop.permute.xlu0 %49
    %vm51 = vcmask 589312
    %52 = vst.msk [vmem:[#allocation0] sm:$0x1] %vm51, %v50
    %s53 = scalar_lea.vmem %s0, 7
    %v54 = vld [vmem:[%s53] sm:$0x1]
    %55 = vrot.lane.b32.xlu0 %v54, 56
    %v56 = vpop.permute.xlu0 %55
    %vm57 = vcmask 523712
    %58 = vst.msk [vmem:[#allocation0] sm:$0x1] %vm57, %v56
    %s59 = scalar_lea.vmem %s0, 6
    %v60 = vld [vmem:[%s59] sm:$0x1]
    %61 = vrot.lane.b32.xlu0 %v60, 48
    %v62 = vpop.permute.xlu0 %61
    %vm63 = vcmask 458112
    %64 = vst.msk [vmem:[#allocation0] sm:$0x1] %vm63, %v62
    %s65 = scalar_lea.vmem %s0, 5
    %v66 = vld [vmem:[%s65] sm:$0x1]
    %67 = vrot.lane.b32.xlu0 %v66, 40
    %v68 = vpop.permute.xlu0 %67
    %vm69 = vcmask 392512
    %70 = vst.msk [vmem:[#allocation0] sm:$0x1] %vm69, %v68
    %s71 = scalar_lea.vmem %s0, 4
    %v72 = vld [vmem:[%s71] sm:$0x1]
    %73 = vrot.lane.b32.xlu0 %v72, 32
    %v74 = vpop.permute.xlu0 %73
    %vm75 = vcmask 326912
    %76 = vst.msk [vmem:[#allocation0] sm:$0x1] %vm75, %v74
    %s77 = scalar_lea.vmem %s0, 3
    %v78 = vld [vmem:[%s77] sm:$0x1]
    %79 = vrot.lane.b32.xlu0 %v78, 24
    %v80 = vpop.permute.xlu0 %79
    %vm81 = vcmask 261312
    %82 = vst.msk [vmem:[#allocation0] sm:$0x1] %vm81, %v80
    %s83 = scalar_lea.vmem %s0, 2
    %v84 = vld [vmem:[%s83] sm:$0x1]
    %85 = vrot.lane.b32.xlu0 %v84, 16
    %v86 = vpop.permute.xlu0 %85
    %vm87 = vcmask 195712
    %88 = vst.msk [vmem:[#allocation0] sm:$0x1] %vm87, %v86
    %s89 = scalar_lea.vmem %s0, 1
    %v90 = vld [vmem:[%s89] sm:$0x1]
    %91 = vrot.lane.b32.xlu0 %v90, 8
    %v92 = vpop.permute.xlu0 %91
    %vm93 = vcmask 130112
    %94 = vst.msk [vmem:[#allocation0] sm:$0x1] %vm93, %v92
    %s96 = ssub.s32 2, 1
    %v97 = vld [vmem:[#allocation0] sm:%s96]
    %s99 = ssub.s32 2, 1
    %100 = vst [vmem:[%s1] sm:%s99] %v97

// kernel: lipread_forward.9
$region0: #{lipread_forward.9}
  #allocation0 [shape = 'u32[]', space=smem, size = 0x4, offset = 0x4, fixed_abs, tag = 'smem constant byte address 0x4 - core index']
  #allocation1 [shape = 'u32[72,128]{1,0:T(1,128)}', space=vmem, size = 0x9000, scoped, tag = 'internal scratch']
  %s0 = inlined_call_operand.vmem [shape: f32[16,16,128], index: 0, kind: input, shape index: {}]
  %s1 = inlined_call_operand.vmem [shape: f32[2,128], index: 1, kind: input, shape index: {}]
  %s2 = inlined_call_operand.vmem [shape: f32[128,64], index: 2, kind: input, shape index: {}]
  %s3 = inlined_call_operand.vmem [shape: f32[16,8,64], index: 3, kind: output, shape index: {}]
  %s4 = sld [smem:[#allocation0]]
  $region45: #{lipread_forward.9} parent=0
    _
  %s6 = ssub.s32 1, %s4
  %s7 = scalar_select 0, %s6, %s4
  loop: start=0, step=1, limit=4
  $region2: #{lipread_forward.9} parent=0 // loop_pre_header
    _
  $region3: #{lipread_forward.9} parent=0 // loop_header
    %s9 = sphi 0, %s13
    %p10 = scmp.ge.s32.totalorder %s9, 4
    %s19 = sphi 0, %s21
    %s22 = sphi 0, %s19
    %s23 = sphi 0, %s22
    %s39 = sphi 0, %s23
    %s43 = sphi 0, %s43
    %s45 = sphi 0, %s43
    %s46 = sphi 0, %s45
    %s60 = sphi 0, %s46
    %s64 = sphi 0, %s64
    %s66 = sphi 0, %s64
    %s67 = sphi 0, %s66
    %s81 = sphi 0, %s67
    %s87 = sphi 0, %s89
    %s90 = sphi 0, %s87
    %s91 = sphi 0, %s90
    %s107 = sphi 0, %s91
  $region4: #{lipread_forward.9} parent=0 // loop_header_branch
    %12 = sbr.rel (%p10) target = $region8
  $region5: #{lipread_forward.9} parent=0 // loop_body
    %s14 = ssub.s32 %s9, 1
    %s15 = ssub.s32 %s9, 2
    %s16 = sadd.s32 %s9, 1
    %s17 = ssub.s32 %s9, %s16
    %p18 = scmp.eq.s32.totalorder %s17, 0
    %s20 = sadd.s32 %s19, 1
    %s21 = scalar_select %p18, %s19, %s20
    %p24 = pneg %p18
    %p25 = scmp.eq.s32.totalorder %s9, 1
    %p26 = por %p24, %p25
    %p27 = scmp.ne.s32.totalorder %s19, %s22
    %p28 = scmp.eq.s32.totalorder %s9, 0
    %p29 = por %p27, %p28
    %p30 = scmp.ne.s32.totalorder %s19, %s22
    %p31 = scmp.eq.s32.totalorder %s14, 1
    %p32 = por %p30, %p31
    %p33 = scmp.ne.s32.totalorder %s22, %s23
    %p34 = scmp.eq.s32.totalorder %s14, 0
    %p35 = por %p33, %p34
    %p36 = scmp.ne.s32.totalorder %s22, %s23
    %p37 = scmp.eq.s32.totalorder %s15, 1
    %p38 = por %p36, %p37
    %p40 = scmp.ne.s32.totalorder %s23, %s39
    %p41 = scmp.eq.s32.totalorder %s15, 0
    %p42 = por %p40, %p41
    %s44 = sadd.s32 %s43, 1
    %p47 = scmp.eq.s32.totalorder %s9, 1
    %p48 = scmp.ne.s32.totalorder %s43, %s45
    %p49 = scmp.eq.s32.totalorder %s9, 0
    %p50 = por %p48, %p49
    %p51 = scmp.ne.s32.totalorder %s43, %s45
    %p52 = scmp.eq.s32.totalorder %s14, 1
    %p53 = por %p51, %p52
    %p54 = scmp.ne.s32.totalorder %s45, %s46
    %p55 = scmp.eq.s32.totalorder %s14, 0
    %p56 = por %p54, %p55
    %p57 = scmp.ne.s32.totalorder %s45, %s46
    %p58 = scmp.eq.s32.totalorder %s15, 1
    %p59 = por %p57, %p58
    %p61 = scmp.ne.s32.totalorder %s46, %s60
    %p62 = scmp.eq.s32.totalorder %s15, 0
    %p63 = por %p61, %p62
    %s65 = sadd.s32 %s64, 1
    %p68 = scmp.eq.s32.totalorder %s9, 1
    %p69 = scmp.ne.s32.totalorder %s64, %s66
    %p70 = scmp.eq.s32.totalorder %s9, 0
    %p71 = por %p69, %p70
    %p72 = scmp.ne.s32.totalorder %s64, %s66
    %p73 = scmp.eq.s32.totalorder %s14, 1
    %p74 = por %p72, %p73
    %p75 = scmp.ne.s32.totalorder %s66, %s67
    %p76 = scmp.eq.s32.totalorder %s14, 0
    %p77 = por %p75, %p76
    %p78 = scmp.ne.s32.totalorder %s66, %s67
    %p79 = scmp.eq.s32.totalorder %s15, 1
    %p80 = por %p78, %p79
    %p82 = scmp.ne.s32.totalorder %s67, %s81
    %p83 = scmp.eq.s32.totalorder %s15, 0
    %p84 = por %p82, %p83
    %s85 = ssub.s32 %s9, %s16
    %p86 = scmp.eq.s32.totalorder %s85, 0
    %s88 = sadd.s32 %s87, 1
    %s89 = scalar_select %p86, %s87, %s88
    %p92 = pneg %p86
    %p93 = scmp.eq.s32.totalorder %s9, 1
    %p94 = por %p92, %p93
    %p95 = scmp.ne.s32.totalorder %s87, %s90
    %p96 = scmp.eq.s32.totalorder %s9, 0
    %p97 = por %p95, %p96
    %p98 = scmp.ne.s32.totalorder %s87, %s90
    %p99 = scmp.eq.s32.totalorder %s14, 1
    %p100 = por %p98, %p99
    %p101 = scmp.ne.s32.totalorder %s90, %s91
    %p102 = scmp.eq.s32.totalorder %s14, 0
    %p103 = por %p101, %p102
    %p104 = scmp.ne.s32.totalorder %s90, %s91
    %p105 = scmp.eq.s32.totalorder %s15, 1
    %p106 = por %p104, %p105
    %p108 = scmp.ne.s32.totalorder %s91, %s107
    %p109 = scmp.eq.s32.totalorder %s15, 0
    %p110 = por %p108, %p109
    %p111 = scmp.le.s32.totalorder 1, %s9
    %p112 = scmp.lt.s32.totalorder %s9, 3
    %p113 = pnand %p111, %p112
    %p114 = pneg %p113
    // Predicated region
    $region9: #{lipread_forward.9} parent=5 // pred_check
      _
    $region10: #{lipread_forward.9} parent=5 // pred_check_branch
      %116 = sbr.rel (%p113) target = $region12
    $region11: #{lipread_forward.9} parent=5 // pred_region
      %s117 = ssub.s32 %s9, 1
      // Predicated region
      $region13: #{lipread_forward.9} parent=11 // pred_check
        %p118 = pneg %p56
      $region14: #{lipread_forward.9} parent=11 // pred_check_branch
        %120 = sbr.rel (%p118) target = $region16
      $region15: #{lipread_forward.9} parent=11 // pred_region
        _
      $region16: #{lipread_forward.9} parent=11 // pred_fallthru
        _
      // Predicated region
      $region17: #{lipread_forward.9} parent=11 // pred_check
        %p121 = pneg %p77
      $region18: #{lipread_forward.9} parent=11 // pred_check_branch
        %123 = sbr.rel (%p121) target = $region20
      $region19: #{lipread_forward.9} parent=11 // pred_region
        _
      $region20: #{lipread_forward.9} parent=11 // pred_fallthru
        _
    $region12: #{lipread_forward.9} parent=5 // pred_fallthru
      _
    %p124 = scmp.lt.s32.totalorder %s9, 2
    // Predicated region
    $region21: #{lipread_forward.9} parent=5 // pred_check
      %p125 = pneg %p124
    $region22: #{lipread_forward.9} parent=5 // pred_check_branch
      %127 = sbr.rel (%p125) target = $region24
    $region23: #{lipread_forward.9} parent=5 // pred_region
      // Predicated region
      $region25: #{lipread_forward.9} parent=23 // pred_check
        %p128 = pneg %p29
      $region26: #{lipread_forward.9} parent=23 // pred_check_branch
        %130 = sbr.rel (%p128) target = $region28
      $region27: #{lipread_forward.9} parent=23 // pred_region
        %s131 = smul.u32 8, %s9
        %p132 = scmp.lt.s32.totalorder %s131, 15
        %s133 = scalar_select %p132, %s131, 15
        %s134 = smul.addr %s133, 2
        %s135 = smul.addr %s134, 8
        %s136 = scalar_lea.vmem %s0, %s135
        %s137 = smul.u32 8, %s9
      $region28: #{lipread_forward.9} parent=23 // pred_fallthru
        _
    $region24: #{lipread_forward.9} parent=5 // pred_fallthru
      _
    %p138 = scmp.le.s32.totalorder 1, %s9
    %p139 = scmp.lt.s32.totalorder %s9, 3
    %p140 = pnand %p138, %p139
    %p141 = pneg %p140
    // Predicated region
    $region29: #{lipread_forward.9} parent=5 // pred_check
      _
    $region30: #{lipread_forward.9} parent=5 // pred_check_branch
      %143 = sbr.rel (%p140) target = $region32
    $region31: #{lipread_forward.9} parent=5 // pred_region
      %s144 = ssub.s32 %s9, 1
      %s145 = smul.u32 8, %s14
      %p146 = scmp.lt.s32.totalorder %s145, 15
      %s147 = scalar_select %p146, %s145, 15
      %s148 = smul.addr %s147, 2
      %s149 = smul.addr %s148, 8
      %s150 = scalar_lea.vmem %s0, %s149
      %p151 = pneg %p35
      %p152 = pneg %p32
      %p153 = pneg %p56
      %p154 = pneg %p53
      %p155 = pneg %p77
      %p156 = pneg %p74
      %p157 = pneg %p103
      %p158 = pneg %p100
      %s159 = smul.u32 8, %s14
      %p160 = scmp.lt.s32.totalorder %s159, 15
      %s161 = scalar_select %p160, %s159, 15
      %s162 = smul.addr %s161, 8
      %s163 = scalar_lea.vmem %s3, %s162
      %s164 = smul.u32 8, %s14
      %p165 = scmp.lt.s32.totalorder %s164, 15
      %s166 = scalar_select %p165, %s164, 15
      %s167 = smul.addr %s166, 2
      %s168 = smul.addr %s167, 8
      %s169 = scalar_lea.vmem %s0, %s168
      %s170 = smul.u32 8, %s14
      %s171 = smul.u32 8, %s14
      %p172 = scmp.lt.s32.totalorder %s171, 15
      %s173 = scalar_select %p172, %s171, 15
      %s174 = smul.addr %s173, 8
      %s175 = scalar_lea.vmem %s3, %s174
      %s176 = smul.u32 8, %s14
      %v177 = vld [vmem:[%s169] sm:$0xff]
      %v178 = vld [vmem:[%s169 + $0x8] sm:$0xff]
      %v179 = vld [vmem:[%s169 + $0x10] sm:$0xff]
      %v180 = vld [vmem:[%s169 + $0x18] sm:$0xff]
      %v181 = vld [vmem:[%s169 + $0x20] sm:$0xff]
      %v182 = vld [vmem:[%s169 + $0x28] sm:$0xff]
      %v183 = vld [vmem:[%s169 + $0x30] sm:$0xff]
      %v184 = vld [vmem:[%s169 + $0x38] sm:$0xff]
      %v185 = vld [vmem:[%s169 + $0x40] sm:$0xff]
      %v186 = vld [vmem:[%s169 + $0x48] sm:$0xff]
      %v187 = vld [vmem:[%s169 + $0x50] sm:$0xff]
      %v188 = vld [vmem:[%s169 + $0x58] sm:$0xff]
      %v189 = vld [vmem:[%s169 + $0x60] sm:$0xff]
      %v190 = vld [vmem:[%s169 + $0x68] sm:$0xff]
      %v191 = vld [vmem:[%s169 + $0x70] sm:$0xff]
      %v192 = vld [vmem:[%s169 + $0x78] sm:$0xff]
      %v193 = vld [vmem:[%s1] sm:$0x1]
      %v194 = vperm.slane %v193, 0
      %v195 = vmul.f32 %v177, %v194
      %v196 = vmul.f32 %v178, %v194
      %v197 = vmul.f32 %v179, %v194
      %v198 = vmul.f32 %v180, %v194
      %v199 = vmul.f32 %v181, %v194
      %v200 = vmul.f32 %v182, %v194
      %v201 = vmul.f32 %v183, %v194
      %v202 = vmul.f32 %v184, %v194
      %v203 = vmul.f32 %v185, %v194
      %v204 = vmul.f32 %v186, %v194
      %v205 = vmul.f32 %v187, %v194
      %v206 = vmul.f32 %v188, %v194
      %v207 = vmul.f32 %v189, %v194
      %v208 = vmul.f32 %v190, %v194
      %v209 = vmul.f32 %v191, %v194
      %v210 = vmul.f32 %v192, %v194
      %v211 = vld [vmem:[%s1 + $0x1] sm:$0x1]
      %v212 = vperm.slane %v211, 0
      %v213 = vadd.f32 %v195, %v212
      %v214 = vadd.f32 %v196, %v212
      %v215 = vadd.f32 %v197, %v212
      %v216 = vadd.f32 %v198, %v212
      %v217 = vadd.f32 %v199, %v212
      %v218 = vadd.f32 %v200, %v212
      %v219 = vadd.f32 %v201, %v212
      %v220 = vadd.f32 %v202, %v212
      %v221 = vadd.f32 %v203, %v212
      %v222 = vadd.f32 %v204, %v212
      %v223 = vadd.f32 %v205, %v212
      %v224 = vadd.f32 %v206, %v212
      %v225 = vadd.f32 %v207, %v212
      %v226 = vadd.f32 %v208, %v212
      %v227 = vadd.f32 %v209, %v212
      %v228 = vadd.f32 %v210, %v212
      %v229 = vmax.f32 %v213, 0.0
      %v230 = vmax.f32 %v214, 0.0
      %v231 = vmax.f32 %v215, 0.0
      %v232 = vmax.f32 %v216, 0.0
      %v233 = vmax.f32 %v217, 0.0
      %v234 = vmax.f32 %v218, 0.0
      %v235 = vmax.f32 %v219, 0.0
      %v236 = vmax.f32 %v220, 0.0
      %v237 = vmax.f32 %v221, 0.0
      %v238 = vmax.f32 %v222, 0.0
      %v239 = vmax.f32 %v223, 0.0
      %v240 = vmax.f32 %v224, 0.0
      %v241 = vmax.f32 %v225, 0.0
      %v242 = vmax.f32 %v226, 0.0
      %v243 = vmax.f32 %v227, 0.0
      %v244 = vmax.f32 %v228, 0.0
      %261 = vrot.lane.b32.xlu0 %v229, 8
      %v262 = vpop.permute.xlu0 %261
      %263 = vrot.lane.b32.xlu0 %v230, 8
      %v264 = vpop.permute.xlu0 %263
      %265 = vrot.lane.b32.xlu0 %v231, 8
      %v266 = vpop.permute.xlu0 %265
      %267 = vrot.lane.b32.xlu0 %v232, 8
      %v268 = vpop.permute.xlu0 %267
      %269 = vrot.lane.b32.xlu0 %v233, 8
      %v270 = vpop.permute.xlu0 %269
      %271 = vrot.lane.b32.xlu0 %v234, 8
      %v272 = vpop.permute.xlu0 %271
      %273 = vrot.lane.b32.xlu0 %v235, 8
      %v274 = vpop.permute.xlu0 %273
      %275 = vrot.lane.b32.xlu0 %v236, 8
      %v276 = vpop.permute.xlu0 %275
      %277 = vrot.lane.b32.xlu0 %v237, 8
      %v278 = vpop.permute.xlu0 %277
      %279 = vrot.lane.b32.xlu0 %v238, 8
      %v280 = vpop.permute.xlu0 %279
      %281 = vrot.lane.b32.xlu0 %v239, 8
      %v282 = vpop.permute.xlu0 %281
      %283 = vrot.lane.b32.xlu0 %v240, 8
      %v284 = vpop.permute.xlu0 %283
      %285 = vrot.lane.b32.xlu0 %v241, 8
      %v286 = vpop.permute.xlu0 %285
      %287 = vrot.lane.b32.xlu0 %v242, 8
      %v288 = vpop.permute.xlu0 %287
      %289 = vrot.lane.b32.xlu0 %v243, 8
      %v290 = vpop.permute.xlu0 %289
      %291 = vrot.lane.b32.xlu0 %v244, 8
      %v292 = vpop.permute.xlu0 %291
      %vm309 = vcmask 64512
      %v310 = vsel %vm309, 0.0, %v262
      %v311 = vsel %vm309, 0.0, %v264
      %v312 = vsel %vm309, 0.0, %v266
      %v313 = vsel %vm309, 0.0, %v268
      %v314 = vsel %vm309, 0.0, %v270
      %v315 = vsel %vm309, 0.0, %v272
      %v316 = vsel %vm309, 0.0, %v274
      %v317 = vsel %vm309, 0.0, %v276
      %v318 = vsel %vm309, 0.0, %v278
      %v319 = vsel %vm309, 0.0, %v280
      %v320 = vsel %vm309, 0.0, %v282
      %v321 = vsel %vm309, 0.0, %v284
      %v322 = vsel %vm309, 0.0, %v286
      %v323 = vsel %vm309, 0.0, %v288
      %v324 = vsel %vm309, 0.0, %v290
      %v325 = vsel %vm309, 0.0, %v292
      %326 = vrot.lane.b32.xlu0 %v229, 120
      %v327 = vpop.permute.xlu0 %326
      %328 = vrot.lane.b32.xlu0 %v230, 120
      %v329 = vpop.permute.xlu0 %328
      %330 = vrot.lane.b32.xlu0 %v231, 120
      %v331 = vpop.permute.xlu0 %330
      %332 = vrot.lane.b32.xlu0 %v232, 120
      %v333 = vpop.permute.xlu0 %332
      %334 = vrot.lane.b32.xlu0 %v233, 120
      %v335 = vpop.permute.xlu0 %334
      %336 = vrot.lane.b32.xlu0 %v234, 120
      %v337 = vpop.permute.xlu0 %336
      %338 = vrot.lane.b32.xlu0 %v235, 120
      %v339 = vpop.permute.xlu0 %338
      %340 = vrot.lane.b32.xlu0 %v236, 120
      %v341 = vpop.permute.xlu0 %340
      %342 = vrot.lane.b32.xlu0 %v237, 120
      %v343 = vpop.permute.xlu0 %342
      %344 = vrot.lane.b32.xlu0 %v238, 120
      %v345 = vpop.permute.xlu0 %344
      %346 = vrot.lane.b32.xlu0 %v239, 120
      %v347 = vpop.permute.xlu0 %346
      %348 = vrot.lane.b32.xlu0 %v240, 120
      %v349 = vpop.permute.xlu0 %348
      %350 = vrot.lane.b32.xlu0 %v241, 120
      %v351 = vpop.permute.xlu0 %350
      %352 = vrot.lane.b32.xlu0 %v242, 120
      %v353 = vpop.permute.xlu0 %352
      %354 = vrot.lane.b32.xlu0 %v243, 120
      %v355 = vpop.permute.xlu0 %354
      %356 = vrot.lane.b32.xlu0 %v244, 120
      %v357 = vpop.permute.xlu0 %356
      %vm374 = vcmask 982016
      %v375 = vsel %vm374, %v327, 0.0
      %v376 = vsel %vm374, %v329, 0.0
      %v377 = vsel %vm374, %v331, 0.0
      %v378 = vsel %vm374, %v333, 0.0
      %v379 = vsel %vm374, %v335, 0.0
      %v380 = vsel %vm374, %v337, 0.0
      %v381 = vsel %vm374, %v339, 0.0
      %v382 = vsel %vm374, %v341, 0.0
      %v383 = vsel %vm374, %v343, 0.0
      %v384 = vsel %vm374, %v345, 0.0
      %v385 = vsel %vm374, %v347, 0.0
      %v386 = vsel %vm374, %v349, 0.0
      %v387 = vsel %vm374, %v351, 0.0
      %v388 = vsel %vm374, %v353, 0.0
      %v389 = vsel %vm374, %v355, 0.0
      %v390 = vsel %vm374, %v357, 0.0
      %v391 = vmax.f32 %v229, %v310
      %v392 = vmax.f32 %v230, %v311
      %v393 = vmax.f32 %v231, %v312
      %v394 = vmax.f32 %v232, %v313
      %v395 = vmax.f32 %v233, %v314
      %v396 = vmax.f32 %v234, %v315
      %v397 = vmax.f32 %v235, %v316
      %v398 = vmax.f32 %v236, %v317
      %v399 = vmax.f32 %v237, %v318
      %v400 = vmax.f32 %v238, %v319
      %v401 = vmax.f32 %v239, %v320
      %v402 = vmax.f32 %v240, %v321
      %v403 = vmax.f32 %v241, %v322
      %v404 = vmax.f32 %v242, %v323
      %v405 = vmax.f32 %v243, %v324
      %v406 = vmax.f32 %v244, %v325
      %v407 = vmax.f32 %v391, %v375
      %v408 = vmax.f32 %v392, %v376
      %v409 = vmax.f32 %v393, %v377
      %v410 = vmax.f32 %v394, %v378
      %v411 = vmax.f32 %v395, %v379
      %v412 = vmax.f32 %v396, %v380
      %v413 = vmax.f32 %v397, %v381
      %v414 = vmax.f32 %v398, %v382
      %v415 = vmax.f32 %v399, %v383
      %v416 = vmax.f32 %v400, %v384
      %v417 = vmax.f32 %v401, %v385
      %v418 = vmax.f32 %v402, %v386
      %v419 = vmax.f32 %v403, %v387
      %v420 = vmax.f32 %v404, %v388
      %v421 = vmax.f32 %v405, %v389
      %v422 = vmax.f32 %v406, %v390
      %vm439 = vcmask 1040384
      %v440 = vrot.slane %v407, 7
      %v441 = vrot.slane %v408, 7
      %v442 = vsel %vm439, %v440, %v441
      %v443 = vrot.slane %v409, 7
      %v444 = vrot.slane %v410, 7
      %v445 = vsel %vm439, %v443, %v444
      %v446 = vrot.slane %v411, 7
      %v447 = vrot.slane %v412, 7
      %v448 = vsel %vm439, %v446, %v447
      %v449 = vrot.slane %v413, 7
      %v450 = vrot.slane %v414, 7
      %v451 = vsel %vm439, %v449, %v450
      %v452 = vrot.slane %v415, 7
      %v453 = vrot.slane %v416, 7
      %v454 = vsel %vm439, %v452, %v453
      %v455 = vrot.slane %v417, 7
      %v456 = vrot.slane %v418, 7
      %v457 = vsel %vm439, %v455, %v456
      %v458 = vrot.slane %v419, 7
      %v459 = vrot.slane %v420, 7
      %v460 = vsel %vm439, %v458, %v459
      %v461 = vrot.slane %v421, 7
      %v462 = vrot.slane %v422, 7
      %v463 = vsel %vm439, %v461, %v462
      %v480 = vsel %vm439, 0.0, %v440
      %v481 = vsel %vm439, 0.0, %v443
      %v482 = vsel %vm439, 0.0, %v446
      %v483 = vsel %vm439, 0.0, %v449
      %v484 = vsel %vm439, 0.0, %v452
      %v485 = vsel %vm439, 0.0, %v455
      %v486 = vsel %vm439, 0.0, %v458
      %v487 = vsel %vm439, 0.0, %v461
      %vm488 = vcmask 1046528
      %v489 = vrot.slane %v407, 1
      %v490 = vrot.slane %v408, 1
      %v491 = vsel %vm488, %v489, %v490
      %v492 = vrot.slane %v409, 1
      %v493 = vrot.slane %v410, 1
      %v494 = vsel %vm488, %v492, %v493
      %v495 = vrot.slane %v411, 1
      %v496 = vrot.slane %v412, 1
      %v497 = vsel %vm488, %v495, %v496
      %v498 = vrot.slane %v413, 1
      %v499 = vrot.slane %v414, 1
      %v500 = vsel %vm488, %v498, %v499
      %v501 = vrot.slane %v415, 1
      %v502 = vrot.slane %v416, 1
      %v503 = vsel %vm488, %v501, %v502
      %v504 = vrot.slane %v417, 1
      %v505 = vrot.slane %v418, 1
      %v506 = vsel %vm488, %v504, %v505
      %v507 = vrot.slane %v419, 1
      %v508 = vrot.slane %v420, 1
      %v509 = vsel %vm488, %v507, %v508
      %v510 = vrot.slane %v421, 1
      %v511 = vrot.slane %v422, 1
      %v512 = vsel %vm488, %v510, %v511
      %v529 = vsel %vm488, %v490, 0.0
      %v530 = vsel %vm488, %v493, 0.0
      %v531 = vsel %vm488, %v496, 0.0
      %v532 = vsel %vm488, %v499, 0.0
      %v533 = vsel %vm488, %v502, 0.0
      %v534 = vsel %vm488, %v505, 0.0
      %v535 = vsel %vm488, %v508, 0.0
      %v536 = vsel %vm488, %v511, 0.0
      %v537 = vmax.f32 %v407, %v480
      %v538 = vmax.f32 %v408, %v442
      %v539 = vmax.f32 %v409, %v481
      %v540 = vmax.f32 %v410, %v445
      %v541 = vmax.f32 %v411, %v482
      %v542 = vmax.f32 %v412, %v448
      %v543 = vmax.f32 %v413, %v483
      %v544 = vmax.f32 %v414, %v451
      %v545 = vmax.f32 %v415, %v484
      %v546 = vmax.f32 %v416, %v454
      %v547 = vmax.f32 %v417, %v485
      %v548 = vmax.f32 %v418, %v457
      %v549 = vmax.f32 %v419, %v486
      %v550 = vmax.f32 %v420, %v460
      %v551 = vmax.f32 %v421, %v487
      %v552 = vmax.f32 %v422, %v463
      %v553 = vmax.f32 %v537, %v491
      %v554 = vmax.f32 %v538, %v529
      %v555 = vmax.f32 %v539, %v494
      %v556 = vmax.f32 %v540, %v530
      %v557 = vmax.f32 %v541, %v497
      %v558 = vmax.f32 %v542, %v531
      %v559 = vmax.f32 %v543, %v500
      %v560 = vmax.f32 %v544, %v532
      %v561 = vmax.f32 %v545, %v503
      %v562 = vmax.f32 %v546, %v533
      %v563 = vmax.f32 %v547, %v506
      %v564 = vmax.f32 %v548, %v534
      %v565 = vmax.f32 %v549, %v509
      %v566 = vmax.f32 %v550, %v535
      %v567 = vmax.f32 %v551, %v512
      %v568 = vmax.f32 %v552, %v536
      %v569 = vld [vmem:[%s2] sm:$0xff]
      %v570 = vld [vmem:[%s2 + $0x8] sm:$0xff]
      %v571 = vld [vmem:[%s2 + $0x10] sm:$0xff]
      %v572 = vld [vmem:[%s2 + $0x18] sm:$0xff]
      %v573 = vld [vmem:[%s2 + $0x20] sm:$0xff]
      %v574 = vld [vmem:[%s2 + $0x28] sm:$0xff]
      %v575 = vld [vmem:[%s2 + $0x30] sm:$0xff]
      %v576 = vld [vmem:[%s2 + $0x38] sm:$0xff]
      %v577 = vld [vmem:[%s2 + $0x40] sm:$0xff]
      %v578 = vld [vmem:[%s2 + $0x48] sm:$0xff]
      %v579 = vld [vmem:[%s2 + $0x50] sm:$0xff]
      %v580 = vld [vmem:[%s2 + $0x58] sm:$0xff]
      %v581 = vld [vmem:[%s2 + $0x60] sm:$0xff]
      %v582 = vld [vmem:[%s2 + $0x68] sm:$0xff]
      %v583 = vld [vmem:[%s2 + $0x70] sm:$0xff]
      %v584 = vld [vmem:[%s2 + $0x78] sm:$0xff]
      %585 = vmatpush.msra.mxu0 %v584
      %586 = vmatpush.msra.mxu0 %v583
      %587 = vmatpush.msra.mxu0 %v582
      %588 = vmatpush.msra.mxu0 %v581
      %589 = vmatpush.msra.mxu0 %v580
      %590 = vmatpush.msra.mxu0 %v579
      %591 = vmatpush.msra.mxu0 %v578
      %592 = vmatpush.msra.mxu0 %v577
      %593 = vmatpush.msra.mxu0 %v576
      %594 = vmatpush.msra.mxu0 %v575
      %595 = vmatpush.msra.mxu0 %v574
      %596 = vmatpush.msra.mxu0 %v573
      %597 = vmatpush.msra.mxu0 %v572
      %598 = vmatpush.msra.mxu0 %v571
      %599 = vmatpush.msra.mxu0 %v570
      %600 = vmatpush.msra.mxu0 %v569
      %601 = vmatmul.f32.gmra.mxu0 %v553
      %v602 = vpop.f32.mrf.mxu0
      %v603 = vadd.f32 0.0, %v602
      %604 = vmatmul.f32.gmra.mxu0 %v554
      %v605 = vpop.f32.mrf.mxu0
      %v606 = vadd.f32 0.0, %v605
      %607 = vmatmul.f32.gmra.mxu0 %v555
      %v608 = vpop.f32.mrf.mxu0
      %v609 = vadd.f32 0.0, %v608
      %610 = vmatmul.f32.gmra.mxu0 %v556
      %v611 = vpop.f32.mrf.mxu0
      %v612 = vadd.f32 0.0, %v611
      %613 = vmatmul.f32.gmra.mxu0 %v557
      %v614 = vpop.f32.mrf.mxu0
      %v615 = vadd.f32 0.0, %v614
      %616 = vmatmul.f32.gmra.mxu0 %v558
      %v617 = vpop.f32.mrf.mxu0
      %v618 = vadd.f32 0.0, %v617
      %619 = vmatmul.f32.gmra.mxu0 %v559
      %v620 = vpop.f32.mrf.mxu0
      %v621 = vadd.f32 0.0, %v620
      %622 = vmatmul.f32.gmra.mxu0 %v560
      %v623 = vpop.f32.mrf.mxu0
      %v624 = vadd.f32 0.0, %v623
      %625 = vmatmul.f32.gmra.mxu0 %v561
      %v626 = vpop.f32.mrf.mxu0
      %v627 = vadd.f32 0.0, %v626
      %628 = vmatmul.f32.gmra.mxu0 %v562
      %v629 = vpop.f32.mrf.mxu0
      %v630 = vadd.f32 0.0, %v629
      %631 = vmatmul.f32.gmra.mxu0 %v563
      %v632 = vpop.f32.mrf.mxu0
      %v633 = vadd.f32 0.0, %v632
      %634 = vmatmul.f32.gmra.mxu0 %v564
      %v635 = vpop.f32.mrf.mxu0
      %v636 = vadd.f32 0.0, %v635
      %637 = vmatmul.f32.gmra.mxu0 %v565
      %v638 = vpop.f32.mrf.mxu0
      %v639 = vadd.f32 0.0, %v638
      %640 = vmatmul.f32.gmra.mxu0 %v566
      %v641 = vpop.f32.mrf.mxu0
      %v642 = vadd.f32 0.0, %v641
      %643 = vmatmul.f32.gmra.mxu0 %v567
      %v644 = vpop.f32.mrf.mxu0
      %v645 = vadd.f32 0.0, %v644
      %646 = vmatmul.f32.gmra.mxu0 %v568
      %v647 = vpop.f32.mrf.mxu0
      %v648 = vadd.f32 0.0, %v647
      %649 = vdwg.mxu0
      %vm650 = vcmask 516096
      %651 = vst.msk [vmem:[%s175] sm:$0x1] %vm650, %v603
      %652 = vst.msk [vmem:[%s175 + $0x8] sm:$0x1] %vm650, %v609
      %653 = vst.msk [vmem:[%s175 + $0x10] sm:$0x1] %vm650, %v615
      %654 = vst.msk [vmem:[%s175 + $0x18] sm:$0x1] %vm650, %v621
      %655 = vst.msk [vmem:[%s175 + $0x20] sm:$0x1] %vm650, %v627
      %656 = vst.msk [vmem:[%s175 + $0x28] sm:$0x1] %vm650, %v633
      %657 = vst.msk [vmem:[%s175 + $0x30] sm:$0x1] %vm650, %v639
      %658 = vst.msk [vmem:[%s175 + $0x38] sm:$0x1] %vm650, %v645
      %vm659 = vcmask 518146
      %660 = vst.msk [vmem:[%s175 - $0x1] sm:$0x4] %vm659, %v603
      %661 = vst.msk [vmem:[%s175 + $0x7] sm:$0x4] %vm659, %v609
      %662 = vst.msk [vmem:[%s175 + $0xf] sm:$0x4] %vm659, %v615
      %663 = vst.msk [vmem:[%s175 + $0x17] sm:$0x4] %vm659, %v621
      %664 = vst.msk [vmem:[%s175 + $0x1f] sm:$0x4] %vm659, %v627
      %665 = vst.msk [vmem:[%s175 + $0x27] sm:$0x4] %vm659, %v633
      %666 = vst.msk [vmem:[%s175 + $0x2f] sm:$0x4] %vm659, %v639
      %667 = vst.msk [vmem:[%s175 + $0x37] sm:$0x4] %vm659, %v645
      %vm668 = vcmask 520196
      %669 = vst.msk [vmem:[%s175 - $0x2] sm:$0x10] %vm668, %v603
      %670 = vst.msk [vmem:[%s175 + $0x6] sm:$0x10] %vm668, %v609
      %671 = vst.msk [vmem:[%s175 + $0xe] sm:$0x10] %vm668, %v615
      %672 = vst.msk [vmem:[%s175 + $0x16] sm:$0x10] %vm668, %v621
      %673 = vst.msk [vmem:[%s175 + $0x1e] sm:$0x10] %vm668, %v627
      %674 = vst.msk [vmem:[%s175 + $0x26] sm:$0x10] %vm668, %v633
      %675 = vst.msk [vmem:[%s175 + $0x2e] sm:$0x10] %vm668, %v639
      %676 = vst.msk [vmem:[%s175 + $0x36] sm:$0x10] %vm668, %v645
      %vm677 = vcmask 522246
      %678 = vst.msk [vmem:[%s175 - $0x3] sm:$0x40] %vm677, %v603
      %679 = vst.msk [vmem:[%s175 + $0x5] sm:$0x40] %vm677, %v609
      %680 = vst.msk [vmem:[%s175 + $0xd] sm:$0x40] %vm677, %v615
      %681 = vst.msk [vmem:[%s175 + $0x15] sm:$0x40] %vm677, %v621
      %682 = vst.msk [vmem:[%s175 + $0x1d] sm:$0x40] %vm677, %v627
      %683 = vst.msk [vmem:[%s175 + $0x25] sm:$0x40] %vm677, %v633
      %684 = vst.msk [vmem:[%s175 + $0x2d] sm:$0x40] %vm677, %v639
      %685 = vst.msk [vmem:[%s175 + $0x35] sm:$0x40] %vm677, %v645
      %686 = vst.msk [vmem:[%s175 + $0x4] sm:$0x1] %vm650, %v606
      %687 = vst.msk [vmem:[%s175 + $0xc] sm:$0x1] %vm650, %v612
      %688 = vst.msk [vmem:[%s175 + $0x14] sm:$0x1] %vm650, %v618
      %689 = vst.msk [vmem:[%s175 + $0x1c] sm:$0x1] %vm650, %v624
      %690 = vst.msk [vmem:[%s175 + $0x24] sm:$0x1] %vm650, %v630
      %691 = vst.msk [vmem:[%s175 + $0x2c] sm:$0x1] %vm650, %v636
      %692 = vst.msk [vmem:[%s175 + $0x34] sm:$0x1] %vm650, %v642
      %693 = vst.msk [vmem:[%s175 + $0x3c] sm:$0x1] %vm650, %v648
      %694 = vst.msk [vmem:[%s175 + $0x3] sm:$0x4] %vm659, %v606
      %695 = vst.msk [vmem:[%s175 + $0xb] sm:$0x4] %vm659, %v612
      %696 = vst.msk [vmem:[%s175 + $0x13] sm:$0x4] %vm659, %v618
      %697 = vst.msk [vmem:[%s175 + $0x1b] sm:$0x4] %vm659, %v624
      %698 = vst.msk [vmem:[%s175 + $0x23] sm:$0x4] %vm659, %v630
      %699 = vst.msk [vmem:[%s175 + $0x2b] sm:$0x4] %vm659, %v636
      %700 = vst.msk [vmem:[%s175 + $0x33] sm:$0x4] %vm659, %v642
      %701 = vst.msk [vmem:[%s175 + $0x3b] sm:$0x4] %vm659, %v648
      %702 = vst.msk [vmem:[%s175 + $0x2] sm:$0x10] %vm668, %v606
      %703 = vst.msk [vmem:[%s175 + $0xa] sm:$0x10] %vm668, %v612
      %704 = vst.msk [vmem:[%s175 + $0x12] sm:$0x10] %vm668, %v618
      %705 = vst.msk [vmem:[%s175 + $0x1a] sm:$0x10] %vm668, %v624
      %706 = vst.msk [vmem:[%s175 + $0x22] sm:$0x10] %vm668, %v630
      %707 = vst.msk [vmem:[%s175 + $0x2a] sm:$0x10] %vm668, %v636
      %708 = vst.msk [vmem:[%s175 + $0x32] sm:$0x10] %vm668, %v642
      %709 = vst.msk [vmem:[%s175 + $0x3a] sm:$0x10] %vm668, %v648
      %710 = vst.msk [vmem:[%s175 + $0x1] sm:$0x40] %vm677, %v606
      %711 = vst.msk [vmem:[%s175 + $0x9] sm:$0x40] %vm677, %v612
      %712 = vst.msk [vmem:[%s175 + $0x11] sm:$0x40] %vm677, %v618
      %713 = vst.msk [vmem:[%s175 + $0x19] sm:$0x40] %vm677, %v624
      %714 = vst.msk [vmem:[%s175 + $0x21] sm:$0x40] %vm677, %v630
      %715 = vst.msk [vmem:[%s175 + $0x29] sm:$0x40] %vm677, %v636
      %716 = vst.msk [vmem:[%s175 + $0x31] sm:$0x40] %vm677, %v642
      %717 = vst.msk [vmem:[%s175 + $0x39] sm:$0x40] %vm677, %v648
      %s718 = smul.u32 8, %s14
      %p719 = scmp.lt.s32.totalorder %s718, 15
      %s720 = scalar_select %p719, %s718, 15
      %s721 = smul.addr %s720, 8
      %s722 = scalar_lea.vmem %s3, %s721
      // Predicated region
      $region33: #{lipread_forward.9} parent=31 // pred_check
        %p723 = pneg %p100
      $region34: #{lipread_forward.9} parent=31 // pred_check_branch
        %725 = sbr.rel (%p723) target = $region36
      $region35: #{lipread_forward.9} parent=31 // pred_region
        %s726 = smul.u32 8, %s14
      $region36: #{lipread_forward.9} parent=31 // pred_fallthru
        _
    $region32: #{lipread_forward.9} parent=5 // pred_fallthru
      _
    %p727 = scmp.le.s32.totalorder 2, %s9
    // Predicated region
    $region37: #{lipread_forward.9} parent=5 // pred_check
      %p728 = pneg %p727
    $region38: #{lipread_forward.9} parent=5 // pred_check_branch
      %730 = sbr.rel (%p728) target = $region40
    $region39: #{lipread_forward.9} parent=5 // pred_region
      %s731 = ssub.s32 %s9, 2
      // Predicated region
      $region41: #{lipread_forward.9} parent=39 // pred_check
        %p732 = pneg %p106
      $region42: #{lipread_forward.9} parent=39 // pred_check_branch
        %734 = sbr.rel (%p732) target = $region44
      $region43: #{lipread_forward.9} parent=39 // pred_region
        %s735 = smul.u32 8, %s15
        %p736 = scmp.lt.s32.totalorder %s735, 15
        %s737 = scalar_select %p736, %s735, 15
        %s738 = smul.addr %s737, 8
        %s739 = scalar_lea.vmem %s3, %s738
      $region44: #{lipread_forward.9} parent=39 // pred_fallthru
        _
    $region40: #{lipread_forward.9} parent=5 // pred_fallthru
      _
  $region6: #{lipread_forward.9} parent=0 // loop_footer
    %s13 = sadd.s32 1, %s9
  $region7: #{lipread_forward.9} parent=0 // loop_footer_branch
    %8 = sbr.rel target = $region3
  $region8: #{lipread_forward.9} parent=0 // loop_exit
    _

// kernel: lipread_forward.8
$region0: #{lipread_forward.8}
  #allocation0 [shape = 'u32[]', space=smem, size = 0x4, offset = 0x4, fixed_abs, tag = 'smem constant byte address 0x4 - core index']
  #allocation1 [shape = 'u32[72,128]{1,0:T(1,128)}', space=vmem, size = 0x9000, scoped, tag = 'internal scratch']
  %s0 = inlined_call_operand.vmem [shape: f32[4096,256], index: 0, kind: input, shape index: {}]
  %s1 = inlined_call_operand.vmem [shape: bf16[256,8], index: 1, kind: input, shape index: {}]
  %s2 = inlined_call_operand.vmem [shape: f32[4096,8], index: 2, kind: output, shape index: {0}]
  %s3 = inlined_call_operand.vmem [shape: f32[4,2,8], index: 3, kind: output, shape index: {1}]
  %4 = xla_tuple %s2, %s3
  %s5 = sld [smem:[#allocation0]]
  $region49: #{lipread_forward.8} parent=0
    _
  %s7 = ssub.s32 1, %s5
  %s8 = scalar_select 0, %s7, %s5
  loop: start=0, step=1, limit=6
  $region2: #{lipread_forward.8} parent=0 // loop_pre_header
    _
  $region3: #{lipread_forward.8} parent=0 // loop_header
    %s10 = sphi 0, %s14
    %p11 = scmp.ge.s32.totalorder %s10, 6
    %s20 = sphi 0, %s22
    %s23 = sphi 0, %s20
    %s24 = sphi 0, %s23
    %s40 = sphi 0, %s24
    %s44 = sphi 0, %s44
    %s46 = sphi 0, %s44
    %s47 = sphi 0, %s46
    %s61 = sphi 0, %s47
    %s67 = sphi 0, %s69
    %s70 = sphi 0, %s67
    %s71 = sphi 0, %s70
    %s87 = sphi 0, %s71
    %s93 = sphi 0, %s95
    %s96 = sphi 0, %s93
    %s97 = sphi 0, %s96
    %s113 = sphi 0, %s97
  $region4: #{lipread_forward.8} parent=0 // loop_header_branch
    %13 = sbr.rel (%p11) target = $region8
  $region5: #{lipread_forward.8} parent=0 // loop_body
    %s15 = ssub.s32 %s10, 1
    %s16 = ssub.s32 %s10, 2
    %s17 = sadd.s32 %s10, 1
    %s18 = ssub.s32 %s10, %s17
    %p19 = scmp.eq.s32.totalorder %s18, 0
    %s21 = sadd.s32 %s20, 1
    %s22 = scalar_select %p19, %s20, %s21
    %p25 = pneg %p19
    %p26 = scmp.eq.s32.totalorder %s10, 3
    %p27 = por %p25, %p26
    %p28 = scmp.ne.s32.totalorder %s20, %s23
    %p29 = scmp.eq.s32.totalorder %s10, 0
    %p30 = por %p28, %p29
    %p31 = scmp.ne.s32.totalorder %s20, %s23
    %p32 = scmp.eq.s32.totalorder %s15, 3
    %p33 = por %p31, %p32
    %p34 = scmp.ne.s32.totalorder %s23, %s24
    %p35 = scmp.eq.s32.totalorder %s15, 0
    %p36 = por %p34, %p35
    %p37 = scmp.ne.s32.totalorder %s23, %s24
    %p38 = scmp.eq.s32.totalorder %s16, 3
    %p39 = por %p37, %p38
    %p41 = scmp.ne.s32.totalorder %s24, %s40
    %p42 = scmp.eq.s32.totalorder %s16, 0
    %p43 = por %p41, %p42
    %s45 = sadd.s32 %s44, 1
    %p48 = scmp.eq.s32.totalorder %s10, 3
    %p49 = scmp.ne.s32.totalorder %s44, %s46
    %p50 = scmp.eq.s32.totalorder %s10, 0
    %p51 = por %p49, %p50
    %p52 = scmp.ne.s32.totalorder %s44, %s46
    %p53 = scmp.eq.s32.totalorder %s15, 3
    %p54 = por %p52, %p53
    %p55 = scmp.ne.s32.totalorder %s46, %s47
    %p56 = scmp.eq.s32.totalorder %s15, 0
    %p57 = por %p55, %p56
    %p58 = scmp.ne.s32.totalorder %s46, %s47
    %p59 = scmp.eq.s32.totalorder %s16, 3
    %p60 = por %p58, %p59
    %p62 = scmp.ne.s32.totalorder %s47, %s61
    %p63 = scmp.eq.s32.totalorder %s16, 0
    %p64 = por %p62, %p63
    %s65 = ssub.s32 %s10, %s17
    %p66 = scmp.eq.s32.totalorder %s65, 0
    %s68 = sadd.s32 %s67, 1
    %s69 = scalar_select %p66, %s67, %s68
    %p72 = pneg %p66
    %p73 = scmp.eq.s32.totalorder %s10, 3
    %p74 = por %p72, %p73
    %p75 = scmp.ne.s32.totalorder %s67, %s70
    %p76 = scmp.eq.s32.totalorder %s10, 0
    %p77 = por %p75, %p76
    %p78 = scmp.ne.s32.totalorder %s67, %s70
    %p79 = scmp.eq.s32.totalorder %s15, 3
    %p80 = por %p78, %p79
    %p81 = scmp.ne.s32.totalorder %s70, %s71
    %p82 = scmp.eq.s32.totalorder %s15, 0
    %p83 = por %p81, %p82
    %p84 = scmp.ne.s32.totalorder %s70, %s71
    %p85 = scmp.eq.s32.totalorder %s16, 3
    %p86 = por %p84, %p85
    %p88 = scmp.ne.s32.totalorder %s71, %s87
    %p89 = scmp.eq.s32.totalorder %s16, 0
    %p90 = por %p88, %p89
    %s91 = ssub.s32 %s10, %s17
    %p92 = scmp.eq.s32.totalorder %s91, 0
    %s94 = sadd.s32 %s93, 1
    %s95 = scalar_select %p92, %s93, %s94
    %p98 = pneg %p92
    %p99 = scmp.eq.s32.totalorder %s10, 3
    %p100 = por %p98, %p99
    %p101 = scmp.ne.s32.totalorder %s93, %s96
    %p102 = scmp.eq.s32.totalorder %s10, 0
    %p103 = por %p101, %p102
    %p104 = scmp.ne.s32.totalorder %s93, %s96
    %p105 = scmp.eq.s32.totalorder %s15, 3
    %p106 = por %p104, %p105
    %p107 = scmp.ne.s32.totalorder %s96, %s97
    %p108 = scmp.eq.s32.totalorder %s15, 0
    %p109 = por %p107, %p108
    %p110 = scmp.ne.s32.totalorder %s96, %s97
    %p111 = scmp.eq.s32.totalorder %s16, 3
    %p112 = por %p110, %p111
    %p114 = scmp.ne.s32.totalorder %s97, %s113
    %p115 = scmp.eq.s32.totalorder %s16, 0
    %p116 = por %p114, %p115
    %p117 = scmp.le.s32.totalorder 1, %s10
    %p118 = scmp.lt.s32.totalorder %s10, 5
    %p119 = pnand %p117, %p118
    %p120 = pneg %p119
    // Predicated region
    $region9: #{lipread_forward.8} parent=5 // pred_check
      _
    $region10: #{lipread_forward.8} parent=5 // pred_check_branch
      %122 = sbr.rel (%p119) target = $region12
    $region11: #{lipread_forward.8} parent=5 // pred_region
      %s123 = ssub.s32 %s10, 1
      // Predicated region
      $region13: #{lipread_forward.8} parent=11 // pred_check
        %p124 = pneg %p57
      $region14: #{lipread_forward.8} parent=11 // pred_check_branch
        %126 = sbr.rel (%p124) target = $region16
      $region15: #{lipread_forward.8} parent=11 // pred_region
        _
      $region16: #{lipread_forward.8} parent=11 // pred_fallthru
        _
    $region12: #{lipread_forward.8} parent=5 // pred_fallthru
      _
    %p127 = scmp.lt.s32.totalorder %s10, 4
    // Predicated region
    $region17: #{lipread_forward.8} parent=5 // pred_check
      %p128 = pneg %p127
    $region18: #{lipread_forward.8} parent=5 // pred_check_branch
      %130 = sbr.rel (%p128) target = $region20
    $region19: #{lipread_forward.8} parent=5 // pred_region
      // Predicated region
      $region21: #{lipread_forward.8} parent=19 // pred_check
        %p131 = pneg %p30
      $region22: #{lipread_forward.8} parent=19 // pred_check_branch
        %133 = sbr.rel (%p131) target = $region24
      $region23: #{lipread_forward.8} parent=19 // pred_region
        %s134 = smul.u32 128, %s10
        %p135 = scmp.lt.s32.totalorder %s134, 511
        %s136 = scalar_select %p135, %s134, 511
        %s137 = smul.addr %s136, 2
        %s138 = smul.addr %s137, 8
        %s139 = scalar_lea.vmem %s0, %s138
        %s140 = smul.u32 128, %s10
      $region24: #{lipread_forward.8} parent=19 // pred_fallthru
        _
    $region20: #{lipread_forward.8} parent=5 // pred_fallthru
      _
    %p141 = scmp.le.s32.totalorder 1, %s10
    %p142 = scmp.lt.s32.totalorder %s10, 5
    %p143 = pnand %p141, %p142
    %p144 = pneg %p143
    // Predicated region
    $region25: #{lipread_forward.8} parent=5 // pred_check
      _
    $region26: #{lipread_forward.8} parent=5 // pred_check_branch
      %146 = sbr.rel (%p143) target = $region28
    $region27: #{lipread_forward.8} parent=5 // pred_region
      %s147 = ssub.s32 %s10, 1
      %s148 = smul.u32 128, %s15
      %p149 = scmp.lt.s32.totalorder %s148, 511
      %s150 = scalar_select %p149, %s148, 511
      %s151 = smul.addr %s150, 2
      %s152 = smul.addr %s151, 8
      %s153 = scalar_lea.vmem %s0, %s152
      %p154 = pneg %p36
      %p155 = pneg %p33
      %p156 = pneg %p57
      %p157 = pneg %p54
      %p158 = pneg %p83
      %p159 = pneg %p80
      %s160 = smul.u32 128, %s15
      %p161 = scmp.lt.s32.totalorder %s160, 511
      %s162 = scalar_select %p161, %s160, 511
      %s163 = smul.addr %s162, 8
      %s164 = scalar_lea.vmem %s2, %s163
      %p165 = pneg %p109
      %p166 = pneg %p106
      %p167 = scmp.lt.s32.totalorder %s15, 3
      %s168 = scalar_select %p167, %s15, 3
      %s169 = smul.addr %s168, 2
      %s170 = scalar_lea.vmem %s3, %s169
      %s171 = smul.u32 128, %s15
      %p172 = scmp.lt.s32.totalorder %s171, 511
      %s173 = scalar_select %p172, %s171, 511
      %s174 = smul.addr %s173, 2
      %s175 = smul.addr %s174, 8
      %s176 = scalar_lea.vmem %s0, %s175
      %s177 = smul.u32 128, %s15
      %s178 = smul.u32 128, %s15
      %p179 = scmp.lt.s32.totalorder %s178, 511
      %s180 = scalar_select %p179, %s178, 511
      %s181 = smul.addr %s180, 8
      %s182 = scalar_lea.vmem %s2, %s181
      %s183 = smul.u32 128, %s15
      %p184 = scmp.lt.s32.totalorder %s15, 3
      %s185 = scalar_select %p184, %s15, 3
      %s186 = smul.addr %s185, 2
      %s187 = scalar_lea.vmem %s3, %s186
      %v188 = vld [vmem:[%s176] sm:$0xff]
      %v189 = vld [vmem:[%s176 + $0x8] sm:$0xff]
      %v190 = vld [vmem:[%s176 + $0x10] sm:$0xff]
      %v191 = vld [vmem:[%s176 + $0x18] sm:$0xff]
      %v192 = vld [vmem:[%s176 + $0x20] sm:$0xff]
      %v193 = vld [vmem:[%s176 + $0x28] sm:$0xff]
      %v194 = vld [vmem:[%s176 + $0x30] sm:$0xff]
      %v195 = vld [vmem:[%s176 + $0x38] sm:$0xff]
      %v196 = vld [vmem:[%s176 + $0x40] sm:$0xff]
      %v197 = vld [vmem:[%s176 + $0x48] sm:$0xff]
      %v198 = vld [vmem:[%s176 + $0x50] sm:$0xff]
      %v199 = vld [vmem:[%s176 + $0x58] sm:$0xff]
      %v200 = vld [vmem:[%s176 + $0x60] sm:$0xff]
      %v201 = vld [vmem:[%s176 + $0x68] sm:$0xff]
      %v202 = vld [vmem:[%s176 + $0x70] sm:$0xff]
      %v203 = vld [vmem:[%s176 + $0x78] sm:$0xff]
      %v204 = vld [vmem:[%s176 + $0x80] sm:$0xff]
      %v205 = vld [vmem:[%s176 + $0x88] sm:$0xff]
      %v206 = vld [vmem:[%s176 + $0x90] sm:$0xff]
      %v207 = vld [vmem:[%s176 + $0x98] sm:$0xff]
      %v208 = vld [vmem:[%s176 + $0xa0] sm:$0xff]
      %v209 = vld [vmem:[%s176 + $0xa8] sm:$0xff]
      %v210 = vld [vmem:[%s176 + $0xb0] sm:$0xff]
      %v211 = vld [vmem:[%s176 + $0xb8] sm:$0xff]
      %v212 = vld [vmem:[%s176 + $0xc0] sm:$0xff]
      %v213 = vld [vmem:[%s176 + $0xc8] sm:$0xff]
      %v214 = vld [vmem:[%s176 + $0xd0] sm:$0xff]
      %v215 = vld [vmem:[%s176 + $0xd8] sm:$0xff]
      %v216 = vld [vmem:[%s176 + $0xe0] sm:$0xff]
      %v217 = vld [vmem:[%s176 + $0xe8] sm:$0xff]
      %v218 = vld [vmem:[%s176 + $0xf0] sm:$0xff]
      %v219 = vld [vmem:[%s176 + $0xf8] sm:$0xff]
      %v220 = vld [vmem:[%s176 + $0x100] sm:$0xff]
      %v221 = vld [vmem:[%s176 + $0x108] sm:$0xff]
      %v222 = vld [vmem:[%s176 + $0x110] sm:$0xff]
      %v223 = vld [vmem:[%s176 + $0x118] sm:$0xff]
      %v224 = vld [vmem:[%s176 + $0x120] sm:$0xff]
      %v225 = vld [vmem:[%s176 + $0x128] sm:$0xff]
      %v226 = vld [vmem:[%s176 + $0x130] sm:$0xff]
      %v227 = vld [vmem:[%s176 + $0x138] sm:$0xff]
      %v228 = vld [vmem:[%s176 + $0x140] sm:$0xff]
      %v229 = vld [vmem:[%s176 + $0x148] sm:$0xff]
      %v230 = vld [vmem:[%s176 + $0x150] sm:$0xff]
      %v231 = vld [vmem:[%s176 + $0x158] sm:$0xff]
      %v232 = vld [vmem:[%s176 + $0x160] sm:$0xff]
      %v233 = vld [vmem:[%s176 + $0x168] sm:$0xff]
      %v234 = vld [vmem:[%s176 + $0x170] sm:$0xff]
      %v235 = vld [vmem:[%s176 + $0x178] sm:$0xff]
      %v236 = vld [vmem:[%s176 + $0x180] sm:$0xff]
      %v237 = vld [vmem:[%s176 + $0x188] sm:$0xff]
      %v238 = vld [vmem:[%s176 + $0x190] sm:$0xff]
      %v239 = vld [vmem:[%s176 + $0x198] sm:$0xff]
      %v240 = vld [vmem:[%s176 + $0x1a0] sm:$0xff]
      %v241 = vld [vmem:[%s176 + $0x1a8] sm:$0xff]
      %v242 = vld [vmem:[%s176 + $0x1b0] sm:$0xff]
      %v243 = vld [vmem:[%s176 + $0x1b8] sm:$0xff]
      %v244 = vld [vmem:[%s176 + $0x1c0] sm:$0xff]
      %v245 = vld [vmem:[%s176 + $0x1c8] sm:$0xff]
      %v246 = vld [vmem:[%s176 + $0x1d0] sm:$0xff]
      %v247 = vld [vmem:[%s176 + $0x1d8] sm:$0xff]
      %v248 = vld [vmem:[%s176 + $0x1e0] sm:$0xff]
      %v249 = vld [vmem:[%s176 + $0x1e8] sm:$0xff]
      %v250 = vld [vmem:[%s176 + $0x1f0] sm:$0xff]
      %v251 = vld [vmem:[%s176 + $0x1f8] sm:$0xff]
      %v252 = vld [vmem:[%s176 + $0x200] sm:$0xff]
      %v253 = vld [vmem:[%s176 + $0x208] sm:$0xff]
      %v254 = vld [vmem:[%s176 + $0x210] sm:$0xff]
      %v255 = vld [vmem:[%s176 + $0x218] sm:$0xff]
      %v256 = vld [vmem:[%s176 + $0x220] sm:$0xff]
      %v257 = vld [vmem:[%s176 + $0x228] sm:$0xff]
      %v258 = vld [vmem:[%s176 + $0x230] sm:$0xff]
      %v259 = vld [vmem:[%s176 + $0x238] sm:$0xff]
      %v260 = vld [vmem:[%s176 + $0x240] sm:$0xff]
      %v261 = vld [vmem:[%s176 + $0x248] sm:$0xff]
      %v262 = vld [vmem:[%s176 + $0x250] sm:$0xff]
      %v263 = vld [vmem:[%s176 + $0x258] sm:$0xff]
      %v264 = vld [vmem:[%s176 + $0x260] sm:$0xff]
      %v265 = vld [vmem:[%s176 + $0x268] sm:$0xff]
      %v266 = vld [vmem:[%s176 + $0x270] sm:$0xff]
      %v267 = vld [vmem:[%s176 + $0x278] sm:$0xff]
      %v268 = vld [vmem:[%s176 + $0x280] sm:$0xff]
      %v269 = vld [vmem:[%s176 + $0x288] sm:$0xff]
      %v270 = vld [vmem:[%s176 + $0x290] sm:$0xff]
      %v271 = vld [vmem:[%s176 + $0x298] sm:$0xff]
      %v272 = vld [vmem:[%s176 + $0x2a0] sm:$0xff]
      %v273 = vld [vmem:[%s176 + $0x2a8] sm:$0xff]
      %v274 = vld [vmem:[%s176 + $0x2b0] sm:$0xff]
      %v275 = vld [vmem:[%s176 + $0x2b8] sm:$0xff]
      %v276 = vld [vmem:[%s176 + $0x2c0] sm:$0xff]
      %v277 = vld [vmem:[%s176 + $0x2c8] sm:$0xff]
      %v278 = vld [vmem:[%s176 + $0x2d0] sm:$0xff]
      %v279 = vld [vmem:[%s176 + $0x2d8] sm:$0xff]
      %v280 = vld [vmem:[%s176 + $0x2e0] sm:$0xff]
      %v281 = vld [vmem:[%s176 + $0x2e8] sm:$0xff]
      %v282 = vld [vmem:[%s176 + $0x2f0] sm:$0xff]
      %v283 = vld [vmem:[%s176 + $0x2f8] sm:$0xff]
      %v284 = vld [vmem:[%s176 + $0x300] sm:$0xff]
      %v285 = vld [vmem:[%s176 + $0x308] sm:$0xff]
      %v286 = vld [vmem:[%s176 + $0x310] sm:$0xff]
      %v287 = vld [vmem:[%s176 + $0x318] sm:$0xff]
      %v288 = vld [vmem:[%s176 + $0x320] sm:$0xff]
      %v289 = vld [vmem:[%s176 + $0x328] sm:$0xff]
      %v290 = vld [vmem:[%s176 + $0x330] sm:$0xff]
      %v291 = vld [vmem:[%s176 + $0x338] sm:$0xff]
      %v292 = vld [vmem:[%s176 + $0x340] sm:$0xff]
      %v293 = vld [vmem:[%s176 + $0x348] sm:$0xff]
      %v294 = vld [vmem:[%s176 + $0x350] sm:$0xff]
      %v295 = vld [vmem:[%s176 + $0x358] sm:$0xff]
      %v296 = vld [vmem:[%s176 + $0x360] sm:$0xff]
      %v297 = vld [vmem:[%s176 + $0x368] sm:$0xff]
      %v298 = vld [vmem:[%s176 + $0x370] sm:$0xff]
      %v299 = vld [vmem:[%s176 + $0x378] sm:$0xff]
      %v300 = vld [vmem:[%s176 + $0x380] sm:$0xff]
      %v301 = vld [vmem:[%s176 + $0x388] sm:$0xff]
      %v302 = vld [vmem:[%s176 + $0x390] sm:$0xff]
      %v303 = vld [vmem:[%s176 + $0x398] sm:$0xff]
      %v304 = vld [vmem:[%s176 + $0x3a0] sm:$0xff]
      %v305 = vld [vmem:[%s176 + $0x3a8] sm:$0xff]
      %v306 = vld [vmem:[%s176 + $0x3b0] sm:$0xff]
      %v307 = vld [vmem:[%s176 + $0x3b8] sm:$0xff]
      %v308 = vld [vmem:[%s176 + $0x3c0] sm:$0xff]
      %v309 = vld [vmem:[%s176 + $0x3c8] sm:$0xff]
      %v310 = vld [vmem:[%s176 + $0x3d0] sm:$0xff]
      %v311 = vld [vmem:[%s176 + $0x3d8] sm:$0xff]
      %v312 = vld [vmem:[%s176 + $0x3e0] sm:$0xff]
      %v313 = vld [vmem:[%s176 + $0x3e8] sm:$0xff]
      %v314 = vld [vmem:[%s176 + $0x3f0] sm:$0xff]
      %v315 = vld [vmem:[%s176 + $0x3f8] sm:$0xff]
      %v316 = vld [vmem:[%s176 + $0x400] sm:$0xff]
      %v317 = vld [vmem:[%s176 + $0x408] sm:$0xff]
      %v318 = vld [vmem:[%s176 + $0x410] sm:$0xff]
      %v319 = vld [vmem:[%s176 + $0x418] sm:$0xff]
      %v320 = vld [vmem:[%s176 + $0x420] sm:$0xff]
      %v321 = vld [vmem:[%s176 + $0x428] sm:$0xff]
      %v322 = vld [vmem:[%s176 + $0x430] sm:$0xff]
      %v323 = vld [vmem:[%s176 + $0x438] sm:$0xff]
      %v324 = vld [vmem:[%s176 + $0x440] sm:$0xff]
      %v325 = vld [vmem:[%s176 + $0x448] sm:$0xff]
      %v326 = vld [vmem:[%s176 + $0x450] sm:$0xff]
      %v327 = vld [vmem:[%s176 + $0x458] sm:$0xff]
      %v328 = vld [vmem:[%s176 + $0x460] sm:$0xff]
      %v329 = vld [vmem:[%s176 + $0x468] sm:$0xff]
      %v330 = vld [vmem:[%s176 + $0x470] sm:$0xff]
      %v331 = vld [vmem:[%s176 + $0x478] sm:$0xff]
      %v332 = vld [vmem:[%s176 + $0x480] sm:$0xff]
      %v333 = vld [vmem:[%s176 + $0x488] sm:$0xff]
      %v334 = vld [vmem:[%s176 + $0x490] sm:$0xff]
      %v335 = vld [vmem:[%s176 + $0x498] sm:$0xff]
      %v336 = vld [vmem:[%s176 + $0x4a0] sm:$0xff]
      %v337 = vld [vmem:[%s176 + $0x4a8] sm:$0xff]
      %v338 = vld [vmem:[%s176 + $0x4b0] sm:$0xff]
      %v339 = vld [vmem:[%s176 + $0x4b8] sm:$0xff]
      %v340 = vld [vmem:[%s176 + $0x4c0] sm:$0xff]
      %v341 = vld [vmem:[%s176 + $0x4c8] sm:$0xff]
      %v342 = vld [vmem:[%s176 + $0x4d0] sm:$0xff]
      %v343 = vld [vmem:[%s176 + $0x4d8] sm:$0xff]
      %v344 = vld [vmem:[%s176 + $0x4e0] sm:$0xff]
      %v345 = vld [vmem:[%s176 + $0x4e8] sm:$0xff]
      %v346 = vld [vmem:[%s176 + $0x4f0] sm:$0xff]
      %v347 = vld [vmem:[%s176 + $0x4f8] sm:$0xff]
      %v348 = vld [vmem:[%s176 + $0x500] sm:$0xff]
      %v349 = vld [vmem:[%s176 + $0x508] sm:$0xff]
      %v350 = vld [vmem:[%s176 + $0x510] sm:$0xff]
      %v351 = vld [vmem:[%s176 + $0x518] sm:$0xff]
      %v352 = vld [vmem:[%s176 + $0x520] sm:$0xff]
      %v353 = vld [vmem:[%s176 + $0x528] sm:$0xff]
      %v354 = vld [vmem:[%s176 + $0x530] sm:$0xff]
      %v355 = vld [vmem:[%s176 + $0x538] sm:$0xff]
      %v356 = vld [vmem:[%s176 + $0x540] sm:$0xff]
      %v357 = vld [vmem:[%s176 + $0x548] sm:$0xff]
      %v358 = vld [vmem:[%s176 + $0x550] sm:$0xff]
      %v359 = vld [vmem:[%s176 + $0x558] sm:$0xff]
      %v360 = vld [vmem:[%s176 + $0x560] sm:$0xff]
      %v361 = vld [vmem:[%s176 + $0x568] sm:$0xff]
      %v362 = vld [vmem:[%s176 + $0x570] sm:$0xff]
      %v363 = vld [vmem:[%s176 + $0x578] sm:$0xff]
      %v364 = vld [vmem:[%s176 + $0x580] sm:$0xff]
      %v365 = vld [vmem:[%s176 + $0x588] sm:$0xff]
      %v366 = vld [vmem:[%s176 + $0x590] sm:$0xff]
      %v367 = vld [vmem:[%s176 + $0x598] sm:$0xff]
      %v368 = vld [vmem:[%s176 + $0x5a0] sm:$0xff]
      %v369 = vld [vmem:[%s176 + $0x5a8] sm:$0xff]
      %v370 = vld [vmem:[%s176 + $0x5b0] sm:$0xff]
      %v371 = vld [vmem:[%s176 + $0x5b8] sm:$0xff]
      %v372 = vld [vmem:[%s176 + $0x5c0] sm:$0xff]
      %v373 = vld [vmem:[%s176 + $0x5c8] sm:$0xff]
      %v374 = vld [vmem:[%s176 + $0x5d0] sm:$0xff]
      %v375 = vld [vmem:[%s176 + $0x5d8] sm:$0xff]
      %v376 = vld [vmem:[%s176 + $0x5e0] sm:$0xff]
      %v377 = vld [vmem:[%s176 + $0x5e8] sm:$0xff]
      %v378 = vld [vmem:[%s176 + $0x5f0] sm:$0xff]
      %v379 = vld [vmem:[%s176 + $0x5f8] sm:$0xff]
      %v380 = vld [vmem:[%s176 + $0x600] sm:$0xff]
      %v381 = vld [vmem:[%s176 + $0x608] sm:$0xff]
      %v382 = vld [vmem:[%s176 + $0x610] sm:$0xff]
      %v383 = vld [vmem:[%s176 + $0x618] sm:$0xff]
      %v384 = vld [vmem:[%s176 + $0x620] sm:$0xff]
      %v385 = vld [vmem:[%s176 + $0x628] sm:$0xff]
      %v386 = vld [vmem:[%s176 + $0x630] sm:$0xff]
      %v387 = vld [vmem:[%s176 + $0x638] sm:$0xff]
      %v388 = vld [vmem:[%s176 + $0x640] sm:$0xff]
      %v389 = vld [vmem:[%s176 + $0x648] sm:$0xff]
      %v390 = vld [vmem:[%s176 + $0x650] sm:$0xff]
      %v391 = vld [vmem:[%s176 + $0x658] sm:$0xff]
      %v392 = vld [vmem:[%s176 + $0x660] sm:$0xff]
      %v393 = vld [vmem:[%s176 + $0x668] sm:$0xff]
      %v394 = vld [vmem:[%s176 + $0x670] sm:$0xff]
      %v395 = vld [vmem:[%s176 + $0x678] sm:$0xff]
      %v396 = vld [vmem:[%s176 + $0x680] sm:$0xff]
      %v397 = vld [vmem:[%s176 + $0x688] sm:$0xff]
      %v398 = vld [vmem:[%s176 + $0x690] sm:$0xff]
      %v399 = vld [vmem:[%s176 + $0x698] sm:$0xff]
      %v400 = vld [vmem:[%s176 + $0x6a0] sm:$0xff]
      %v401 = vld [vmem:[%s176 + $0x6a8] sm:$0xff]
      %v402 = vld [vmem:[%s176 + $0x6b0] sm:$0xff]
      %v403 = vld [vmem:[%s176 + $0x6b8] sm:$0xff]
      %v404 = vld [vmem:[%s176 + $0x6c0] sm:$0xff]
      %v405 = vld [vmem:[%s176 + $0x6c8] sm:$0xff]
      %v406 = vld [vmem:[%s176 + $0x6d0] sm:$0xff]
      %v407 = vld [vmem:[%s176 + $0x6d8] sm:$0xff]
      %v408 = vld [vmem:[%s176 + $0x6e0] sm:$0xff]
      %v409 = vld [vmem:[%s176 + $0x6e8] sm:$0xff]
      %v410 = vld [vmem:[%s176 + $0x6f0] sm:$0xff]
      %v411 = vld [vmem:[%s176 + $0x6f8] sm:$0xff]
      %v412 = vld [vmem:[%s176 + $0x700] sm:$0xff]
      %v413 = vld [vmem:[%s176 + $0x708] sm:$0xff]
      %v414 = vld [vmem:[%s176 + $0x710] sm:$0xff]
      %v415 = vld [vmem:[%s176 + $0x718] sm:$0xff]
      %v416 = vld [vmem:[%s176 + $0x720] sm:$0xff]
      %v417 = vld [vmem:[%s176 + $0x728] sm:$0xff]
      %v418 = vld [vmem:[%s176 + $0x730] sm:$0xff]
      %v419 = vld [vmem:[%s176 + $0x738] sm:$0xff]
      %v420 = vld [vmem:[%s176 + $0x740] sm:$0xff]
      %v421 = vld [vmem:[%s176 + $0x748] sm:$0xff]
      %v422 = vld [vmem:[%s176 + $0x750] sm:$0xff]
      %v423 = vld [vmem:[%s176 + $0x758] sm:$0xff]
      %v424 = vld [vmem:[%s176 + $0x760] sm:$0xff]
      %v425 = vld [vmem:[%s176 + $0x768] sm:$0xff]
      %v426 = vld [vmem:[%s176 + $0x770] sm:$0xff]
      %v427 = vld [vmem:[%s176 + $0x778] sm:$0xff]
      %v428 = vld [vmem:[%s176 + $0x780] sm:$0xff]
      %v429 = vld [vmem:[%s176 + $0x788] sm:$0xff]
      %v430 = vld [vmem:[%s176 + $0x790] sm:$0xff]
      %v431 = vld [vmem:[%s176 + $0x798] sm:$0xff]
      %v432 = vld [vmem:[%s176 + $0x7a0] sm:$0xff]
      %v433 = vld [vmem:[%s176 + $0x7a8] sm:$0xff]
      %v434 = vld [vmem:[%s176 + $0x7b0] sm:$0xff]
      %v435 = vld [vmem:[%s176 + $0x7b8] sm:$0xff]
      %v436 = vld [vmem:[%s176 + $0x7c0] sm:$0xff]
      %v437 = vld [vmem:[%s176 + $0x7c8] sm:$0xff]
      %v438 = vld [vmem:[%s176 + $0x7d0] sm:$0xff]
      %v439 = vld [vmem:[%s176 + $0x7d8] sm:$0xff]
      %v440 = vld [vmem:[%s176 + $0x7e0] sm:$0xff]
      %v441 = vld [vmem:[%s176 + $0x7e8] sm:$0xff]
      %v442 = vld [vmem:[%s176 + $0x7f0] sm:$0xff]
      %v443 = vld [vmem:[%s176 + $0x7f8] sm:$0xff]
      %v444 = vpack.c.bf16 %v190, %v188
      %v445 = vpack.c.bf16 %v191, %v189
      %v446 = vpack.c.bf16 %v194, %v192
      %v447 = vpack.c.bf16 %v195, %v193
      %v448 = vpack.c.bf16 %v198, %v196
      %v449 = vpack.c.bf16 %v199, %v197
      %v450 = vpack.c.bf16 %v202, %v200
      %v451 = vpack.c.bf16 %v203, %v201
      %v452 = vpack.c.bf16 %v206, %v204
      %v453 = vpack.c.bf16 %v207, %v205
      %v454 = vpack.c.bf16 %v210, %v208
      %v455 = vpack.c.bf16 %v211, %v209
      %v456 = vpack.c.bf16 %v214, %v212
      %v457 = vpack.c.bf16 %v215, %v213
      %v458 = vpack.c.bf16 %v218, %v216
      %v459 = vpack.c.bf16 %v219, %v217
      %v460 = vpack.c.bf16 %v222, %v220
      %v461 = vpack.c.bf16 %v223, %v221
      %v462 = vpack.c.bf16 %v226, %v224
      %v463 = vpack.c.bf16 %v227, %v225
      %v464 = vpack.c.bf16 %v230, %v228
      %v465 = vpack.c.bf16 %v231, %v229
      %v466 = vpack.c.bf16 %v234, %v232
      %v467 = vpack.c.bf16 %v235, %v233
      %v468 = vpack.c.bf16 %v238, %v236
      %v469 = vpack.c.bf16 %v239, %v237
      %v470 = vpack.c.bf16 %v242, %v240
      %v471 = vpack.c.bf16 %v243, %v241
      %v472 = vpack.c.bf16 %v246, %v244
      %v473 = vpack.c.bf16 %v247, %v245
      %v474 = vpack.c.bf16 %v250, %v248
      %v475 = vpack.c.bf16 %v251, %v249
      %v476 = vpack.c.bf16 %v254, %v252
      %v477 = vpack.c.bf16 %v255, %v253
      %v478 = vpack.c.bf16 %v258, %v256
      %v479 = vpack.c.bf16 %v259, %v257
      %v480 = vpack.c.bf16 %v262, %v260
      %v481 = vpack.c.bf16 %v263, %v261
      %v482 = vpack.c.bf16 %v266, %v264
      %v483 = vpack.c.bf16 %v267, %v265
      %v484 = vpack.c.bf16 %v270, %v268
      %v485 = vpack.c.bf16 %v271, %v269
      %v486 = vpack.c.bf16 %v274, %v272
      %v487 = vpack.c.bf16 %v275, %v273
      %v488 = vpack.c.bf16 %v278, %v276
      %v489 = vpack.c.bf16 %v279, %v277
      %v490 = vpack.c.bf16 %v282, %v280
      %v491 = vpack.c.bf16 %v283, %v281
      %v492 = vpack.c.bf16 %v286, %v284
      %v493 = vpack.c.bf16 %v287, %v285
      %v494 = vpack.c.bf16 %v290, %v288
      %v495 = vpack.c.bf16 %v291, %v289
      %v496 = vpack.c.bf16 %v294, %v292
      %v497 = vpack.c.bf16 %v295, %v293
      %v498 = vpack.c.bf16 %v298, %v296
      %v499 = vpack.c.bf16 %v299, %v297
      %v500 = vpack.c.bf16 %v302, %v300
      %v501 = vpack.c.bf16 %v303, %v301
      %v502 = vpack.c.bf16 %v306, %v304
      %v503 = vpack.c.bf16 %v307, %v305
      %v504 = vpack.c.bf16 %v310, %v308
      %v505 = vpack.c.bf16 %v311, %v309
      %v506 = vpack.c.bf16 %v314, %v312
      %v507 = vpack.c.bf16 %v315, %v313
      %v508 = vpack.c.bf16 %v318, %v316
      %v509 = vpack.c.bf16 %v319, %v317
      %v510 = vpack.c.bf16 %v322, %v320
      %v511 = vpack.c.bf16 %v323, %v321
      %v512 = vpack.c.bf16 %v326, %v324
      %v513 = vpack.c.bf16 %v327, %v325
      %v514 = vpack.c.bf16 %v330, %v328
      %v515 = vpack.c.bf16 %v331, %v329
      %v516 = vpack.c.bf16 %v334, %v332
      %v517 = vpack.c.bf16 %v335, %v333
      %v518 = vpack.c.bf16 %v338, %v336
      %v519 = vpack.c.bf16 %v339, %v337
      %v520 = vpack.c.bf16 %v342, %v340
      %v521 = vpack.c.bf16 %v343, %v341
      %v522 = vpack.c.bf16 %v346, %v344
      %v523 = vpack.c.bf16 %v347, %v345
      %v524 = vpack.c.bf16 %v350, %v348
      %v525 = vpack.c.bf16 %v351, %v349
      %v526 = vpack.c.bf16 %v354, %v352
      %v527 = vpack.c.bf16 %v355, %v353
      %v528 = vpack.c.bf16 %v358, %v356
      %v529 = vpack.c.bf16 %v359, %v357
      %v530 = vpack.c.bf16 %v362, %v360
      %v531 = vpack.c.bf16 %v363, %v361
      %v532 = vpack.c.bf16 %v366, %v364
      %v533 = vpack.c.bf16 %v367, %v365
      %v534 = vpack.c.bf16 %v370, %v368
      %v535 = vpack.c.bf16 %v371, %v369
      %v536 = vpack.c.bf16 %v374, %v372
      %v537 = vpack.c.bf16 %v375, %v373
      %v538 = vpack.c.bf16 %v378, %v376
      %v539 = vpack.c.bf16 %v379, %v377
      %v540 = vpack.c.bf16 %v382, %v380
      %v541 = vpack.c.bf16 %v383, %v381
      %v542 = vpack.c.bf16 %v386, %v384
      %v543 = vpack.c.bf16 %v387, %v385
      %v544 = vpack.c.bf16 %v390, %v388
      %v545 = vpack.c.bf16 %v391, %v389
      %v546 = vpack.c.bf16 %v394, %v392
      %v547 = vpack.c.bf16 %v395, %v393
      %v548 = vpack.c.bf16 %v398, %v396
      %v549 = vpack.c.bf16 %v399, %v397
      %v550 = vpack.c.bf16 %v402, %v400
      %v551 = vpack.c.bf16 %v403, %v401
      %v552 = vpack.c.bf16 %v406, %v404
      %v553 = vpack.c.bf16 %v407, %v405
      %v554 = vpack.c.bf16 %v410, %v408
      %v555 = vpack.c.bf16 %v411, %v409
      %v556 = vpack.c.bf16 %v414, %v412
      %v557 = vpack.c.bf16 %v415, %v413
      %v558 = vpack.c.bf16 %v418, %v416
      %v559 = vpack.c.bf16 %v419, %v417
      %v560 = vpack.c.bf16 %v422, %v420
      %v561 = vpack.c.bf16 %v423, %v421
      %v562 = vpack.c.bf16 %v426, %v424
      %v563 = vpack.c.bf16 %v427, %v425
      %v564 = vpack.c.bf16 %v430, %v428
      %v565 = vpack.c.bf16 %v431, %v429
      %v566 = vpack.c.bf16 %v434, %v432
      %v567 = vpack.c.bf16 %v435, %v433
      %v568 = vpack.c.bf16 %v438, %v436
      %v569 = vpack.c.bf16 %v439, %v437
      %v570 = vpack.c.bf16 %v442, %v440
      %v571 = vpack.c.bf16 %v443, %v441
      %v572 = vld [vmem:[%s1] sm:$0xf]
      %v573 = vld [vmem:[%s1 + $0x4] sm:$0xf]
      %v574 = vld [vmem:[%s1 + $0x8] sm:$0xf]
      %v575 = vld [vmem:[%s1 + $0xc] sm:$0xf]
      %v576 = vld [vmem:[%s1 + $0x10] sm:$0xf]
      %v577 = vld [vmem:[%s1 + $0x14] sm:$0xf]
      %v578 = vld [vmem:[%s1 + $0x18] sm:$0xf]
      %v579 = vld [vmem:[%s1 + $0x1c] sm:$0xf]
      %v580 = vld [vmem:[%s1 + $0x20] sm:$0xf]
      %v581 = vld [vmem:[%s1 + $0x24] sm:$0xf]
      %v582 = vld [vmem:[%s1 + $0x28] sm:$0xf]
      %v583 = vld [vmem:[%s1 + $0x2c] sm:$0xf]
      %v584 = vld [vmem:[%s1 + $0x30] sm:$0xf]
      %v585 = vld [vmem:[%s1 + $0x34] sm:$0xf]
      %v586 = vld [vmem:[%s1 + $0x38] sm:$0xf]
      %v587 = vld [vmem:[%s1 + $0x3c] sm:$0xf]
      %v588 = vld [vmem:[%s1 + $0x40] sm:$0xf]
      %v589 = vld [vmem:[%s1 + $0x44] sm:$0xf]
      %v590 = vld [vmem:[%s1 + $0x48] sm:$0xf]
      %v591 = vld [vmem:[%s1 + $0x4c] sm:$0xf]
      %v592 = vld [vmem:[%s1 + $0x50] sm:$0xf]
      %v593 = vld [vmem:[%s1 + $0x54] sm:$0xf]
      %v594 = vld [vmem:[%s1 + $0x58] sm:$0xf]
      %v595 = vld [vmem:[%s1 + $0x5c] sm:$0xf]
      %v596 = vld [vmem:[%s1 + $0x60] sm:$0xf]
      %v597 = vld [vmem:[%s1 + $0x64] sm:$0xf]
      %v598 = vld [vmem:[%s1 + $0x68] sm:$0xf]
      %v599 = vld [vmem:[%s1 + $0x6c] sm:$0xf]
      %v600 = vld [vmem:[%s1 + $0x70] sm:$0xf]
      %v601 = vld [vmem:[%s1 + $0x74] sm:$0xf]
      %v602 = vld [vmem:[%s1 + $0x78] sm:$0xf]
      %v603 = vld [vmem:[%s1 + $0x7c] sm:$0xf]
      %v636 = vunpack.c.l.b16 %v572
      %v637 = vunpack.c.l.b16 %v573
      %v638 = vunpack.c.l.b16 %v574
      %v639 = vunpack.c.l.b16 %v575
      %v640 = vunpack.c.l.b16 %v576
      %v641 = vunpack.c.l.b16 %v577
      %v642 = vunpack.c.l.b16 %v578
      %v643 = vunpack.c.l.b16 %v579
      %v644 = vunpack.c.l.b16 %v580
      %v645 = vunpack.c.l.b16 %v581
      %v646 = vunpack.c.l.b16 %v582
      %v647 = vunpack.c.l.b16 %v583
      %v648 = vunpack.c.l.b16 %v584
      %v649 = vunpack.c.l.b16 %v585
      %v650 = vunpack.c.l.b16 %v586
      %v651 = vunpack.c.l.b16 %v587
      %v652 = vunpack.c.l.b16 %v588
      %v653 = vunpack.c.l.b16 %v589
      %v654 = vunpack.c.l.b16 %v590
      %v655 = vunpack.c.l.b16 %v591
      %v656 = vunpack.c.l.b16 %v592
      %v657 = vunpack.c.l.b16 %v593
      %v658 = vunpack.c.l.b16 %v594
      %v659 = vunpack.c.l.b16 %v595
      %v660 = vunpack.c.l.b16 %v596
      %v661 = vunpack.c.l.b16 %v597
      %v662 = vunpack.c.l.b16 %v598
      %v663 = vunpack.c.l.b16 %v599
      %v664 = vunpack.c.l.b16 %v600
      %v665 = vunpack.c.l.b16 %v601
      %v666 = vunpack.c.l.b16 %v602
      %v667 = vunpack.c.l.b16 %v603
      %v668 = vpack.c.b16 %v637, %v636
      %v669 = vpack.c.b16 %v639, %v638
      %v670 = vpack.c.b16 %v641, %v640
      %v671 = vpack.c.b16 %v643, %v642
      %v672 = vpack.c.b16 %v645, %v644
      %v673 = vpack.c.b16 %v647, %v646
      %v674 = vpack.c.b16 %v649, %v648
      %v675 = vpack.c.b16 %v651, %v650
      %v676 = vpack.c.b16 %v653, %v652
      %v677 = vpack.c.b16 %v655, %v654
      %v678 = vpack.c.b16 %v657, %v656
      %v679 = vpack.c.b16 %v659, %v658
      %v680 = vpack.c.b16 %v661, %v660
      %v681 = vpack.c.b16 %v663, %v662
      %v682 = vpack.c.b16 %v665, %v664
      %v683 = vpack.c.b16 %v667, %v666
      %700 = vmatpush.bf16.msra.mxu0 %v675
      %701 = vmatpush.bf16.msra.mxu0 %v674
      %702 = vmatpush.bf16.msra.mxu0 %v673
      %703 = vmatpush.bf16.msra.mxu0 %v672
      %704 = vmatpush.bf16.msra.mxu0 %v671
      %705 = vmatpush.bf16.msra.mxu0 %v670
      %706 = vmatpush.bf16.msra.mxu0 %v669
      %707 = vmatpush.bf16.msra.mxu0 %v668
      %708 = vmatmul.bf16.gmra.mxu0 %v444
      %v709 = vpop.f32.mrf.mxu0
      %v710 = vadd.f32 0.0, %v709
      %v711 = vpop.f32.mrf.mxu0
      %v712 = vadd.f32 0.0, %v711
      %713 = vmatmul.bf16.gmra.mxu0 %v446
      %v714 = vpop.f32.mrf.mxu0
      %v715 = vadd.f32 0.0, %v714
      %v716 = vpop.f32.mrf.mxu0
      %v717 = vadd.f32 0.0, %v716
      %718 = vmatmul.bf16.gmra.mxu0 %v448
      %v719 = vpop.f32.mrf.mxu0
      %v720 = vadd.f32 0.0, %v719
      %v721 = vpop.f32.mrf.mxu0
      %v722 = vadd.f32 0.0, %v721
      %723 = vmatmul.bf16.gmra.mxu0 %v450
      %v724 = vpop.f32.mrf.mxu0
      %v725 = vadd.f32 0.0, %v724
      %v726 = vpop.f32.mrf.mxu0
      %v727 = vadd.f32 0.0, %v726
      %728 = vmatmul.bf16.gmra.mxu0 %v452
      %v729 = vpop.f32.mrf.mxu0
      %v730 = vadd.f32 0.0, %v729
      %v731 = vpop.f32.mrf.mxu0
      %v732 = vadd.f32 0.0, %v731
      %733 = vmatmul.bf16.gmra.mxu0 %v454
      %v734 = vpop.f32.mrf.mxu0
      %v735 = vadd.f32 0.0, %v734
      %v736 = vpop.f32.mrf.mxu0
      %v737 = vadd.f32 0.0, %v736
      %738 = vmatmul.bf16.gmra.mxu0 %v456
      %v739 = vpop.f32.mrf.mxu0
      %v740 = vadd.f32 0.0, %v739
      %v741 = vpop.f32.mrf.mxu0
      %v742 = vadd.f32 0.0, %v741
      %743 = vmatmul.bf16.gmra.mxu0 %v458
      %v744 = vpop.f32.mrf.mxu0
      %v745 = vadd.f32 0.0, %v744
      %v746 = vpop.f32.mrf.mxu0
      %v747 = vadd.f32 0.0, %v746
      %748 = vmatmul.bf16.gmra.mxu0 %v460
      %v749 = vpop.f32.mrf.mxu0
      %v750 = vadd.f32 0.0, %v749
      %v751 = vpop.f32.mrf.mxu0
      %v752 = vadd.f32 0.0, %v751
      %753 = vmatmul.bf16.gmra.mxu0 %v462
      %v754 = vpop.f32.mrf.mxu0
      %v755 = vadd.f32 0.0, %v754
      %v756 = vpop.f32.mrf.mxu0
      %v757 = vadd.f32 0.0, %v756
      %758 = vmatmul.bf16.gmra.mxu0 %v464
      %v759 = vpop.f32.mrf.mxu0
      %v760 = vadd.f32 0.0, %v759
      %v761 = vpop.f32.mrf.mxu0
      %v762 = vadd.f32 0.0, %v761
      %763 = vmatmul.bf16.gmra.mxu0 %v466
      %v764 = vpop.f32.mrf.mxu0
      %v765 = vadd.f32 0.0, %v764
      %v766 = vpop.f32.mrf.mxu0
      %v767 = vadd.f32 0.0, %v766
      %768 = vmatmul.bf16.gmra.mxu0 %v468
      %v769 = vpop.f32.mrf.mxu0
      %v770 = vadd.f32 0.0, %v769
      %v771 = vpop.f32.mrf.mxu0
      %v772 = vadd.f32 0.0, %v771
      %773 = vmatmul.bf16.gmra.mxu0 %v470
      %v774 = vpop.f32.mrf.mxu0
      %v775 = vadd.f32 0.0, %v774
      %v776 = vpop.f32.mrf.mxu0
      %v777 = vadd.f32 0.0, %v776
      %778 = vmatmul.bf16.gmra.mxu0 %v472
      %v779 = vpop.f32.mrf.mxu0
      %v780 = vadd.f32 0.0, %v779
      %v781 = vpop.f32.mrf.mxu0
      %v782 = vadd.f32 0.0, %v781
      %783 = vmatmul.bf16.gmra.mxu0 %v474
      %v784 = vpop.f32.mrf.mxu0
      %v785 = vadd.f32 0.0, %v784
      %v786 = vpop.f32.mrf.mxu0
      %v787 = vadd.f32 0.0, %v786
      %788 = vmatmul.bf16.gmra.mxu0 %v476
      %v789 = vpop.f32.mrf.mxu0
      %v790 = vadd.f32 0.0, %v789
      %v791 = vpop.f32.mrf.mxu0
      %v792 = vadd.f32 0.0, %v791
      %793 = vmatmul.bf16.gmra.mxu0 %v478
      %v794 = vpop.f32.mrf.mxu0
      %v795 = vadd.f32 0.0, %v794
      %v796 = vpop.f32.mrf.mxu0
      %v797 = vadd.f32 0.0, %v796
      %798 = vmatmul.bf16.gmra.mxu0 %v480
      %v799 = vpop.f32.mrf.mxu0
      %v800 = vadd.f32 0.0, %v799
      %v801 = vpop.f32.mrf.mxu0
      %v802 = vadd.f32 0.0, %v801
      %803 = vmatmul.bf16.gmra.mxu0 %v482
      %v804 = vpop.f32.mrf.mxu0
      %v805 = vadd.f32 0.0, %v804
      %v806 = vpop.f32.mrf.mxu0
      %v807 = vadd.f32 0.0, %v806
      %808 = vmatmul.bf16.gmra.mxu0 %v484
      %v809 = vpop.f32.mrf.mxu0
      %v810 = vadd.f32 0.0, %v809
      %v811 = vpop.f32.mrf.mxu0
      %v812 = vadd.f32 0.0, %v811
      %813 = vmatmul.bf16.gmra.mxu0 %v486
      %v814 = vpop.f32.mrf.mxu0
      %v815 = vadd.f32 0.0, %v814
      %v816 = vpop.f32.mrf.mxu0
      %v817 = vadd.f32 0.0, %v816
      %818 = vmatmul.bf16.gmra.mxu0 %v488
      %v819 = vpop.f32.mrf.mxu0
      %v820 = vadd.f32 0.0, %v819
      %v821 = vpop.f32.mrf.mxu0
      %v822 = vadd.f32 0.0, %v821
      %823 = vmatmul.bf16.gmra.mxu0 %v490
      %v824 = vpop.f32.mrf.mxu0
      %v825 = vadd.f32 0.0, %v824
      %v826 = vpop.f32.mrf.mxu0
      %v827 = vadd.f32 0.0, %v826
      %828 = vmatmul.bf16.gmra.mxu0 %v492
      %v829 = vpop.f32.mrf.mxu0
      %v830 = vadd.f32 0.0, %v829
      %v831 = vpop.f32.mrf.mxu0
      %v832 = vadd.f32 0.0, %v831
      %833 = vmatmul.bf16.gmra.mxu0 %v494
      %v834 = vpop.f32.mrf.mxu0
      %v835 = vadd.f32 0.0, %v834
      %v836 = vpop.f32.mrf.mxu0
      %v837 = vadd.f32 0.0, %v836
      %838 = vmatmul.bf16.gmra.mxu0 %v496
      %v839 = vpop.f32.mrf.mxu0
      %v840 = vadd.f32 0.0, %v839
      %v841 = vpop.f32.mrf.mxu0
      %v842 = vadd.f32 0.0, %v841
      %843 = vmatmul.bf16.gmra.mxu0 %v498
      %v844 = vpop.f32.mrf.mxu0
      %v845 = vadd.f32 0.0, %v844
      %v846 = vpop.f32.mrf.mxu0
      %v847 = vadd.f32 0.0, %v846
      %848 = vmatmul.bf16.gmra.mxu0 %v500
      %v849 = vpop.f32.mrf.mxu0
      %v850 = vadd.f32 0.0, %v849
      %v851 = vpop.f32.mrf.mxu0
      %v852 = vadd.f32 0.0, %v851
      %853 = vmatmul.bf16.gmra.mxu0 %v502
      %v854 = vpop.f32.mrf.mxu0
      %v855 = vadd.f32 0.0, %v854
      %v856 = vpop.f32.mrf.mxu0
      %v857 = vadd.f32 0.0, %v856
      %858 = vmatmul.bf16.gmra.mxu0 %v504
      %v859 = vpop.f32.mrf.mxu0
      %v860 = vadd.f32 0.0, %v859
      %v861 = vpop.f32.mrf.mxu0
      %v862 = vadd.f32 0.0, %v861
      %863 = vmatmul.bf16.gmra.mxu0 %v506
      %v864 = vpop.f32.mrf.mxu0
      %v865 = vadd.f32 0.0, %v864
      %v866 = vpop.f32.mrf.mxu0
      %v867 = vadd.f32 0.0, %v866
      %868 = vmatmul.bf16.gmra.mxu0 %v508
      %v869 = vpop.f32.mrf.mxu0
      %v870 = vadd.f32 0.0, %v869
      %v871 = vpop.f32.mrf.mxu0
      %v872 = vadd.f32 0.0, %v871
      %873 = vmatmul.bf16.gmra.mxu0 %v510
      %v874 = vpop.f32.mrf.mxu0
      %v875 = vadd.f32 0.0, %v874
      %v876 = vpop.f32.mrf.mxu0
      %v877 = vadd.f32 0.0, %v876
      %878 = vmatmul.bf16.gmra.mxu0 %v512
      %v879 = vpop.f32.mrf.mxu0
      %v880 = vadd.f32 0.0, %v879
      %v881 = vpop.f32.mrf.mxu0
      %v882 = vadd.f32 0.0, %v881
      %883 = vmatmul.bf16.gmra.mxu0 %v514
      %v884 = vpop.f32.mrf.mxu0
      %v885 = vadd.f32 0.0, %v884
      %v886 = vpop.f32.mrf.mxu0
      %v887 = vadd.f32 0.0, %v886
      %888 = vmatmul.bf16.gmra.mxu0 %v516
      %v889 = vpop.f32.mrf.mxu0
      %v890 = vadd.f32 0.0, %v889
      %v891 = vpop.f32.mrf.mxu0
      %v892 = vadd.f32 0.0, %v891
      %893 = vmatmul.bf16.gmra.mxu0 %v518
      %v894 = vpop.f32.mrf.mxu0
      %v895 = vadd.f32 0.0, %v894
      %v896 = vpop.f32.mrf.mxu0
      %v897 = vadd.f32 0.0, %v896
      %898 = vmatmul.bf16.gmra.mxu0 %v520
      %v899 = vpop.f32.mrf.mxu0
      %v900 = vadd.f32 0.0, %v899
      %v901 = vpop.f32.mrf.mxu0
      %v902 = vadd.f32 0.0, %v901
      %903 = vmatmul.bf16.gmra.mxu0 %v522
      %v904 = vpop.f32.mrf.mxu0
      %v905 = vadd.f32 0.0, %v904
      %v906 = vpop.f32.mrf.mxu0
      %v907 = vadd.f32 0.0, %v906
      %908 = vmatmul.bf16.gmra.mxu0 %v524
      %v909 = vpop.f32.mrf.mxu0
      %v910 = vadd.f32 0.0, %v909
      %v911 = vpop.f32.mrf.mxu0
      %v912 = vadd.f32 0.0, %v911
      %913 = vmatmul.bf16.gmra.mxu0 %v526
      %v914 = vpop.f32.mrf.mxu0
      %v915 = vadd.f32 0.0, %v914
      %v916 = vpop.f32.mrf.mxu0
      %v917 = vadd.f32 0.0, %v916
      %918 = vmatmul.bf16.gmra.mxu0 %v528
      %v919 = vpop.f32.mrf.mxu0
      %v920 = vadd.f32 0.0, %v919
      %v921 = vpop.f32.mrf.mxu0
      %v922 = vadd.f32 0.0, %v921
      %923 = vmatmul.bf16.gmra.mxu0 %v530
      %v924 = vpop.f32.mrf.mxu0
      %v925 = vadd.f32 0.0, %v924
      %v926 = vpop.f32.mrf.mxu0
      %v927 = vadd.f32 0.0, %v926
      %928 = vmatmul.bf16.gmra.mxu0 %v532
      %v929 = vpop.f32.mrf.mxu0
      %v930 = vadd.f32 0.0, %v929
      %v931 = vpop.f32.mrf.mxu0
      %v932 = vadd.f32 0.0, %v931
      %933 = vmatmul.bf16.gmra.mxu0 %v534
      %v934 = vpop.f32.mrf.mxu0
      %v935 = vadd.f32 0.0, %v934
      %v936 = vpop.f32.mrf.mxu0
      %v937 = vadd.f32 0.0, %v936
      %938 = vmatmul.bf16.gmra.mxu0 %v536
      %v939 = vpop.f32.mrf.mxu0
      %v940 = vadd.f32 0.0, %v939
      %v941 = vpop.f32.mrf.mxu0
      %v942 = vadd.f32 0.0, %v941
      %943 = vmatmul.bf16.gmra.mxu0 %v538
      %v944 = vpop.f32.mrf.mxu0
      %v945 = vadd.f32 0.0, %v944
      %v946 = vpop.f32.mrf.mxu0
      %v947 = vadd.f32 0.0, %v946
      %948 = vmatmul.bf16.gmra.mxu0 %v540
      %v949 = vpop.f32.mrf.mxu0
      %v950 = vadd.f32 0.0, %v949
      %v951 = vpop.f32.mrf.mxu0
      %v952 = vadd.f32 0.0, %v951
      %953 = vmatmul.bf16.gmra.mxu0 %v542
      %v954 = vpop.f32.mrf.mxu0
      %v955 = vadd.f32 0.0, %v954
      %v956 = vpop.f32.mrf.mxu0
      %v957 = vadd.f32 0.0, %v956
      %958 = vmatmul.bf16.gmra.mxu0 %v544
      %v959 = vpop.f32.mrf.mxu0
      %v960 = vadd.f32 0.0, %v959
      %v961 = vpop.f32.mrf.mxu0
      %v962 = vadd.f32 0.0, %v961
      %963 = vmatmul.bf16.gmra.mxu0 %v546
      %v964 = vpop.f32.mrf.mxu0
      %v965 = vadd.f32 0.0, %v964
      %v966 = vpop.f32.mrf.mxu0
      %v967 = vadd.f32 0.0, %v966
      %968 = vmatmul.bf16.gmra.mxu0 %v548
      %v969 = vpop.f32.mrf.mxu0
      %v970 = vadd.f32 0.0, %v969
      %v971 = vpop.f32.mrf.mxu0
      %v972 = vadd.f32 0.0, %v971
      %973 = vmatmul.bf16.gmra.mxu0 %v550
      %v974 = vpop.f32.mrf.mxu0
      %v975 = vadd.f32 0.0, %v974
      %v976 = vpop.f32.mrf.mxu0
      %v977 = vadd.f32 0.0, %v976
      %978 = vmatmul.bf16.gmra.mxu0 %v552
      %v979 = vpop.f32.mrf.mxu0
      %v980 = vadd.f32 0.0, %v979
      %v981 = vpop.f32.mrf.mxu0
      %v982 = vadd.f32 0.0, %v981
      %983 = vmatmul.bf16.gmra.mxu0 %v554
      %v984 = vpop.f32.mrf.mxu0
      %v985 = vadd.f32 0.0, %v984
      %v986 = vpop.f32.mrf.mxu0
      %v987 = vadd.f32 0.0, %v986
      %988 = vmatmul.bf16.gmra.mxu0 %v556
      %v989 = vpop.f32.mrf.mxu0
      %v990 = vadd.f32 0.0, %v989
      %v991 = vpop.f32.mrf.mxu0
      %v992 = vadd.f32 0.0, %v991
      %993 = vmatmul.bf16.gmra.mxu0 %v558
      %v994 = vpop.f32.mrf.mxu0
      %v995 = vadd.f32 0.0, %v994
      %v996 = vpop.f32.mrf.mxu0
      %v997 = vadd.f32 0.0, %v996
      %998 = vmatmul.bf16.gmra.mxu0 %v560
      %v999 = vpop.f32.mrf.mxu0
      %v1000 = vadd.f32 0.0, %v999
      %v1001 = vpop.f32.mrf.mxu0
      %v1002 = vadd.f32 0.0, %v1001
      %1003 = vmatmul.bf16.gmra.mxu0 %v562
      %v1004 = vpop.f32.mrf.mxu0
      %v1005 = vadd.f32 0.0, %v1004
      %v1006 = vpop.f32.mrf.mxu0
      %v1007 = vadd.f32 0.0, %v1006
      %1008 = vmatmul.bf16.gmra.mxu0 %v564
      %v1009 = vpop.f32.mrf.mxu0
      %v1010 = vadd.f32 0.0, %v1009
      %v1011 = vpop.f32.mrf.mxu0
      %v1012 = vadd.f32 0.0, %v1011
      %1013 = vmatmul.bf16.gmra.mxu0 %v566
      %v1014 = vpop.f32.mrf.mxu0
      %v1015 = vadd.f32 0.0, %v1014
      %v1016 = vpop.f32.mrf.mxu0
      %v1017 = vadd.f32 0.0, %v1016
      %1018 = vmatmul.bf16.gmra.mxu0 %v568
      %v1019 = vpop.f32.mrf.mxu0
      %v1020 = vadd.f32 0.0, %v1019
      %v1021 = vpop.f32.mrf.mxu0
      %v1022 = vadd.f32 0.0, %v1021
      %1023 = vmatmul.bf16.gmra.mxu0 %v570
      %v1024 = vpop.f32.mrf.mxu0
      %v1025 = vadd.f32 0.0, %v1024
      %v1026 = vpop.f32.mrf.mxu0
      %v1027 = vadd.f32 0.0, %v1026
      %1028 = vdwg.mxu0
      %1029 = vmatpush.bf16.msra.mxu0 %v683
      %1030 = vmatpush.bf16.msra.mxu0 %v682
      %1031 = vmatpush.bf16.msra.mxu0 %v681
      %1032 = vmatpush.bf16.msra.mxu0 %v680
      %1033 = vmatpush.bf16.msra.mxu0 %v679
      %1034 = vmatpush.bf16.msra.mxu0 %v678
      %1035 = vmatpush.bf16.msra.mxu0 %v677
      %1036 = vmatpush.bf16.msra.mxu0 %v676
      %1037 = vmatmul.bf16.gmra.mxu0 %v445
      %v1038 = vpop.f32.mrf.mxu0
      %v1039 = vadd.f32 %v710, %v1038
      %v1040 = vpop.f32.mrf.mxu0
      %v1041 = vadd.f32 %v712, %v1040
      %1042 = vmatmul.bf16.gmra.mxu0 %v447
      %v1043 = vpop.f32.mrf.mxu0
      %v1044 = vadd.f32 %v715, %v1043
      %v1045 = vpop.f32.mrf.mxu0
      %v1046 = vadd.f32 %v717, %v1045
      %1047 = vmatmul.bf16.gmra.mxu0 %v449
      %v1048 = vpop.f32.mrf.mxu0
      %v1049 = vadd.f32 %v720, %v1048
      %v1050 = vpop.f32.mrf.mxu0
      %v1051 = vadd.f32 %v722, %v1050
      %1052 = vmatmul.bf16.gmra.mxu0 %v451
      %v1053 = vpop.f32.mrf.mxu0
      %v1054 = vadd.f32 %v725, %v1053
      %v1055 = vpop.f32.mrf.mxu0
      %v1056 = vadd.f32 %v727, %v1055
      %1057 = vmatmul.bf16.gmra.mxu0 %v453
      %v1058 = vpop.f32.mrf.mxu0
      %v1059 = vadd.f32 %v730, %v1058
      %v1060 = vpop.f32.mrf.mxu0
      %v1061 = vadd.f32 %v732, %v1060
      %1062 = vmatmul.bf16.gmra.mxu0 %v455
      %v1063 = vpop.f32.mrf.mxu0
      %v1064 = vadd.f32 %v735, %v1063
      %v1065 = vpop.f32.mrf.mxu0
      %v1066 = vadd.f32 %v737, %v1065
      %1067 = vmatmul.bf16.gmra.mxu0 %v457
      %v1068 = vpop.f32.mrf.mxu0
      %v1069 = vadd.f32 %v740, %v1068
      %v1070 = vpop.f32.mrf.mxu0
      %v1071 = vadd.f32 %v742, %v1070
      %1072 = vmatmul.bf16.gmra.mxu0 %v459
      %v1073 = vpop.f32.mrf.mxu0
      %v1074 = vadd.f32 %v745, %v1073
      %v1075 = vpop.f32.mrf.mxu0
      %v1076 = vadd.f32 %v747, %v1075
      %1077 = vmatmul.bf16.gmra.mxu0 %v461
      %v1078 = vpop.f32.mrf.mxu0
      %v1079 = vadd.f32 %v750, %v1078
      %v1080 = vpop.f32.mrf.mxu0
      %v1081 = vadd.f32 %v752, %v1080
      %1082 = vmatmul.bf16.gmra.mxu0 %v463
      %v1083 = vpop.f32.mrf.mxu0
      %v1084 = vadd.f32 %v755, %v1083
      %v1085 = vpop.f32.mrf.mxu0
      %v1086 = vadd.f32 %v757, %v1085
      %1087 = vmatmul.bf16.gmra.mxu0 %v465
      %v1088 = vpop.f32.mrf.mxu0
      %v1089 = vadd.f32 %v760, %v1088
      %v1090 = vpop.f32.mrf.mxu0
      %v1091 = vadd.f32 %v762, %v1090
      %1092 = vmatmul.bf16.gmra.mxu0 %v467
      %v1093 = vpop.f32.mrf.mxu0
      %v1094 = vadd.f32 %v765, %v1093
      %v1095 = vpop.f32.mrf.mxu0
      %v1096 = vadd.f32 %v767, %v1095
      %1097 = vmatmul.bf16.gmra.mxu0 %v469
      %v1098 = vpop.f32.mrf.mxu0
      %v1099 = vadd.f32 %v770, %v1098
      %v1100 = vpop.f32.mrf.mxu0
      %v1101 = vadd.f32 %v772, %v1100
      %1102 = vmatmul.bf16.gmra.mxu0 %v471
      %v1103 = vpop.f32.mrf.mxu0
      %v1104 = vadd.f32 %v775, %v1103
      %v1105 = vpop.f32.mrf.mxu0
      %v1106 = vadd.f32 %v777, %v1105
      %1107 = vmatmul.bf16.gmra.mxu0 %v473
      %v1108 = vpop.f32.mrf.mxu0
      %v1109 = vadd.f32 %v780, %v1108
      %v1110 = vpop.f32.mrf.mxu0
      %v1111 = vadd.f32 %v782, %v1110
      %1112 = vmatmul.bf16.gmra.mxu0 %v475
      %v1113 = vpop.f32.mrf.mxu0
      %v1114 = vadd.f32 %v785, %v1113
      %v1115 = vpop.f32.mrf.mxu0
      %v1116 = vadd.f32 %v787, %v1115
      %1117 = vmatmul.bf16.gmra.mxu0 %v477
      %v1118 = vpop.f32.mrf.mxu0
      %v1119 = vadd.f32 %v790, %v1118
      %v1120 = vpop.f32.mrf.mxu0
      %v1121 = vadd.f32 %v792, %v1120
      %1122 = vmatmul.bf16.gmra.mxu0 %v479
      %v1123 = vpop.f32.mrf.mxu0
      %v1124 = vadd.f32 %v795, %v1123
      %v1125 = vpop.f32.mrf.mxu0
      %v1126 = vadd.f32 %v797, %v1125
      %1127 = vmatmul.bf16.gmra.mxu0 %v481
      %v1128 = vpop.f32.mrf.mxu0
      %v1129 = vadd.f32 %v800, %v1128
      %v1130 = vpop.f32.mrf.mxu0
      %v1131 = vadd.f32 %v802, %v1130
      %1132 = vmatmul.bf16.gmra.mxu0 %v483
      %v1133 = vpop.f32.mrf.mxu0
      %v1134 = vadd.f32 %v805, %v1133
      %v1135 = vpop.f32.mrf.mxu0
      %v1136 = vadd.f32 %v807, %v1135
      %1137 = vmatmul.bf16.gmra.mxu0 %v485
      %v1138 = vpop.f32.mrf.mxu0
      %v1139 = vadd.f32 %v810, %v1138
      %v1140 = vpop.f32.mrf.mxu0
      %v1141 = vadd.f32 %v812, %v1140
      %1142 = vmatmul.bf16.gmra.mxu0 %v487
      %v1143 = vpop.f32.mrf.mxu0
      %v1144 = vadd.f32 %v815, %v1143
      %v1145 = vpop.f32.mrf.mxu0
      %v1146 = vadd.f32 %v817, %v1145
      %1147 = vmatmul.bf16.gmra.mxu0 %v489
      %v1148 = vpop.f32.mrf.mxu0
      %v1149 = vadd.f32 %v820, %v1148
      %v1150 = vpop.f32.mrf.mxu0
      %v1151 = vadd.f32 %v822, %v1150
      %1152 = vmatmul.bf16.gmra.mxu0 %v491
      %v1153 = vpop.f32.mrf.mxu0
      %v1154 = vadd.f32 %v825, %v1153
      %v1155 = vpop.f32.mrf.mxu0
      %v1156 = vadd.f32 %v827, %v1155
      %1157 = vmatmul.bf16.gmra.mxu0 %v493
      %v1158 = vpop.f32.mrf.mxu0
      %v1159 = vadd.f32 %v830, %v1158
      %v1160 = vpop.f32.mrf.mxu0
      %v1161 = vadd.f32 %v832, %v1160
      %1162 = vmatmul.bf16.gmra.mxu0 %v495
      %v1163 = vpop.f32.mrf.mxu0
      %v1164 = vadd.f32 %v835, %v1163
      %v1165 = vpop.f32.mrf.mxu0
      %v1166 = vadd.f32 %v837, %v1165
      %1167 = vmatmul.bf16.gmra.mxu0 %v497
      %v1168 = vpop.f32.mrf.mxu0
      %v1169 = vadd.f32 %v840, %v1168
      %v1170 = vpop.f32.mrf.mxu0
      %v1171 = vadd.f32 %v842, %v1170
      %1172 = vmatmul.bf16.gmra.mxu0 %v499
      %v1173 = vpop.f32.mrf.mxu0
      %v1174 = vadd.f32 %v845, %v1173
      %v1175 = vpop.f32.mrf.mxu0
      %v1176 = vadd.f32 %v847, %v1175
      %1177 = vmatmul.bf16.gmra.mxu0 %v501
      %v1178 = vpop.f32.mrf.mxu0
      %v1179 = vadd.f32 %v850, %v1178
      %v1180 = vpop.f32.mrf.mxu0
      %v1181 = vadd.f32 %v852, %v1180
      %1182 = vmatmul.bf16.gmra.mxu0 %v503
      %v1183 = vpop.f32.mrf.mxu0
      %v1184 = vadd.f32 %v855, %v1183
      %v1185 = vpop.f32.mrf.mxu0
      %v1186 = vadd.f32 %v857, %v1185
      %1187 = vmatmul.bf16.gmra.mxu0 %v505
      %v1188 = vpop.f32.mrf.mxu0
      %v1189 = vadd.f32 %v860, %v1188
      %v1190 = vpop.f32.mrf.mxu0
      %v1191 = vadd.f32 %v862, %v1190
      %1192 = vmatmul.bf16.gmra.mxu0 %v507
      %v1193 = vpop.f32.mrf.mxu0
      %v1194 = vadd.f32 %v865, %v1193
      %v1195 = vpop.f32.mrf.mxu0
      %v1196 = vadd.f32 %v867, %v1195
      %1197 = vmatmul.bf16.gmra.mxu0 %v509
      %v1198 = vpop.f32.mrf.mxu0
      %v1199 = vadd.f32 %v870, %v1198
      %v1200 = vpop.f32.mrf.mxu0
      %v1201 = vadd.f32 %v872, %v1200
      %1202 = vmatmul.bf16.gmra.mxu0 %v511
      %v1203 = vpop.f32.mrf.mxu0
      %v1204 = vadd.f32 %v875, %v1203
      %v1205 = vpop.f32.mrf.mxu0
      %v1206 = vadd.f32 %v877, %v1205
      %1207 = vmatmul.bf16.gmra.mxu0 %v513
      %v1208 = vpop.f32.mrf.mxu0
      %v1209 = vadd.f32 %v880, %v1208
      %v1210 = vpop.f32.mrf.mxu0
      %v1211 = vadd.f32 %v882, %v1210
      %1212 = vmatmul.bf16.gmra.mxu0 %v515
      %v1213 = vpop.f32.mrf.mxu0
      %v1214 = vadd.f32 %v885, %v1213
      %v1215 = vpop.f32.mrf.mxu0
      %v1216 = vadd.f32 %v887, %v1215
      %1217 = vmatmul.bf16.gmra.mxu0 %v517
      %v1218 = vpop.f32.mrf.mxu0
      %v1219 = vadd.f32 %v890, %v1218
      %v1220 = vpop.f32.mrf.mxu0
      %v1221 = vadd.f32 %v892, %v1220
      %1222 = vmatmul.bf16.gmra.mxu0 %v519
      %v1223 = vpop.f32.mrf.mxu0
      %v1224 = vadd.f32 %v895, %v1223
      %v1225 = vpop.f32.mrf.mxu0
      %v1226 = vadd.f32 %v897, %v1225
      %1227 = vmatmul.bf16.gmra.mxu0 %v521
      %v1228 = vpop.f32.mrf.mxu0
      %v1229 = vadd.f32 %v900, %v1228
      %v1230 = vpop.f32.mrf.mxu0
      %v1231 = vadd.f32 %v902, %v1230
      %1232 = vmatmul.bf16.gmra.mxu0 %v523
      %v1233 = vpop.f32.mrf.mxu0
      %v1234 = vadd.f32 %v905, %v1233
      %v1235 = vpop.f32.mrf.mxu0
      %v1236 = vadd.f32 %v907, %v1235
      %1237 = vmatmul.bf16.gmra.mxu0 %v525
      %v1238 = vpop.f32.mrf.mxu0
      %v1239 = vadd.f32 %v910, %v1238
      %v1240 = vpop.f32.mrf.mxu0
      %v1241 = vadd.f32 %v912, %v1240
      %1242 = vmatmul.bf16.gmra.mxu0 %v527
      %v1243 = vpop.f32.mrf.mxu0
      %v1244 = vadd.f32 %v915, %v1243
      %v1245 = vpop.f32.mrf.mxu0
      %v1246 = vadd.f32 %v917, %v1245
      %1247 = vmatmul.bf16.gmra.mxu0 %v529
      %v1248 = vpop.f32.mrf.mxu0
      %v1249 = vadd.f32 %v920, %v1248
      %v1250 = vpop.f32.mrf.mxu0
      %v1251 = vadd.f32 %v922, %v1250
      %1252 = vmatmul.bf16.gmra.mxu0 %v531
      %v1253 = vpop.f32.mrf.mxu0
      %v1254 = vadd.f32 %v925, %v1253
      %v1255 = vpop.f32.mrf.mxu0
      %v1256 = vadd.f32 %v927, %v1255
      %1257 = vmatmul.bf16.gmra.mxu0 %v533
      %v1258 = vpop.f32.mrf.mxu0
      %v1259 = vadd.f32 %v930, %v1258
      %v1260 = vpop.f32.mrf.mxu0
      %v1261 = vadd.f32 %v932, %v1260
      %1262 = vmatmul.bf16.gmra.mxu0 %v535
      %v1263 = vpop.f32.mrf.mxu0
      %v1264 = vadd.f32 %v935, %v1263
      %v1265 = vpop.f32.mrf.mxu0
      %v1266 = vadd.f32 %v937, %v1265
      %1267 = vmatmul.bf16.gmra.mxu0 %v537
      %v1268 = vpop.f32.mrf.mxu0
      %v1269 = vadd.f32 %v940, %v1268
      %v1270 = vpop.f32.mrf.mxu0
      %v1271 = vadd.f32 %v942, %v1270
      %1272 = vmatmul.bf16.gmra.mxu0 %v539
      %v1273 = vpop.f32.mrf.mxu0
      %v1274 = vadd.f32 %v945, %v1273
      %v1275 = vpop.f32.mrf.mxu0
      %v1276 = vadd.f32 %v947, %v1275
      %1277 = vmatmul.bf16.gmra.mxu0 %v541
      %v1278 = vpop.f32.mrf.mxu0
      %v1279 = vadd.f32 %v950, %v1278
      %v1280 = vpop.f32.mrf.mxu0
      %v1281 = vadd.f32 %v952, %v1280
      %1282 = vmatmul.bf16.gmra.mxu0 %v543
      %v1283 = vpop.f32.mrf.mxu0
      %v1284 = vadd.f32 %v955, %v1283
      %v1285 = vpop.f32.mrf.mxu0
      %v1286 = vadd.f32 %v957, %v1285
      %1287 = vmatmul.bf16.gmra.mxu0 %v545
      %v1288 = vpop.f32.mrf.mxu0
      %v1289 = vadd.f32 %v960, %v1288
      %v1290 = vpop.f32.mrf.mxu0
      %v1291 = vadd.f32 %v962, %v1290
      %1292 = vmatmul.bf16.gmra.mxu0 %v547
      %v1293 = vpop.f32.mrf.mxu0
      %v1294 = vadd.f32 %v965, %v1293
      %v1295 = vpop.f32.mrf.mxu0
      %v1296 = vadd.f32 %v967, %v1295
      %1297 = vmatmul.bf16.gmra.mxu0 %v549
      %v1298 = vpop.f32.mrf.mxu0
      %v1299 = vadd.f32 %v970, %v1298
      %v1300 = vpop.f32.mrf.mxu0
      %v1301 = vadd.f32 %v972, %v1300
      %1302 = vmatmul.bf16.gmra.mxu0 %v551
      %v1303 = vpop.f32.mrf.mxu0
      %v1304 = vadd.f32 %v975, %v1303
      %v1305 = vpop.f32.mrf.mxu0
      %v1306 = vadd.f32 %v977, %v1305
      %1307 = vmatmul.bf16.gmra.mxu0 %v553
      %v1308 = vpop.f32.mrf.mxu0
      %v1309 = vadd.f32 %v980, %v1308
      %v1310 = vpop.f32.mrf.mxu0
      %v1311 = vadd.f32 %v982, %v1310
      %1312 = vmatmul.bf16.gmra.mxu0 %v555
      %v1313 = vpop.f32.mrf.mxu0
      %v1314 = vadd.f32 %v985, %v1313
      %v1315 = vpop.f32.mrf.mxu0
      %v1316 = vadd.f32 %v987, %v1315
      %1317 = vmatmul.bf16.gmra.mxu0 %v557
      %v1318 = vpop.f32.mrf.mxu0
      %v1319 = vadd.f32 %v990, %v1318
      %v1320 = vpop.f32.mrf.mxu0
      %v1321 = vadd.f32 %v992, %v1320
      %1322 = vmatmul.bf16.gmra.mxu0 %v559
      %v1323 = vpop.f32.mrf.mxu0
      %v1324 = vadd.f32 %v995, %v1323
      %v1325 = vpop.f32.mrf.mxu0
      %v1326 = vadd.f32 %v997, %v1325
      %1327 = vmatmul.bf16.gmra.mxu0 %v561
      %v1328 = vpop.f32.mrf.mxu0
      %v1329 = vadd.f32 %v1000, %v1328
      %v1330 = vpop.f32.mrf.mxu0
      %v1331 = vadd.f32 %v1002, %v1330
      %1332 = vmatmul.bf16.gmra.mxu0 %v563
      %v1333 = vpop.f32.mrf.mxu0
      %v1334 = vadd.f32 %v1005, %v1333
      %v1335 = vpop.f32.mrf.mxu0
      %v1336 = vadd.f32 %v1007, %v1335
      %1337 = vmatmul.bf16.gmra.mxu0 %v565
      %v1338 = vpop.f32.mrf.mxu0
      %v1339 = vadd.f32 %v1010, %v1338
      %v1340 = vpop.f32.mrf.mxu0
      %v1341 = vadd.f32 %v1012, %v1340
      %1342 = vmatmul.bf16.gmra.mxu0 %v567
      %v1343 = vpop.f32.mrf.mxu0
      %v1344 = vadd.f32 %v1015, %v1343
      %v1345 = vpop.f32.mrf.mxu0
      %v1346 = vadd.f32 %v1017, %v1345
      %1347 = vmatmul.bf16.gmra.mxu0 %v569
      %v1348 = vpop.f32.mrf.mxu0
      %v1349 = vadd.f32 %v1020, %v1348
      %v1350 = vpop.f32.mrf.mxu0
      %v1351 = vadd.f32 %v1022, %v1350
      %1352 = vmatmul.bf16.gmra.mxu0 %v571
      %v1353 = vpop.f32.mrf.mxu0
      %v1354 = vadd.f32 %v1025, %v1353
      %v1355 = vpop.f32.mrf.mxu0
      %v1356 = vadd.f32 %v1027, %v1355
      %1357 = vdwg.mxu0
      %vm1358 = vcmask 64512
      %1359 = vst.msk [vmem:[%s182] sm:$0xff] %vm1358, %v1039
      %1360 = vst.msk [vmem:[%s182 + $0x8] sm:$0xff] %vm1358, %v1041
      %1361 = vst.msk [vmem:[%s182 + $0x10] sm:$0xff] %vm1358, %v1044
      %1362 = vst.msk [vmem:[%s182 + $0x18] sm:$0xff] %vm1358, %v1046
      %1363 = vst.msk [vmem:[%s182 + $0x20] sm:$0xff] %vm1358, %v1049
      %1364 = vst.msk [vmem:[%s182 + $0x28] sm:$0xff] %vm1358, %v1051
      %1365 = vst.msk [vmem:[%s182 + $0x30] sm:$0xff] %vm1358, %v1054
      %1366 = vst.msk [vmem:[%s182 + $0x38] sm:$0xff] %vm1358, %v1056
      %1367 = vst.msk [vmem:[%s182 + $0x40] sm:$0xff] %vm1358, %v1059
      %1368 = vst.msk [vmem:[%s182 + $0x48] sm:$0xff] %vm1358, %v1061
      %1369 = vst.msk [vmem:[%s182 + $0x50] sm:$0xff] %vm1358, %v1064
      %1370 = vst.msk [vmem:[%s182 + $0x58] sm:$0xff] %vm1358, %v1066
      %1371 = vst.msk [vmem:[%s182 + $0x60] sm:$0xff] %vm1358, %v1069
      %1372 = vst.msk [vmem:[%s182 + $0x68] sm:$0xff] %vm1358, %v1071
      %1373 = vst.msk [vmem:[%s182 + $0x70] sm:$0xff] %vm1358, %v1074
      %1374 = vst.msk [vmem:[%s182 + $0x78] sm:$0xff] %vm1358, %v1076
      %1375 = vst.msk [vmem:[%s182 + $0x80] sm:$0xff] %vm1358, %v1079
      %1376 = vst.msk [vmem:[%s182 + $0x88] sm:$0xff] %vm1358, %v1081
      %1377 = vst.msk [vmem:[%s182 + $0x90] sm:$0xff] %vm1358, %v1084
      %1378 = vst.msk [vmem:[%s182 + $0x98] sm:$0xff] %vm1358, %v1086
      %1379 = vst.msk [vmem:[%s182 + $0xa0] sm:$0xff] %vm1358, %v1089
      %1380 = vst.msk [vmem:[%s182 + $0xa8] sm:$0xff] %vm1358, %v1091
      %1381 = vst.msk [vmem:[%s182 + $0xb0] sm:$0xff] %vm1358, %v1094
      %1382 = vst.msk [vmem:[%s182 + $0xb8] sm:$0xff] %vm1358, %v1096
      %1383 = vst.msk [vmem:[%s182 + $0xc0] sm:$0xff] %vm1358, %v1099
      %1384 = vst.msk [vmem:[%s182 + $0xc8] sm:$0xff] %vm1358, %v1101
      %1385 = vst.msk [vmem:[%s182 + $0xd0] sm:$0xff] %vm1358, %v1104
      %1386 = vst.msk [vmem:[%s182 + $0xd8] sm:$0xff] %vm1358, %v1106
      %1387 = vst.msk [vmem:[%s182 + $0xe0] sm:$0xff] %vm1358, %v1109
      %1388 = vst.msk [vmem:[%s182 + $0xe8] sm:$0xff] %vm1358, %v1111
      %1389 = vst.msk [vmem:[%s182 + $0xf0] sm:$0xff] %vm1358, %v1114
      %1390 = vst.msk [vmem:[%s182 + $0xf8] sm:$0xff] %vm1358, %v1116
      %1391 = vst.msk [vmem:[%s182 + $0x100] sm:$0xff] %vm1358, %v1119
      %1392 = vst.msk [vmem:[%s182 + $0x108] sm:$0xff] %vm1358, %v1121
      %1393 = vst.msk [vmem:[%s182 + $0x110] sm:$0xff] %vm1358, %v1124
      %1394 = vst.msk [vmem:[%s182 + $0x118] sm:$0xff] %vm1358, %v1126
      %1395 = vst.msk [vmem:[%s182 + $0x120] sm:$0xff] %vm1358, %v1129
      %1396 = vst.msk [vmem:[%s182 + $0x128] sm:$0xff] %vm1358, %v1131
      %1397 = vst.msk [vmem:[%s182 + $0x130] sm:$0xff] %vm1358, %v1134
      %1398 = vst.msk [vmem:[%s182 + $0x138] sm:$0xff] %vm1358, %v1136
      %1399 = vst.msk [vmem:[%s182 + $0x140] sm:$0xff] %vm1358, %v1139
      %1400 = vst.msk [vmem:[%s182 + $0x148] sm:$0xff] %vm1358, %v1141
      %1401 = vst.msk [vmem:[%s182 + $0x150] sm:$0xff] %vm1358, %v1144
      %1402 = vst.msk [vmem:[%s182 + $0x158] sm:$0xff] %vm1358, %v1146
      %1403 = vst.msk [vmem:[%s182 + $0x160] sm:$0xff] %vm1358, %v1149
      %1404 = vst.msk [vmem:[%s182 + $0x168] sm:$0xff] %vm1358, %v1151
      %1405 = vst.msk [vmem:[%s182 + $0x170] sm:$0xff] %vm1358, %v1154
      %1406 = vst.msk [vmem:[%s182 + $0x178] sm:$0xff] %vm1358, %v1156
      %1407 = vst.msk [vmem:[%s182 + $0x180] sm:$0xff] %vm1358, %v1159
      %1408 = vst.msk [vmem:[%s182 + $0x188] sm:$0xff] %vm1358, %v1161
      %1409 = vst.msk [vmem:[%s182 + $0x190] sm:$0xff] %vm1358, %v1164
      %1410 = vst.msk [vmem:[%s182 + $0x198] sm:$0xff] %vm1358, %v1166
      %1411 = vst.msk [vmem:[%s182 + $0x1a0] sm:$0xff] %vm1358, %v1169
      %1412 = vst.msk [vmem:[%s182 + $0x1a8] sm:$0xff] %vm1358, %v1171
      %1413 = vst.msk [vmem:[%s182 + $0x1b0] sm:$0xff] %vm1358, %v1174
      %1414 = vst.msk [vmem:[%s182 + $0x1b8] sm:$0xff] %vm1358, %v1176
      %1415 = vst.msk [vmem:[%s182 + $0x1c0] sm:$0xff] %vm1358, %v1179
      %1416 = vst.msk [vmem:[%s182 + $0x1c8] sm:$0xff] %vm1358, %v1181
      %1417 = vst.msk [vmem:[%s182 + $0x1d0] sm:$0xff] %vm1358, %v1184
      %1418 = vst.msk [vmem:[%s182 + $0x1d8] sm:$0xff] %vm1358, %v1186
      %1419 = vst.msk [vmem:[%s182 + $0x1e0] sm:$0xff] %vm1358, %v1189
      %1420 = vst.msk [vmem:[%s182 + $0x1e8] sm:$0xff] %vm1358, %v1191
      %1421 = vst.msk [vmem:[%s182 + $0x1f0] sm:$0xff] %vm1358, %v1194
      %1422 = vst.msk [vmem:[%s182 + $0x1f8] sm:$0xff] %vm1358, %v1196
      %1423 = vst.msk [vmem:[%s182 + $0x200] sm:$0xff] %vm1358, %v1199
      %1424 = vst.msk [vmem:[%s182 + $0x208] sm:$0xff] %vm1358, %v1201
      %1425 = vst.msk [vmem:[%s182 + $0x210] sm:$0xff] %vm1358, %v1204
      %1426 = vst.msk [vmem:[%s182 + $0x218] sm:$0xff] %vm1358, %v1206
      %1427 = vst.msk [vmem:[%s182 + $0x220] sm:$0xff] %vm1358, %v1209
      %1428 = vst.msk [vmem:[%s182 + $0x228] sm:$0xff] %vm1358, %v1211
      %1429 = vst.msk [vmem:[%s182 + $0x230] sm:$0xff] %vm1358, %v1214
      %1430 = vst.msk [vmem:[%s182 + $0x238] sm:$0xff] %vm1358, %v1216
      %1431 = vst.msk [vmem:[%s182 + $0x240] sm:$0xff] %vm1358, %v1219
      %1432 = vst.msk [vmem:[%s182 + $0x248] sm:$0xff] %vm1358, %v1221
      %1433 = vst.msk [vmem:[%s182 + $0x250] sm:$0xff] %vm1358, %v1224
      %1434 = vst.msk [vmem:[%s182 + $0x258] sm:$0xff] %vm1358, %v1226
      %1435 = vst.msk [vmem:[%s182 + $0x260] sm:$0xff] %vm1358, %v1229
      %1436 = vst.msk [vmem:[%s182 + $0x268] sm:$0xff] %vm1358, %v1231
      %1437 = vst.msk [vmem:[%s182 + $0x270] sm:$0xff] %vm1358, %v1234
      %1438 = vst.msk [vmem:[%s182 + $0x278] sm:$0xff] %vm1358, %v1236
      %1439 = vst.msk [vmem:[%s182 + $0x280] sm:$0xff] %vm1358, %v1239
      %1440 = vst.msk [vmem:[%s182 + $0x288] sm:$0xff] %vm1358, %v1241
      %1441 = vst.msk [vmem:[%s182 + $0x290] sm:$0xff] %vm1358, %v1244
      %1442 = vst.msk [vmem:[%s182 + $0x298] sm:$0xff] %vm1358, %v1246
      %1443 = vst.msk [vmem:[%s182 + $0x2a0] sm:$0xff] %vm1358, %v1249
      %1444 = vst.msk [vmem:[%s182 + $0x2a8] sm:$0xff] %vm1358, %v1251
      %1445 = vst.msk [vmem:[%s182 + $0x2b0] sm:$0xff] %vm1358, %v1254
      %1446 = vst.msk [vmem:[%s182 + $0x2b8] sm:$0xff] %vm1358, %v1256
      %1447 = vst.msk [vmem:[%s182 + $0x2c0] sm:$0xff] %vm1358, %v1259
      %1448 = vst.msk [vmem:[%s182 + $0x2c8] sm:$0xff] %vm1358, %v1261
      %1449 = vst.msk [vmem:[%s182 + $0x2d0] sm:$0xff] %vm1358, %v1264
      %1450 = vst.msk [vmem:[%s182 + $0x2d8] sm:$0xff] %vm1358, %v1266
      %1451 = vst.msk [vmem:[%s182 + $0x2e0] sm:$0xff] %vm1358, %v1269
      %1452 = vst.msk [vmem:[%s182 + $0x2e8] sm:$0xff] %vm1358, %v1271
      %1453 = vst.msk [vmem:[%s182 + $0x2f0] sm:$0xff] %vm1358, %v1274
      %1454 = vst.msk [vmem:[%s182 + $0x2f8] sm:$0xff] %vm1358, %v1276
      %1455 = vst.msk [vmem:[%s182 + $0x300] sm:$0xff] %vm1358, %v1279
      %1456 = vst.msk [vmem:[%s182 + $0x308] sm:$0xff] %vm1358, %v1281
      %1457 = vst.msk [vmem:[%s182 + $0x310] sm:$0xff] %vm1358, %v1284
      %1458 = vst.msk [vmem:[%s182 + $0x318] sm:$0xff] %vm1358, %v1286
      %1459 = vst.msk [vmem:[%s182 + $0x320] sm:$0xff] %vm1358, %v1289
      %1460 = vst.msk [vmem:[%s182 + $0x328] sm:$0xff] %vm1358, %v1291
      %1461 = vst.msk [vmem:[%s182 + $0x330] sm:$0xff] %vm1358, %v1294
      %1462 = vst.msk [vmem:[%s182 + $0x338] sm:$0xff] %vm1358, %v1296
      %1463 = vst.msk [vmem:[%s182 + $0x340] sm:$0xff] %vm1358, %v1299
      %1464 = vst.msk [vmem:[%s182 + $0x348] sm:$0xff] %vm1358, %v1301
      %1465 = vst.msk [vmem:[%s182 + $0x350] sm:$0xff] %vm1358, %v1304
      %1466 = vst.msk [vmem:[%s182 + $0x358] sm:$0xff] %vm1358, %v1306
      %1467 = vst.msk [vmem:[%s182 + $0x360] sm:$0xff] %vm1358, %v1309
      %1468 = vst.msk [vmem:[%s182 + $0x368] sm:$0xff] %vm1358, %v1311
      %1469 = vst.msk [vmem:[%s182 + $0x370] sm:$0xff] %vm1358, %v1314
      %1470 = vst.msk [vmem:[%s182 + $0x378] sm:$0xff] %vm1358, %v1316
      %1471 = vst.msk [vmem:[%s182 + $0x380] sm:$0xff] %vm1358, %v1319
      %1472 = vst.msk [vmem:[%s182 + $0x388] sm:$0xff] %vm1358, %v1321
      %1473 = vst.msk [vmem:[%s182 + $0x390] sm:$0xff] %vm1358, %v1324
      %1474 = vst.msk [vmem:[%s182 + $0x398] sm:$0xff] %vm1358, %v1326
      %1475 = vst.msk [vmem:[%s182 + $0x3a0] sm:$0xff] %vm1358, %v1329
      %1476 = vst.msk [vmem:[%s182 + $0x3a8] sm:$0xff] %vm1358, %v1331
      %1477 = vst.msk [vmem:[%s182 + $0x3b0] sm:$0xff] %vm1358, %v1334
      %1478 = vst.msk [vmem:[%s182 + $0x3b8] sm:$0xff] %vm1358, %v1336
      %1479 = vst.msk [vmem:[%s182 + $0x3c0] sm:$0xff] %vm1358, %v1339
      %1480 = vst.msk [vmem:[%s182 + $0x3c8] sm:$0xff] %vm1358, %v1341
      %1481 = vst.msk [vmem:[%s182 + $0x3d0] sm:$0xff] %vm1358, %v1344
      %1482 = vst.msk [vmem:[%s182 + $0x3d8] sm:$0xff] %vm1358, %v1346
      %1483 = vst.msk [vmem:[%s182 + $0x3e0] sm:$0xff] %vm1358, %v1349
      %1484 = vst.msk [vmem:[%s182 + $0x3e8] sm:$0xff] %vm1358, %v1351
      %1485 = vst.msk [vmem:[%s182 + $0x3f0] sm:$0xff] %vm1358, %v1354
      %1486 = vst.msk [vmem:[%s182 + $0x3f8] sm:$0xff] %vm1358, %v1356
      %v1487 = vsel %vm1358, %v1039, 0.0
      %v1488 = vsel %vm1358, %v1041, 0.0
      %v1489 = vadd.f32 %v1487, %v1488
      %v1490 = vsel %vm1358, %v1044, 0.0
      %v1491 = vadd.f32 %v1489, %v1490
      %v1492 = vsel %vm1358, %v1046, 0.0
      %v1493 = vadd.f32 %v1491, %v1492
      %v1494 = vsel %vm1358, %v1049, 0.0
      %v1495 = vadd.f32 %v1493, %v1494
      %v1496 = vsel %vm1358, %v1051, 0.0
      %v1497 = vadd.f32 %v1495, %v1496
      %v1498 = vsel %vm1358, %v1054, 0.0
      %v1499 = vadd.f32 %v1497, %v1498
      %v1500 = vsel %vm1358, %v1056, 0.0
      %v1501 = vadd.f32 %v1499, %v1500
      %v1502 = vsel %vm1358, %v1059, 0.0
      %v1503 = vadd.f32 %v1501, %v1502
      %v1504 = vsel %vm1358, %v1061, 0.0
      %v1505 = vadd.f32 %v1503, %v1504
      %v1506 = vsel %vm1358, %v1064, 0.0
      %v1507 = vadd.f32 %v1505, %v1506
      %v1508 = vsel %vm1358, %v1066, 0.0
      %v1509 = vadd.f32 %v1507, %v1508
      %v1510 = vsel %vm1358, %v1069, 0.0
      %v1511 = vadd.f32 %v1509, %v1510
      %v1512 = vsel %vm1358, %v1071, 0.0
      %v1513 = vadd.f32 %v1511, %v1512
      %v1514 = vsel %vm1358, %v1074, 0.0
      %v1515 = vadd.f32 %v1513, %v1514
      %v1516 = vsel %vm1358, %v1076, 0.0
      %v1517 = vadd.f32 %v1515, %v1516
      %v1518 = vsel %vm1358, %v1079, 0.0
      %v1519 = vadd.f32 %v1517, %v1518
      %v1520 = vsel %vm1358, %v1081, 0.0
      %v1521 = vadd.f32 %v1519, %v1520
      %v1522 = vsel %vm1358, %v1084, 0.0
      %v1523 = vadd.f32 %v1521, %v1522
      %v1524 = vsel %vm1358, %v1086, 0.0
      %v1525 = vadd.f32 %v1523, %v1524
      %v1526 = vsel %vm1358, %v1089, 0.0
      %v1527 = vadd.f32 %v1525, %v1526
      %v1528 = vsel %vm1358, %v1091, 0.0
      %v1529 = vadd.f32 %v1527, %v1528
      %v1530 = vsel %vm1358, %v1094, 0.0
      %v1531 = vadd.f32 %v1529, %v1530
      %v1532 = vsel %vm1358, %v1096, 0.0
      %v1533 = vadd.f32 %v1531, %v1532
      %v1534 = vsel %vm1358, %v1099, 0.0
      %v1535 = vadd.f32 %v1533, %v1534
      %v1536 = vsel %vm1358, %v1101, 0.0
      %v1537 = vadd.f32 %v1535, %v1536
      %v1538 = vsel %vm1358, %v1104, 0.0
      %v1539 = vadd.f32 %v1537, %v1538
      %v1540 = vsel %vm1358, %v1106, 0.0
      %v1541 = vadd.f32 %v1539, %v1540
      %v1542 = vsel %vm1358, %v1109, 0.0
      %v1543 = vadd.f32 %v1541, %v1542
      %v1544 = vsel %vm1358, %v1111, 0.0
      %v1545 = vadd.f32 %v1543, %v1544
      %v1546 = vsel %vm1358, %v1114, 0.0
      %v1547 = vadd.f32 %v1545, %v1546
      %v1548 = vsel %vm1358, %v1116, 0.0
      %v1549 = vadd.f32 %v1547, %v1548
      %v1550 = vsel %vm1358, %v1119, 0.0
      %v1551 = vadd.f32 %v1549, %v1550
      %v1552 = vsel %vm1358, %v1121, 0.0
      %v1553 = vadd.f32 %v1551, %v1552
      %v1554 = vsel %vm1358, %v1124, 0.0
      %v1555 = vadd.f32 %v1553, %v1554
      %v1556 = vsel %vm1358, %v1126, 0.0
      %v1557 = vadd.f32 %v1555, %v1556
      %v1558 = vsel %vm1358, %v1129, 0.0
      %v1559 = vadd.f32 %v1557, %v1558
      %v1560 = vsel %vm1358, %v1131, 0.0
      %v1561 = vadd.f32 %v1559, %v1560
      %v1562 = vsel %vm1358, %v1134, 0.0
      %v1563 = vadd.f32 %v1561, %v1562
      %v1564 = vsel %vm1358, %v1136, 0.0
      %v1565 = vadd.f32 %v1563, %v1564
      %v1566 = vsel %vm1358, %v1139, 0.0
      %v1567 = vadd.f32 %v1565, %v1566
      %v1568 = vsel %vm1358, %v1141, 0.0
      %v1569 = vadd.f32 %v1567, %v1568
      %v1570 = vsel %vm1358, %v1144, 0.0
      %v1571 = vadd.f32 %v1569, %v1570
      %v1572 = vsel %vm1358, %v1146, 0.0
      %v1573 = vadd.f32 %v1571, %v1572
      %v1574 = vsel %vm1358, %v1149, 0.0
      %v1575 = vadd.f32 %v1573, %v1574
      %v1576 = vsel %vm1358, %v1151, 0.0
      %v1577 = vadd.f32 %v1575, %v1576
      %v1578 = vsel %vm1358, %v1154, 0.0
      %v1579 = vadd.f32 %v1577, %v1578
      %v1580 = vsel %vm1358, %v1156, 0.0
      %v1581 = vadd.f32 %v1579, %v1580
      %v1582 = vsel %vm1358, %v1159, 0.0
      %v1583 = vadd.f32 %v1581, %v1582
      %v1584 = vsel %vm1358, %v1161, 0.0
      %v1585 = vadd.f32 %v1583, %v1584
      %v1586 = vsel %vm1358, %v1164, 0.0
      %v1587 = vadd.f32 %v1585, %v1586
      %v1588 = vsel %vm1358, %v1166, 0.0
      %v1589 = vadd.f32 %v1587, %v1588
      %v1590 = vsel %vm1358, %v1169, 0.0
      %v1591 = vadd.f32 %v1589, %v1590
      %v1592 = vsel %vm1358, %v1171, 0.0
      %v1593 = vadd.f32 %v1591, %v1592
      %v1594 = vsel %vm1358, %v1174, 0.0
      %v1595 = vadd.f32 %v1593, %v1594
      %v1596 = vsel %vm1358, %v1176, 0.0
      %v1597 = vadd.f32 %v1595, %v1596
      %v1598 = vsel %vm1358, %v1179, 0.0
      %v1599 = vadd.f32 %v1597, %v1598
      %v1600 = vsel %vm1358, %v1181, 0.0
      %v1601 = vadd.f32 %v1599, %v1600
      %v1602 = vsel %vm1358, %v1184, 0.0
      %v1603 = vadd.f32 %v1601, %v1602
      %v1604 = vsel %vm1358, %v1186, 0.0
      %v1605 = vadd.f32 %v1603, %v1604
      %v1606 = vsel %vm1358, %v1189, 0.0
      %v1607 = vadd.f32 %v1605, %v1606
      %v1608 = vsel %vm1358, %v1191, 0.0
      %v1609 = vadd.f32 %v1607, %v1608
      %v1610 = vsel %vm1358, %v1194, 0.0
      %v1611 = vadd.f32 %v1609, %v1610
      %v1612 = vsel %vm1358, %v1196, 0.0
      %v1613 = vadd.f32 %v1611, %v1612
      %v1614 = vsel %vm1358, %v1199, 0.0
      %v1615 = vadd.f32 %v1613, %v1614
      %v1616 = vsel %vm1358, %v1201, 0.0
      %v1617 = vadd.f32 %v1615, %v1616
      %v1618 = vsel %vm1358, %v1204, 0.0
      %v1619 = vadd.f32 %v1617, %v1618
      %v1620 = vsel %vm1358, %v1206, 0.0
      %v1621 = vadd.f32 %v1619, %v1620
      %v1622 = vsel %vm1358, %v1209, 0.0
      %v1623 = vadd.f32 %v1621, %v1622
      %v1624 = vsel %vm1358, %v1211, 0.0
      %v1625 = vadd.f32 %v1623, %v1624
      %v1626 = vsel %vm1358, %v1214, 0.0
      %v1627 = vadd.f32 %v1625, %v1626
      %v1628 = vsel %vm1358, %v1216, 0.0
      %v1629 = vadd.f32 %v1627, %v1628
      %v1630 = vsel %vm1358, %v1219, 0.0
      %v1631 = vadd.f32 %v1629, %v1630
      %v1632 = vsel %vm1358, %v1221, 0.0
      %v1633 = vadd.f32 %v1631, %v1632
      %v1634 = vsel %vm1358, %v1224, 0.0
      %v1635 = vadd.f32 %v1633, %v1634
      %v1636 = vsel %vm1358, %v1226, 0.0
      %v1637 = vadd.f32 %v1635, %v1636
      %v1638 = vsel %vm1358, %v1229, 0.0
      %v1639 = vadd.f32 %v1637, %v1638
      %v1640 = vsel %vm1358, %v1231, 0.0
      %v1641 = vadd.f32 %v1639, %v1640
      %v1642 = vsel %vm1358, %v1234, 0.0
      %v1643 = vadd.f32 %v1641, %v1642
      %v1644 = vsel %vm1358, %v1236, 0.0
      %v1645 = vadd.f32 %v1643, %v1644
      %v1646 = vsel %vm1358, %v1239, 0.0
      %v1647 = vadd.f32 %v1645, %v1646
      %v1648 = vsel %vm1358, %v1241, 0.0
      %v1649 = vadd.f32 %v1647, %v1648
      %v1650 = vsel %vm1358, %v1244, 0.0
      %v1651 = vadd.f32 %v1649, %v1650
      %v1652 = vsel %vm1358, %v1246, 0.0
      %v1653 = vadd.f32 %v1651, %v1652
      %v1654 = vsel %vm1358, %v1249, 0.0
      %v1655 = vadd.f32 %v1653, %v1654
      %v1656 = vsel %vm1358, %v1251, 0.0
      %v1657 = vadd.f32 %v1655, %v1656
      %v1658 = vsel %vm1358, %v1254, 0.0
      %v1659 = vadd.f32 %v1657, %v1658
      %v1660 = vsel %vm1358, %v1256, 0.0
      %v1661 = vadd.f32 %v1659, %v1660
      %v1662 = vsel %vm1358, %v1259, 0.0
      %v1663 = vadd.f32 %v1661, %v1662
      %v1664 = vsel %vm1358, %v1261, 0.0
      %v1665 = vadd.f32 %v1663, %v1664
      %v1666 = vsel %vm1358, %v1264, 0.0
      %v1667 = vadd.f32 %v1665, %v1666
      %v1668 = vsel %vm1358, %v1266, 0.0
      %v1669 = vadd.f32 %v1667, %v1668
      %v1670 = vsel %vm1358, %v1269, 0.0
      %v1671 = vadd.f32 %v1669, %v1670
      %v1672 = vsel %vm1358, %v1271, 0.0
      %v1673 = vadd.f32 %v1671, %v1672
      %v1674 = vsel %vm1358, %v1274, 0.0
      %v1675 = vadd.f32 %v1673, %v1674
      %v1676 = vsel %vm1358, %v1276, 0.0
      %v1677 = vadd.f32 %v1675, %v1676
      %v1678 = vsel %vm1358, %v1279, 0.0
      %v1679 = vadd.f32 %v1677, %v1678
      %v1680 = vsel %vm1358, %v1281, 0.0
      %v1681 = vadd.f32 %v1679, %v1680
      %v1682 = vsel %vm1358, %v1284, 0.0
      %v1683 = vadd.f32 %v1681, %v1682
      %v1684 = vsel %vm1358, %v1286, 0.0
      %v1685 = vadd.f32 %v1683, %v1684
      %v1686 = vsel %vm1358, %v1289, 0.0
      %v1687 = vadd.f32 %v1685, %v1686
      %v1688 = vsel %vm1358, %v1291, 0.0
      %v1689 = vadd.f32 %v1687, %v1688
      %v1690 = vsel %vm1358, %v1294, 0.0
      %v1691 = vadd.f32 %v1689, %v1690
      %v1692 = vsel %vm1358, %v1296, 0.0
      %v1693 = vadd.f32 %v1691, %v1692
      %v1694 = vsel %vm1358, %v1299, 0.0
      %v1695 = vadd.f32 %v1693, %v1694
      %v1696 = vsel %vm1358, %v1301, 0.0
      %v1697 = vadd.f32 %v1695, %v1696
      %v1698 = vsel %vm1358, %v1304, 0.0
      %v1699 = vadd.f32 %v1697, %v1698
      %v1700 = vsel %vm1358, %v1306, 0.0
      %v1701 = vadd.f32 %v1699, %v1700
      %v1702 = vsel %vm1358, %v1309, 0.0
      %v1703 = vadd.f32 %v1701, %v1702
      %v1704 = vsel %vm1358, %v1311, 0.0
      %v1705 = vadd.f32 %v1703, %v1704
      %v1706 = vsel %vm1358, %v1314, 0.0
      %v1707 = vadd.f32 %v1705, %v1706
      %v1708 = vsel %vm1358, %v1316, 0.0
      %v1709 = vadd.f32 %v1707, %v1708
      %v1710 = vsel %vm1358, %v1319, 0.0
      %v1711 = vadd.f32 %v1709, %v1710
      %v1712 = vsel %vm1358, %v1321, 0.0
      %v1713 = vadd.f32 %v1711, %v1712
      %v1714 = vsel %vm1358, %v1324, 0.0
      %v1715 = vadd.f32 %v1713, %v1714
      %v1716 = vsel %vm1358, %v1326, 0.0
      %v1717 = vadd.f32 %v1715, %v1716
      %v1718 = vsel %vm1358, %v1329, 0.0
      %v1719 = vadd.f32 %v1717, %v1718
      %v1720 = vsel %vm1358, %v1331, 0.0
      %v1721 = vadd.f32 %v1719, %v1720
      %v1722 = vsel %vm1358, %v1334, 0.0
      %v1723 = vadd.f32 %v1721, %v1722
      %v1724 = vsel %vm1358, %v1336, 0.0
      %v1725 = vadd.f32 %v1723, %v1724
      %v1726 = vsel %vm1358, %v1339, 0.0
      %v1727 = vadd.f32 %v1725, %v1726
      %v1728 = vsel %vm1358, %v1341, 0.0
      %v1729 = vadd.f32 %v1727, %v1728
      %v1730 = vsel %vm1358, %v1344, 0.0
      %v1731 = vadd.f32 %v1729, %v1730
      %v1732 = vsel %vm1358, %v1346, 0.0
      %v1733 = vadd.f32 %v1731, %v1732
      %v1734 = vsel %vm1358, %v1349, 0.0
      %v1735 = vadd.f32 %v1733, %v1734
      %v1736 = vsel %vm1358, %v1351, 0.0
      %v1737 = vadd.f32 %v1735, %v1736
      %v1738 = vsel %vm1358, %v1354, 0.0
      %v1739 = vadd.f32 %v1737, %v1738
      %v1740 = vsel %vm1358, %v1356, 0.0
      %v1741 = vadd.f32 %v1739, %v1740
      %v1742 = vrot.slane %v1741, 4
      %v1743 = vadd.f32 %v1741, %v1742
      %v1744 = vrot.slane %v1743, 2
      %v1745 = vadd.f32 %v1743, %v1744
      %v1746 = vrot.slane %v1745, 1
      %v1747 = vadd.f32 %v1745, %v1746
      %v1748 = vmul.f32 %v1039, %v1039
      %v1749 = vmul.f32 %v1041, %v1041
      %v1750 = vmul.f32 %v1044, %v1044
      %v1751 = vmul.f32 %v1046, %v1046
      %v1752 = vmul.f32 %v1049, %v1049
      %v1753 = vmul.f32 %v1051, %v1051
      %v1754 = vmul.f32 %v1054, %v1054
      %v1755 = vmul.f32 %v1056, %v1056
      %v1756 = vmul.f32 %v1059, %v1059
      %v1757 = vmul.f32 %v1061, %v1061
      %v1758 = vmul.f32 %v1064, %v1064
      %v1759 = vmul.f32 %v1066, %v1066
      %v1760 = vmul.f32 %v1069, %v1069
      %v1761 = vmul.f32 %v1071, %v1071
      %v1762 = vmul.f32 %v1074, %v1074
      %v1763 = vmul.f32 %v1076, %v1076
      %v1764 = vmul.f32 %v1079, %v1079
      %v1765 = vmul.f32 %v1081, %v1081
      %v1766 = vmul.f32 %v1084, %v1084
      %v1767 = vmul.f32 %v1086, %v1086
      %v1768 = vmul.f32 %v1089, %v1089
      %v1769 = vmul.f32 %v1091, %v1091
      %v1770 = vmul.f32 %v1094, %v1094
      %v1771 = vmul.f32 %v1096, %v1096
      %v1772 = vmul.f32 %v1099, %v1099
      %v1773 = vmul.f32 %v1101, %v1101
      %v1774 = vmul.f32 %v1104, %v1104
      %v1775 = vmul.f32 %v1106, %v1106
      %v1776 = vmul.f32 %v1109, %v1109
      %v1777 = vmul.f32 %v1111, %v1111
      %v1778 = vmul.f32 %v1114, %v1114
      %v1779 = vmul.f32 %v1116, %v1116
      %v1780 = vmul.f32 %v1119, %v1119
      %v1781 = vmul.f32 %v1121, %v1121
      %v1782 = vmul.f32 %v1124, %v1124
      %v1783 = vmul.f32 %v1126, %v1126
      %v1784 = vmul.f32 %v1129, %v1129
      %v1785 = vmul.f32 %v1131, %v1131
      %v1786 = vmul.f32 %v1134, %v1134
      %v1787 = vmul.f32 %v1136, %v1136
      %v1788 = vmul.f32 %v1139, %v1139
      %v1789 = vmul.f32 %v1141, %v1141
      %v1790 = vmul.f32 %v1144, %v1144
      %v1791 = vmul.f32 %v1146, %v1146
      %v1792 = vmul.f32 %v1149, %v1149
      %v1793 = vmul.f32 %v1151, %v1151
      %v1794 = vmul.f32 %v1154, %v1154
      %v1795 = vmul.f32 %v1156, %v1156
      %v1796 = vmul.f32 %v1159, %v1159
      %v1797 = vmul.f32 %v1161, %v1161
      %v1798 = vmul.f32 %v1164, %v1164
      %v1799 = vmul.f32 %v1166, %v1166
      %v1800 = vmul.f32 %v1169, %v1169
      %v1801 = vmul.f32 %v1171, %v1171
      %v1802 = vmul.f32 %v1174, %v1174
      %v1803 = vmul.f32 %v1176, %v1176
      %v1804 = vmul.f32 %v1179, %v1179
      %v1805 = vmul.f32 %v1181, %v1181
      %v1806 = vmul.f32 %v1184, %v1184
      %v1807 = vmul.f32 %v1186, %v1186
      %v1808 = vmul.f32 %v1189, %v1189
      %v1809 = vmul.f32 %v1191, %v1191
      %v1810 = vmul.f32 %v1194, %v1194
      %v1811 = vmul.f32 %v1196, %v1196
      %v1812 = vmul.f32 %v1199, %v1199
      %v1813 = vmul.f32 %v1201, %v1201
      %v1814 = vmul.f32 %v1204, %v1204
      %v1815 = vmul.f32 %v1206, %v1206
      %v1816 = vmul.f32 %v1209, %v1209
      %v1817 = vmul.f32 %v1211, %v1211
      %v1818 = vmul.f32 %v1214, %v1214
      %v1819 = vmul.f32 %v1216, %v1216
      %v1820 = vmul.f32 %v1219, %v1219
      %v1821 = vmul.f32 %v1221, %v1221
      %v1822 = vmul.f32 %v1224, %v1224
      %v1823 = vmul.f32 %v1226, %v1226
      %v1824 = vmul.f32 %v1229, %v1229
      %v1825 = vmul.f32 %v1231, %v1231
      %v1826 = vmul.f32 %v1234, %v1234
      %v1827 = vmul.f32 %v1236, %v1236
      %v1828 = vmul.f32 %v1239, %v1239
      %v1829 = vmul.f32 %v1241, %v1241
      %v1830 = vmul.f32 %v1244, %v1244
      %v1831 = vmul.f32 %v1246, %v1246
      %v1832 = vmul.f32 %v1249, %v1249
      %v1833 = vmul.f32 %v1251, %v1251
      %v1834 = vmul.f32 %v1254, %v1254
      %v1835 = vmul.f32 %v1256, %v1256
      %v1836 = vmul.f32 %v1259, %v1259
      %v1837 = vmul.f32 %v1261, %v1261
      %v1838 = vmul.f32 %v1264, %v1264
      %v1839 = vmul.f32 %v1266, %v1266
      %v1840 = vmul.f32 %v1269, %v1269
      %v1841 = vmul.f32 %v1271, %v1271
      %v1842 = vmul.f32 %v1274, %v1274
      %v1843 = vmul.f32 %v1276, %v1276
      %v1844 = vmul.f32 %v1279, %v1279
      %v1845 = vmul.f32 %v1281, %v1281
      %v1846 = vmul.f32 %v1284, %v1284
      %v1847 = vmul.f32 %v1286, %v1286
      %v1848 = vmul.f32 %v1289, %v1289
      %v1849 = vmul.f32 %v1291, %v1291
      %v1850 = vmul.f32 %v1294, %v1294
      %v1851 = vmul.f32 %v1296, %v1296
      %v1852 = vmul.f32 %v1299, %v1299
      %v1853 = vmul.f32 %v1301, %v1301
      %v1854 = vmul.f32 %v1304, %v1304
      %v1855 = vmul.f32 %v1306, %v1306
      %v1856 = vmul.f32 %v1309, %v1309
      %v1857 = vmul.f32 %v1311, %v1311
      %v1858 = vmul.f32 %v1314, %v1314
      %v1859 = vmul.f32 %v1316, %v1316
      %v1860 = vmul.f32 %v1319, %v1319
      %v1861 = vmul.f32 %v1321, %v1321
      %v1862 = vmul.f32 %v1324, %v1324
      %v1863 = vmul.f32 %v1326, %v1326
      %v1864 = vmul.f32 %v1329, %v1329
      %v1865 = vmul.f32 %v1331, %v1331
      %v1866 = vmul.f32 %v1334, %v1334
      %v1867 = vmul.f32 %v1336, %v1336
      %v1868 = vmul.f32 %v1339, %v1339
      %v1869 = vmul.f32 %v1341, %v1341
      %v1870 = vmul.f32 %v1344, %v1344
      %v1871 = vmul.f32 %v1346, %v1346
      %v1872 = vmul.f32 %v1349, %v1349
      %v1873 = vmul.f32 %v1351, %v1351
      %v1874 = vmul.f32 %v1354, %v1354
      %v1875 = vmul.f32 %v1356, %v1356
      %v1876 = vsel %vm1358, %v1748, 0.0
      %v1877 = vsel %vm1358, %v1749, 0.0
      %v1878 = vadd.f32 %v1876, %v1877
      %v1879 = vsel %vm1358, %v1750, 0.0
      %v1880 = vadd.f32 %v1878, %v1879
      %v1881 = vsel %vm1358, %v1751, 0.0
      %v1882 = vadd.f32 %v1880, %v1881
      %v1883 = vsel %vm1358, %v1752, 0.0
      %v1884 = vadd.f32 %v1882, %v1883
      %v1885 = vsel %vm1358, %v1753, 0.0
      %v1886 = vadd.f32 %v1884, %v1885
      %v1887 = vsel %vm1358, %v1754, 0.0
      %v1888 = vadd.f32 %v1886, %v1887
      %v1889 = vsel %vm1358, %v1755, 0.0
      %v1890 = vadd.f32 %v1888, %v1889
      %v1891 = vsel %vm1358, %v1756, 0.0
      %v1892 = vadd.f32 %v1890, %v1891
      %v1893 = vsel %vm1358, %v1757, 0.0
      %v1894 = vadd.f32 %v1892, %v1893
      %v1895 = vsel %vm1358, %v1758, 0.0
      %v1896 = vadd.f32 %v1894, %v1895
      %v1897 = vsel %vm1358, %v1759, 0.0
      %v1898 = vadd.f32 %v1896, %v1897
      %v1899 = vsel %vm1358, %v1760, 0.0
      %v1900 = vadd.f32 %v1898, %v1899
      %v1901 = vsel %vm1358, %v1761, 0.0
      %v1902 = vadd.f32 %v1900, %v1901
      %v1903 = vsel %vm1358, %v1762, 0.0
      %v1904 = vadd.f32 %v1902, %v1903
      %v1905 = vsel %vm1358, %v1763, 0.0
      %v1906 = vadd.f32 %v1904, %v1905
      %v1907 = vsel %vm1358, %v1764, 0.0
      %v1908 = vadd.f32 %v1906, %v1907
      %v1909 = vsel %vm1358, %v1765, 0.0
      %v1910 = vadd.f32 %v1908, %v1909
      %v1911 = vsel %vm1358, %v1766, 0.0
      %v1912 = vadd.f32 %v1910, %v1911
      %v1913 = vsel %vm1358, %v1767, 0.0
      %v1914 = vadd.f32 %v1912, %v1913
      %v1915 = vsel %vm1358, %v1768, 0.0
      %v1916 = vadd.f32 %v1914, %v1915
      %v1917 = vsel %vm1358, %v1769, 0.0
      %v1918 = vadd.f32 %v1916, %v1917
      %v1919 = vsel %vm1358, %v1770, 0.0
      %v1920 = vadd.f32 %v1918, %v1919
      %v1921 = vsel %vm1358, %v1771, 0.0
      %v1922 = vadd.f32 %v1920, %v1921
      %v1923 = vsel %vm1358, %v1772, 0.0
      %v1924 = vadd.f32 %v1922, %v1923
      %v1925 = vsel %vm1358, %v1773, 0.0
      %v1926 = vadd.f32 %v1924, %v1925
      %v1927 = vsel %vm1358, %v1774, 0.0
      %v1928 = vadd.f32 %v1926, %v1927
      %v1929 = vsel %vm1358, %v1775, 0.0
      %v1930 = vadd.f32 %v1928, %v1929
      %v1931 = vsel %vm1358, %v1776, 0.0
      %v1932 = vadd.f32 %v1930, %v1931
      %v1933 = vsel %vm1358, %v1777, 0.0
      %v1934 = vadd.f32 %v1932, %v1933
      %v1935 = vsel %vm1358, %v1778, 0.0
      %v1936 = vadd.f32 %v1934, %v1935
      %v1937 = vsel %vm1358, %v1779, 0.0
      %v1938 = vadd.f32 %v1936, %v1937
      %v1939 = vsel %vm1358, %v1780, 0.0
      %v1940 = vadd.f32 %v1938, %v1939
      %v1941 = vsel %vm1358, %v1781, 0.0
      %v1942 = vadd.f32 %v1940, %v1941
      %v1943 = vsel %vm1358, %v1782, 0.0
      %v1944 = vadd.f32 %v1942, %v1943
      %v1945 = vsel %vm1358, %v1783, 0.0
      %v1946 = vadd.f32 %v1944, %v1945
      %v1947 = vsel %vm1358, %v1784, 0.0
      %v1948 = vadd.f32 %v1946, %v1947
      %v1949 = vsel %vm1358, %v1785, 0.0
      %v1950 = vadd.f32 %v1948, %v1949
      %v1951 = vsel %vm1358, %v1786, 0.0
      %v1952 = vadd.f32 %v1950, %v1951
      %v1953 = vsel %vm1358, %v1787, 0.0
      %v1954 = vadd.f32 %v1952, %v1953
      %v1955 = vsel %vm1358, %v1788, 0.0
      %v1956 = vadd.f32 %v1954, %v1955
      %v1957 = vsel %vm1358, %v1789, 0.0
      %v1958 = vadd.f32 %v1956, %v1957
      %v1959 = vsel %vm1358, %v1790, 0.0
      %v1960 = vadd.f32 %v1958, %v1959
      %v1961 = vsel %vm1358, %v1791, 0.0
      %v1962 = vadd.f32 %v1960, %v1961
      %v1963 = vsel %vm1358, %v1792, 0.0
      %v1964 = vadd.f32 %v1962, %v1963
      %v1965 = vsel %vm1358, %v1793, 0.0
      %v1966 = vadd.f32 %v1964, %v1965
      %v1967 = vsel %vm1358, %v1794, 0.0
      %v1968 = vadd.f32 %v1966, %v1967
      %v1969 = vsel %vm1358, %v1795, 0.0
      %v1970 = vadd.f32 %v1968, %v1969
      %v1971 = vsel %vm1358, %v1796, 0.0
      %v1972 = vadd.f32 %v1970, %v1971
      %v1973 = vsel %vm1358, %v1797, 0.0
      %v1974 = vadd.f32 %v1972, %v1973
      %v1975 = vsel %vm1358, %v1798, 0.0
      %v1976 = vadd.f32 %v1974, %v1975
      %v1977 = vsel %vm1358, %v1799, 0.0
      %v1978 = vadd.f32 %v1976, %v1977
      %v1979 = vsel %vm1358, %v1800, 0.0
      %v1980 = vadd.f32 %v1978, %v1979
      %v1981 = vsel %vm1358, %v1801, 0.0
      %v1982 = vadd.f32 %v1980, %v1981
      %v1983 = vsel %vm1358, %v1802, 0.0
      %v1984 = vadd.f32 %v1982, %v1983
      %v1985 = vsel %vm1358, %v1803, 0.0
      %v1986 = vadd.f32 %v1984, %v1985
      %v1987 = vsel %vm1358, %v1804, 0.0
      %v1988 = vadd.f32 %v1986, %v1987
      %v1989 = vsel %vm1358, %v1805, 0.0
      %v1990 = vadd.f32 %v1988, %v1989
      %v1991 = vsel %vm1358, %v1806, 0.0
      %v1992 = vadd.f32 %v1990, %v1991
      %v1993 = vsel %vm1358, %v1807, 0.0
      %v1994 = vadd.f32 %v1992, %v1993
      %v1995 = vsel %vm1358, %v1808, 0.0
      %v1996 = vadd.f32 %v1994, %v1995
      %v1997 = vsel %vm1358, %v1809, 0.0
      %v1998 = vadd.f32 %v1996, %v1997
      %v1999 = vsel %vm1358, %v1810, 0.0
      %v2000 = vadd.f32 %v1998, %v1999
      %v2001 = vsel %vm1358, %v1811, 0.0
      %v2002 = vadd.f32 %v2000, %v2001
      %v2003 = vsel %vm1358, %v1812, 0.0
      %v2004 = vadd.f32 %v2002, %v2003
      %v2005 = vsel %vm1358, %v1813, 0.0
      %v2006 = vadd.f32 %v2004, %v2005
      %v2007 = vsel %vm1358, %v1814, 0.0
      %v2008 = vadd.f32 %v2006, %v2007
      %v2009 = vsel %vm1358, %v1815, 0.0
      %v2010 = vadd.f32 %v2008, %v2009
      %v2011 = vsel %vm1358, %v1816, 0.0
      %v2012 = vadd.f32 %v2010, %v2011
      %v2013 = vsel %vm1358, %v1817, 0.0
      %v2014 = vadd.f32 %v2012, %v2013
      %v2015 = vsel %vm1358, %v1818, 0.0
      %v2016 = vadd.f32 %v2014, %v2015
      %v2017 = vsel %vm1358, %v1819, 0.0
      %v2018 = vadd.f32 %v2016, %v2017
      %v2019 = vsel %vm1358, %v1820, 0.0
      %v2020 = vadd.f32 %v2018, %v2019
      %v2021 = vsel %vm1358, %v1821, 0.0
      %v2022 = vadd.f32 %v2020, %v2021
      %v2023 = vsel %vm1358, %v1822, 0.0
      %v2024 = vadd.f32 %v2022, %v2023
      %v2025 = vsel %vm1358, %v1823, 0.0
      %v2026 = vadd.f32 %v2024, %v2025
      %v2027 = vsel %vm1358, %v1824, 0.0
      %v2028 = vadd.f32 %v2026, %v2027
      %v2029 = vsel %vm1358, %v1825, 0.0
      %v2030 = vadd.f32 %v2028, %v2029
      %v2031 = vsel %vm1358, %v1826, 0.0
      %v2032 = vadd.f32 %v2030, %v2031
      %v2033 = vsel %vm1358, %v1827, 0.0
      %v2034 = vadd.f32 %v2032, %v2033
      %v2035 = vsel %vm1358, %v1828, 0.0
      %v2036 = vadd.f32 %v2034, %v2035
      %v2037 = vsel %vm1358, %v1829, 0.0
      %v2038 = vadd.f32 %v2036, %v2037
      %v2039 = vsel %vm1358, %v1830, 0.0
      %v2040 = vadd.f32 %v2038, %v2039
      %v2041 = vsel %vm1358, %v1831, 0.0
      %v2042 = vadd.f32 %v2040, %v2041
      %v2043 = vsel %vm1358, %v1832, 0.0
      %v2044 = vadd.f32 %v2042, %v2043
      %v2045 = vsel %vm1358, %v1833, 0.0
      %v2046 = vadd.f32 %v2044, %v2045
      %v2047 = vsel %vm1358, %v1834, 0.0
      %v2048 = vadd.f32 %v2046, %v2047
      %v2049 = vsel %vm1358, %v1835, 0.0
      %v2050 = vadd.f32 %v2048, %v2049
      %v2051 = vsel %vm1358, %v1836, 0.0
      %v2052 = vadd.f32 %v2050, %v2051
      %v2053 = vsel %vm1358, %v1837, 0.0
      %v2054 = vadd.f32 %v2052, %v2053
      %v2055 = vsel %vm1358, %v1838, 0.0
      %v2056 = vadd.f32 %v2054, %v2055
      %v2057 = vsel %vm1358, %v1839, 0.0
      %v2058 = vadd.f32 %v2056, %v2057
      %v2059 = vsel %vm1358, %v1840, 0.0
      %v2060 = vadd.f32 %v2058, %v2059
      %v2061 = vsel %vm1358, %v1841, 0.0
      %v2062 = vadd.f32 %v2060, %v2061
      %v2063 = vsel %vm1358, %v1842, 0.0
      %v2064 = vadd.f32 %v2062, %v2063
      %v2065 = vsel %vm1358, %v1843, 0.0
      %v2066 = vadd.f32 %v2064, %v2065
      %v2067 = vsel %vm1358, %v1844, 0.0
      %v2068 = vadd.f32 %v2066, %v2067
      %v2069 = vsel %vm1358, %v1845, 0.0
      %v2070 = vadd.f32 %v2068, %v2069
      %v2071 = vsel %vm1358, %v1846, 0.0
      %v2072 = vadd.f32 %v2070, %v2071
      %v2073 = vsel %vm1358, %v1847, 0.0
      %v2074 = vadd.f32 %v2072, %v2073
      %v2075 = vsel %vm1358, %v1848, 0.0
      %v2076 = vadd.f32 %v2074, %v2075
      %v2077 = vsel %vm1358, %v1849, 0.0
      %v2078 = vadd.f32 %v2076, %v2077
      %v2079 = vsel %vm1358, %v1850, 0.0
      %v2080 = vadd.f32 %v2078, %v2079
      %v2081 = vsel %vm1358, %v1851, 0.0
      %v2082 = vadd.f32 %v2080, %v2081
      %v2083 = vsel %vm1358, %v1852, 0.0
      %v2084 = vadd.f32 %v2082, %v2083
      %v2085 = vsel %vm1358, %v1853, 0.0
      %v2086 = vadd.f32 %v2084, %v2085
      %v2087 = vsel %vm1358, %v1854, 0.0
      %v2088 = vadd.f32 %v2086, %v2087
      %v2089 = vsel %vm1358, %v1855, 0.0
      %v2090 = vadd.f32 %v2088, %v2089
      %v2091 = vsel %vm1358, %v1856, 0.0
      %v2092 = vadd.f32 %v2090, %v2091
      %v2093 = vsel %vm1358, %v1857, 0.0
      %v2094 = vadd.f32 %v2092, %v2093
      %v2095 = vsel %vm1358, %v1858, 0.0
      %v2096 = vadd.f32 %v2094, %v2095
      %v2097 = vsel %vm1358, %v1859, 0.0
      %v2098 = vadd.f32 %v2096, %v2097
      %v2099 = vsel %vm1358, %v1860, 0.0
      %v2100 = vadd.f32 %v2098, %v2099
      %v2101 = vsel %vm1358, %v1861, 0.0
      %v2102 = vadd.f32 %v2100, %v2101
      %v2103 = vsel %vm1358, %v1862, 0.0
      %v2104 = vadd.f32 %v2102, %v2103
      %v2105 = vsel %vm1358, %v1863, 0.0
      %v2106 = vadd.f32 %v2104, %v2105
      %v2107 = vsel %vm1358, %v1864, 0.0
      %v2108 = vadd.f32 %v2106, %v2107
      %v2109 = vsel %vm1358, %v1865, 0.0
      %v2110 = vadd.f32 %v2108, %v2109
      %v2111 = vsel %vm1358, %v1866, 0.0
      %v2112 = vadd.f32 %v2110, %v2111
      %v2113 = vsel %vm1358, %v1867, 0.0
      %v2114 = vadd.f32 %v2112, %v2113
      %v2115 = vsel %vm1358, %v1868, 0.0
      %v2116 = vadd.f32 %v2114, %v2115
      %v2117 = vsel %vm1358, %v1869, 0.0
      %v2118 = vadd.f32 %v2116, %v2117
      %v2119 = vsel %vm1358, %v1870, 0.0
      %v2120 = vadd.f32 %v2118, %v2119
      %v2121 = vsel %vm1358, %v1871, 0.0
      %v2122 = vadd.f32 %v2120, %v2121
      %v2123 = vsel %vm1358, %v1872, 0.0
      %v2124 = vadd.f32 %v2122, %v2123
      %v2125 = vsel %vm1358, %v1873, 0.0
      %v2126 = vadd.f32 %v2124, %v2125
      %v2127 = vsel %vm1358, %v1874, 0.0
      %v2128 = vadd.f32 %v2126, %v2127
      %v2129 = vsel %vm1358, %v1875, 0.0
      %v2130 = vadd.f32 %v2128, %v2129
      %v2131 = vrot.slane %v2130, 4
      %v2132 = vadd.f32 %v2130, %v2131
      %v2133 = vrot.slane %v2132, 2
      %v2134 = vadd.f32 %v2132, %v2133
      %v2135 = vrot.slane %v2134, 1
      %v2136 = vadd.f32 %v2134, %v2135
      %vm2137 = vcmask 1040384
      %v2138 = vsel %vm2137, %v1747, %v2136
      %vm2139 = vcmask 58368
      %2140 = vst.msk [vmem:[%s187] sm:$0x3] %vm2139, %v2138
      %s2141 = smul.u32 128, %s15
      %p2142 = scmp.lt.s32.totalorder %s2141, 511
      %s2143 = scalar_select %p2142, %s2141, 511
      %s2144 = smul.addr %s2143, 8
      %s2145 = scalar_lea.vmem %s2, %s2144
      %p2146 = scmp.lt.s32.totalorder %s15, 3
      %s2147 = scalar_select %p2146, %s15, 3
      %s2148 = smul.addr %s2147, 2
      %s2149 = scalar_lea.vmem %s3, %s2148
      // Predicated region
      $region29: #{lipread_forward.8} parent=27 // pred_check
        %p2150 = pneg %p80
      $region30: #{lipread_forward.8} parent=27 // pred_check_branch
        %2152 = sbr.rel (%p2150) target = $region32
      $region31: #{lipread_forward.8} parent=27 // pred_region
        %s2153 = smul.u32 128, %s15
      $region32: #{lipread_forward.8} parent=27 // pred_fallthru
        _
      // Predicated region
      $region33: #{lipread_forward.8} parent=27 // pred_check
        %p2154 = pneg %p106
      $region34: #{lipread_forward.8} parent=27 // pred_check_branch
        %2156 = sbr.rel (%p2154) target = $region36
      $region35: #{lipread_forward.8} parent=27 // pred_region
        _
      $region36: #{lipread_forward.8} parent=27 // pred_fallthru
        _
    $region28: #{lipread_forward.8} parent=5 // pred_fallthru
      _
    %p2157 = scmp.le.s32.totalorder 2, %s10
    // Predicated region
    $region37: #{lipread_forward.8} parent=5 // pred_check
      %p2158 = pneg %p2157
    $region38: #{lipread_forward.8} parent=5 // pred_check_branch
      %2160 = sbr.rel (%p2158) target = $region40
    $region39: #{lipread_forward.8} parent=5 // pred_region
      %s2161 = ssub.s32 %s10, 2
      // Predicated region
      $region41: #{lipread_forward.8} parent=39 // pred_check
        %p2162 = pneg %p86
      $region42: #{lipread_forward.8} parent=39 // pred_check_branch
        %2164 = sbr.rel (%p2162) target = $region44
      $region43: #{lipread_forward.8} parent=39 // pred_region
        %s2165 = smul.u32 128, %s16
        %p2166 = scmp.lt.s32.totalorder %s2165, 511
        %s2167 = scalar_select %p2166, %s2165, 511
        %s2168 = smul.addr %s2167, 8
        %s2169 = scalar_lea.vmem %s2, %s2168
      $region44: #{lipread_forward.8} parent=39 // pred_fallthru
        _
      // Predicated region
      $region45: #{lipread_forward.8} parent=39 // pred_check
        %p2170 = pneg %p112
      $region46: #{lipread_forward.8} parent=39 // pred_check_branch
        %2172 = sbr.rel (%p2170) target = $region48
      $region47: #{lipread_forward.8} parent=39 // pred_region
        %p2173 = scmp.lt.s32.totalorder %s16, 3
        %s2174 = scalar_select %p2173, %s16, 3
        %s2175 = smul.addr %s2174, 2
        %s2176 = scalar_lea.vmem %s3, %s2175
      $region48: #{lipread_forward.8} parent=39 // pred_fallthru
        _
    $region40: #{lipread_forward.8} parent=5 // pred_fallthru
      _
  $region6: #{lipread_forward.8} parent=0 // loop_footer
    %s14 = sadd.s32 1, %s10
  $region7: #{lipread_forward.8} parent=0 // loop_footer_branch
    %9 = sbr.rel target = $region3
  $region8: #{lipread_forward.8} parent=0 // loop_exit
    _

// kernel: lipread_forward.10
$region0: #{lipread_forward.10}
  #allocation0 [shape = 'u32[]', space=smem, size = 0x4, offset = 0x4, fixed_abs, tag = 'smem constant byte address 0x4 - core index']
  #allocation1 [shape = 'u32[72,128]{1,0:T(1,128)}', space=vmem, size = 0x9000, scoped, tag = 'internal scratch']
  %s0 = inlined_call_operand.vmem [shape: f32[256,128], index: 0, kind: input, shape index: {}]
  %s1 = inlined_call_operand.vmem [shape: bf16[128,16], index: 1, kind: input, shape index: {}]
  %s2 = inlined_call_operand.vmem [shape: f32[256,16], index: 2, kind: output, shape index: {0}]
  %s3 = inlined_call_operand.vmem [shape: f32[2,2,16], index: 3, kind: output, shape index: {1}]
  %4 = xla_tuple %s2, %s3
  %s5 = sld [smem:[#allocation0]]
  $region49: #{lipread_forward.10} parent=0
    _
  %s7 = ssub.s32 1, %s5
  %s8 = scalar_select 0, %s7, %s5
  loop: start=0, step=1, limit=4
  $region2: #{lipread_forward.10} parent=0 // loop_pre_header
    _
  $region3: #{lipread_forward.10} parent=0 // loop_header
    %s10 = sphi 0, %s14
    %p11 = scmp.ge.s32.totalorder %s10, 4
    %s20 = sphi 0, %s22
    %s23 = sphi 0, %s20
    %s24 = sphi 0, %s23
    %s40 = sphi 0, %s24
    %s44 = sphi 0, %s44
    %s46 = sphi 0, %s44
    %s47 = sphi 0, %s46
    %s61 = sphi 0, %s47
    %s67 = sphi 0, %s69
    %s70 = sphi 0, %s67
    %s71 = sphi 0, %s70
    %s87 = sphi 0, %s71
    %s93 = sphi 0, %s95
    %s96 = sphi 0, %s93
    %s97 = sphi 0, %s96
    %s113 = sphi 0, %s97
  $region4: #{lipread_forward.10} parent=0 // loop_header_branch
    %13 = sbr.rel (%p11) target = $region8
  $region5: #{lipread_forward.10} parent=0 // loop_body
    %s15 = ssub.s32 %s10, 1
    %s16 = ssub.s32 %s10, 2
    %s17 = sadd.s32 %s10, 1
    %s18 = ssub.s32 %s10, %s17
    %p19 = scmp.eq.s32.totalorder %s18, 0
    %s21 = sadd.s32 %s20, 1
    %s22 = scalar_select %p19, %s20, %s21
    %p25 = pneg %p19
    %p26 = scmp.eq.s32.totalorder %s10, 1
    %p27 = por %p25, %p26
    %p28 = scmp.ne.s32.totalorder %s20, %s23
    %p29 = scmp.eq.s32.totalorder %s10, 0
    %p30 = por %p28, %p29
    %p31 = scmp.ne.s32.totalorder %s20, %s23
    %p32 = scmp.eq.s32.totalorder %s15, 1
    %p33 = por %p31, %p32
    %p34 = scmp.ne.s32.totalorder %s23, %s24
    %p35 = scmp.eq.s32.totalorder %s15, 0
    %p36 = por %p34, %p35
    %p37 = scmp.ne.s32.totalorder %s23, %s24
    %p38 = scmp.eq.s32.totalorder %s16, 1
    %p39 = por %p37, %p38
    %p41 = scmp.ne.s32.totalorder %s24, %s40
    %p42 = scmp.eq.s32.totalorder %s16, 0
    %p43 = por %p41, %p42
    %s45 = sadd.s32 %s44, 1
    %p48 = scmp.eq.s32.totalorder %s10, 1
    %p49 = scmp.ne.s32.totalorder %s44, %s46
    %p50 = scmp.eq.s32.totalorder %s10, 0
    %p51 = por %p49, %p50
    %p52 = scmp.ne.s32.totalorder %s44, %s46
    %p53 = scmp.eq.s32.totalorder %s15, 1
    %p54 = por %p52, %p53
    %p55 = scmp.ne.s32.totalorder %s46, %s47
    %p56 = scmp.eq.s32.totalorder %s15, 0
    %p57 = por %p55, %p56
    %p58 = scmp.ne.s32.totalorder %s46, %s47
    %p59 = scmp.eq.s32.totalorder %s16, 1
    %p60 = por %p58, %p59
    %p62 = scmp.ne.s32.totalorder %s47, %s61
    %p63 = scmp.eq.s32.totalorder %s16, 0
    %p64 = por %p62, %p63
    %s65 = ssub.s32 %s10, %s17
    %p66 = scmp.eq.s32.totalorder %s65, 0
    %s68 = sadd.s32 %s67, 1
    %s69 = scalar_select %p66, %s67, %s68
    %p72 = pneg %p66
    %p73 = scmp.eq.s32.totalorder %s10, 1
    %p74 = por %p72, %p73
    %p75 = scmp.ne.s32.totalorder %s67, %s70
    %p76 = scmp.eq.s32.totalorder %s10, 0
    %p77 = por %p75, %p76
    %p78 = scmp.ne.s32.totalorder %s67, %s70
    %p79 = scmp.eq.s32.totalorder %s15, 1
    %p80 = por %p78, %p79
    %p81 = scmp.ne.s32.totalorder %s70, %s71
    %p82 = scmp.eq.s32.totalorder %s15, 0
    %p83 = por %p81, %p82
    %p84 = scmp.ne.s32.totalorder %s70, %s71
    %p85 = scmp.eq.s32.totalorder %s16, 1
    %p86 = por %p84, %p85
    %p88 = scmp.ne.s32.totalorder %s71, %s87
    %p89 = scmp.eq.s32.totalorder %s16, 0
    %p90 = por %p88, %p89
    %s91 = ssub.s32 %s10, %s17
    %p92 = scmp.eq.s32.totalorder %s91, 0
    %s94 = sadd.s32 %s93, 1
    %s95 = scalar_select %p92, %s93, %s94
    %p98 = pneg %p92
    %p99 = scmp.eq.s32.totalorder %s10, 1
    %p100 = por %p98, %p99
    %p101 = scmp.ne.s32.totalorder %s93, %s96
    %p102 = scmp.eq.s32.totalorder %s10, 0
    %p103 = por %p101, %p102
    %p104 = scmp.ne.s32.totalorder %s93, %s96
    %p105 = scmp.eq.s32.totalorder %s15, 1
    %p106 = por %p104, %p105
    %p107 = scmp.ne.s32.totalorder %s96, %s97
    %p108 = scmp.eq.s32.totalorder %s15, 0
    %p109 = por %p107, %p108
    %p110 = scmp.ne.s32.totalorder %s96, %s97
    %p111 = scmp.eq.s32.totalorder %s16, 1
    %p112 = por %p110, %p111
    %p114 = scmp.ne.s32.totalorder %s97, %s113
    %p115 = scmp.eq.s32.totalorder %s16, 0
    %p116 = por %p114, %p115
    %p117 = scmp.le.s32.totalorder 1, %s10
    %p118 = scmp.lt.s32.totalorder %s10, 3
    %p119 = pnand %p117, %p118
    %p120 = pneg %p119
    // Predicated region
    $region9: #{lipread_forward.10} parent=5 // pred_check
      _
    $region10: #{lipread_forward.10} parent=5 // pred_check_branch
      %122 = sbr.rel (%p119) target = $region12
    $region11: #{lipread_forward.10} parent=5 // pred_region
      %s123 = ssub.s32 %s10, 1
      // Predicated region
      $region13: #{lipread_forward.10} parent=11 // pred_check
        %p124 = pneg %p57
      $region14: #{lipread_forward.10} parent=11 // pred_check_branch
        %126 = sbr.rel (%p124) target = $region16
      $region15: #{lipread_forward.10} parent=11 // pred_region
        _
      $region16: #{lipread_forward.10} parent=11 // pred_fallthru
        _
    $region12: #{lipread_forward.10} parent=5 // pred_fallthru
      _
    %p127 = scmp.lt.s32.totalorder %s10, 2
    // Predicated region
    $region17: #{lipread_forward.10} parent=5 // pred_check
      %p128 = pneg %p127
    $region18: #{lipread_forward.10} parent=5 // pred_check_branch
      %130 = sbr.rel (%p128) target = $region20
    $region19: #{lipread_forward.10} parent=5 // pred_region
      // Predicated region
      $region21: #{lipread_forward.10} parent=19 // pred_check
        %p131 = pneg %p30
      $region22: #{lipread_forward.10} parent=19 // pred_check_branch
        %133 = sbr.rel (%p131) target = $region24
      $region23: #{lipread_forward.10} parent=19 // pred_region
        %s134 = smul.u32 16, %s10
        %p135 = scmp.lt.s32.totalorder %s134, 31
        %s136 = scalar_select %p135, %s134, 31
        %s137 = smul.addr %s136, 8
        %s138 = scalar_lea.vmem %s0, %s137
        %s139 = smul.u32 16, %s10
      $region24: #{lipread_forward.10} parent=19 // pred_fallthru
        _
    $region20: #{lipread_forward.10} parent=5 // pred_fallthru
      _
    %p140 = scmp.le.s32.totalorder 1, %s10
    %p141 = scmp.lt.s32.totalorder %s10, 3
    %p142 = pnand %p140, %p141
    %p143 = pneg %p142
    // Predicated region
    $region25: #{lipread_forward.10} parent=5 // pred_check
      _
    $region26: #{lipread_forward.10} parent=5 // pred_check_branch
      %145 = sbr.rel (%p142) target = $region28
    $region27: #{lipread_forward.10} parent=5 // pred_region
      %s146 = ssub.s32 %s10, 1
      %s147 = smul.u32 16, %s15
      %p148 = scmp.lt.s32.totalorder %s147, 31
      %s149 = scalar_select %p148, %s147, 31
      %s150 = smul.addr %s149, 8
      %s151 = scalar_lea.vmem %s0, %s150
      %p152 = pneg %p36
      %p153 = pneg %p33
      %p154 = pneg %p57
      %p155 = pneg %p54
      %p156 = pneg %p83
      %p157 = pneg %p80
      %s158 = smul.u32 16, %s15
      %p159 = scmp.lt.s32.totalorder %s158, 31
      %s160 = scalar_select %p159, %s158, 31
      %s161 = smul.addr %s160, 8
      %s162 = scalar_lea.vmem %s2, %s161
      %p163 = pneg %p109
      %p164 = pneg %p106
      %p165 = scmp.lt.s32.totalorder %s15, 1
      %s166 = scalar_select %p165, %s15, 1
      %s167 = smul.addr %s166, 2
      %s168 = scalar_lea.vmem %s3, %s167
      %s169 = smul.u32 16, %s15
      %p170 = scmp.lt.s32.totalorder %s169, 31
      %s171 = scalar_select %p170, %s169, 31
      %s172 = smul.addr %s171, 8
      %s173 = scalar_lea.vmem %s0, %s172
      %s174 = smul.u32 16, %s15
      %s175 = smul.u32 16, %s15
      %p176 = scmp.lt.s32.totalorder %s175, 31
      %s177 = scalar_select %p176, %s175, 31
      %s178 = smul.addr %s177, 8
      %s179 = scalar_lea.vmem %s2, %s178
      %s180 = smul.u32 16, %s15
      %p181 = scmp.lt.s32.totalorder %s15, 1
      %s182 = scalar_select %p181, %s15, 1
      %s183 = smul.addr %s182, 2
      %s184 = scalar_lea.vmem %s3, %s183
      %v185 = vld [vmem:[%s173] sm:$0xff]
      %v186 = vld [vmem:[%s173 + $0x8] sm:$0xff]
      %v187 = vld [vmem:[%s173 + $0x10] sm:$0xff]
      %v188 = vld [vmem:[%s173 + $0x18] sm:$0xff]
      %v189 = vld [vmem:[%s173 + $0x20] sm:$0xff]
      %v190 = vld [vmem:[%s173 + $0x28] sm:$0xff]
      %v191 = vld [vmem:[%s173 + $0x30] sm:$0xff]
      %v192 = vld [vmem:[%s173 + $0x38] sm:$0xff]
      %v193 = vld [vmem:[%s173 + $0x40] sm:$0xff]
      %v194 = vld [vmem:[%s173 + $0x48] sm:$0xff]
      %v195 = vld [vmem:[%s173 + $0x50] sm:$0xff]
      %v196 = vld [vmem:[%s173 + $0x58] sm:$0xff]
      %v197 = vld [vmem:[%s173 + $0x60] sm:$0xff]
      %v198 = vld [vmem:[%s173 + $0x68] sm:$0xff]
      %v199 = vld [vmem:[%s173 + $0x70] sm:$0xff]
      %v200 = vld [vmem:[%s173 + $0x78] sm:$0xff]
      %v201 = vpack.c.bf16 %v186, %v185
      %v202 = vpack.c.bf16 %v188, %v187
      %v203 = vpack.c.bf16 %v190, %v189
      %v204 = vpack.c.bf16 %v192, %v191
      %v205 = vpack.c.bf16 %v194, %v193
      %v206 = vpack.c.bf16 %v196, %v195
      %v207 = vpack.c.bf16 %v198, %v197
      %v208 = vpack.c.bf16 %v200, %v199
      %v209 = vld [vmem:[%s1] sm:$0xf]
      %v210 = vld [vmem:[%s1 + $0x4] sm:$0xf]
      %v211 = vld [vmem:[%s1 + $0x8] sm:$0xf]
      %v212 = vld [vmem:[%s1 + $0xc] sm:$0xf]
      %v213 = vld [vmem:[%s1 + $0x10] sm:$0xf]
      %v214 = vld [vmem:[%s1 + $0x14] sm:$0xf]
      %v215 = vld [vmem:[%s1 + $0x18] sm:$0xf]
      %v216 = vld [vmem:[%s1 + $0x1c] sm:$0xf]
      %v217 = vld [vmem:[%s1 + $0x20] sm:$0xf]
      %v218 = vld [vmem:[%s1 + $0x24] sm:$0xf]
      %v219 = vld [vmem:[%s1 + $0x28] sm:$0xf]
      %v220 = vld [vmem:[%s1 + $0x2c] sm:$0xf]
      %v221 = vld [vmem:[%s1 + $0x30] sm:$0xf]
      %v222 = vld [vmem:[%s1 + $0x34] sm:$0xf]
      %v223 = vld [vmem:[%s1 + $0x38] sm:$0xf]
      %v224 = vld [vmem:[%s1 + $0x3c] sm:$0xf]
      %v241 = vunpack.c.l.b16 %v209
      %v242 = vunpack.c.l.b16 %v210
      %v243 = vunpack.c.l.b16 %v211
      %v244 = vunpack.c.l.b16 %v212
      %v245 = vunpack.c.l.b16 %v213
      %v246 = vunpack.c.l.b16 %v214
      %v247 = vunpack.c.l.b16 %v215
      %v248 = vunpack.c.l.b16 %v216
      %v249 = vunpack.c.l.b16 %v217
      %v250 = vunpack.c.l.b16 %v218
      %v251 = vunpack.c.l.b16 %v219
      %v252 = vunpack.c.l.b16 %v220
      %v253 = vunpack.c.l.b16 %v221
      %v254 = vunpack.c.l.b16 %v222
      %v255 = vunpack.c.l.b16 %v223
      %v256 = vunpack.c.l.b16 %v224
      %v257 = vpack.c.b16 %v242, %v241
      %v258 = vpack.c.b16 %v244, %v243
      %v259 = vpack.c.b16 %v246, %v245
      %v260 = vpack.c.b16 %v248, %v247
      %v261 = vpack.c.b16 %v250, %v249
      %v262 = vpack.c.b16 %v252, %v251
      %v263 = vpack.c.b16 %v254, %v253
      %v264 = vpack.c.b16 %v256, %v255
      %273 = vmatpush.bf16.msra.mxu0 %v264
      %274 = vmatpush.bf16.msra.mxu0 %v263
      %275 = vmatpush.bf16.msra.mxu0 %v262
      %276 = vmatpush.bf16.msra.mxu0 %v261
      %277 = vmatpush.bf16.msra.mxu0 %v260
      %278 = vmatpush.bf16.msra.mxu0 %v259
      %279 = vmatpush.bf16.msra.mxu0 %v258
      %280 = vmatpush.bf16.msra.mxu0 %v257
      %281 = vmatmul.bf16.gmra.mxu0 %v201
      %v282 = vpop.f32.mrf.mxu0
      %v283 = vadd.f32 0.0, %v282
      %v284 = vpop.f32.mrf.mxu0
      %v285 = vadd.f32 0.0, %v284
      %286 = vmatmul.bf16.gmra.mxu0 %v202
      %v287 = vpop.f32.mrf.mxu0
      %v288 = vadd.f32 0.0, %v287
      %v289 = vpop.f32.mrf.mxu0
      %v290 = vadd.f32 0.0, %v289
      %291 = vmatmul.bf16.gmra.mxu0 %v203
      %v292 = vpop.f32.mrf.mxu0
      %v293 = vadd.f32 0.0, %v292
      %v294 = vpop.f32.mrf.mxu0
      %v295 = vadd.f32 0.0, %v294
      %296 = vmatmul.bf16.gmra.mxu0 %v204
      %v297 = vpop.f32.mrf.mxu0
      %v298 = vadd.f32 0.0, %v297
      %v299 = vpop.f32.mrf.mxu0
      %v300 = vadd.f32 0.0, %v299
      %301 = vmatmul.bf16.gmra.mxu0 %v205
      %v302 = vpop.f32.mrf.mxu0
      %v303 = vadd.f32 0.0, %v302
      %v304 = vpop.f32.mrf.mxu0
      %v305 = vadd.f32 0.0, %v304
      %306 = vmatmul.bf16.gmra.mxu0 %v206
      %v307 = vpop.f32.mrf.mxu0
      %v308 = vadd.f32 0.0, %v307
      %v309 = vpop.f32.mrf.mxu0
      %v310 = vadd.f32 0.0, %v309
      %311 = vmatmul.bf16.gmra.mxu0 %v207
      %v312 = vpop.f32.mrf.mxu0
      %v313 = vadd.f32 0.0, %v312
      %v314 = vpop.f32.mrf.mxu0
      %v315 = vadd.f32 0.0, %v314
      %316 = vmatmul.bf16.gmra.mxu0 %v208
      %v317 = vpop.f32.mrf.mxu0
      %v318 = vadd.f32 0.0, %v317
      %v319 = vpop.f32.mrf.mxu0
      %v320 = vadd.f32 0.0, %v319
      %321 = vdwg.mxu0
      %vm322 = vcmask 130048
      %323 = vst.msk [vmem:[%s179] sm:$0xff] %vm322, %v283
      %324 = vst.msk [vmem:[%s179 + $0x8] sm:$0xff] %vm322, %v285
      %325 = vst.msk [vmem:[%s179 + $0x10] sm:$0xff] %vm322, %v288
      %326 = vst.msk [vmem:[%s179 + $0x18] sm:$0xff] %vm322, %v290
      %327 = vst.msk [vmem:[%s179 + $0x20] sm:$0xff] %vm322, %v293
      %328 = vst.msk [vmem:[%s179 + $0x28] sm:$0xff] %vm322, %v295
      %329 = vst.msk [vmem:[%s179 + $0x30] sm:$0xff] %vm322, %v298
      %330 = vst.msk [vmem:[%s179 + $0x38] sm:$0xff] %vm322, %v300
      %331 = vst.msk [vmem:[%s179 + $0x40] sm:$0xff] %vm322, %v303
      %332 = vst.msk [vmem:[%s179 + $0x48] sm:$0xff] %vm322, %v305
      %333 = vst.msk [vmem:[%s179 + $0x50] sm:$0xff] %vm322, %v308
      %334 = vst.msk [vmem:[%s179 + $0x58] sm:$0xff] %vm322, %v310
      %335 = vst.msk [vmem:[%s179 + $0x60] sm:$0xff] %vm322, %v313
      %336 = vst.msk [vmem:[%s179 + $0x68] sm:$0xff] %vm322, %v315
      %337 = vst.msk [vmem:[%s179 + $0x70] sm:$0xff] %vm322, %v318
      %338 = vst.msk [vmem:[%s179 + $0x78] sm:$0xff] %vm322, %v320
      %v339 = vsel %vm322, %v283, 0.0
      %v340 = vsel %vm322, %v285, 0.0
      %v341 = vadd.f32 %v339, %v340
      %v342 = vsel %vm322, %v288, 0.0
      %v343 = vadd.f32 %v341, %v342
      %v344 = vsel %vm322, %v290, 0.0
      %v345 = vadd.f32 %v343, %v344
      %v346 = vsel %vm322, %v293, 0.0
      %v347 = vadd.f32 %v345, %v346
      %v348 = vsel %vm322, %v295, 0.0
      %v349 = vadd.f32 %v347, %v348
      %v350 = vsel %vm322, %v298, 0.0
      %v351 = vadd.f32 %v349, %v350
      %v352 = vsel %vm322, %v300, 0.0
      %v353 = vadd.f32 %v351, %v352
      %v354 = vsel %vm322, %v303, 0.0
      %v355 = vadd.f32 %v353, %v354
      %v356 = vsel %vm322, %v305, 0.0
      %v357 = vadd.f32 %v355, %v356
      %v358 = vsel %vm322, %v308, 0.0
      %v359 = vadd.f32 %v357, %v358
      %v360 = vsel %vm322, %v310, 0.0
      %v361 = vadd.f32 %v359, %v360
      %v362 = vsel %vm322, %v313, 0.0
      %v363 = vadd.f32 %v361, %v362
      %v364 = vsel %vm322, %v315, 0.0
      %v365 = vadd.f32 %v363, %v364
      %v366 = vsel %vm322, %v318, 0.0
      %v367 = vadd.f32 %v365, %v366
      %v368 = vsel %vm322, %v320, 0.0
      %v369 = vadd.f32 %v367, %v368
      %v370 = vrot.slane %v369, 4
      %v371 = vadd.f32 %v369, %v370
      %v372 = vrot.slane %v371, 2
      %v373 = vadd.f32 %v371, %v372
      %v374 = vrot.slane %v373, 1
      %v375 = vadd.f32 %v373, %v374
      %v376 = vmul.f32 %v283, %v283
      %v377 = vmul.f32 %v285, %v285
      %v378 = vmul.f32 %v288, %v288
      %v379 = vmul.f32 %v290, %v290
      %v380 = vmul.f32 %v293, %v293
      %v381 = vmul.f32 %v295, %v295
      %v382 = vmul.f32 %v298, %v298
      %v383 = vmul.f32 %v300, %v300
      %v384 = vmul.f32 %v303, %v303
      %v385 = vmul.f32 %v305, %v305
      %v386 = vmul.f32 %v308, %v308
      %v387 = vmul.f32 %v310, %v310
      %v388 = vmul.f32 %v313, %v313
      %v389 = vmul.f32 %v315, %v315
      %v390 = vmul.f32 %v318, %v318
      %v391 = vmul.f32 %v320, %v320
      %v392 = vsel %vm322, %v376, 0.0
      %v393 = vsel %vm322, %v377, 0.0
      %v394 = vadd.f32 %v392, %v393
      %v395 = vsel %vm322, %v378, 0.0
      %v396 = vadd.f32 %v394, %v395
      %v397 = vsel %vm322, %v379, 0.0
      %v398 = vadd.f32 %v396, %v397
      %v399 = vsel %vm322, %v380, 0.0
      %v400 = vadd.f32 %v398, %v399
      %v401 = vsel %vm322, %v381, 0.0
      %v402 = vadd.f32 %v400, %v401
      %v403 = vsel %vm322, %v382, 0.0
      %v404 = vadd.f32 %v402, %v403
      %v405 = vsel %vm322, %v383, 0.0
      %v406 = vadd.f32 %v404, %v405
      %v407 = vsel %vm322, %v384, 0.0
      %v408 = vadd.f32 %v406, %v407
      %v409 = vsel %vm322, %v385, 0.0
      %v410 = vadd.f32 %v408, %v409
      %v411 = vsel %vm322, %v386, 0.0
      %v412 = vadd.f32 %v410, %v411
      %v413 = vsel %vm322, %v387, 0.0
      %v414 = vadd.f32 %v412, %v413
      %v415 = vsel %vm322, %v388, 0.0
      %v416 = vadd.f32 %v414, %v415
      %v417 = vsel %vm322, %v389, 0.0
      %v418 = vadd.f32 %v416, %v417
      %v419 = vsel %vm322, %v390, 0.0
      %v420 = vadd.f32 %v418, %v419
      %v421 = vsel %vm322, %v391, 0.0
      %v422 = vadd.f32 %v420, %v421
      %v423 = vrot.slane %v422, 4
      %v424 = vadd.f32 %v422, %v423
      %v425 = vrot.slane %v424, 2
      %v426 = vadd.f32 %v424, %v425
      %v427 = vrot.slane %v426, 1
      %v428 = vadd.f32 %v426, %v427
      %vm429 = vcmask 1040384
      %v430 = vsel %vm429, %v375, %v428
      %vm431 = vcmask 123904
      %432 = vst.msk [vmem:[%s184] sm:$0x3] %vm431, %v430
      %s433 = smul.u32 16, %s15
      %p434 = scmp.lt.s32.totalorder %s433, 31
      %s435 = scalar_select %p434, %s433, 31
      %s436 = smul.addr %s435, 8
      %s437 = scalar_lea.vmem %s2, %s436
      %p438 = scmp.lt.s32.totalorder %s15, 1
      %s439 = scalar_select %p438, %s15, 1
      %s440 = smul.addr %s439, 2
      %s441 = scalar_lea.vmem %s3, %s440
      // Predicated region
      $region29: #{lipread_forward.10} parent=27 // pred_check
        %p442 = pneg %p80
      $region30: #{lipread_forward.10} parent=27 // pred_check_branch
        %444 = sbr.rel (%p442) target = $region32
      $region31: #{lipread_forward.10} parent=27 // pred_region
        %s445 = smul.u32 16, %s15
      $region32: #{lipread_forward.10} parent=27 // pred_fallthru
        _
      // Predicated region
      $region33: #{lipread_forward.10} parent=27 // pred_check
        %p446 = pneg %p106
      $region34: #{lipread_forward.10} parent=27 // pred_check_branch
        %448 = sbr.rel (%p446) target = $region36
      $region35: #{lipread_forward.10} parent=27 // pred_region
        _
      $region36: #{lipread_forward.10} parent=27 // pred_fallthru
        _
    $region28: #{lipread_forward.10} parent=5 // pred_fallthru
      _
    %p449 = scmp.le.s32.totalorder 2, %s10
    // Predicated region
    $region37: #{lipread_forward.10} parent=5 // pred_check
      %p450 = pneg %p449
    $region38: #{lipread_forward.10} parent=5 // pred_check_branch
      %452 = sbr.rel (%p450) target = $region40
    $region39: #{lipread_forward.10} parent=5 // pred_region
      %s453 = ssub.s32 %s10, 2
      // Predicated region
      $region41: #{lipread_forward.10} parent=39 // pred_check
        %p454 = pneg %p86
      $region42: #{lipread_forward.10} parent=39 // pred_check_branch
        %456 = sbr.rel (%p454) target = $region44
      $region43: #{lipread_forward.10} parent=39 // pred_region
        %s457 = smul.u32 16, %s16
        %p458 = scmp.lt.s32.totalorder %s457, 31
        %s459 = scalar_select %p458, %s457, 31
        %s460 = smul.addr %s459, 8
        %s461 = scalar_lea.vmem %s2, %s460
      $region44: #{lipread_forward.10} parent=39 // pred_fallthru
        _
      // Predicated region
      $region45: #{lipread_forward.10} parent=39 // pred_check
        %p462 = pneg %p112
      $region46: #{lipread_forward.10} parent=39 // pred_check_branch
        %464 = sbr.rel (%p462) target = $region48
      $region47: #{lipread_forward.10} parent=39 // pred_region
        %p465 = scmp.lt.s32.totalorder %s16, 1
        %s466 = scalar_select %p465, %s16, 1
        %s467 = smul.addr %s466, 2
        %s468 = scalar_lea.vmem %s3, %s467
      $region48: #{lipread_forward.10} parent=39 // pred_fallthru
        _
    $region40: #{lipread_forward.10} parent=5 // pred_fallthru
      _
  $region6: #{lipread_forward.10} parent=0 // loop_footer
    %s14 = sadd.s32 1, %s10
  $region7: #{lipread_forward.10} parent=0 // loop_footer_branch
    %9 = sbr.rel target = $region3
  $region8: #{lipread_forward.10} parent=0 // loop_exit
    _

// kernel: tile.103
$region0: #{tile.103}
  #allocation0 [shape = 's32[1]{0}', space=sflag, size = 0x4, scoped, tag = 'scoped memory for tile.103']
  %s0 = inlined_call_operand.vmem [shape: f32[16], index: 0, kind: input, shape index: {}]
  %s1 = inlined_call_operand.vmem [shape: f32[16,16], index: 1, kind: output, shape index: {}]
  // Predicated region
  $region2: #{tile.103} parent=0 // pred_check
    _
  $region3: #{tile.103} parent=0 // pred_check_branch
    %3 = sbr.rel (0) target = $region5
  $region4: #{tile.103} parent=0 // pred_region
    _
  $region5: #{tile.103} parent=0 // pred_fallthru
    _
  %v4 = vld [vmem:[%s0] ss:$0 sm:$0xff]
  %5 = vst [vmem:[%s1] sm:$0xff] %v4
  %s6 = scalar_lea.vmem %s1, 8
  %7 = vst [vmem:[%s6] sm:$0xff] %v4

// kernel: tile.108
$region0: #{tile.108}
  %s0 = inlined_call_operand.vmem [shape: f32[16,16], index: 0, kind: input, shape index: {}]
  %s1 = inlined_call_operand.vmem [shape: f32[1,256], index: 1, kind: output, shape index: {}]
  $region1: #{tile.108} parent=0
    #allocation0 [shape = 'u8[8192]{0}', space=vmem, size = 0x2000, scoped, tag = 'scoped mem for output reshape']
    %s2 = smov 3
    %v3 = vld [vmem:[%s0] ss:$8 sm:%s2]
    %vm4 = vcmask 130048
    %5 = vst.msk [vmem:[#allocation0] ss:$8 sm:$0x3] %vm4, %v3
    %s6 = scalar_lea.vmem %s0, 7
    %s7 = smov 3
    %v8 = vld [vmem:[%s6] ss:$8 sm:%s7]
    %9 = vrot.lane.b32.xlu0 %v8, 112
    %v10 = vpop.permute.xlu0 %9
    %vm11 = vcmask 1048448
    %12 = vst.msk [vmem:[#allocation0] ss:$8 sm:$0x3] %vm11, %v10
    %s13 = scalar_lea.vmem %s0, 6
    %s14 = smov 3
    %v15 = vld [vmem:[%s13] ss:$8 sm:%s14]
    %16 = vrot.lane.b32.xlu0 %v15, 96
    %v17 = vpop.permute.xlu0 %16
    %vm18 = vcmask 917248
    %19 = vst.msk [vmem:[#allocation0] ss:$8 sm:$0x3] %vm18, %v17
    %s20 = scalar_lea.vmem %s0, 5
    %s21 = smov 3
    %v22 = vld [vmem:[%s20] ss:$8 sm:%s21]
    %23 = vrot.lane.b32.xlu0 %v22, 80
    %v24 = vpop.permute.xlu0 %23
    %vm25 = vcmask 786048
    %26 = vst.msk [vmem:[#allocation0] ss:$8 sm:$0x3] %vm25, %v24
    %s27 = scalar_lea.vmem %s0, 4
    %s28 = smov 3
    %v29 = vld [vmem:[%s27] ss:$8 sm:%s28]
    %30 = vrot.lane.b32.xlu0 %v29, 64
    %v31 = vpop.permute.xlu0 %30
    %vm32 = vcmask 654848
    %33 = vst.msk [vmem:[#allocation0] ss:$8 sm:$0x3] %vm32, %v31
    %s34 = scalar_lea.vmem %s0, 3
    %s35 = smov 3
    %v36 = vld [vmem:[%s34] ss:$8 sm:%s35]
    %37 = vrot.lane.b32.xlu0 %v36, 48
    %v38 = vpop.permute.xlu0 %37
    %vm39 = vcmask 523648
    %40 = vst.msk [vmem:[#allocation0] ss:$8 sm:$0x3] %vm39, %v38
    %s41 = scalar_lea.vmem %s0, 2
    %s42 = smov 3
    %v43 = vld [vmem:[%s41] ss:$8 sm:%s42]
    %44 = vrot.lane.b32.xlu0 %v43, 32
    %v45 = vpop.permute.xlu0 %44
    %vm46 = vcmask 392448
    %47 = vst.msk [vmem:[#allocation0] ss:$8 sm:$0x3] %vm46, %v45
    %s48 = scalar_lea.vmem %s0, 1
    %s49 = smov 3
    %v50 = vld [vmem:[%s48] ss:$8 sm:%s49]
    %51 = vrot.lane.b32.xlu0 %v50, 16
    %v52 = vpop.permute.xlu0 %51
    %vm53 = vcmask 261248
    %54 = vst.msk [vmem:[#allocation0] ss:$8 sm:$0x3] %vm53, %v52
    %s56 = ssub.s32 2, 1
    %v57 = vld [vmem:[#allocation0] sm:%s56]
    %s59 = ssub.s32 2, 1
    %60 = vst [vmem:[%s1] sm:%s59] %v57
    %s61 = scalar_lea.vmem [#allocation0], 8
    %v62 = vld [vmem:[%s61] sm:%s56]
    %s64 = ssub.s32 2, 1
    %s65 = scalar_lea.vmem %s1, 1
    %66 = vst [vmem:[%s65] sm:%s64] %v62

// kernel: tile.68
$region0: #{tile.68}
  #allocation0 [shape = 's32[1]{0}', space=sflag, size = 0x4, scoped, tag = 'scoped memory for tile.68']
  %s0 = inlined_call_operand.vmem [shape: f32[16], index: 0, kind: input, shape index: {}]
  %s1 = inlined_call_operand.vmem [shape: f32[9,16], index: 1, kind: output, shape index: {}]
  // Predicated region
  $region2: #{tile.68} parent=0 // pred_check
    _
  $region3: #{tile.68} parent=0 // pred_check_branch
    %3 = sbr.rel (0) target = $region5
  $region4: #{tile.68} parent=0 // pred_region
    _
  $region5: #{tile.68} parent=0 // pred_fallthru
    _
  %v4 = vld [vmem:[%s0] ss:$0 sm:$0xff]
  %5 = vst [vmem:[%s1] sm:$0xff] %v4
  %s6 = scalar_lea.vmem %s1, 8
  %7 = vst [vmem:[%s6] sm:$0xff] %v4

// kernel: tile.73
$region0: #{tile.73}
  %s0 = inlined_call_operand.vmem [shape: f32[9,16], index: 0, kind: input, shape index: {}]
  %s1 = inlined_call_operand.vmem [shape: f32[1,144], index: 1, kind: output, shape index: {}]
  $region1: #{tile.73} parent=0
    #allocation0 [shape = 'u8[8192]{0}', space=vmem, size = 0x2000, scoped, tag = 'scoped mem for output reshape']
    %s2 = smov 3
    %v3 = vld [vmem:[%s0] ss:$8 sm:%s2]
    %vm4 = vcmask 130048
    %5 = vst.msk [vmem:[#allocation0] ss:$8 sm:$0x3] %vm4, %v3
    %s6 = scalar_lea.vmem %s0, 7
    %v7 = vld [vmem:[%s6] sm:$0x1]
    %8 = vrot.lane.b32.xlu0 %v7, 112
    %v9 = vpop.permute.xlu0 %8
    %vm10 = vcmask 1048448
    %11 = vst.msk [vmem:[#allocation0] sm:$0x1] %vm10, %v9
    %s12 = scalar_lea.vmem %s0, 6
    %v13 = vld [vmem:[%s12] sm:$0x1]
    %14 = vrot.lane.b32.xlu0 %v13, 96
    %v15 = vpop.permute.xlu0 %14
    %vm16 = vcmask 917248
    %17 = vst.msk [vmem:[#allocation0] sm:$0x1] %vm16, %v15
    %s18 = scalar_lea.vmem %s0, 5
    %v19 = vld [vmem:[%s18] sm:$0x1]
    %20 = vrot.lane.b32.xlu0 %v19, 80
    %v21 = vpop.permute.xlu0 %20
    %vm22 = vcmask 786048
    %23 = vst.msk [vmem:[#allocation0] sm:$0x1] %vm22, %v21
    %s24 = scalar_lea.vmem %s0, 4
    %v25 = vld [vmem:[%s24] sm:$0x1]
    %26 = vrot.lane.b32.xlu0 %v25, 64
    %v27 = vpop.permute.xlu0 %26
    %vm28 = vcmask 654848
    %29 = vst.msk [vmem:[#allocation0] sm:$0x1] %vm28, %v27
    %s30 = scalar_lea.vmem %s0, 3
    %v31 = vld [vmem:[%s30] sm:$0x1]
    %32 = vrot.lane.b32.xlu0 %v31, 48
    %v33 = vpop.permute.xlu0 %32
    %vm34 = vcmask 523648
    %35 = vst.msk [vmem:[#allocation0] sm:$0x1] %vm34, %v33
    %s36 = scalar_lea.vmem %s0, 2
    %v37 = vld [vmem:[%s36] sm:$0x1]
    %38 = vrot.lane.b32.xlu0 %v37, 32
    %v39 = vpop.permute.xlu0 %38
    %vm40 = vcmask 392448
    %41 = vst.msk [vmem:[#allocation0] sm:$0x1] %vm40, %v39
    %s42 = scalar_lea.vmem %s0, 1
    %v43 = vld [vmem:[%s42] sm:$0x1]
    %44 = vrot.lane.b32.xlu0 %v43, 16
    %v45 = vpop.permute.xlu0 %44
    %vm46 = vcmask 261248
    %47 = vst.msk [vmem:[#allocation0] sm:$0x1] %vm46, %v45
    %s49 = ssub.s32 2, 1
    %v50 = vld [vmem:[#allocation0] sm:%s49]
    %s52 = ssub.s32 2, 1
    %53 = vst [vmem:[%s1] sm:%s52] %v50
    %s54 = scalar_lea.vmem [#allocation0], 8
    %v55 = vld [vmem:[%s54] sm:%s49]
    %s57 = ssub.s32 2, 1
    %s58 = scalar_lea.vmem %s1, 1
    %59 = vst [vmem:[%s58] sm:%s57] %v55

// kernel: lipread_forward.11
$region0: #{lipread_forward.11}
  #allocation0 [shape = 'u32[]', space=smem, size = 0x4, offset = 0x4, fixed_abs, tag = 'smem constant byte address 0x4 - core index']
  #allocation1 [shape = 'u32[72,128]{1,0:T(1,128)}', space=vmem, size = 0x9000, scoped, tag = 'internal scratch']
  %s0 = inlined_call_operand.vmem [shape: f32[256,256], index: 0, kind: input, shape index: {}]
  %s1 = inlined_call_operand.vmem [shape: bf16[256,16], index: 1, kind: input, shape index: {}]
  %s2 = inlined_call_operand.vmem [shape: f32[1,256], index: 2, kind: input, shape index: {}]
  %s3 = inlined_call_operand.vmem [shape: f32[1,256], index: 3, kind: input, shape index: {}]
  %s4 = inlined_call_operand.vmem [shape: f32[256,16], index: 4, kind: output, shape index: {0}]
  %s5 = inlined_call_operand.vmem [shape: f32[2,2,16], index: 5, kind: output, shape index: {1}]
  %6 = xla_tuple %s4, %s5
  %s7 = sld [smem:[#allocation0]]
  $region57: #{lipread_forward.11} parent=0
    _
  %s9 = ssub.s32 1, %s7
  %s10 = scalar_select 0, %s9, %s7
  loop: start=0, step=1, limit=4
  $region2: #{lipread_forward.11} parent=0 // loop_pre_header
    _
  $region3: #{lipread_forward.11} parent=0 // loop_header
    %s12 = sphi 0, %s16
    %p13 = scmp.ge.s32.totalorder %s12, 4
    %s22 = sphi 0, %s24
    %s25 = sphi 0, %s22
    %s26 = sphi 0, %s25
    %s42 = sphi 0, %s26
    %s46 = sphi 0, %s46
    %s48 = sphi 0, %s46
    %s49 = sphi 0, %s48
    %s63 = sphi 0, %s49
    %s67 = sphi 0, %s67
    %s69 = sphi 0, %s67
    %s70 = sphi 0, %s69
    %s84 = sphi 0, %s70
    %s88 = sphi 0, %s88
    %s90 = sphi 0, %s88
    %s91 = sphi 0, %s90
    %s105 = sphi 0, %s91
    %s111 = sphi 0, %s113
    %s114 = sphi 0, %s111
    %s115 = sphi 0, %s114
    %s131 = sphi 0, %s115
    %s137 = sphi 0, %s139
    %s140 = sphi 0, %s137
    %s141 = sphi 0, %s140
    %s157 = sphi 0, %s141
  $region4: #{lipread_forward.11} parent=0 // loop_header_branch
    %15 = sbr.rel (%p13) target = $region8
  $region5: #{lipread_forward.11} parent=0 // loop_body
    %s17 = ssub.s32 %s12, 1
    %s18 = ssub.s32 %s12, 2
    %s19 = sadd.s32 %s12, 1
    %s20 = ssub.s32 %s12, %s19
    %p21 = scmp.eq.s32.totalorder %s20, 0
    %s23 = sadd.s32 %s22, 1
    %s24 = scalar_select %p21, %s22, %s23
    %p27 = pneg %p21
    %p28 = scmp.eq.s32.totalorder %s12, 1
    %p29 = por %p27, %p28
    %p30 = scmp.ne.s32.totalorder %s22, %s25
    %p31 = scmp.eq.s32.totalorder %s12, 0
    %p32 = por %p30, %p31
    %p33 = scmp.ne.s32.totalorder %s22, %s25
    %p34 = scmp.eq.s32.totalorder %s17, 1
    %p35 = por %p33, %p34
    %p36 = scmp.ne.s32.totalorder %s25, %s26
    %p37 = scmp.eq.s32.totalorder %s17, 0
    %p38 = por %p36, %p37
    %p39 = scmp.ne.s32.totalorder %s25, %s26
    %p40 = scmp.eq.s32.totalorder %s18, 1
    %p41 = por %p39, %p40
    %p43 = scmp.ne.s32.totalorder %s26, %s42
    %p44 = scmp.eq.s32.totalorder %s18, 0
    %p45 = por %p43, %p44
    %s47 = sadd.s32 %s46, 1
    %p50 = scmp.eq.s32.totalorder %s12, 1
    %p51 = scmp.ne.s32.totalorder %s46, %s48
    %p52 = scmp.eq.s32.totalorder %s12, 0
    %p53 = por %p51, %p52
    %p54 = scmp.ne.s32.totalorder %s46, %s48
    %p55 = scmp.eq.s32.totalorder %s17, 1
    %p56 = por %p54, %p55
    %p57 = scmp.ne.s32.totalorder %s48, %s49
    %p58 = scmp.eq.s32.totalorder %s17, 0
    %p59 = por %p57, %p58
    %p60 = scmp.ne.s32.totalorder %s48, %s49
    %p61 = scmp.eq.s32.totalorder %s18, 1
    %p62 = por %p60, %p61
    %p64 = scmp.ne.s32.totalorder %s49, %s63
    %p65 = scmp.eq.s32.totalorder %s18, 0
    %p66 = por %p64, %p65
    %s68 = sadd.s32 %s67, 1
    %p71 = scmp.eq.s32.totalorder %s12, 1
    %p72 = scmp.ne.s32.totalorder %s67, %s69
    %p73 = scmp.eq.s32.totalorder %s12, 0
    %p74 = por %p72, %p73
    %p75 = scmp.ne.s32.totalorder %s67, %s69
    %p76 = scmp.eq.s32.totalorder %s17, 1
    %p77 = por %p75, %p76
    %p78 = scmp.ne.s32.totalorder %s69, %s70
    %p79 = scmp.eq.s32.totalorder %s17, 0
    %p80 = por %p78, %p79
    %p81 = scmp.ne.s32.totalorder %s69, %s70
    %p82 = scmp.eq.s32.totalorder %s18, 1
    %p83 = por %p81, %p82
    %p85 = scmp.ne.s32.totalorder %s70, %s84
    %p86 = scmp.eq.s32.totalorder %s18, 0
    %p87 = por %p85, %p86
    %s89 = sadd.s32 %s88, 1
    %p92 = scmp.eq.s32.totalorder %s12, 1
    %p93 = scmp.ne.s32.totalorder %s88, %s90
    %p94 = scmp.eq.s32.totalorder %s12, 0
    %p95 = por %p93, %p94
    %p96 = scmp.ne.s32.totalorder %s88, %s90
    %p97 = scmp.eq.s32.totalorder %s17, 1
    %p98 = por %p96, %p97
    %p99 = scmp.ne.s32.totalorder %s90, %s91
    %p100 = scmp.eq.s32.totalorder %s17, 0
    %p101 = por %p99, %p100
    %p102 = scmp.ne.s32.totalorder %s90, %s91
    %p103 = scmp.eq.s32.totalorder %s18, 1
    %p104 = por %p102, %p103
    %p106 = scmp.ne.s32.totalorder %s91, %s105
    %p107 = scmp.eq.s32.totalorder %s18, 0
    %p108 = por %p106, %p107
    %s109 = ssub.s32 %s12, %s19
    %p110 = scmp.eq.s32.totalorder %s109, 0
    %s112 = sadd.s32 %s111, 1
    %s113 = scalar_select %p110, %s111, %s112
    %p116 = pneg %p110
    %p117 = scmp.eq.s32.totalorder %s12, 1
    %p118 = por %p116, %p117
    %p119 = scmp.ne.s32.totalorder %s111, %s114
    %p120 = scmp.eq.s32.totalorder %s12, 0
    %p121 = por %p119, %p120
    %p122 = scmp.ne.s32.totalorder %s111, %s114
    %p123 = scmp.eq.s32.totalorder %s17, 1
    %p124 = por %p122, %p123
    %p125 = scmp.ne.s32.totalorder %s114, %s115
    %p126 = scmp.eq.s32.totalorder %s17, 0
    %p127 = por %p125, %p126
    %p128 = scmp.ne.s32.totalorder %s114, %s115
    %p129 = scmp.eq.s32.totalorder %s18, 1
    %p130 = por %p128, %p129
    %p132 = scmp.ne.s32.totalorder %s115, %s131
    %p133 = scmp.eq.s32.totalorder %s18, 0
    %p134 = por %p132, %p133
    %s135 = ssub.s32 %s12, %s19
    %p136 = scmp.eq.s32.totalorder %s135, 0
    %s138 = sadd.s32 %s137, 1
    %s139 = scalar_select %p136, %s137, %s138
    %p142 = pneg %p136
    %p143 = scmp.eq.s32.totalorder %s12, 1
    %p144 = por %p142, %p143
    %p145 = scmp.ne.s32.totalorder %s137, %s140
    %p146 = scmp.eq.s32.totalorder %s12, 0
    %p147 = por %p145, %p146
    %p148 = scmp.ne.s32.totalorder %s137, %s140
    %p149 = scmp.eq.s32.totalorder %s17, 1
    %p150 = por %p148, %p149
    %p151 = scmp.ne.s32.totalorder %s140, %s141
    %p152 = scmp.eq.s32.totalorder %s17, 0
    %p153 = por %p151, %p152
    %p154 = scmp.ne.s32.totalorder %s140, %s141
    %p155 = scmp.eq.s32.totalorder %s18, 1
    %p156 = por %p154, %p155
    %p158 = scmp.ne.s32.totalorder %s141, %s157
    %p159 = scmp.eq.s32.totalorder %s18, 0
    %p160 = por %p158, %p159
    %p161 = scmp.le.s32.totalorder 1, %s12
    %p162 = scmp.lt.s32.totalorder %s12, 3
    %p163 = pnand %p161, %p162
    %p164 = pneg %p163
    // Predicated region
    $region9: #{lipread_forward.11} parent=5 // pred_check
      _
    $region10: #{lipread_forward.11} parent=5 // pred_check_branch
      %166 = sbr.rel (%p163) target = $region12
    $region11: #{lipread_forward.11} parent=5 // pred_region
      %s167 = ssub.s32 %s12, 1
      // Predicated region
      $region13: #{lipread_forward.11} parent=11 // pred_check
        %p168 = pneg %p59
      $region14: #{lipread_forward.11} parent=11 // pred_check_branch
        %170 = sbr.rel (%p168) target = $region16
      $region15: #{lipread_forward.11} parent=11 // pred_region
        _
      $region16: #{lipread_forward.11} parent=11 // pred_fallthru
        _
      // Predicated region
      $region17: #{lipread_forward.11} parent=11 // pred_check
        %p171 = pneg %p80
      $region18: #{lipread_forward.11} parent=11 // pred_check_branch
        %173 = sbr.rel (%p171) target = $region20
      $region19: #{lipread_forward.11} parent=11 // pred_region
        _
      $region20: #{lipread_forward.11} parent=11 // pred_fallthru
        _
      // Predicated region
      $region21: #{lipread_forward.11} parent=11 // pred_check
        %p174 = pneg %p101
      $region22: #{lipread_forward.11} parent=11 // pred_check_branch
        %176 = sbr.rel (%p174) target = $region24
      $region23: #{lipread_forward.11} parent=11 // pred_region
        _
      $region24: #{lipread_forward.11} parent=11 // pred_fallthru
        _
    $region12: #{lipread_forward.11} parent=5 // pred_fallthru
      _
    %p177 = scmp.lt.s32.totalorder %s12, 2
    // Predicated region
    $region25: #{lipread_forward.11} parent=5 // pred_check
      %p178 = pneg %p177
    $region26: #{lipread_forward.11} parent=5 // pred_check_branch
      %180 = sbr.rel (%p178) target = $region28
    $region27: #{lipread_forward.11} parent=5 // pred_region
      // Predicated region
      $region29: #{lipread_forward.11} parent=27 // pred_check
        %p181 = pneg %p32
      $region30: #{lipread_forward.11} parent=27 // pred_check_branch
        %183 = sbr.rel (%p181) target = $region32
      $region31: #{lipread_forward.11} parent=27 // pred_region
        %s184 = smul.u32 16, %s12
        %p185 = scmp.lt.s32.totalorder %s184, 31
        %s186 = scalar_select %p185, %s184, 31
        %s187 = smul.addr %s186, 2
        %s188 = smul.addr %s187, 8
        %s189 = scalar_lea.vmem %s0, %s188
        %s190 = smul.u32 16, %s12
      $region32: #{lipread_forward.11} parent=27 // pred_fallthru
        _
    $region28: #{lipread_forward.11} parent=5 // pred_fallthru
      _
    %p191 = scmp.le.s32.totalorder 1, %s12
    %p192 = scmp.lt.s32.totalorder %s12, 3
    %p193 = pnand %p191, %p192
    %p194 = pneg %p193
    // Predicated region
    $region33: #{lipread_forward.11} parent=5 // pred_check
      _
    $region34: #{lipread_forward.11} parent=5 // pred_check_branch
      %196 = sbr.rel (%p193) target = $region36
    $region35: #{lipread_forward.11} parent=5 // pred_region
      %s197 = ssub.s32 %s12, 1
      %s198 = smul.u32 16, %s17
      %p199 = scmp.lt.s32.totalorder %s198, 31
      %s200 = scalar_select %p199, %s198, 31
      %s201 = smul.addr %s200, 2
      %s202 = smul.addr %s201, 8
      %s203 = scalar_lea.vmem %s0, %s202
      %p204 = pneg %p38
      %p205 = pneg %p35
      %p206 = pneg %p59
      %p207 = pneg %p56
      %p208 = pneg %p80
      %p209 = pneg %p77
      %p210 = pneg %p101
      %p211 = pneg %p98
      %p212 = pneg %p127
      %p213 = pneg %p124
      %s214 = smul.u32 16, %s17
      %p215 = scmp.lt.s32.totalorder %s214, 31
      %s216 = scalar_select %p215, %s214, 31
      %s217 = smul.addr %s216, 8
      %s218 = scalar_lea.vmem %s4, %s217
      %p219 = pneg %p153
      %p220 = pneg %p150
      %p221 = scmp.lt.s32.totalorder %s17, 1
      %s222 = scalar_select %p221, %s17, 1
      %s223 = smul.addr %s222, 2
      %s224 = scalar_lea.vmem %s5, %s223
      %s225 = smul.u32 16, %s17
      %p226 = scmp.lt.s32.totalorder %s225, 31
      %s227 = scalar_select %p226, %s225, 31
      %s228 = smul.addr %s227, 2
      %s229 = smul.addr %s228, 8
      %s230 = scalar_lea.vmem %s0, %s229
      %s231 = smul.u32 16, %s17
      %s232 = smul.u32 16, %s17
      %p233 = scmp.lt.s32.totalorder %s232, 31
      %s234 = scalar_select %p233, %s232, 31
      %s235 = smul.addr %s234, 8
      %s236 = scalar_lea.vmem %s4, %s235
      %s237 = smul.u32 16, %s17
      %p238 = scmp.lt.s32.totalorder %s17, 1
      %s239 = scalar_select %p238, %s17, 1
      %s240 = smul.addr %s239, 2
      %s241 = scalar_lea.vmem %s5, %s240
      %v242 = vld [vmem:[%s230] sm:$0xff]
      %v243 = vld [vmem:[%s230 + $0x8] sm:$0xff]
      %v244 = vld [vmem:[%s230 + $0x10] sm:$0xff]
      %v245 = vld [vmem:[%s230 + $0x18] sm:$0xff]
      %v246 = vld [vmem:[%s230 + $0x20] sm:$0xff]
      %v247 = vld [vmem:[%s230 + $0x28] sm:$0xff]
      %v248 = vld [vmem:[%s230 + $0x30] sm:$0xff]
      %v249 = vld [vmem:[%s230 + $0x38] sm:$0xff]
      %v250 = vld [vmem:[%s230 + $0x40] sm:$0xff]
      %v251 = vld [vmem:[%s230 + $0x48] sm:$0xff]
      %v252 = vld [vmem:[%s230 + $0x50] sm:$0xff]
      %v253 = vld [vmem:[%s230 + $0x58] sm:$0xff]
      %v254 = vld [vmem:[%s230 + $0x60] sm:$0xff]
      %v255 = vld [vmem:[%s230 + $0x68] sm:$0xff]
      %v256 = vld [vmem:[%s230 + $0x70] sm:$0xff]
      %v257 = vld [vmem:[%s230 + $0x78] sm:$0xff]
      %v258 = vld [vmem:[%s230 + $0x80] sm:$0xff]
      %v259 = vld [vmem:[%s230 + $0x88] sm:$0xff]
      %v260 = vld [vmem:[%s230 + $0x90] sm:$0xff]
      %v261 = vld [vmem:[%s230 + $0x98] sm:$0xff]
      %v262 = vld [vmem:[%s230 + $0xa0] sm:$0xff]
      %v263 = vld [vmem:[%s230 + $0xa8] sm:$0xff]
      %v264 = vld [vmem:[%s230 + $0xb0] sm:$0xff]
      %v265 = vld [vmem:[%s230 + $0xb8] sm:$0xff]
      %v266 = vld [vmem:[%s230 + $0xc0] sm:$0xff]
      %v267 = vld [vmem:[%s230 + $0xc8] sm:$0xff]
      %v268 = vld [vmem:[%s230 + $0xd0] sm:$0xff]
      %v269 = vld [vmem:[%s230 + $0xd8] sm:$0xff]
      %v270 = vld [vmem:[%s230 + $0xe0] sm:$0xff]
      %v271 = vld [vmem:[%s230 + $0xe8] sm:$0xff]
      %v272 = vld [vmem:[%s230 + $0xf0] sm:$0xff]
      %v273 = vld [vmem:[%s230 + $0xf8] sm:$0xff]
      %v274 = vld [vmem:[%s2] sm:$0x3]
      %v276 = vperm.slane %v274, 0
      %v277 = vperm.slane %v274, 1
      %v280 = vmul.f32 %v242, %v276
      %v281 = vmul.f32 %v243, %v277
      %v282 = vmul.f32 %v244, %v276
      %v283 = vmul.f32 %v245, %v277
      %v284 = vmul.f32 %v246, %v276
      %v285 = vmul.f32 %v247, %v277
      %v286 = vmul.f32 %v248, %v276
      %v287 = vmul.f32 %v249, %v277
      %v288 = vmul.f32 %v250, %v276
      %v289 = vmul.f32 %v251, %v277
      %v290 = vmul.f32 %v252, %v276
      %v291 = vmul.f32 %v253, %v277
      %v292 = vmul.f32 %v254, %v276
      %v293 = vmul.f32 %v255, %v277
      %v294 = vmul.f32 %v256, %v276
      %v295 = vmul.f32 %v257, %v277
      %v296 = vmul.f32 %v258, %v276
      %v297 = vmul.f32 %v259, %v277
      %v298 = vmul.f32 %v260, %v276
      %v299 = vmul.f32 %v261, %v277
      %v300 = vmul.f32 %v262, %v276
      %v301 = vmul.f32 %v263, %v277
      %v302 = vmul.f32 %v264, %v276
      %v303 = vmul.f32 %v265, %v277
      %v304 = vmul.f32 %v266, %v276
      %v305 = vmul.f32 %v267, %v277
      %v306 = vmul.f32 %v268, %v276
      %v307 = vmul.f32 %v269, %v277
      %v308 = vmul.f32 %v270, %v276
      %v309 = vmul.f32 %v271, %v277
      %v310 = vmul.f32 %v272, %v276
      %v311 = vmul.f32 %v273, %v277
      %v312 = vld [vmem:[%s3] sm:$0x3]
      %v314 = vperm.slane %v312, 0
      %v315 = vperm.slane %v312, 1
      %v318 = vadd.f32 %v280, %v314
      %v319 = vadd.f32 %v281, %v315
      %v320 = vadd.f32 %v282, %v314
      %v321 = vadd.f32 %v283, %v315
      %v322 = vadd.f32 %v284, %v314
      %v323 = vadd.f32 %v285, %v315
      %v324 = vadd.f32 %v286, %v314
      %v325 = vadd.f32 %v287, %v315
      %v326 = vadd.f32 %v288, %v314
      %v327 = vadd.f32 %v289, %v315
      %v328 = vadd.f32 %v290, %v314
      %v329 = vadd.f32 %v291, %v315
      %v330 = vadd.f32 %v292, %v314
      %v331 = vadd.f32 %v293, %v315
      %v332 = vadd.f32 %v294, %v314
      %v333 = vadd.f32 %v295, %v315
      %v334 = vadd.f32 %v296, %v314
      %v335 = vadd.f32 %v297, %v315
      %v336 = vadd.f32 %v298, %v314
      %v337 = vadd.f32 %v299, %v315
      %v338 = vadd.f32 %v300, %v314
      %v339 = vadd.f32 %v301, %v315
      %v340 = vadd.f32 %v302, %v314
      %v341 = vadd.f32 %v303, %v315
      %v342 = vadd.f32 %v304, %v314
      %v343 = vadd.f32 %v305, %v315
      %v344 = vadd.f32 %v306, %v314
      %v345 = vadd.f32 %v307, %v315
      %v346 = vadd.f32 %v308, %v314
      %v347 = vadd.f32 %v309, %v315
      %v348 = vadd.f32 %v310, %v314
      %v349 = vadd.f32 %v311, %v315
      %v350 = vmax.f32 %v318, 0.0
      %v351 = vmax.f32 %v319, 0.0
      %v352 = vmax.f32 %v320, 0.0
      %v353 = vmax.f32 %v321, 0.0
      %v354 = vmax.f32 %v322, 0.0
      %v355 = vmax.f32 %v323, 0.0
      %v356 = vmax.f32 %v324, 0.0
      %v357 = vmax.f32 %v325, 0.0
      %v358 = vmax.f32 %v326, 0.0
      %v359 = vmax.f32 %v327, 0.0
      %v360 = vmax.f32 %v328, 0.0
      %v361 = vmax.f32 %v329, 0.0
      %v362 = vmax.f32 %v330, 0.0
      %v363 = vmax.f32 %v331, 0.0
      %v364 = vmax.f32 %v332, 0.0
      %v365 = vmax.f32 %v333, 0.0
      %v366 = vmax.f32 %v334, 0.0
      %v367 = vmax.f32 %v335, 0.0
      %v368 = vmax.f32 %v336, 0.0
      %v369 = vmax.f32 %v337, 0.0
      %v370 = vmax.f32 %v338, 0.0
      %v371 = vmax.f32 %v339, 0.0
      %v372 = vmax.f32 %v340, 0.0
      %v373 = vmax.f32 %v341, 0.0
      %v374 = vmax.f32 %v342, 0.0
      %v375 = vmax.f32 %v343, 0.0
      %v376 = vmax.f32 %v344, 0.0
      %v377 = vmax.f32 %v345, 0.0
      %v378 = vmax.f32 %v346, 0.0
      %v379 = vmax.f32 %v347, 0.0
      %v380 = vmax.f32 %v348, 0.0
      %v381 = vmax.f32 %v349, 0.0
      %v382 = vpack.c.bf16 %v352, %v350
      %v383 = vpack.c.bf16 %v353, %v351
      %v384 = vpack.c.bf16 %v356, %v354
      %v385 = vpack.c.bf16 %v357, %v355
      %v386 = vpack.c.bf16 %v360, %v358
      %v387 = vpack.c.bf16 %v361, %v359
      %v388 = vpack.c.bf16 %v364, %v362
      %v389 = vpack.c.bf16 %v365, %v363
      %v390 = vpack.c.bf16 %v368, %v366
      %v391 = vpack.c.bf16 %v369, %v367
      %v392 = vpack.c.bf16 %v372, %v370
      %v393 = vpack.c.bf16 %v373, %v371
      %v394 = vpack.c.bf16 %v376, %v374
      %v395 = vpack.c.bf16 %v377, %v375
      %v396 = vpack.c.bf16 %v380, %v378
      %v397 = vpack.c.bf16 %v381, %v379
      %v398 = vld [vmem:[%s1] sm:$0xf]
      %v399 = vld [vmem:[%s1 + $0x4] sm:$0xf]
      %v400 = vld [vmem:[%s1 + $0x8] sm:$0xf]
      %v401 = vld [vmem:[%s1 + $0xc] sm:$0xf]
      %v402 = vld [vmem:[%s1 + $0x10] sm:$0xf]
      %v403 = vld [vmem:[%s1 + $0x14] sm:$0xf]
      %v404 = vld [vmem:[%s1 + $0x18] sm:$0xf]
      %v405 = vld [vmem:[%s1 + $0x1c] sm:$0xf]
      %v406 = vld [vmem:[%s1 + $0x20] sm:$0xf]
      %v407 = vld [vmem:[%s1 + $0x24] sm:$0xf]
      %v408 = vld [vmem:[%s1 + $0x28] sm:$0xf]
      %v409 = vld [vmem:[%s1 + $0x2c] sm:$0xf]
      %v410 = vld [vmem:[%s1 + $0x30] sm:$0xf]
      %v411 = vld [vmem:[%s1 + $0x34] sm:$0xf]
      %v412 = vld [vmem:[%s1 + $0x38] sm:$0xf]
      %v413 = vld [vmem:[%s1 + $0x3c] sm:$0xf]
      %v414 = vld [vmem:[%s1 + $0x40] sm:$0xf]
      %v415 = vld [vmem:[%s1 + $0x44] sm:$0xf]
      %v416 = vld [vmem:[%s1 + $0x48] sm:$0xf]
      %v417 = vld [vmem:[%s1 + $0x4c] sm:$0xf]
      %v418 = vld [vmem:[%s1 + $0x50] sm:$0xf]
      %v419 = vld [vmem:[%s1 + $0x54] sm:$0xf]
      %v420 = vld [vmem:[%s1 + $0x58] sm:$0xf]
      %v421 = vld [vmem:[%s1 + $0x5c] sm:$0xf]
      %v422 = vld [vmem:[%s1 + $0x60] sm:$0xf]
      %v423 = vld [vmem:[%s1 + $0x64] sm:$0xf]
      %v424 = vld [vmem:[%s1 + $0x68] sm:$0xf]
      %v425 = vld [vmem:[%s1 + $0x6c] sm:$0xf]
      %v426 = vld [vmem:[%s1 + $0x70] sm:$0xf]
      %v427 = vld [vmem:[%s1 + $0x74] sm:$0xf]
      %v428 = vld [vmem:[%s1 + $0x78] sm:$0xf]
      %v429 = vld [vmem:[%s1 + $0x7c] sm:$0xf]
      %v462 = vunpack.c.l.b16 %v398
      %v463 = vunpack.c.l.b16 %v399
      %v464 = vunpack.c.l.b16 %v400
      %v465 = vunpack.c.l.b16 %v401
      %v466 = vunpack.c.l.b16 %v402
      %v467 = vunpack.c.l.b16 %v403
      %v468 = vunpack.c.l.b16 %v404
      %v469 = vunpack.c.l.b16 %v405
      %v470 = vunpack.c.l.b16 %v406
      %v471 = vunpack.c.l.b16 %v407
      %v472 = vunpack.c.l.b16 %v408
      %v473 = vunpack.c.l.b16 %v409
      %v474 = vunpack.c.l.b16 %v410
      %v475 = vunpack.c.l.b16 %v411
      %v476 = vunpack.c.l.b16 %v412
      %v477 = vunpack.c.l.b16 %v413
      %v478 = vunpack.c.l.b16 %v414
      %v479 = vunpack.c.l.b16 %v415
      %v480 = vunpack.c.l.b16 %v416
      %v481 = vunpack.c.l.b16 %v417
      %v482 = vunpack.c.l.b16 %v418
      %v483 = vunpack.c.l.b16 %v419
      %v484 = vunpack.c.l.b16 %v420
      %v485 = vunpack.c.l.b16 %v421
      %v486 = vunpack.c.l.b16 %v422
      %v487 = vunpack.c.l.b16 %v423
      %v488 = vunpack.c.l.b16 %v424
      %v489 = vunpack.c.l.b16 %v425
      %v490 = vunpack.c.l.b16 %v426
      %v491 = vunpack.c.l.b16 %v427
      %v492 = vunpack.c.l.b16 %v428
      %v493 = vunpack.c.l.b16 %v429
      %v494 = vpack.c.b16 %v463, %v462
      %v495 = vpack.c.b16 %v465, %v464
      %v496 = vpack.c.b16 %v467, %v466
      %v497 = vpack.c.b16 %v469, %v468
      %v498 = vpack.c.b16 %v471, %v470
      %v499 = vpack.c.b16 %v473, %v472
      %v500 = vpack.c.b16 %v475, %v474
      %v501 = vpack.c.b16 %v477, %v476
      %v502 = vpack.c.b16 %v479, %v478
      %v503 = vpack.c.b16 %v481, %v480
      %v504 = vpack.c.b16 %v483, %v482
      %v505 = vpack.c.b16 %v485, %v484
      %v506 = vpack.c.b16 %v487, %v486
      %v507 = vpack.c.b16 %v489, %v488
      %v508 = vpack.c.b16 %v491, %v490
      %v509 = vpack.c.b16 %v493, %v492
      %526 = vmatpush.bf16.msra.mxu0 %v501
      %527 = vmatpush.bf16.msra.mxu0 %v500
      %528 = vmatpush.bf16.msra.mxu0 %v499
      %529 = vmatpush.bf16.msra.mxu0 %v498
      %530 = vmatpush.bf16.msra.mxu0 %v497
      %531 = vmatpush.bf16.msra.mxu0 %v496
      %532 = vmatpush.bf16.msra.mxu0 %v495
      %533 = vmatpush.bf16.msra.mxu0 %v494
      %534 = vmatmul.bf16.gmra.mxu0 %v382
      %v535 = vpop.f32.mrf.mxu0
      %v536 = vadd.f32 0.0, %v535
      %v537 = vpop.f32.mrf.mxu0
      %v538 = vadd.f32 0.0, %v537
      %539 = vmatmul.bf16.gmra.mxu0 %v384
      %v540 = vpop.f32.mrf.mxu0
      %v541 = vadd.f32 0.0, %v540
      %v542 = vpop.f32.mrf.mxu0
      %v543 = vadd.f32 0.0, %v542
      %544 = vmatmul.bf16.gmra.mxu0 %v386
      %v545 = vpop.f32.mrf.mxu0
      %v546 = vadd.f32 0.0, %v545
      %v547 = vpop.f32.mrf.mxu0
      %v548 = vadd.f32 0.0, %v547
      %549 = vmatmul.bf16.gmra.mxu0 %v388
      %v550 = vpop.f32.mrf.mxu0
      %v551 = vadd.f32 0.0, %v550
      %v552 = vpop.f32.mrf.mxu0
      %v553 = vadd.f32 0.0, %v552
      %554 = vmatmul.bf16.gmra.mxu0 %v390
      %v555 = vpop.f32.mrf.mxu0
      %v556 = vadd.f32 0.0, %v555
      %v557 = vpop.f32.mrf.mxu0
      %v558 = vadd.f32 0.0, %v557
      %559 = vmatmul.bf16.gmra.mxu0 %v392
      %v560 = vpop.f32.mrf.mxu0
      %v561 = vadd.f32 0.0, %v560
      %v562 = vpop.f32.mrf.mxu0
      %v563 = vadd.f32 0.0, %v562
      %564 = vmatmul.bf16.gmra.mxu0 %v394
      %v565 = vpop.f32.mrf.mxu0
      %v566 = vadd.f32 0.0, %v565
      %v567 = vpop.f32.mrf.mxu0
      %v568 = vadd.f32 0.0, %v567
      %569 = vmatmul.bf16.gmra.mxu0 %v396
      %v570 = vpop.f32.mrf.mxu0
      %v571 = vadd.f32 0.0, %v570
      %v572 = vpop.f32.mrf.mxu0
      %v573 = vadd.f32 0.0, %v572
      %574 = vdwg.mxu0
      %575 = vmatpush.bf16.msra.mxu0 %v509
      %576 = vmatpush.bf16.msra.mxu0 %v508
      %577 = vmatpush.bf16.msra.mxu0 %v507
      %578 = vmatpush.bf16.msra.mxu0 %v506
      %579 = vmatpush.bf16.msra.mxu0 %v505
      %580 = vmatpush.bf16.msra.mxu0 %v504
      %581 = vmatpush.bf16.msra.mxu0 %v503
      %582 = vmatpush.bf16.msra.mxu0 %v502
      %583 = vmatmul.bf16.gmra.mxu0 %v383
      %v584 = vpop.f32.mrf.mxu0
      %v585 = vadd.f32 %v536, %v584
      %v586 = vpop.f32.mrf.mxu0
      %v587 = vadd.f32 %v538, %v586
      %588 = vmatmul.bf16.gmra.mxu0 %v385
      %v589 = vpop.f32.mrf.mxu0
      %v590 = vadd.f32 %v541, %v589
      %v591 = vpop.f32.mrf.mxu0
      %v592 = vadd.f32 %v543, %v591
      %593 = vmatmul.bf16.gmra.mxu0 %v387
      %v594 = vpop.f32.mrf.mxu0
      %v595 = vadd.f32 %v546, %v594
      %v596 = vpop.f32.mrf.mxu0
      %v597 = vadd.f32 %v548, %v596
      %598 = vmatmul.bf16.gmra.mxu0 %v389
      %v599 = vpop.f32.mrf.mxu0
      %v600 = vadd.f32 %v551, %v599
      %v601 = vpop.f32.mrf.mxu0
      %v602 = vadd.f32 %v553, %v601
      %603 = vmatmul.bf16.gmra.mxu0 %v391
      %v604 = vpop.f32.mrf.mxu0
      %v605 = vadd.f32 %v556, %v604
      %v606 = vpop.f32.mrf.mxu0
      %v607 = vadd.f32 %v558, %v606
      %608 = vmatmul.bf16.gmra.mxu0 %v393
      %v609 = vpop.f32.mrf.mxu0
      %v610 = vadd.f32 %v561, %v609
      %v611 = vpop.f32.mrf.mxu0
      %v612 = vadd.f32 %v563, %v611
      %613 = vmatmul.bf16.gmra.mxu0 %v395
      %v614 = vpop.f32.mrf.mxu0
      %v615 = vadd.f32 %v566, %v614
      %v616 = vpop.f32.mrf.mxu0
      %v617 = vadd.f32 %v568, %v616
      %618 = vmatmul.bf16.gmra.mxu0 %v397
      %v619 = vpop.f32.mrf.mxu0
      %v620 = vadd.f32 %v571, %v619
      %v621 = vpop.f32.mrf.mxu0
      %v622 = vadd.f32 %v573, %v621
      %623 = vdwg.mxu0
      %vm624 = vcmask 130048
      %625 = vst.msk [vmem:[%s236] sm:$0xff] %vm624, %v585
      %626 = vst.msk [vmem:[%s236 + $0x8] sm:$0xff] %vm624, %v587
      %627 = vst.msk [vmem:[%s236 + $0x10] sm:$0xff] %vm624, %v590
      %628 = vst.msk [vmem:[%s236 + $0x18] sm:$0xff] %vm624, %v592
      %629 = vst.msk [vmem:[%s236 + $0x20] sm:$0xff] %vm624, %v595
      %630 = vst.msk [vmem:[%s236 + $0x28] sm:$0xff] %vm624, %v597
      %631 = vst.msk [vmem:[%s236 + $0x30] sm:$0xff] %vm624, %v600
      %632 = vst.msk [vmem:[%s236 + $0x38] sm:$0xff] %vm624, %v602
      %633 = vst.msk [vmem:[%s236 + $0x40] sm:$0xff] %vm624, %v605
      %634 = vst.msk [vmem:[%s236 + $0x48] sm:$0xff] %vm624, %v607
      %635 = vst.msk [vmem:[%s236 + $0x50] sm:$0xff] %vm624, %v610
      %636 = vst.msk [vmem:[%s236 + $0x58] sm:$0xff] %vm624, %v612
      %637 = vst.msk [vmem:[%s236 + $0x60] sm:$0xff] %vm624, %v615
      %638 = vst.msk [vmem:[%s236 + $0x68] sm:$0xff] %vm624, %v617
      %639 = vst.msk [vmem:[%s236 + $0x70] sm:$0xff] %vm624, %v620
      %640 = vst.msk [vmem:[%s236 + $0x78] sm:$0xff] %vm624, %v622
      %v641 = vsel %vm624, %v585, 0.0
      %v642 = vsel %vm624, %v587, 0.0
      %v643 = vadd.f32 %v641, %v642
      %v644 = vsel %vm624, %v590, 0.0
      %v645 = vadd.f32 %v643, %v644
      %v646 = vsel %vm624, %v592, 0.0
      %v647 = vadd.f32 %v645, %v646
      %v648 = vsel %vm624, %v595, 0.0
      %v649 = vadd.f32 %v647, %v648
      %v650 = vsel %vm624, %v597, 0.0
      %v651 = vadd.f32 %v649, %v650
      %v652 = vsel %vm624, %v600, 0.0
      %v653 = vadd.f32 %v651, %v652
      %v654 = vsel %vm624, %v602, 0.0
      %v655 = vadd.f32 %v653, %v654
      %v656 = vsel %vm624, %v605, 0.0
      %v657 = vadd.f32 %v655, %v656
      %v658 = vsel %vm624, %v607, 0.0
      %v659 = vadd.f32 %v657, %v658
      %v660 = vsel %vm624, %v610, 0.0
      %v661 = vadd.f32 %v659, %v660
      %v662 = vsel %vm624, %v612, 0.0
      %v663 = vadd.f32 %v661, %v662
      %v664 = vsel %vm624, %v615, 0.0
      %v665 = vadd.f32 %v663, %v664
      %v666 = vsel %vm624, %v617, 0.0
      %v667 = vadd.f32 %v665, %v666
      %v668 = vsel %vm624, %v620, 0.0
      %v669 = vadd.f32 %v667, %v668
      %v670 = vsel %vm624, %v622, 0.0
      %v671 = vadd.f32 %v669, %v670
      %v672 = vrot.slane %v671, 4
      %v673 = vadd.f32 %v671, %v672
      %v674 = vrot.slane %v673, 2
      %v675 = vadd.f32 %v673, %v674
      %v676 = vrot.slane %v675, 1
      %v677 = vadd.f32 %v675, %v676
      %v678 = vmul.f32 %v585, %v585
      %v679 = vmul.f32 %v587, %v587
      %v680 = vmul.f32 %v590, %v590
      %v681 = vmul.f32 %v592, %v592
      %v682 = vmul.f32 %v595, %v595
      %v683 = vmul.f32 %v597, %v597
      %v684 = vmul.f32 %v600, %v600
      %v685 = vmul.f32 %v602, %v602
      %v686 = vmul.f32 %v605, %v605
      %v687 = vmul.f32 %v607, %v607
      %v688 = vmul.f32 %v610, %v610
      %v689 = vmul.f32 %v612, %v612
      %v690 = vmul.f32 %v615, %v615
      %v691 = vmul.f32 %v617, %v617
      %v692 = vmul.f32 %v620, %v620
      %v693 = vmul.f32 %v622, %v622
      %v694 = vsel %vm624, %v678, 0.0
      %v695 = vsel %vm624, %v679, 0.0
      %v696 = vadd.f32 %v694, %v695
      %v697 = vsel %vm624, %v680, 0.0
      %v698 = vadd.f32 %v696, %v697
      %v699 = vsel %vm624, %v681, 0.0
      %v700 = vadd.f32 %v698, %v699
      %v701 = vsel %vm624, %v682, 0.0
      %v702 = vadd.f32 %v700, %v701
      %v703 = vsel %vm624, %v683, 0.0
      %v704 = vadd.f32 %v702, %v703
      %v705 = vsel %vm624, %v684, 0.0
      %v706 = vadd.f32 %v704, %v705
      %v707 = vsel %vm624, %v685, 0.0
      %v708 = vadd.f32 %v706, %v707
      %v709 = vsel %vm624, %v686, 0.0
      %v710 = vadd.f32 %v708, %v709
      %v711 = vsel %vm624, %v687, 0.0
      %v712 = vadd.f32 %v710, %v711
      %v713 = vsel %vm624, %v688, 0.0
      %v714 = vadd.f32 %v712, %v713
      %v715 = vsel %vm624, %v689, 0.0
      %v716 = vadd.f32 %v714, %v715
      %v717 = vsel %vm624, %v690, 0.0
      %v718 = vadd.f32 %v716, %v717
      %v719 = vsel %vm624, %v691, 0.0
      %v720 = vadd.f32 %v718, %v719
      %v721 = vsel %vm624, %v692, 0.0
      %v722 = vadd.f32 %v720, %v721
      %v723 = vsel %vm624, %v693, 0.0
      %v724 = vadd.f32 %v722, %v723
      %v725 = vrot.slane %v724, 4
      %v726 = vadd.f32 %v724, %v725
      %v727 = vrot.slane %v726, 2
      %v728 = vadd.f32 %v726, %v727
      %v729 = vrot.slane %v728, 1
      %v730 = vadd.f32 %v728, %v729
      %vm731 = vcmask 1040384
      %v732 = vsel %vm731, %v677, %v730
      %vm733 = vcmask 123904
      %734 = vst.msk [vmem:[%s241] sm:$0x3] %vm733, %v732
      %s735 = smul.u32 16, %s17
      %p736 = scmp.lt.s32.totalorder %s735, 31
      %s737 = scalar_select %p736, %s735, 31
      %s738 = smul.addr %s737, 8
      %s739 = scalar_lea.vmem %s4, %s738
      %p740 = scmp.lt.s32.totalorder %s17, 1
      %s741 = scalar_select %p740, %s17, 1
      %s742 = smul.addr %s741, 2
      %s743 = scalar_lea.vmem %s5, %s742
      // Predicated region
      $region37: #{lipread_forward.11} parent=35 // pred_check
        %p744 = pneg %p124
      $region38: #{lipread_forward.11} parent=35 // pred_check_branch
        %746 = sbr.rel (%p744) target = $region40
      $region39: #{lipread_forward.11} parent=35 // pred_region
        %s747 = smul.u32 16, %s17
      $region40: #{lipread_forward.11} parent=35 // pred_fallthru
        _
      // Predicated region
      $region41: #{lipread_forward.11} parent=35 // pred_check
        %p748 = pneg %p150
      $region42: #{lipread_forward.11} parent=35 // pred_check_branch
        %750 = sbr.rel (%p748) target = $region44
      $region43: #{lipread_forward.11} parent=35 // pred_region
        _
      $region44: #{lipread_forward.11} parent=35 // pred_fallthru
        _
    $region36: #{lipread_forward.11} parent=5 // pred_fallthru
      _
    %p751 = scmp.le.s32.totalorder 2, %s12
    // Predicated region
    $region45: #{lipread_forward.11} parent=5 // pred_check
      %p752 = pneg %p751
    $region46: #{lipread_forward.11} parent=5 // pred_check_branch
      %754 = sbr.rel (%p752) target = $region48
    $region47: #{lipread_forward.11} parent=5 // pred_region
      %s755 = ssub.s32 %s12, 2
      // Predicated region
      $region49: #{lipread_forward.11} parent=47 // pred_check
        %p756 = pneg %p130
      $region50: #{lipread_forward.11} parent=47 // pred_check_branch
        %758 = sbr.rel (%p756) target = $region52
      $region51: #{lipread_forward.11} parent=47 // pred_region
        %s759 = smul.u32 16, %s18
        %p760 = scmp.lt.s32.totalorder %s759, 31
        %s761 = scalar_select %p760, %s759, 31
        %s762 = smul.addr %s761, 8
        %s763 = scalar_lea.vmem %s4, %s762
      $region52: #{lipread_forward.11} parent=47 // pred_fallthru
        _
      // Predicated region
      $region53: #{lipread_forward.11} parent=47 // pred_check
        %p764 = pneg %p156
      $region54: #{lipread_forward.11} parent=47 // pred_check_branch
        %766 = sbr.rel (%p764) target = $region56
      $region55: #{lipread_forward.11} parent=47 // pred_region
        %p767 = scmp.lt.s32.totalorder %s18, 1
        %s768 = scalar_select %p767, %s18, 1
        %s769 = smul.addr %s768, 2
        %s770 = scalar_lea.vmem %s5, %s769
      $region56: #{lipread_forward.11} parent=47 // pred_fallthru
        _
    $region48: #{lipread_forward.11} parent=5 // pred_fallthru
      _
  $region6: #{lipread_forward.11} parent=0 // loop_footer
    %s16 = sadd.s32 1, %s12
  $region7: #{lipread_forward.11} parent=0 // loop_footer_branch
    %11 = sbr.rel target = $region3
  $region8: #{lipread_forward.11} parent=0 // loop_exit
    _

// kernel: lipread_forward.13
$region0: #{lipread_forward.13}
  #allocation0 [shape = 'u32[]', space=smem, size = 0x4, offset = 0x4, fixed_abs, tag = 'smem constant byte address 0x4 - core index']
  #allocation1 [shape = 'u32[72,128]{1,0:T(1,128)}', space=vmem, size = 0x9000, scoped, tag = 'internal scratch']
  %s0 = inlined_call_operand.vmem [shape: f32[16,256], index: 0, kind: input, shape index: {}]
  %s1 = inlined_call_operand.vmem [shape: f32[16,256], index: 1, kind: input, shape index: {}]
  %s2 = inlined_call_operand.vmem [shape: f32[2,256], index: 2, kind: input, shape index: {}]
  %s3 = inlined_call_operand.vmem [shape: f32[2,256], index: 3, kind: input, shape index: {}]
  %s4 = inlined_call_operand.vmem [shape: f32[256,32], index: 4, kind: input, shape index: {}]
  %s5 = inlined_call_operand.vmem [shape: f32[1,32], index: 5, kind: input, shape index: {}]
  %s6 = inlined_call_operand.vmem [shape: f32[16,32], index: 6, kind: output, shape index: {}]
  %s7 = sld [smem:[#allocation0]]
  $region57: #{lipread_forward.13} parent=0
    _
  %s9 = ssub.s32 1, %s7
  %s10 = scalar_select 0, %s9, %s7
  loop: start=0, step=1, limit=4
  $region2: #{lipread_forward.13} parent=0 // loop_pre_header
    _
  $region3: #{lipread_forward.13} parent=0 // loop_header
    %s12 = sphi 0, %s16
    %p13 = scmp.ge.s32.totalorder %s12, 4
    %s22 = sphi 0, %s24
    %s25 = sphi 0, %s22
    %s26 = sphi 0, %s25
    %s42 = sphi 0, %s26
    %s48 = sphi 0, %s50
    %s51 = sphi 0, %s48
    %s52 = sphi 0, %s51
    %s68 = sphi 0, %s52
    %s72 = sphi 0, %s72
    %s74 = sphi 0, %s72
    %s75 = sphi 0, %s74
    %s89 = sphi 0, %s75
    %s93 = sphi 0, %s93
    %s95 = sphi 0, %s93
    %s96 = sphi 0, %s95
    %s110 = sphi 0, %s96
    %s114 = sphi 0, %s114
    %s116 = sphi 0, %s114
    %s117 = sphi 0, %s116
    %s131 = sphi 0, %s117
    %s135 = sphi 0, %s135
    %s137 = sphi 0, %s135
    %s138 = sphi 0, %s137
    %s152 = sphi 0, %s138
    %s158 = sphi 0, %s160
    %s161 = sphi 0, %s158
    %s162 = sphi 0, %s161
    %s178 = sphi 0, %s162
  $region4: #{lipread_forward.13} parent=0 // loop_header_branch
    %15 = sbr.rel (%p13) target = $region8
  $region5: #{lipread_forward.13} parent=0 // loop_body
    %s17 = ssub.s32 %s12, 1
    %s18 = ssub.s32 %s12, 2
    %s19 = sadd.s32 %s12, 1
    %s20 = ssub.s32 %s12, %s19
    %p21 = scmp.eq.s32.totalorder %s20, 0
    %s23 = sadd.s32 %s22, 1
    %s24 = scalar_select %p21, %s22, %s23
    %p27 = pneg %p21
    %p28 = scmp.eq.s32.totalorder %s12, 1
    %p29 = por %p27, %p28
    %p30 = scmp.ne.s32.totalorder %s22, %s25
    %p31 = scmp.eq.s32.totalorder %s12, 0
    %p32 = por %p30, %p31
    %p33 = scmp.ne.s32.totalorder %s22, %s25
    %p34 = scmp.eq.s32.totalorder %s17, 1
    %p35 = por %p33, %p34
    %p36 = scmp.ne.s32.totalorder %s25, %s26
    %p37 = scmp.eq.s32.totalorder %s17, 0
    %p38 = por %p36, %p37
    %p39 = scmp.ne.s32.totalorder %s25, %s26
    %p40 = scmp.eq.s32.totalorder %s18, 1
    %p41 = por %p39, %p40
    %p43 = scmp.ne.s32.totalorder %s26, %s42
    %p44 = scmp.eq.s32.totalorder %s18, 0
    %p45 = por %p43, %p44
    %s46 = ssub.s32 %s12, %s19
    %p47 = scmp.eq.s32.totalorder %s46, 0
    %s49 = sadd.s32 %s48, 1
    %s50 = scalar_select %p47, %s48, %s49
    %p53 = pneg %p47
    %p54 = scmp.eq.s32.totalorder %s12, 1
    %p55 = por %p53, %p54
    %p56 = scmp.ne.s32.totalorder %s48, %s51
    %p57 = scmp.eq.s32.totalorder %s12, 0
    %p58 = por %p56, %p57
    %p59 = scmp.ne.s32.totalorder %s48, %s51
    %p60 = scmp.eq.s32.totalorder %s17, 1
    %p61 = por %p59, %p60
    %p62 = scmp.ne.s32.totalorder %s51, %s52
    %p63 = scmp.eq.s32.totalorder %s17, 0
    %p64 = por %p62, %p63
    %p65 = scmp.ne.s32.totalorder %s51, %s52
    %p66 = scmp.eq.s32.totalorder %s18, 1
    %p67 = por %p65, %p66
    %p69 = scmp.ne.s32.totalorder %s52, %s68
    %p70 = scmp.eq.s32.totalorder %s18, 0
    %p71 = por %p69, %p70
    %s73 = sadd.s32 %s72, 1
    %p76 = scmp.eq.s32.totalorder %s12, 1
    %p77 = scmp.ne.s32.totalorder %s72, %s74
    %p78 = scmp.eq.s32.totalorder %s12, 0
    %p79 = por %p77, %p78
    %p80 = scmp.ne.s32.totalorder %s72, %s74
    %p81 = scmp.eq.s32.totalorder %s17, 1
    %p82 = por %p80, %p81
    %p83 = scmp.ne.s32.totalorder %s74, %s75
    %p84 = scmp.eq.s32.totalorder %s17, 0
    %p85 = por %p83, %p84
    %p86 = scmp.ne.s32.totalorder %s74, %s75
    %p87 = scmp.eq.s32.totalorder %s18, 1
    %p88 = por %p86, %p87
    %p90 = scmp.ne.s32.totalorder %s75, %s89
    %p91 = scmp.eq.s32.totalorder %s18, 0
    %p92 = por %p90, %p91
    %s94 = sadd.s32 %s93, 1
    %p97 = scmp.eq.s32.totalorder %s12, 1
    %p98 = scmp.ne.s32.totalorder %s93, %s95
    %p99 = scmp.eq.s32.totalorder %s12, 0
    %p100 = por %p98, %p99
    %p101 = scmp.ne.s32.totalorder %s93, %s95
    %p102 = scmp.eq.s32.totalorder %s17, 1
    %p103 = por %p101, %p102
    %p104 = scmp.ne.s32.totalorder %s95, %s96
    %p105 = scmp.eq.s32.totalorder %s17, 0
    %p106 = por %p104, %p105
    %p107 = scmp.ne.s32.totalorder %s95, %s96
    %p108 = scmp.eq.s32.totalorder %s18, 1
    %p109 = por %p107, %p108
    %p111 = scmp.ne.s32.totalorder %s96, %s110
    %p112 = scmp.eq.s32.totalorder %s18, 0
    %p113 = por %p111, %p112
    %s115 = sadd.s32 %s114, 1
    %p118 = scmp.eq.s32.totalorder %s12, 1
    %p119 = scmp.ne.s32.totalorder %s114, %s116
    %p120 = scmp.eq.s32.totalorder %s12, 0
    %p121 = por %p119, %p120
    %p122 = scmp.ne.s32.totalorder %s114, %s116
    %p123 = scmp.eq.s32.totalorder %s17, 1
    %p124 = por %p122, %p123
    %p125 = scmp.ne.s32.totalorder %s116, %s117
    %p126 = scmp.eq.s32.totalorder %s17, 0
    %p127 = por %p125, %p126
    %p128 = scmp.ne.s32.totalorder %s116, %s117
    %p129 = scmp.eq.s32.totalorder %s18, 1
    %p130 = por %p128, %p129
    %p132 = scmp.ne.s32.totalorder %s117, %s131
    %p133 = scmp.eq.s32.totalorder %s18, 0
    %p134 = por %p132, %p133
    %s136 = sadd.s32 %s135, 1
    %p139 = scmp.eq.s32.totalorder %s12, 1
    %p140 = scmp.ne.s32.totalorder %s135, %s137
    %p141 = scmp.eq.s32.totalorder %s12, 0
    %p142 = por %p140, %p141
    %p143 = scmp.ne.s32.totalorder %s135, %s137
    %p144 = scmp.eq.s32.totalorder %s17, 1
    %p145 = por %p143, %p144
    %p146 = scmp.ne.s32.totalorder %s137, %s138
    %p147 = scmp.eq.s32.totalorder %s17, 0
    %p148 = por %p146, %p147
    %p149 = scmp.ne.s32.totalorder %s137, %s138
    %p150 = scmp.eq.s32.totalorder %s18, 1
    %p151 = por %p149, %p150
    %p153 = scmp.ne.s32.totalorder %s138, %s152
    %p154 = scmp.eq.s32.totalorder %s18, 0
    %p155 = por %p153, %p154
    %s156 = ssub.s32 %s12, %s19
    %p157 = scmp.eq.s32.totalorder %s156, 0
    %s159 = sadd.s32 %s158, 1
    %s160 = scalar_select %p157, %s158, %s159
    %p163 = pneg %p157
    %p164 = scmp.eq.s32.totalorder %s12, 1
    %p165 = por %p163, %p164
    %p166 = scmp.ne.s32.totalorder %s158, %s161
    %p167 = scmp.eq.s32.totalorder %s12, 0
    %p168 = por %p166, %p167
    %p169 = scmp.ne.s32.totalorder %s158, %s161
    %p170 = scmp.eq.s32.totalorder %s17, 1
    %p171 = por %p169, %p170
    %p172 = scmp.ne.s32.totalorder %s161, %s162
    %p173 = scmp.eq.s32.totalorder %s17, 0
    %p174 = por %p172, %p173
    %p175 = scmp.ne.s32.totalorder %s161, %s162
    %p176 = scmp.eq.s32.totalorder %s18, 1
    %p177 = por %p175, %p176
    %p179 = scmp.ne.s32.totalorder %s162, %s178
    %p180 = scmp.eq.s32.totalorder %s18, 0
    %p181 = por %p179, %p180
    %p182 = scmp.le.s32.totalorder 1, %s12
    %p183 = scmp.lt.s32.totalorder %s12, 3
    %p184 = pnand %p182, %p183
    %p185 = pneg %p184
    // Predicated region
    $region9: #{lipread_forward.13} parent=5 // pred_check
      _
    $region10: #{lipread_forward.13} parent=5 // pred_check_branch
      %187 = sbr.rel (%p184) target = $region12
    $region11: #{lipread_forward.13} parent=5 // pred_region
      %s188 = ssub.s32 %s12, 1
      // Predicated region
      $region13: #{lipread_forward.13} parent=11 // pred_check
        %p189 = pneg %p85
      $region14: #{lipread_forward.13} parent=11 // pred_check_branch
        %191 = sbr.rel (%p189) target = $region16
      $region15: #{lipread_forward.13} parent=11 // pred_region
        _
      $region16: #{lipread_forward.13} parent=11 // pred_fallthru
        _
      // Predicated region
      $region17: #{lipread_forward.13} parent=11 // pred_check
        %p192 = pneg %p106
      $region18: #{lipread_forward.13} parent=11 // pred_check_branch
        %194 = sbr.rel (%p192) target = $region20
      $region19: #{lipread_forward.13} parent=11 // pred_region
        _
      $region20: #{lipread_forward.13} parent=11 // pred_fallthru
        _
      // Predicated region
      $region21: #{lipread_forward.13} parent=11 // pred_check
        %p195 = pneg %p127
      $region22: #{lipread_forward.13} parent=11 // pred_check_branch
        %197 = sbr.rel (%p195) target = $region24
      $region23: #{lipread_forward.13} parent=11 // pred_region
        _
      $region24: #{lipread_forward.13} parent=11 // pred_fallthru
        _
      // Predicated region
      $region25: #{lipread_forward.13} parent=11 // pred_check
        %p198 = pneg %p148
      $region26: #{lipread_forward.13} parent=11 // pred_check_branch
        %200 = sbr.rel (%p198) target = $region28
      $region27: #{lipread_forward.13} parent=11 // pred_region
        _
      $region28: #{lipread_forward.13} parent=11 // pred_fallthru
        _
    $region12: #{lipread_forward.13} parent=5 // pred_fallthru
      _
    %p201 = scmp.lt.s32.totalorder %s12, 2
    // Predicated region
    $region29: #{lipread_forward.13} parent=5 // pred_check
      %p202 = pneg %p201
    $region30: #{lipread_forward.13} parent=5 // pred_check_branch
      %204 = sbr.rel (%p202) target = $region32
    $region31: #{lipread_forward.13} parent=5 // pred_region
      // Predicated region
      $region33: #{lipread_forward.13} parent=31 // pred_check
        %p205 = pneg %p32
      $region34: #{lipread_forward.13} parent=31 // pred_check_branch
        %207 = sbr.rel (%p205) target = $region36
      $region35: #{lipread_forward.13} parent=31 // pred_region
        %p208 = scmp.lt.s32.totalorder %s12, 1
        %s209 = scalar_select %p208, %s12, 1
        %s210 = smul.addr %s209, 2
        %s211 = smul.addr %s210, 8
        %s212 = scalar_lea.vmem %s0, %s211
      $region36: #{lipread_forward.13} parent=31 // pred_fallthru
        _
      // Predicated region
      $region37: #{lipread_forward.13} parent=31 // pred_check
        %p213 = pneg %p58
      $region38: #{lipread_forward.13} parent=31 // pred_check_branch
        %215 = sbr.rel (%p213) target = $region40
      $region39: #{lipread_forward.13} parent=31 // pred_region
        %p216 = scmp.lt.s32.totalorder %s12, 1
        %s217 = scalar_select %p216, %s12, 1
        %s218 = smul.addr %s217, 2
        %s219 = smul.addr %s218, 8
        %s220 = scalar_lea.vmem %s1, %s219
      $region40: #{lipread_forward.13} parent=31 // pred_fallthru
        _
    $region32: #{lipread_forward.13} parent=5 // pred_fallthru
      _
    %p221 = scmp.le.s32.totalorder 1, %s12
    %p222 = scmp.lt.s32.totalorder %s12, 3
    %p223 = pnand %p221, %p222
    %p224 = pneg %p223
    // Predicated region
    $region41: #{lipread_forward.13} parent=5 // pred_check
      _
    $region42: #{lipread_forward.13} parent=5 // pred_check_branch
      %226 = sbr.rel (%p223) target = $region44
    $region43: #{lipread_forward.13} parent=5 // pred_region
      %s227 = ssub.s32 %s12, 1
      %p228 = scmp.lt.s32.totalorder %s17, 1
      %s229 = scalar_select %p228, %s17, 1
      %s230 = smul.addr %s229, 2
      %s231 = smul.addr %s230, 8
      %s232 = scalar_lea.vmem %s0, %s231
      %p233 = pneg %p38
      %p234 = pneg %p35
      %p235 = scmp.lt.s32.totalorder %s17, 1
      %s236 = scalar_select %p235, %s17, 1
      %s237 = smul.addr %s236, 2
      %s238 = smul.addr %s237, 8
      %s239 = scalar_lea.vmem %s1, %s238
      %p240 = pneg %p64
      %p241 = pneg %p61
      %p242 = pneg %p85
      %p243 = pneg %p82
      %p244 = pneg %p106
      %p245 = pneg %p103
      %p246 = pneg %p127
      %p247 = pneg %p124
      %p248 = pneg %p148
      %p249 = pneg %p145
      %p250 = pneg %p174
      %p251 = pneg %p171
      %p252 = scmp.lt.s32.totalorder %s17, 1
      %s253 = scalar_select %p252, %s17, 1
      %s254 = smul.addr %s253, 8
      %s255 = scalar_lea.vmem %s6, %s254
      %p256 = scmp.lt.s32.totalorder %s17, 1
      %s257 = scalar_select %p256, %s17, 1
      %s258 = smul.addr %s257, 2
      %s259 = smul.addr %s258, 8
      %s260 = scalar_lea.vmem %s0, %s259
      %p261 = scmp.lt.s32.totalorder %s17, 1
      %s262 = scalar_select %p261, %s17, 1
      %s263 = smul.addr %s262, 2
      %s264 = smul.addr %s263, 8
      %s265 = scalar_lea.vmem %s1, %s264
      %p266 = scmp.lt.s32.totalorder %s17, 1
      %s267 = scalar_select %p266, %s17, 1
      %s268 = smul.addr %s267, 8
      %s269 = scalar_lea.vmem %s6, %s268
      %v270 = vld [vmem:[%s260] sm:$0xff]
      %v271 = vld [vmem:[%s260 + $0x8] sm:$0xff]
      %v272 = vld [vmem:[%s2] ss:$2 sm:$0x3]
      %v274 = vperm.slane %v272, 0
      %v275 = vperm.slane %v272, 1
      %v278 = vmul.f32 %v270, %v274
      %v279 = vmul.f32 %v271, %v275
      %s280 = scalar_lea.vmem %s2, 1
      %v281 = vld [vmem:[%s280] ss:$2 sm:$0x3]
      %v283 = vperm.slane %v281, 0
      %v284 = vperm.slane %v281, 1
      %v287 = vadd.f32 %v278, %v283
      %v288 = vadd.f32 %v279, %v284
      %v289 = vld [vmem:[%s265] sm:$0xff]
      %v290 = vld [vmem:[%s265 + $0x8] sm:$0xff]
      %v291 = vld [vmem:[%s3] ss:$2 sm:$0x3]
      %v293 = vperm.slane %v291, 0
      %v294 = vperm.slane %v291, 1
      %v297 = vmul.f32 %v289, %v293
      %v298 = vmul.f32 %v290, %v294
      %s299 = scalar_lea.vmem %s3, 1
      %v300 = vld [vmem:[%s299] ss:$2 sm:$0x3]
      %v302 = vperm.slane %v300, 0
      %v303 = vperm.slane %v300, 1
      %v306 = vadd.f32 %v297, %v302
      %v307 = vadd.f32 %v298, %v303
      %v308 = vmax.f32 %v306, 0.0
      %v309 = vmax.f32 %v307, 0.0
      %v310 = vadd.f32 %v287, %v308
      %v311 = vadd.f32 %v288, %v309
      %v312 = vmax.f32 %v310, 0.0
      %v313 = vmax.f32 %v311, 0.0
      %v314 = vld [vmem:[%s4] sm:$0xff]
      %v315 = vld [vmem:[%s4 + $0x8] sm:$0xff]
      %v316 = vld [vmem:[%s4 + $0x10] sm:$0xff]
      %v317 = vld [vmem:[%s4 + $0x18] sm:$0xff]
      %v318 = vld [vmem:[%s4 + $0x20] sm:$0xff]
      %v319 = vld [vmem:[%s4 + $0x28] sm:$0xff]
      %v320 = vld [vmem:[%s4 + $0x30] sm:$0xff]
      %v321 = vld [vmem:[%s4 + $0x38] sm:$0xff]
      %v322 = vld [vmem:[%s4 + $0x40] sm:$0xff]
      %v323 = vld [vmem:[%s4 + $0x48] sm:$0xff]
      %v324 = vld [vmem:[%s4 + $0x50] sm:$0xff]
      %v325 = vld [vmem:[%s4 + $0x58] sm:$0xff]
      %v326 = vld [vmem:[%s4 + $0x60] sm:$0xff]
      %v327 = vld [vmem:[%s4 + $0x68] sm:$0xff]
      %v328 = vld [vmem:[%s4 + $0x70] sm:$0xff]
      %v329 = vld [vmem:[%s4 + $0x78] sm:$0xff]
      %v330 = vld [vmem:[%s4 + $0x80] sm:$0xff]
      %v331 = vld [vmem:[%s4 + $0x88] sm:$0xff]
      %v332 = vld [vmem:[%s4 + $0x90] sm:$0xff]
      %v333 = vld [vmem:[%s4 + $0x98] sm:$0xff]
      %v334 = vld [vmem:[%s4 + $0xa0] sm:$0xff]
      %v335 = vld [vmem:[%s4 + $0xa8] sm:$0xff]
      %v336 = vld [vmem:[%s4 + $0xb0] sm:$0xff]
      %v337 = vld [vmem:[%s4 + $0xb8] sm:$0xff]
      %v338 = vld [vmem:[%s4 + $0xc0] sm:$0xff]
      %v339 = vld [vmem:[%s4 + $0xc8] sm:$0xff]
      %v340 = vld [vmem:[%s4 + $0xd0] sm:$0xff]
      %v341 = vld [vmem:[%s4 + $0xd8] sm:$0xff]
      %v342 = vld [vmem:[%s4 + $0xe0] sm:$0xff]
      %v343 = vld [vmem:[%s4 + $0xe8] sm:$0xff]
      %v344 = vld [vmem:[%s4 + $0xf0] sm:$0xff]
      %v345 = vld [vmem:[%s4 + $0xf8] sm:$0xff]
      %v346 = vld [vmem:[%s5] sm:$0x1]
      %v348 = vperm.slane %v346, 0
      %350 = vmatpush.msra.mxu0 %v329
      %351 = vmatpush.msra.mxu0 %v328
      %352 = vmatpush.msra.mxu0 %v327
      %353 = vmatpush.msra.mxu0 %v326
      %354 = vmatpush.msra.mxu0 %v325
      %355 = vmatpush.msra.mxu0 %v324
      %356 = vmatpush.msra.mxu0 %v323
      %357 = vmatpush.msra.mxu0 %v322
      %358 = vmatpush.msra.mxu0 %v321
      %359 = vmatpush.msra.mxu0 %v320
      %360 = vmatpush.msra.mxu0 %v319
      %361 = vmatpush.msra.mxu0 %v318
      %362 = vmatpush.msra.mxu0 %v317
      %363 = vmatpush.msra.mxu0 %v316
      %364 = vmatpush.msra.mxu0 %v315
      %365 = vmatpush.msra.mxu0 %v314
      %366 = vmatmul.f32.gmra.mxu0 %v312
      %v367 = vpop.f32.mrf.mxu0
      %v368 = vadd.f32 %v348, %v367
      %369 = vdwg.mxu0
      %370 = vmatpush.msra.mxu0 %v345
      %371 = vmatpush.msra.mxu0 %v344
      %372 = vmatpush.msra.mxu0 %v343
      %373 = vmatpush.msra.mxu0 %v342
      %374 = vmatpush.msra.mxu0 %v341
      %375 = vmatpush.msra.mxu0 %v340
      %376 = vmatpush.msra.mxu0 %v339
      %377 = vmatpush.msra.mxu0 %v338
      %378 = vmatpush.msra.mxu0 %v337
      %379 = vmatpush.msra.mxu0 %v336
      %380 = vmatpush.msra.mxu0 %v335
      %381 = vmatpush.msra.mxu0 %v334
      %382 = vmatpush.msra.mxu0 %v333
      %383 = vmatpush.msra.mxu0 %v332
      %384 = vmatpush.msra.mxu0 %v331
      %385 = vmatpush.msra.mxu0 %v330
      %386 = vmatmul.f32.gmra.mxu0 %v313
      %v387 = vpop.f32.mrf.mxu0
      %v388 = vadd.f32 %v368, %v387
      %389 = vdwg.mxu0
      %vm390 = vcmask 261120
      %391 = vst.msk [vmem:[%s269] sm:$0xff] %vm390, %v388
      %p392 = scmp.lt.s32.totalorder %s17, 1
      %s393 = scalar_select %p392, %s17, 1
      %s394 = smul.addr %s393, 8
      %s395 = scalar_lea.vmem %s6, %s394
      // Predicated region
      $region45: #{lipread_forward.13} parent=43 // pred_check
        %p396 = pneg %p171
      $region46: #{lipread_forward.13} parent=43 // pred_check_branch
        %398 = sbr.rel (%p396) target = $region48
      $region47: #{lipread_forward.13} parent=43 // pred_region
        _
      $region48: #{lipread_forward.13} parent=43 // pred_fallthru
        _
    $region44: #{lipread_forward.13} parent=5 // pred_fallthru
      _
    %p399 = scmp.le.s32.totalorder 2, %s12
    // Predicated region
    $region49: #{lipread_forward.13} parent=5 // pred_check
      %p400 = pneg %p399
    $region50: #{lipread_forward.13} parent=5 // pred_check_branch
      %402 = sbr.rel (%p400) target = $region52
    $region51: #{lipread_forward.13} parent=5 // pred_region
      %s403 = ssub.s32 %s12, 2
      // Predicated region
      $region53: #{lipread_forward.13} parent=51 // pred_check
        %p404 = pneg %p177
      $region54: #{lipread_forward.13} parent=51 // pred_check_branch
        %406 = sbr.rel (%p404) target = $region56
      $region55: #{lipread_forward.13} parent=51 // pred_region
        %p407 = scmp.lt.s32.totalorder %s18, 1
        %s408 = scalar_select %p407, %s18, 1
        %s409 = smul.addr %s408, 8
        %s410 = scalar_lea.vmem %s6, %s409
      $region56: #{lipread_forward.13} parent=51 // pred_fallthru
        _
    $region52: #{lipread_forward.13} parent=5 // pred_fallthru
      _
  $region6: #{lipread_forward.13} parent=0 // loop_footer
    %s16 = sadd.s32 1, %s12
  $region7: #{lipread_forward.13} parent=0 // loop_footer_branch
    %11 = sbr.rel target = $region3
  $region8: #{lipread_forward.13} parent=0 // loop_exit
    _

// kernel: lipread_forward.14
$region0: #{lipread_forward.14}
  #allocation0 [shape = 'u32[]', space=smem, size = 0x4, offset = 0x4, fixed_abs, tag = 'smem constant byte address 0x4 - core index']
  #allocation1 [shape = 'u32[72,128]{1,0:T(1,128)}', space=vmem, size = 0x9000, scoped, tag = 'internal scratch']
  #allocation2 [shape = 'f32[2,32]{1,0:T(2,128)}', space=vmem, size = 0x400, scoped, tag = 'scratch operand']
  #allocation3 [shape = 'f32[2,32]{1,0:T(2,128)}', space=vmem, size = 0x400, scoped, tag = 'scratch operand']
  %s0 = inlined_call_operand.vmem [shape: f32[8,2,32], index: 0, kind: input, shape index: {}]
  %s1 = inlined_call_operand.vmem [shape: f32[2,64,128], index: 1, kind: input, shape index: {}]
  %s2 = inlined_call_operand.vmem [shape: f32[2,1,128], index: 2, kind: input, shape index: {}]
  %s3 = inlined_call_operand.vmem [shape: f32[2,8,2,32], index: 3, kind: output, shape index: {}]
  %s4 = sld [smem:[#allocation0]]
  $region45: #{lipread_forward.14} parent=0
    _
  %s6 = ssub.s32 1, %s4
  %s7 = scalar_select 0, %s6, %s4
  loop: start=0, step=1, limit=4
  $region2: #{lipread_forward.14} parent=0 // loop_pre_header
    _
  $region3: #{lipread_forward.14} parent=0 // loop_header
    %s9 = sphi 0, %s13
    %p10 = scmp.ge.s32.totalorder %s9, 4
    %s17 = sphi 0, %s17
    %s19 = sphi 0, %s17
    %s20 = sphi 0, %s19
    %s34 = sphi 0, %s20
    %s40 = sphi 0, %s42
    %s43 = sphi 0, %s40
    %s44 = sphi 0, %s43
    %s60 = sphi 0, %s44
    %s66 = sphi 0, %s68
    %s69 = sphi 0, %s66
    %s70 = sphi 0, %s69
    %s86 = sphi 0, %s70
    %s92 = sphi 0, %s94
    %s95 = sphi 0, %s92
    %s96 = sphi 0, %s95
    %s112 = sphi 0, %s96
  $region4: #{lipread_forward.14} parent=0 // loop_header_branch
    %12 = sbr.rel (%p10) target = $region8
  $region5: #{lipread_forward.14} parent=0 // loop_body
    %s14 = ssub.s32 %s9, 1
    %s15 = ssub.s32 %s9, 2
    %s16 = sadd.s32 %s9, 1
    %s18 = sadd.s32 %s17, 1
    %p21 = scmp.eq.s32.totalorder %s9, 1
    %p22 = scmp.ne.s32.totalorder %s17, %s19
    %p23 = scmp.eq.s32.totalorder %s9, 0
    %p24 = por %p22, %p23
    %p25 = scmp.ne.s32.totalorder %s17, %s19
    %p26 = scmp.eq.s32.totalorder %s14, 1
    %p27 = por %p25, %p26
    %p28 = scmp.ne.s32.totalorder %s19, %s20
    %p29 = scmp.eq.s32.totalorder %s14, 0
    %p30 = por %p28, %p29
    %p31 = scmp.ne.s32.totalorder %s19, %s20
    %p32 = scmp.eq.s32.totalorder %s15, 1
    %p33 = por %p31, %p32
    %p35 = scmp.ne.s32.totalorder %s20, %s34
    %p36 = scmp.eq.s32.totalorder %s15, 0
    %p37 = por %p35, %p36
    %s38 = ssub.s32 %s9, %s16
    %p39 = scmp.eq.s32.totalorder %s38, 0
    %s41 = sadd.s32 %s40, 1
    %s42 = scalar_select %p39, %s40, %s41
    %p45 = pneg %p39
    %p46 = scmp.eq.s32.totalorder %s9, 1
    %p47 = por %p45, %p46
    %p48 = scmp.ne.s32.totalorder %s40, %s43
    %p49 = scmp.eq.s32.totalorder %s9, 0
    %p50 = por %p48, %p49
    %p51 = scmp.ne.s32.totalorder %s40, %s43
    %p52 = scmp.eq.s32.totalorder %s14, 1
    %p53 = por %p51, %p52
    %p54 = scmp.ne.s32.totalorder %s43, %s44
    %p55 = scmp.eq.s32.totalorder %s14, 0
    %p56 = por %p54, %p55
    %p57 = scmp.ne.s32.totalorder %s43, %s44
    %p58 = scmp.eq.s32.totalorder %s15, 1
    %p59 = por %p57, %p58
    %p61 = scmp.ne.s32.totalorder %s44, %s60
    %p62 = scmp.eq.s32.totalorder %s15, 0
    %p63 = por %p61, %p62
    %s64 = ssub.s32 %s9, %s16
    %p65 = scmp.eq.s32.totalorder %s64, 0
    %s67 = sadd.s32 %s66, 1
    %s68 = scalar_select %p65, %s66, %s67
    %p71 = pneg %p65
    %p72 = scmp.eq.s32.totalorder %s9, 1
    %p73 = por %p71, %p72
    %p74 = scmp.ne.s32.totalorder %s66, %s69
    %p75 = scmp.eq.s32.totalorder %s9, 0
    %p76 = por %p74, %p75
    %p77 = scmp.ne.s32.totalorder %s66, %s69
    %p78 = scmp.eq.s32.totalorder %s14, 1
    %p79 = por %p77, %p78
    %p80 = scmp.ne.s32.totalorder %s69, %s70
    %p81 = scmp.eq.s32.totalorder %s14, 0
    %p82 = por %p80, %p81
    %p83 = scmp.ne.s32.totalorder %s69, %s70
    %p84 = scmp.eq.s32.totalorder %s15, 1
    %p85 = por %p83, %p84
    %p87 = scmp.ne.s32.totalorder %s70, %s86
    %p88 = scmp.eq.s32.totalorder %s15, 0
    %p89 = por %p87, %p88
    %s90 = ssub.s32 %s9, %s16
    %p91 = scmp.eq.s32.totalorder %s90, 0
    %s93 = sadd.s32 %s92, 1
    %s94 = scalar_select %p91, %s92, %s93
    %p97 = pneg %p91
    %p98 = scmp.eq.s32.totalorder %s9, 1
    %p99 = por %p97, %p98
    %p100 = scmp.ne.s32.totalorder %s92, %s95
    %p101 = scmp.eq.s32.totalorder %s9, 0
    %p102 = por %p100, %p101
    %p103 = scmp.ne.s32.totalorder %s92, %s95
    %p104 = scmp.eq.s32.totalorder %s14, 1
    %p105 = por %p103, %p104
    %p106 = scmp.ne.s32.totalorder %s95, %s96
    %p107 = scmp.eq.s32.totalorder %s14, 0
    %p108 = por %p106, %p107
    %p109 = scmp.ne.s32.totalorder %s95, %s96
    %p110 = scmp.eq.s32.totalorder %s15, 1
    %p111 = por %p109, %p110
    %p113 = scmp.ne.s32.totalorder %s96, %s112
    %p114 = scmp.eq.s32.totalorder %s15, 0
    %p115 = por %p113, %p114
    %p116 = scmp.le.s32.totalorder 1, %s9
    %p117 = scmp.lt.s32.totalorder %s9, 3
    %p118 = pnand %p116, %p117
    %p119 = pneg %p118
    // Predicated region
    $region9: #{lipread_forward.14} parent=5 // pred_check
      _
    $region10: #{lipread_forward.14} parent=5 // pred_check_branch
      %121 = sbr.rel (%p118) target = $region12
    $region11: #{lipread_forward.14} parent=5 // pred_region
      %s122 = ssub.s32 %s9, 1
      // Predicated region
      $region13: #{lipread_forward.14} parent=11 // pred_check
        %p123 = pneg %p30
      $region14: #{lipread_forward.14} parent=11 // pred_check_branch
        %125 = sbr.rel (%p123) target = $region16
      $region15: #{lipread_forward.14} parent=11 // pred_region
        _
      $region16: #{lipread_forward.14} parent=11 // pred_fallthru
        _
    $region12: #{lipread_forward.14} parent=5 // pred_fallthru
      _
    %p126 = scmp.lt.s32.totalorder %s9, 2
    // Predicated region
    $region17: #{lipread_forward.14} parent=5 // pred_check
      %p127 = pneg %p126
    $region18: #{lipread_forward.14} parent=5 // pred_check_branch
      %129 = sbr.rel (%p127) target = $region20
    $region19: #{lipread_forward.14} parent=5 // pred_region
      // Predicated region
      $region21: #{lipread_forward.14} parent=19 // pred_check
        %p130 = pneg %p50
      $region22: #{lipread_forward.14} parent=19 // pred_check_branch
        %132 = sbr.rel (%p130) target = $region24
      $region23: #{lipread_forward.14} parent=19 // pred_region
        %p133 = scmp.lt.s32.totalorder %s9, 1
        %s134 = scalar_select %p133, %s9, 1
        %s135 = smul.addr %s134, 8
        %s136 = smul.addr %s135, 8
        %s137 = scalar_lea.vmem %s1, %s136
      $region24: #{lipread_forward.14} parent=19 // pred_fallthru
        _
      // Predicated region
      $region25: #{lipread_forward.14} parent=19 // pred_check
        %p138 = pneg %p76
      $region26: #{lipread_forward.14} parent=19 // pred_check_branch
        %140 = sbr.rel (%p138) target = $region28
      $region27: #{lipread_forward.14} parent=19 // pred_region
        %p141 = scmp.lt.s32.totalorder %s9, 1
        %s142 = scalar_select %p141, %s9, 1
        %s143 = scalar_lea.vmem %s2, %s142
      $region28: #{lipread_forward.14} parent=19 // pred_fallthru
        _
    $region20: #{lipread_forward.14} parent=5 // pred_fallthru
      _
    %p144 = scmp.le.s32.totalorder 1, %s9
    %p145 = scmp.lt.s32.totalorder %s9, 3
    %p146 = pnand %p144, %p145
    %p147 = pneg %p146
    // Predicated region
    $region29: #{lipread_forward.14} parent=5 // pred_check
      _
    $region30: #{lipread_forward.14} parent=5 // pred_check_branch
      %149 = sbr.rel (%p146) target = $region32
    $region31: #{lipread_forward.14} parent=5 // pred_region
      %s150 = ssub.s32 %s9, 1
      %p151 = pneg %p30
      %p152 = pneg %p27
      %p153 = scmp.lt.s32.totalorder %s14, 1
      %s154 = scalar_select %p153, %s14, 1
      %s155 = smul.addr %s154, 8
      %s156 = smul.addr %s155, 8
      %s157 = scalar_lea.vmem %s1, %s156
      %p158 = pneg %p56
      %p159 = pneg %p53
      %p160 = scmp.lt.s32.totalorder %s14, 1
      %s161 = scalar_select %p160, %s14, 1
      %s162 = scalar_lea.vmem %s2, %s161
      %p163 = pneg %p82
      %p164 = pneg %p79
      %p165 = pneg %p108
      %p166 = pneg %p105
      %p167 = scmp.lt.s32.totalorder %s14, 1
      %s168 = scalar_select %p167, %s14, 1
      %s169 = smul.addr %s168, 8
      %s170 = smul.addr %s169, 2
      %s171 = scalar_lea.vmem %s3, %s170
      %p172 = scmp.lt.s32.totalorder %s14, 1
      %s173 = scalar_select %p172, %s14, 1
      %s174 = smul.addr %s173, 8
      %s175 = smul.addr %s174, 8
      %s176 = scalar_lea.vmem %s1, %s175
      %p177 = scmp.lt.s32.totalorder %s14, 1
      %s178 = scalar_select %p177, %s14, 1
      %s179 = scalar_lea.vmem %s2, %s178
      %p180 = scmp.lt.s32.totalorder %s14, 1
      %s181 = scalar_select %p180, %s14, 1
      %s182 = smul.addr %s181, 8
      %s183 = smul.addr %s182, 2
      %s184 = scalar_lea.vmem %s3, %s183
      %vm185 = vcmask 254976
      %186 = vst.msk [vmem:[#allocation2] sm:$0x3] %vm185, 0.0
      %187 = vst.msk [vmem:[#allocation3] sm:$0x3] %vm185, 0.0
      %v188 = vld [vmem:[%s176] sm:$0xff]
      %v189 = vld [vmem:[%s176 + $0x8] sm:$0xff]
      %v190 = vld [vmem:[%s176 + $0x10] sm:$0xff]
      %v191 = vld [vmem:[%s176 + $0x18] sm:$0xff]
      %v192 = vld [vmem:[%s176 + $0x20] sm:$0xff]
      %v193 = vld [vmem:[%s176 + $0x28] sm:$0xff]
      %v194 = vld [vmem:[%s176 + $0x30] sm:$0xff]
      %v195 = vld [vmem:[%s176 + $0x38] sm:$0xff]
      %v196 = vld [vmem:[%s179] sm:$0x1]
      %p197 = scmp.eq.s32.totalorder %s14, 0
      %s198 = scalar_select %p197, 0, 7
      %s199 = smul.u32 %s198, 2
      %s200 = scalar_lea.vmem %s0, %s199
      %v201 = vld [vmem:[%s200] sm:$0x3]
      %v202 = vld [vmem:[#allocation2] sm:$0x3]
      %204 = vrot.lane.b32.xlu0 %v202, 32
      %v205 = vpop.permute.xlu0 %204
      %vm207 = vcmask 261120
      %v208 = vsel %vm207, %v201, %v205
      %v210 = vperm.slane %v196, 0
      %vm212 = vcmask 523264
      %v214 = vsel %vm212, %v208, 0
      %216 = vmatpush.msra.mxu0 0.0
      %217 = vmatpush.msra.mxu0 0.0
      %218 = vmatpush.msra.mxu0 0.0
      %219 = vmatpush.msra.mxu0 0.0
      %220 = vmatpush.msra.mxu0 0.0
      %221 = vmatpush.msra.mxu0 0.0
      %222 = vmatpush.msra.mxu0 0.0
      %223 = vmatpush.msra.mxu0 0.0
      %224 = vmatpush.msra.mxu0 %v195
      %225 = vmatpush.msra.mxu0 %v194
      %226 = vmatpush.msra.mxu0 %v193
      %227 = vmatpush.msra.mxu0 %v192
      %228 = vmatpush.msra.mxu0 %v191
      %229 = vmatpush.msra.mxu0 %v190
      %230 = vmatpush.msra.mxu0 %v189
      %231 = vmatpush.msra.mxu0 %v188
      %232 = vmatmul.f32.gmra.mxu0 %v214
      %v233 = vpop.f32.mrf.mxu0
      %v234 = vadd.f32 %v210, %v233
      %235 = vdwg.mxu0
      %v236 = vxor.u32 %v234, 2147483648
      %v237 = vmul.f32 %v236, 1.442695
      %v238 = vpow.pop %v237
      %v239 = vadd.f32 %v238, 1.0
      %v240 = vrcp.pop %v239
      %v241 = vmul.f32 %v239, %v240
      %v242 = vsub.f32 1.0, %v241
      %v243 = vmul.f32 %v240, %v242
      %v244 = vadd.f32 %v240, %v243
      %vm245 = vweird.f32 %v239
      %vm246 = vweird.f32 %v240
      %vm247 = vmor %vm245, %vm246
      %v248 = vsel %vm247, %v240, %v244
      %v249 = vand.u32 2147483647, %v239
      %vm250 = vcmp.eq.f32.partialorder %v249, 8.507059e+37
      %v251 = vand.u32 %v239, 2147483648
      %v252 = vor.u32 1.1754944e-38, %v251
      %v253 = vsel %vm250, %v252, %v248
      %v254 = vmul.f32 1.0, %v253
      %v255 = vtanh.pop %v234
      %v256 = vld [vmem:[#allocation3] sm:$0x3]
      %258 = vrot.lane.b32.xlu0 %v256, 32
      %v259 = vpop.permute.xlu0 %258
      %v261 = vmul.f32 %v254, %v259
      %263 = vrot.lane.b32.xlu0 %v255, 64
      %v264 = vpop.permute.xlu0 %263
      %v266 = vmul.f32 %v254, %v264
      %268 = vrot.lane.b32.xlu0 %v266, 32
      %v269 = vpop.permute.xlu0 %268
      %v271 = vadd.f32 %v261, %v269
      %v272 = vtanh.pop %v271
      %274 = vrot.lane.b32.xlu0 %v272, 64
      %v275 = vpop.permute.xlu0 %274
      %v277 = vmul.f32 %v254, %v275
      %279 = vrot.lane.b32.xlu0 %v277, 32
      %v280 = vpop.permute.xlu0 %279
      %282 = vst.msk [vmem:[#allocation2] sm:$0x3] %vm185, %v280
      %284 = vrot.lane.b32.xlu0 %v271, 96
      %v285 = vpop.permute.xlu0 %284
      %287 = vst.msk [vmem:[#allocation3] sm:$0x3] %vm185, %v285
      %s288 = scalar_lea.vmem %s184, %s199
      %289 = vst.msk [vmem:[%s288] sm:$0x3] %vm185, %v280
      %s290 = scalar_select %p197, 1, 6
      %s291 = smul.u32 %s290, 2
      %s292 = scalar_lea.vmem %s0, %s291
      %v293 = vld [vmem:[%s292] sm:$0x3]
      %v294 = vld [vmem:[#allocation2] sm:$0x3]
      %296 = vrot.lane.b32.xlu0 %v294, 32
      %v297 = vpop.permute.xlu0 %296
      %v299 = vsel %vm207, %v293, %v297
      %v301 = vsel %vm212, %v299, 0
      %303 = vmatpush.msra.mxu0 0.0
      %304 = vmatpush.msra.mxu0 0.0
      %305 = vmatpush.msra.mxu0 0.0
      %306 = vmatpush.msra.mxu0 0.0
      %307 = vmatpush.msra.mxu0 0.0
      %308 = vmatpush.msra.mxu0 0.0
      %309 = vmatpush.msra.mxu0 0.0
      %310 = vmatpush.msra.mxu0 0.0
      %311 = vmatpush.msra.mxu0 %v195
      %312 = vmatpush.msra.mxu0 %v194
      %313 = vmatpush.msra.mxu0 %v193
      %314 = vmatpush.msra.mxu0 %v192
      %315 = vmatpush.msra.mxu0 %v191
      %316 = vmatpush.msra.mxu0 %v190
      %317 = vmatpush.msra.mxu0 %v189
      %318 = vmatpush.msra.mxu0 %v188
      %319 = vmatmul.f32.gmra.mxu0 %v301
      %v320 = vpop.f32.mrf.mxu0
      %v321 = vadd.f32 %v210, %v320
      %322 = vdwg.mxu0
      %v323 = vxor.u32 %v321, 2147483648
      %v324 = vmul.f32 %v323, 1.442695
      %v325 = vpow.pop %v324
      %v326 = vadd.f32 %v325, 1.0
      %v327 = vrcp.pop %v326
      %v328 = vmul.f32 %v326, %v327
      %v329 = vsub.f32 1.0, %v328
      %v330 = vmul.f32 %v327, %v329
      %v331 = vadd.f32 %v327, %v330
      %vm332 = vweird.f32 %v326
      %vm333 = vweird.f32 %v327
      %vm334 = vmor %vm332, %vm333
      %v335 = vsel %vm334, %v327, %v331
      %v336 = vand.u32 2147483647, %v326
      %vm337 = vcmp.eq.f32.partialorder %v336, 8.507059e+37
      %v338 = vand.u32 %v326, 2147483648
      %v339 = vor.u32 1.1754944e-38, %v338
      %v340 = vsel %vm337, %v339, %v335
      %v341 = vmul.f32 1.0, %v340
      %v342 = vtanh.pop %v321
      %v343 = vld [vmem:[#allocation3] sm:$0x3]
      %345 = vrot.lane.b32.xlu0 %v343, 32
      %v346 = vpop.permute.xlu0 %345
      %v348 = vmul.f32 %v341, %v346
      %350 = vrot.lane.b32.xlu0 %v342, 64
      %v351 = vpop.permute.xlu0 %350
      %v353 = vmul.f32 %v341, %v351
      %355 = vrot.lane.b32.xlu0 %v353, 32
      %v356 = vpop.permute.xlu0 %355
      %v358 = vadd.f32 %v348, %v356
      %v359 = vtanh.pop %v358
      %361 = vrot.lane.b32.xlu0 %v359, 64
      %v362 = vpop.permute.xlu0 %361
      %v364 = vmul.f32 %v341, %v362
      %366 = vrot.lane.b32.xlu0 %v364, 32
      %v367 = vpop.permute.xlu0 %366
      %369 = vst.msk [vmem:[#allocation2] sm:$0x3] %vm185, %v367
      %371 = vrot.lane.b32.xlu0 %v358, 96
      %v372 = vpop.permute.xlu0 %371
      %374 = vst.msk [vmem:[#allocation3] sm:$0x3] %vm185, %v372
      %s375 = scalar_lea.vmem %s184, %s291
      %376 = vst.msk [vmem:[%s375] sm:$0x3] %vm185, %v367
      %s377 = scalar_select %p197, 2, 5
      %s378 = smul.u32 %s377, 2
      %s379 = scalar_lea.vmem %s0, %s378
      %v380 = vld [vmem:[%s379] sm:$0x3]
      %v381 = vld [vmem:[#allocation2] sm:$0x3]
      %383 = vrot.lane.b32.xlu0 %v381, 32
      %v384 = vpop.permute.xlu0 %383
      %v386 = vsel %vm207, %v380, %v384
      %v388 = vsel %vm212, %v386, 0
      %390 = vmatpush.msra.mxu0 0.0
      %391 = vmatpush.msra.mxu0 0.0
      %392 = vmatpush.msra.mxu0 0.0
      %393 = vmatpush.msra.mxu0 0.0
      %394 = vmatpush.msra.mxu0 0.0
      %395 = vmatpush.msra.mxu0 0.0
      %396 = vmatpush.msra.mxu0 0.0
      %397 = vmatpush.msra.mxu0 0.0
      %398 = vmatpush.msra.mxu0 %v195
      %399 = vmatpush.msra.mxu0 %v194
      %400 = vmatpush.msra.mxu0 %v193
      %401 = vmatpush.msra.mxu0 %v192
      %402 = vmatpush.msra.mxu0 %v191
      %403 = vmatpush.msra.mxu0 %v190
      %404 = vmatpush.msra.mxu0 %v189
      %405 = vmatpush.msra.mxu0 %v188
      %406 = vmatmul.f32.gmra.mxu0 %v388
      %v407 = vpop.f32.mrf.mxu0
      %v408 = vadd.f32 %v210, %v407
      %409 = vdwg.mxu0
      %v410 = vxor.u32 %v408, 2147483648
      %v411 = vmul.f32 %v410, 1.442695
      %v412 = vpow.pop %v411
      %v413 = vadd.f32 %v412, 1.0
      %v414 = vrcp.pop %v413
      %v415 = vmul.f32 %v413, %v414
      %v416 = vsub.f32 1.0, %v415
      %v417 = vmul.f32 %v414, %v416
      %v418 = vadd.f32 %v414, %v417
      %vm419 = vweird.f32 %v413
      %vm420 = vweird.f32 %v414
      %vm421 = vmor %vm419, %vm420
      %v422 = vsel %vm421, %v414, %v418
      %v423 = vand.u32 2147483647, %v413
      %vm424 = vcmp.eq.f32.partialorder %v423, 8.507059e+37
      %v425 = vand.u32 %v413, 2147483648
      %v426 = vor.u32 1.1754944e-38, %v425
      %v427 = vsel %vm424, %v426, %v422
      %v428 = vmul.f32 1.0, %v427
      %v429 = vtanh.pop %v408
      %v430 = vld [vmem:[#allocation3] sm:$0x3]
      %432 = vrot.lane.b32.xlu0 %v430, 32
      %v433 = vpop.permute.xlu0 %432
      %v435 = vmul.f32 %v428, %v433
      %437 = vrot.lane.b32.xlu0 %v429, 64
      %v438 = vpop.permute.xlu0 %437
      %v440 = vmul.f32 %v428, %v438
      %442 = vrot.lane.b32.xlu0 %v440, 32
      %v443 = vpop.permute.xlu0 %442
      %v445 = vadd.f32 %v435, %v443
      %v446 = vtanh.pop %v445
      %448 = vrot.lane.b32.xlu0 %v446, 64
      %v449 = vpop.permute.xlu0 %448
      %v451 = vmul.f32 %v428, %v449
      %453 = vrot.lane.b32.xlu0 %v451, 32
      %v454 = vpop.permute.xlu0 %453
      %456 = vst.msk [vmem:[#allocation2] sm:$0x3] %vm185, %v454
      %458 = vrot.lane.b32.xlu0 %v445, 96
      %v459 = vpop.permute.xlu0 %458
      %461 = vst.msk [vmem:[#allocation3] sm:$0x3] %vm185, %v459
      %s462 = scalar_lea.vmem %s184, %s378
      %463 = vst.msk [vmem:[%s462] sm:$0x3] %vm185, %v454
      %s464 = scalar_select %p197, 3, 4
      %s465 = smul.u32 %s464, 2
      %s466 = scalar_lea.vmem %s0, %s465
      %v467 = vld [vmem:[%s466] sm:$0x3]
      %v468 = vld [vmem:[#allocation2] sm:$0x3]
      %470 = vrot.lane.b32.xlu0 %v468, 32
      %v471 = vpop.permute.xlu0 %470
      %v473 = vsel %vm207, %v467, %v471
      %v475 = vsel %vm212, %v473, 0
      %477 = vmatpush.msra.mxu0 0.0
      %478 = vmatpush.msra.mxu0 0.0
      %479 = vmatpush.msra.mxu0 0.0
      %480 = vmatpush.msra.mxu0 0.0
      %481 = vmatpush.msra.mxu0 0.0
      %482 = vmatpush.msra.mxu0 0.0
      %483 = vmatpush.msra.mxu0 0.0
      %484 = vmatpush.msra.mxu0 0.0
      %485 = vmatpush.msra.mxu0 %v195
      %486 = vmatpush.msra.mxu0 %v194
      %487 = vmatpush.msra.mxu0 %v193
      %488 = vmatpush.msra.mxu0 %v192
      %489 = vmatpush.msra.mxu0 %v191
      %490 = vmatpush.msra.mxu0 %v190
      %491 = vmatpush.msra.mxu0 %v189
      %492 = vmatpush.msra.mxu0 %v188
      %493 = vmatmul.f32.gmra.mxu0 %v475
      %v494 = vpop.f32.mrf.mxu0
      %v495 = vadd.f32 %v210, %v494
      %496 = vdwg.mxu0
      %v497 = vxor.u32 %v495, 2147483648
      %v498 = vmul.f32 %v497, 1.442695
      %v499 = vpow.pop %v498
      %v500 = vadd.f32 %v499, 1.0
      %v501 = vrcp.pop %v500
      %v502 = vmul.f32 %v500, %v501
      %v503 = vsub.f32 1.0, %v502
      %v504 = vmul.f32 %v501, %v503
      %v505 = vadd.f32 %v501, %v504
      %vm506 = vweird.f32 %v500
      %vm507 = vweird.f32 %v501
      %vm508 = vmor %vm506, %vm507
      %v509 = vsel %vm508, %v501, %v505
      %v510 = vand.u32 2147483647, %v500
      %vm511 = vcmp.eq.f32.partialorder %v510, 8.507059e+37
      %v512 = vand.u32 %v500, 2147483648
      %v513 = vor.u32 1.1754944e-38, %v512
      %v514 = vsel %vm511, %v513, %v509
      %v515 = vmul.f32 1.0, %v514
      %v516 = vtanh.pop %v495
      %v517 = vld [vmem:[#allocation3] sm:$0x3]
      %519 = vrot.lane.b32.xlu0 %v517, 32
      %v520 = vpop.permute.xlu0 %519
      %v522 = vmul.f32 %v515, %v520
      %524 = vrot.lane.b32.xlu0 %v516, 64
      %v525 = vpop.permute.xlu0 %524
      %v527 = vmul.f32 %v515, %v525
      %529 = vrot.lane.b32.xlu0 %v527, 32
      %v530 = vpop.permute.xlu0 %529
      %v532 = vadd.f32 %v522, %v530
      %v533 = vtanh.pop %v532
      %535 = vrot.lane.b32.xlu0 %v533, 64
      %v536 = vpop.permute.xlu0 %535
      %v538 = vmul.f32 %v515, %v536
      %540 = vrot.lane.b32.xlu0 %v538, 32
      %v541 = vpop.permute.xlu0 %540
      %543 = vst.msk [vmem:[#allocation2] sm:$0x3] %vm185, %v541
      %545 = vrot.lane.b32.xlu0 %v532, 96
      %v546 = vpop.permute.xlu0 %545
      %548 = vst.msk [vmem:[#allocation3] sm:$0x3] %vm185, %v546
      %s549 = scalar_lea.vmem %s184, %s465
      %550 = vst.msk [vmem:[%s549] sm:$0x3] %vm185, %v541
      %s551 = scalar_select %p197, 4, 3
      %s552 = smul.u32 %s551, 2
      %s553 = scalar_lea.vmem %s0, %s552
      %v554 = vld [vmem:[%s553] sm:$0x3]
      %v555 = vld [vmem:[#allocation2] sm:$0x3]
      %557 = vrot.lane.b32.xlu0 %v555, 32
      %v558 = vpop.permute.xlu0 %557
      %v560 = vsel %vm207, %v554, %v558
      %v562 = vsel %vm212, %v560, 0
      %564 = vmatpush.msra.mxu0 0.0
      %565 = vmatpush.msra.mxu0 0.0
      %566 = vmatpush.msra.mxu0 0.0
      %567 = vmatpush.msra.mxu0 0.0
      %568 = vmatpush.msra.mxu0 0.0
      %569 = vmatpush.msra.mxu0 0.0
      %570 = vmatpush.msra.mxu0 0.0
      %571 = vmatpush.msra.mxu0 0.0
      %572 = vmatpush.msra.mxu0 %v195
      %573 = vmatpush.msra.mxu0 %v194
      %574 = vmatpush.msra.mxu0 %v193
      %575 = vmatpush.msra.mxu0 %v192
      %576 = vmatpush.msra.mxu0 %v191
      %577 = vmatpush.msra.mxu0 %v190
      %578 = vmatpush.msra.mxu0 %v189
      %579 = vmatpush.msra.mxu0 %v188
      %580 = vmatmul.f32.gmra.mxu0 %v562
      %v581 = vpop.f32.mrf.mxu0
      %v582 = vadd.f32 %v210, %v581
      %583 = vdwg.mxu0
      %v584 = vxor.u32 %v582, 2147483648
      %v585 = vmul.f32 %v584, 1.442695
      %v586 = vpow.pop %v585
      %v587 = vadd.f32 %v586, 1.0
      %v588 = vrcp.pop %v587
      %v589 = vmul.f32 %v587, %v588
      %v590 = vsub.f32 1.0, %v589
      %v591 = vmul.f32 %v588, %v590
      %v592 = vadd.f32 %v588, %v591
      %vm593 = vweird.f32 %v587
      %vm594 = vweird.f32 %v588
      %vm595 = vmor %vm593, %vm594
      %v596 = vsel %vm595, %v588, %v592
      %v597 = vand.u32 2147483647, %v587
      %vm598 = vcmp.eq.f32.partialorder %v597, 8.507059e+37
      %v599 = vand.u32 %v587, 2147483648
      %v600 = vor.u32 1.1754944e-38, %v599
      %v601 = vsel %vm598, %v600, %v596
      %v602 = vmul.f32 1.0, %v601
      %v603 = vtanh.pop %v582
      %v604 = vld [vmem:[#allocation3] sm:$0x3]
      %606 = vrot.lane.b32.xlu0 %v604, 32
      %v607 = vpop.permute.xlu0 %606
      %v609 = vmul.f32 %v602, %v607
      %611 = vrot.lane.b32.xlu0 %v603, 64
      %v612 = vpop.permute.xlu0 %611
      %v614 = vmul.f32 %v602, %v612
      %616 = vrot.lane.b32.xlu0 %v614, 32
      %v617 = vpop.permute.xlu0 %616
      %v619 = vadd.f32 %v609, %v617
      %v620 = vtanh.pop %v619
      %622 = vrot.lane.b32.xlu0 %v620, 64
      %v623 = vpop.permute.xlu0 %622
      %v625 = vmul.f32 %v602, %v623
      %627 = vrot.lane.b32.xlu0 %v625, 32
      %v628 = vpop.permute.xlu0 %627
      %630 = vst.msk [vmem:[#allocation2] sm:$0x3] %vm185, %v628
      %632 = vrot.lane.b32.xlu0 %v619, 96
      %v633 = vpop.permute.xlu0 %632
      %635 = vst.msk [vmem:[#allocation3] sm:$0x3] %vm185, %v633
      %s636 = scalar_lea.vmem %s184, %s552
      %637 = vst.msk [vmem:[%s636] sm:$0x3] %vm185, %v628
      %s638 = scalar_select %p197, 5, 2
      %s639 = smul.u32 %s638, 2
      %s640 = scalar_lea.vmem %s0, %s639
      %v641 = vld [vmem:[%s640] sm:$0x3]
      %v642 = vld [vmem:[#allocation2] sm:$0x3]
      %644 = vrot.lane.b32.xlu0 %v642, 32
      %v645 = vpop.permute.xlu0 %644
      %v647 = vsel %vm207, %v641, %v645
      %v649 = vsel %vm212, %v647, 0
      %651 = vmatpush.msra.mxu0 0.0
      %652 = vmatpush.msra.mxu0 0.0
      %653 = vmatpush.msra.mxu0 0.0
      %654 = vmatpush.msra.mxu0 0.0
      %655 = vmatpush.msra.mxu0 0.0
      %656 = vmatpush.msra.mxu0 0.0
      %657 = vmatpush.msra.mxu0 0.0
      %658 = vmatpush.msra.mxu0 0.0
      %659 = vmatpush.msra.mxu0 %v195
      %660 = vmatpush.msra.mxu0 %v194
      %661 = vmatpush.msra.mxu0 %v193
      %662 = vmatpush.msra.mxu0 %v192
      %663 = vmatpush.msra.mxu0 %v191
      %664 = vmatpush.msra.mxu0 %v190
      %665 = vmatpush.msra.mxu0 %v189
      %666 = vmatpush.msra.mxu0 %v188
      %667 = vmatmul.f32.gmra.mxu0 %v649
      %v668 = vpop.f32.mrf.mxu0
      %v669 = vadd.f32 %v210, %v668
      %670 = vdwg.mxu0
      %v671 = vxor.u32 %v669, 2147483648
      %v672 = vmul.f32 %v671, 1.442695
      %v673 = vpow.pop %v672
      %v674 = vadd.f32 %v673, 1.0
      %v675 = vrcp.pop %v674
      %v676 = vmul.f32 %v674, %v675
      %v677 = vsub.f32 1.0, %v676
      %v678 = vmul.f32 %v675, %v677
      %v679 = vadd.f32 %v675, %v678
      %vm680 = vweird.f32 %v674
      %vm681 = vweird.f32 %v675
      %vm682 = vmor %vm680, %vm681
      %v683 = vsel %vm682, %v675, %v679
      %v684 = vand.u32 2147483647, %v674
      %vm685 = vcmp.eq.f32.partialorder %v684, 8.507059e+37
      %v686 = vand.u32 %v674, 2147483648
      %v687 = vor.u32 1.1754944e-38, %v686
      %v688 = vsel %vm685, %v687, %v683
      %v689 = vmul.f32 1.0, %v688
      %v690 = vtanh.pop %v669
      %v691 = vld [vmem:[#allocation3] sm:$0x3]
      %693 = vrot.lane.b32.xlu0 %v691, 32
      %v694 = vpop.permute.xlu0 %693
      %v696 = vmul.f32 %v689, %v694
      %698 = vrot.lane.b32.xlu0 %v690, 64
      %v699 = vpop.permute.xlu0 %698
      %v701 = vmul.f32 %v689, %v699
      %703 = vrot.lane.b32.xlu0 %v701, 32
      %v704 = vpop.permute.xlu0 %703
      %v706 = vadd.f32 %v696, %v704
      %v707 = vtanh.pop %v706
      %709 = vrot.lane.b32.xlu0 %v707, 64
      %v710 = vpop.permute.xlu0 %709
      %v712 = vmul.f32 %v689, %v710
      %714 = vrot.lane.b32.xlu0 %v712, 32
      %v715 = vpop.permute.xlu0 %714
      %717 = vst.msk [vmem:[#allocation2] sm:$0x3] %vm185, %v715
      %719 = vrot.lane.b32.xlu0 %v706, 96
      %v720 = vpop.permute.xlu0 %719
      %722 = vst.msk [vmem:[#allocation3] sm:$0x3] %vm185, %v720
      %s723 = scalar_lea.vmem %s184, %s639
      %724 = vst.msk [vmem:[%s723] sm:$0x3] %vm185, %v715
      %s725 = scalar_select %p197, 6, 1
      %s726 = smul.u32 %s725, 2
      %s727 = scalar_lea.vmem %s0, %s726
      %v728 = vld [vmem:[%s727] sm:$0x3]
      %v729 = vld [vmem:[#allocation2] sm:$0x3]
      %731 = vrot.lane.b32.xlu0 %v729, 32
      %v732 = vpop.permute.xlu0 %731
      %v734 = vsel %vm207, %v728, %v732
      %v736 = vsel %vm212, %v734, 0
      %738 = vmatpush.msra.mxu0 0.0
      %739 = vmatpush.msra.mxu0 0.0
      %740 = vmatpush.msra.mxu0 0.0
      %741 = vmatpush.msra.mxu0 0.0
      %742 = vmatpush.msra.mxu0 0.0
      %743 = vmatpush.msra.mxu0 0.0
      %744 = vmatpush.msra.mxu0 0.0
      %745 = vmatpush.msra.mxu0 0.0
      %746 = vmatpush.msra.mxu0 %v195
      %747 = vmatpush.msra.mxu0 %v194
      %748 = vmatpush.msra.mxu0 %v193
      %749 = vmatpush.msra.mxu0 %v192
      %750 = vmatpush.msra.mxu0 %v191
      %751 = vmatpush.msra.mxu0 %v190
      %752 = vmatpush.msra.mxu0 %v189
      %753 = vmatpush.msra.mxu0 %v188
      %754 = vmatmul.f32.gmra.mxu0 %v736
      %v755 = vpop.f32.mrf.mxu0
      %v756 = vadd.f32 %v210, %v755
      %757 = vdwg.mxu0
      %v758 = vxor.u32 %v756, 2147483648
      %v759 = vmul.f32 %v758, 1.442695
      %v760 = vpow.pop %v759
      %v761 = vadd.f32 %v760, 1.0
      %v762 = vrcp.pop %v761
      %v763 = vmul.f32 %v761, %v762
      %v764 = vsub.f32 1.0, %v763
      %v765 = vmul.f32 %v762, %v764
      %v766 = vadd.f32 %v762, %v765
      %vm767 = vweird.f32 %v761
      %vm768 = vweird.f32 %v762
      %vm769 = vmor %vm767, %vm768
      %v770 = vsel %vm769, %v762, %v766
      %v771 = vand.u32 2147483647, %v761
      %vm772 = vcmp.eq.f32.partialorder %v771, 8.507059e+37
      %v773 = vand.u32 %v761, 2147483648
      %v774 = vor.u32 1.1754944e-38, %v773
      %v775 = vsel %vm772, %v774, %v770
      %v776 = vmul.f32 1.0, %v775
      %v777 = vtanh.pop %v756
      %v778 = vld [vmem:[#allocation3] sm:$0x3]
      %780 = vrot.lane.b32.xlu0 %v778, 32
      %v781 = vpop.permute.xlu0 %780
      %v783 = vmul.f32 %v776, %v781
      %785 = vrot.lane.b32.xlu0 %v777, 64
      %v786 = vpop.permute.xlu0 %785
      %v788 = vmul.f32 %v776, %v786
      %790 = vrot.lane.b32.xlu0 %v788, 32
      %v791 = vpop.permute.xlu0 %790
      %v793 = vadd.f32 %v783, %v791
      %v794 = vtanh.pop %v793
      %796 = vrot.lane.b32.xlu0 %v794, 64
      %v797 = vpop.permute.xlu0 %796
      %v799 = vmul.f32 %v776, %v797
      %801 = vrot.lane.b32.xlu0 %v799, 32
      %v802 = vpop.permute.xlu0 %801
      %804 = vst.msk [vmem:[#allocation2] sm:$0x3] %vm185, %v802
      %806 = vrot.lane.b32.xlu0 %v793, 96
      %v807 = vpop.permute.xlu0 %806
      %809 = vst.msk [vmem:[#allocation3] sm:$0x3] %vm185, %v807
      %s810 = scalar_lea.vmem %s184, %s726
      %811 = vst.msk [vmem:[%s810] sm:$0x3] %vm185, %v802
      %s812 = scalar_select %p197, 7, 0
      %s813 = smul.u32 %s812, 2
      %s814 = scalar_lea.vmem %s0, %s813
      %v815 = vld [vmem:[%s814] sm:$0x3]
      %v816 = vld [vmem:[#allocation2] sm:$0x3]
      %818 = vrot.lane.b32.xlu0 %v816, 32
      %v819 = vpop.permute.xlu0 %818
      %v821 = vsel %vm207, %v815, %v819
      %v823 = vsel %vm212, %v821, 0
      %825 = vmatpush.msra.mxu0 0.0
      %826 = vmatpush.msra.mxu0 0.0
      %827 = vmatpush.msra.mxu0 0.0
      %828 = vmatpush.msra.mxu0 0.0
      %829 = vmatpush.msra.mxu0 0.0
      %830 = vmatpush.msra.mxu0 0.0
      %831 = vmatpush.msra.mxu0 0.0
      %832 = vmatpush.msra.mxu0 0.0
      %833 = vmatpush.msra.mxu0 %v195
      %834 = vmatpush.msra.mxu0 %v194
      %835 = vmatpush.msra.mxu0 %v193
      %836 = vmatpush.msra.mxu0 %v192
      %837 = vmatpush.msra.mxu0 %v191
      %838 = vmatpush.msra.mxu0 %v190
      %839 = vmatpush.msra.mxu0 %v189
      %840 = vmatpush.msra.mxu0 %v188
      %841 = vmatmul.f32.gmra.mxu0 %v823
      %v842 = vpop.f32.mrf.mxu0
      %v843 = vadd.f32 %v210, %v842
      %844 = vdwg.mxu0
      %v845 = vxor.u32 %v843, 2147483648
      %v846 = vmul.f32 %v845, 1.442695
      %v847 = vpow.pop %v846
      %v848 = vadd.f32 %v847, 1.0
      %v849 = vrcp.pop %v848
      %v850 = vmul.f32 %v848, %v849
      %v851 = vsub.f32 1.0, %v850
      %v852 = vmul.f32 %v849, %v851
      %v853 = vadd.f32 %v849, %v852
      %vm854 = vweird.f32 %v848
      %vm855 = vweird.f32 %v849
      %vm856 = vmor %vm854, %vm855
      %v857 = vsel %vm856, %v849, %v853
      %v858 = vand.u32 2147483647, %v848
      %vm859 = vcmp.eq.f32.partialorder %v858, 8.507059e+37
      %v860 = vand.u32 %v848, 2147483648
      %v861 = vor.u32 1.1754944e-38, %v860
      %v862 = vsel %vm859, %v861, %v857
      %v863 = vmul.f32 1.0, %v862
      %v864 = vtanh.pop %v843
      %v865 = vld [vmem:[#allocation3] sm:$0x3]
      %867 = vrot.lane.b32.xlu0 %v865, 32
      %v868 = vpop.permute.xlu0 %867
      %v870 = vmul.f32 %v863, %v868
      %872 = vrot.lane.b32.xlu0 %v864, 64
      %v873 = vpop.permute.xlu0 %872
      %v875 = vmul.f32 %v863, %v873
      %877 = vrot.lane.b32.xlu0 %v875, 32
      %v878 = vpop.permute.xlu0 %877
      %v880 = vadd.f32 %v870, %v878
      %v881 = vtanh.pop %v880
      %883 = vrot.lane.b32.xlu0 %v881, 64
      %v884 = vpop.permute.xlu0 %883
      %v886 = vmul.f32 %v863, %v884
      %888 = vrot.lane.b32.xlu0 %v886, 32
      %v889 = vpop.permute.xlu0 %888
      %891 = vst.msk [vmem:[#allocation2] sm:$0x3] %vm185, %v889
      %893 = vrot.lane.b32.xlu0 %v880, 96
      %v894 = vpop.permute.xlu0 %893
      %896 = vst.msk [vmem:[#allocation3] sm:$0x3] %vm185, %v894
      %s897 = scalar_lea.vmem %s184, %s813
      %898 = vst.msk [vmem:[%s897] sm:$0x3] %vm185, %v889
      %p899 = scmp.lt.s32.totalorder %s14, 1
      %s900 = scalar_select %p899, %s14, 1
      %s901 = smul.addr %s900, 8
      %s902 = smul.addr %s901, 2
      %s903 = scalar_lea.vmem %s3, %s902
      // Predicated region
      $region33: #{lipread_forward.14} parent=31 // pred_check
        %p904 = pneg %p105
      $region34: #{lipread_forward.14} parent=31 // pred_check_branch
        %906 = sbr.rel (%p904) target = $region36
      $region35: #{lipread_forward.14} parent=31 // pred_region
        _
      $region36: #{lipread_forward.14} parent=31 // pred_fallthru
        _
    $region32: #{lipread_forward.14} parent=5 // pred_fallthru
      _
    %p907 = scmp.le.s32.totalorder 2, %s9
    // Predicated region
    $region37: #{lipread_forward.14} parent=5 // pred_check
      %p908 = pneg %p907
    $region38: #{lipread_forward.14} parent=5 // pred_check_branch
      %910 = sbr.rel (%p908) target = $region40
    $region39: #{lipread_forward.14} parent=5 // pred_region
      %s911 = ssub.s32 %s9, 2
      // Predicated region
      $region41: #{lipread_forward.14} parent=39 // pred_check
        %p912 = pneg %p111
      $region42: #{lipread_forward.14} parent=39 // pred_check_branch
        %914 = sbr.rel (%p912) target = $region44
      $region43: #{lipread_forward.14} parent=39 // pred_region
        %p915 = scmp.lt.s32.totalorder %s15, 1
        %s916 = scalar_select %p915, %s15, 1
        %s917 = smul.addr %s916, 8
        %s918 = smul.addr %s917, 2
        %s919 = scalar_lea.vmem %s3, %s918
      $region44: #{lipread_forward.14} parent=39 // pred_fallthru
        _
    $region40: #{lipread_forward.14} parent=5 // pred_fallthru
      _
  $region6: #{lipread_forward.14} parent=0 // loop_footer
    %s13 = sadd.s32 1, %s9
  $region7: #{lipread_forward.14} parent=0 // loop_footer_branch
    %8 = sbr.rel target = $region3
  $region8: #{lipread_forward.14} parent=0 // loop_exit
    _

// kernel: lipread_forward.15
$region0: #{lipread_forward.15}
  #allocation0 [shape = 'u32[]', space=smem, size = 0x4, offset = 0x4, fixed_abs, tag = 'smem constant byte address 0x4 - core index']
  #allocation1 [shape = 'u32[72,128]{1,0:T(1,128)}', space=vmem, size = 0x9000, scoped, tag = 'internal scratch']
  %s0 = inlined_call_operand.vmem [shape: f32[16,64], index: 0, kind: input, shape index: {}]
  %s1 = inlined_call_operand.vmem [shape: f32[64,10], index: 1, kind: input, shape index: {}]
  %s2 = inlined_call_operand.vmem [shape: f32[1,10], index: 2, kind: input, shape index: {}]
  %s3 = inlined_call_operand.hbm [shape: f32[16,10], index: 3, kind: output, shape index: {}]
  %s4 = sld [smem:[#allocation0]]
  $region22: #{lipread_forward.15} parent=0
    _
  %s6 = ssub.s32 1, %s4
  %s7 = scalar_select 0, %s6, %s4
  $region1: #{lipread_forward.15} parent=0
    #allocation2 [shape = 'u8[8192]{0}', space=vmem, size = 0x2000, scoped, tag = 'output window, operand 0, single buffered']
    #allocation3 [shape = 's32[1]{0}', space=sflag, size = 0x4, scoped, tag = 'scoped memory for lipread_forward.15']
    %8 = vsyncpa [#allocation3], 0
    // Predicated region
    $region2: #{lipread_forward.15} parent=1 // pred_check
      _
    $region3: #{lipread_forward.15} parent=1 // pred_check_branch
      %10 = sbr.rel (0) target = $region5
    $region4: #{lipread_forward.15} parent=1 // pred_region
      _
    $region5: #{lipread_forward.15} parent=1 // pred_fallthru
      _
    // Predicated region
    $region6: #{lipread_forward.15} parent=1 // pred_check
      _
    $region7: #{lipread_forward.15} parent=1 // pred_check_branch
      %12 = sbr.rel (0) target = $region9
    $region8: #{lipread_forward.15} parent=1 // pred_region
      _
    $region9: #{lipread_forward.15} parent=1 // pred_fallthru
      _
    // Predicated region
    $region10: #{lipread_forward.15} parent=1 // pred_check
      _
    $region11: #{lipread_forward.15} parent=1 // pred_check_branch
      %14 = sbr.rel (0) target = $region13
    $region12: #{lipread_forward.15} parent=1 // pred_region
      _
    $region13: #{lipread_forward.15} parent=1 // pred_fallthru
      _
    %v15 = vld [vmem:[%s0] sm:$0xff]
    %v16 = vld [vmem:[%s0 + $0x8] sm:$0xff]
    %v17 = vld [vmem:[%s1] sm:$0xff]
    %v18 = vld [vmem:[%s1 + $0x8] sm:$0xff]
    %v19 = vld [vmem:[%s1 + $0x10] sm:$0xff]
    %v20 = vld [vmem:[%s1 + $0x18] sm:$0xff]
    %v21 = vld [vmem:[%s1 + $0x20] sm:$0xff]
    %v22 = vld [vmem:[%s1 + $0x28] sm:$0xff]
    %v23 = vld [vmem:[%s1 + $0x30] sm:$0xff]
    %v24 = vld [vmem:[%s1 + $0x38] sm:$0xff]
    %v25 = vld [vmem:[%s2] sm:$0x1]
    %v27 = vperm.slane %v25, 0
    %vm29 = vcmask 523264
    %v31 = vsel %vm29, %v15, 0
    %v34 = vsel %vm29, %v16, 0
    %36 = vmatpush.msra.mxu0 0.0
    %37 = vmatpush.msra.mxu0 0.0
    %38 = vmatpush.msra.mxu0 0.0
    %39 = vmatpush.msra.mxu0 0.0
    %40 = vmatpush.msra.mxu0 0.0
    %41 = vmatpush.msra.mxu0 0.0
    %42 = vmatpush.msra.mxu0 0.0
    %43 = vmatpush.msra.mxu0 0.0
    %44 = vmatpush.msra.mxu0 %v24
    %45 = vmatpush.msra.mxu0 %v23
    %46 = vmatpush.msra.mxu0 %v22
    %47 = vmatpush.msra.mxu0 %v21
    %48 = vmatpush.msra.mxu0 %v20
    %49 = vmatpush.msra.mxu0 %v19
    %50 = vmatpush.msra.mxu0 %v18
    %51 = vmatpush.msra.mxu0 %v17
    %52 = vmatmul.f32.gmra.mxu0 %v31
    %v53 = vpop.f32.mrf.mxu0
    %v54 = vadd.f32 %v27, %v53
    %55 = vmatmul.f32.gmra.mxu0 %v34
    %v56 = vpop.f32.mrf.mxu0
    %v57 = vadd.f32 %v27, %v56
    %58 = vdwg.mxu0
    %vm59 = vcmask 80896
    %v60 = vsel %vm59, %v54, -inf
    %61 = vmax.xlane.f32.xlu0 %v60
    %v62 = vpop.xlane.xlu0 %61
    %v63 = vsel %vm59, %v57, -inf
    %64 = vmax.xlane.f32.xlu0 %v63
    %v65 = vpop.xlane.xlu0 %64
    %v66 = vsub.f32 %v54, %v62
    %v67 = vsub.f32 %v57, %v65
    %v68 = vmul.f32 %v66, 1.442695
    %v69 = vpow.pop %v68
    %v70 = vmul.f32 %v67, 1.442695
    %v71 = vpow.pop %v70
    %v72 = vsel %vm59, %v69, 0.0
    %73 = vadd.xlane.f32.xlu0 %v72
    %v74 = vpop.xlane.xlu0 %73
    %v75 = vsel %vm59, %v71, 0.0
    %76 = vadd.xlane.f32.xlu0 %v75
    %v77 = vpop.xlane.xlu0 %76
    %v78 = vlog2.pop %v74
    %v79 = vmul.f32 %v78, 0.6931472
    %v80 = vlog2.pop %v77
    %v81 = vmul.f32 %v80, 0.6931472
    %v82 = vsub.f32 %v66, %v79
    %v83 = vsub.f32 %v67, %v81
    %84 = vst.msk [vmem:[#allocation2] sm:$0xff] %vm59, %v82
    %85 = vst.msk [vmem:[#allocation2 + $0x8] sm:$0xff] %vm59, %v83
    // Predicated region
    $region14: #{lipread_forward.15} parent=1 // pred_check
      _
    $region15: #{lipread_forward.15} parent=1 // pred_check_branch
      %87 = sbr.rel (0) target = $region17
    $region16: #{lipread_forward.15} parent=1 // pred_region
      %89 = vsyncadd [#allocation3], 0
      %s90 = sshll.u32 [#allocation2], 4
      %s91 = int_to_ptr.vmem [resolvable:$true] %s90
      %s92 = sshll.u32 %s3, 4
      %s93 = int_to_ptr.hbm [resolvable:$true] %s92
      %98 = dma.vmem_to_hbm [thread:$0]  %s91, 256, %s93, [#allocation3], 128, 128, 8
    $region17: #{lipread_forward.15} parent=1 // pred_fallthru
      _
    // Predicated region
    $region18: #{lipread_forward.15} parent=1 // pred_check
      _
    $region19: #{lipread_forward.15} parent=1 // pred_check_branch
      %100 = sbr.rel (0) target = $region21
    $region20: #{lipread_forward.15} parent=1 // pred_region
      %102 = dma.done [#allocation3], 256
    $region21: #{lipread_forward.15} parent=1 // pred_fallthru
      _
    %103 = vsyncpa [#allocation3], 1

</llo_original>
